<compile_context>
chip_gen: v6e
topology: v6e:2x2x1
jax: 0.10.0
libtpu: 0.0.40
codegen_flags: <defaults>
</compile_context>

<pallas_src>
import functools
import math

import jax
import jax.numpy as jnp
from jax.experimental import pallas as pl
from jax.experimental.pallas import tpu as pltpu


@functools.lru_cache(maxsize=None)
def _vmem_budget():
    """Generation-aware usable-VMEM budget (leaves headroom for double buffers)."""
    try:
        cap = int(pltpu.get_tpu_info().vmem_capacity_bytes)
    except Exception:
        cap = 64 * 1024 * 1024          # conservative fallback (v7x-sized)
    # ~38 MiB on v7x (64 MiB/TC), ~76 MiB on v5e/v6e (128 MiB), capped at 100 MiB.
    return max(32 * 1024 * 1024, min(int(cap * 0.6), 100 * 1024 * 1024))


# ----------------------------- fused linear kernel -----------------------------

def _make_fused_linear_kernel(has_bias, has_ln, has_gelu, has_res, eps):
    def kernel(*refs):
        it = iter(refs)
        x_ref = next(it)
        w_ref = next(it)
        b_ref = next(it) if has_bias else None
        if has_ln:
            g_ref = next(it)
            beta_ref = next(it)
        r_ref = next(it) if has_res else None
        o_ref = next(it)

        x = x_ref[...]                                  # bf16 [tm, K]
        if has_ln:
            xf = x.astype(jnp.float32)
            mu = jnp.mean(xf, axis=-1, keepdims=True)
            xc = xf - mu
            var = jnp.mean(xc * xc, axis=-1, keepdims=True)
            xn = xc * jax.lax.rsqrt(var + eps)
            x = (xn * g_ref[...].astype(jnp.float32)
                 + beta_ref[...].astype(jnp.float32)).astype(jnp.bfloat16)

        # bf16 x bf16 -> f32 accumulate on the MXU.
        acc = jnp.dot(x, w_ref[...], preferred_element_type=jnp.float32)

        if has_bias:
            acc = acc + b_ref[...].astype(jnp.float32)
        if has_gelu:
            # exact (erf) GELU, matching torch.nn.GELU() default
            acc = 0.5 * acc * (1.0 + jax.lax.erf(acc * (1.0 / math.sqrt(2.0))))
        if has_res:
            acc = acc + r_ref[...].astype(jnp.float32)
        o_ref[...] = acc.astype(o_ref.dtype)
    return kernel


def fused_linear(x2d, w, *, bias=None, ln=None, gelu=False, residual=None,
                 out_dtype=jnp.bfloat16, eps=1e-5):
    """y = [residual +] [gelu(] (LN?(x)) @ w [+ bias] [)]     (bf16 in / f32 acc).

    x2d: [M, K]; w: [K, N] (already transposed vs. torch nn.Linear.weight).
    The weight is kept VMEM-resident (fetched once, constant block index) when it
    fits the generation-aware budget; the M tile is then grown as large as the
    budget allows (fewer grid steps, lane-dense full-N stores, LN done once/row).
    """
    x2d = x2d.astype(jnp.bfloat16)
    w = w.astype(jnp.bfloat16)
    M, K = x2d.shape
    _, N = w.shape
    budget = _vmem_budget()
    out_itemsize = jnp.dtype(out_dtype).itemsize

    # --- N tiling: resident weight whenever it fits comfortably. ---
    w_bytes = K * N * 2
    if w_bytes <= budget // 3:
        tn = N                                   # resident: DMA'd once for the whole call
    else:
        tn = 512
        while tn > 128 and N % tn:
            tn //= 2
        if N % tn:
            tn = N

    # --- M tiling: largest tile that keeps the per-step footprint in budget. ---
    def step_bytes(tm_):
        wb = (1 if tn == N else 2) * K * tn * 2          # weight (1x if resident)
        xb = 2 * tm_ * K * 2                             # x, double buffered
        ob = 2 * tm_ * tn * out_itemsize                 # out, double buffered
        rb = 2 * tm_ * tn * 2 if residual is not None else 0
        return wb + xb + ob + rb

    cap = int(budget * 0.75)
    if step_bytes(M) <= cap:
        tm = M
    else:
        tm = 128
        for cand in (1024, 512, 256):
            if cand < M and step_bytes(cand) <= cap:
                tm = cand
                break

    grid = (pl.cdiv(M, tm), pl.cdiv(N, tn))

    inputs = [x2d, w]
    in_specs = [pl.BlockSpec((tm, K), lambda i, j: (i, 0)),
                pl.BlockSpec((K, tn), lambda i, j: (0, j))]
    if bias is not None:
        inputs.append(bias.reshape(1, N).astype(jnp.float32))
        in_specs.append(pl.BlockSpec((1, tn), lambda i, j: (0, j)))
    if ln is not None:
        g, b = ln
        inputs += [g.reshape(1, K).astype(jnp.float32),
                   b.reshape(1, K).astype(jnp.float32)]
        in_specs += [pl.BlockSpec((1, K), lambda i, j: (0, 0)),
                     pl.BlockSpec((1, K), lambda i, j: (0, 0))]
    if residual is not None:
        inputs.append(residual.astype(jnp.bfloat16))
        in_specs.append(pl.BlockSpec((tm, tn), lambda i, j: (i, j)))

    kernel = _make_fused_linear_kernel(bias is not None, ln is not None,
                                       gelu, residual is not None, eps)
    return pl.pallas_call(
        kernel,
        out_shape=jax.ShapeDtypeStruct((M, N), out_dtype),
        grid=grid,
        in_specs=in_specs,
        out_specs=pl.BlockSpec((tm, tn), lambda i, j: (i, j)),
        compiler_params=pltpu.CompilerParams(
            dimension_semantics=("parallel", "parallel"),
            vmem_limit_bytes=budget),
    )(*inputs)


# ----------------------------- attention kernel -----------------------------

def _divided_attn_kernel(qkv_ref, cls_ref, o_grp_ref, o_cls_ref, *, heads, dh):
    """Divided (time- or space-) attention WITH the CLS attention fused in.

    One grid step = one batch element, all groups, all heads.
      qkv_ref : [1, G, t, 3*D] bf16  (columns q|k|v, heads outer / dh inner,
                                      softmax scale already folded into q)
      cls_ref : [1, 1, 3*D]   bf16  (cls token's q|k|v, q pre-scaled)
      o_grp_ref : [1, G, t, D]       group-token outputs
      o_cls_ref : [1, 1, D]          cls-token output (attends cls + ALL body tokens)

    The cls key/value column of the group softmax is folded in analytically; the
    per-head outputs are concatenated and stored as single lane-dense slabs.
    """
    D = heads * dh
    G = qkv_ref.shape[1]
    grp_outs = []
    cls_outs = []
    for h in range(heads):
        q = qkv_ref[0, :, :, h * dh:(h + 1) * dh]                       # [G, t, dh]
        k = qkv_ref[0, :, :, D + h * dh:D + (h + 1) * dh]               # [G, t, dh]
        v = qkv_ref[0, :, :, 2 * D + h * dh:2 * D + (h + 1) * dh]       # [G, t, dh]
        cq = cls_ref[0, :, h * dh:(h + 1) * dh]                         # [1, dh] (scaled q)
        ck = cls_ref[0, :, D + h * dh:D + (h + 1) * dh]                 # [1, dh]
        cv = cls_ref[0, :, 2 * D + h * dh:2 * D + (h + 1) * dh]         # [1, dh]
        ckf = ck.astype(jnp.float32)
        cvf = cv.astype(jnp.float32)

        # ---- group tokens attend [cls ; own group] (cls column folded analytically)
        s = jnp.einsum('gqd,gkd->gqk', q, k,
                       preferred_element_type=jnp.float32)              # [G, t, t]
        s_c = jnp.sum(q.astype(jnp.float32) * ckf[None, :, :],
                      axis=-1, keepdims=True)                           # [G, t, 1]
        m = jnp.maximum(jnp.max(s, axis=-1, keepdims=True), s_c)
        e = jnp.exp(s - m)
        e_c = jnp.exp(s_c - m)
        denom = jnp.sum(e, axis=-1, keepdims=True) + e_c
        pv = jnp.einsum('gqk,gkd->gqd', e.astype(v.dtype), v,
                        preferred_element_type=jnp.float32)             # [G, t, dh]
        pv = pv + e_c * cvf[None, :, :]
        grp_outs.append((pv * pl.reciprocal(denom, approx=True)).astype(o_grp_ref.dtype))

        # ---- cls token attends [cls ; ALL body tokens] (same loaded k/v re-used)
        cqf = cq.astype(jnp.float32)
        cqb = jnp.broadcast_to(cq.reshape(1, 1, dh), (G, 1, dh))
        s_cb = jnp.einsum('gqd,gkd->gqk', cqb, k,
                          preferred_element_type=jnp.float32)           # [G, 1, t]
        s_cc = jnp.sum(cqf * ckf)                                       # cls·cls score
        m_c = jnp.maximum(jnp.max(s_cb), s_cc)
        e_cb = jnp.exp(s_cb - m_c)
        e_cc = jnp.exp(s_cc - m_c)
        den_c = jnp.sum(e_cb) + e_cc
        pv_cg = jnp.einsum('gqk,gkd->gqd', e_cb.astype(v.dtype), v,
                           preferred_element_type=jnp.float32)          # [G, 1, dh]
        pv_c = jnp.sum(pv_cg, axis=0) + e_cc * cvf                      # [1, dh]
        cls_outs.append(pv_c / den_c)

    # single lane-dense stores (no per-head masked sub-stores)
    o_grp_ref[0, :, :, :] = jnp.concatenate(grp_outs, axis=-1)
    o_cls_ref[0, :, :] = jnp.concatenate(cls_outs, axis=-1).astype(o_cls_ref.dtype)


def pallas_divided_attention(grouped_qkv, cls_qkv, heads, dh, out_dtype=jnp.bfloat16):
    b, G, t, threeD = grouped_qkv.shape
    D = heads * dh
    budget = _vmem_budget()
    return pl.pallas_call(
        functools.partial(_divided_attn_kernel, heads=heads, dh=dh),
        out_shape=(jax.ShapeDtypeStruct((b, G, t, D), out_dtype),
                   jax.ShapeDtypeStruct((b, 1, D), out_dtype)),
        grid=(b,),
        in_specs=[pl.BlockSpec((1, G, t, threeD), lambda i: (i, 0, 0, 0)),
                  pl.BlockSpec((1, 1, threeD), lambda i: (i, 0, 0))],
        out_specs=(pl.BlockSpec((1, G, t, D), lambda i: (i, 0, 0, 0)),
                   pl.BlockSpec((1, 1, D), lambda i: (i, 0, 0))),
        compiler_params=pltpu.CompilerParams(
            dimension_semantics=("parallel",),
            vmem_limit_bytes=budget),
    )(grouped_qkv, cls_qkv)


# ----------------------------- model glue (plain JAX reshapes only) -----------------------------

def spacetime_mhsa(x, ln_g, ln_b, p_att, tokens_to_attend, space_att, heads):
    """x: [b, T, dim] with T = 1 (cls) + frames*patches (classification=True path).
    Returns attention block output with the residual (x) already added."""
    b, T, dim = x.shape
    dh = dim // heads
    D = heads * dh

    # fused LayerNorm + QKV projection (bias=False, matching the reference).
    # softmax scale is already folded into the q weight columns.
    qkv = fused_linear(x.reshape(b * T, dim), p_att['to_qvk'],
                       ln=(ln_g, ln_b)).reshape(b, T, 3 * D)

    cls_qkv = qkv[:, 0:1, :]                                           # [b, 1, 3D]
    body = qkv[:, 1:, :]                                               # [b, n_tok, 3D]
    n_tok = T - 1
    if space_att:
        pch = tokens_to_attend
        frm = n_tok // pch
        # groups = frames, attend over patches: pure reshape, no relayout.
        grouped = body.reshape(b, frm, pch, 3 * D)
    else:
        frm = tokens_to_attend
        pch = n_tok // frm
        # groups = patches, attend over frames: one (f,p) swap with dim minor.
        grouped = jnp.transpose(body.reshape(b, frm, pch, 3 * D), (0, 2, 1, 3))

    # divided attention + cls attention fused in one kernel (single QKV read).
    out_grp, out_cls = pallas_divided_attention(grouped, cls_qkv, heads, dh)

    if space_att:
        om = out_grp.reshape(b, n_tok, D)                              # (f p) ordering
    else:
        om = jnp.transpose(out_grp, (0, 2, 1, 3)).reshape(b, n_tok, D) # back to (f p)

    attn = jnp.concatenate([out_cls, om], axis=1)                      # [b, T, D]
    # output projection W_0 (bias=False) with the residual add fused in.
    return fused_linear(attn.reshape(b * T, D), p_att['W_0'],
                        residual=x.reshape(b * T, dim)).reshape(b, T, dim)


def timesformer_block(x, bp, frames, patches, heads):
    b, T, dim = x.shape
    # time attention (LN fused into QKV, residual fused into W_0)
    x = spacetime_mhsa(x, bp['ln_t_g'], bp['ln_t_b'], bp['time_att'],
                       tokens_to_attend=frames, space_att=False, heads=heads)
    # space attention
    x = spacetime_mhsa(x, bp['ln_s_g'], bp['ln_s_b'], bp['space_att'],
                       tokens_to_attend=patches, space_att=True, heads=heads)
    # MLP: (LN + W1 + bias + GELU) fused; (W2 + bias + residual) fused. Dropout = identity.
    h = fused_linear(x.reshape(b * T, dim), bp['mlp_w1'], bias=bp['mlp_b1'],
                     ln=(bp['ln_m_g'], bp['ln_m_b']), gelu=True)
    x = fused_linear(h, bp['mlp_w2'], bias=bp['mlp_b2'],
                     residual=x.reshape(b * T, dim)).reshape(b, T, dim)
    return x


def timesformer_forward(vid, params, cfg):
    b, f, c, H, W = vid.shape
    p = cfg['patch_dim']
    xh, yw = H // p, W // p
    # rearrange 'b f c (px x) (py y) -> b (f x y) (px py c)'
    t = vid.reshape(b, f, c, p, xh, p, yw)
    t = jnp.transpose(t, (0, 1, 4, 6, 3, 5, 2))                 # b f x y px py c
    tokens = t.reshape(b, f * xh * yw, p * p * c)
    n_tok = tokens.shape[1]
    dim = cfg['dim']

    proj = fused_linear(tokens.reshape(-1, p * p * c),
                        params['proj_w'], bias=params['proj_b']).reshape(b, n_tok, dim)
    cls = jnp.broadcast_to(params['cls_token'].astype(jnp.bfloat16), (b, 1, dim))
    x = jnp.concatenate([cls, proj], axis=1)
    x = (x.astype(jnp.float32) + params['pos_emb'][: n_tok + 1]).astype(jnp.bfloat16)
    # embedding dropout = identity (eval)

    for bp in params['blocks']:
        x = timesformer_block(x, bp, cfg['frames'], cfg['patches'], cfg['heads'])

    y = x[:, 0, :]
    # fused LN + classifier head; head weight is padded to 128 lanes -> slice back.
    logits = fused_linear(y, params['head_w'], bias=params['head_b'],
                          ln=(params['head_ln_g'], params['head_ln_b']),
                          out_dtype=jnp.float32)
    return logits[:, :cfg['num_classes']]


# ----------------------------- deterministic params -----------------------------

def init_params(key, cfg):
    dim, heads = cfg['dim'], cfg['heads']
    dh = dim // heads
    D = heads * dh
    hid = cfg['dim_linear_block']
    n_tok = cfg['frames'] * cfg['patches']
    ncls = cfg['num_classes']
    ncls_pad = ((ncls + 127) // 128) * 128
    scale = dh ** (-0.5)
    keys = iter(jax.random.split(key, 128))

    def w(shape, s=0.02):
        return jax.random.normal(next(keys), shape, jnp.float32) * s

    def reorder_qkv_cols(w_qkv):
        # torch/einops column layout '(d k h)' -> '(k h d)' so q|k|v and per-head
        # slices are contiguous along the lane axis (apply the same permutation
        # when loading pretrained torch weights).  The softmax scale (dh^-0.5)
        # is folded into the q columns so the attention kernels skip the per-
        # element scaling.
        w_ = jnp.transpose(w_qkv.reshape(dim, dh, 3, heads),
                           (0, 2, 3, 1)).reshape(dim, 3 * D)
        return w_.at[:, :D].multiply(scale)

    head_w = jnp.zeros((dim, ncls_pad), jnp.float32)
    head_w = head_w.at[:, :ncls].set(w((dim, ncls)))

    params = {
        'proj_w': w((cfg['token_dim'], dim)).astype(jnp.bfloat16),
        'proj_b': jnp.zeros((dim,), jnp.float32),
        'cls_token': w((1, 1, dim)),
        'pos_emb': w((n_tok + 1, dim)),
        'head_ln_g': jnp.ones((dim,), jnp.float32),
        'head_ln_b': jnp.zeros((dim,), jnp.float32),
        'head_w': head_w.astype(jnp.bfloat16),
        'head_b': jnp.zeros((ncls_pad,), jnp.float32),
        'blocks': [],
    }
    for _ in range(cfg['blocks']):
        params['blocks'].append({
            'ln_t_g': jnp.ones((dim,), jnp.float32), 'ln_t_b': jnp.zeros((dim,), jnp.float32),
            'time_att': {'to_qvk': reorder_qkv_cols(w((dim, 3 * D))).astype(jnp.bfloat16),
                         'W_0': w((D, dim)).astype(jnp.bfloat16)},
            'ln_s_g': jnp.ones((dim,), jnp.float32), 'ln_s_b': jnp.zeros((dim,), jnp.float32),
            'space_att': {'to_qvk': reorder_qkv_cols(w((dim, 3 * D))).astype(jnp.bfloat16),
                          'W_0': w((D, dim)).astype(jnp.bfloat16)},
            'ln_m_g': jnp.ones((dim,), jnp.float32), 'ln_m_b': jnp.zeros((dim,), jnp.float32),
            'mlp_w1': w((dim, hid)).astype(jnp.bfloat16), 'mlp_b1': jnp.zeros((hid,), jnp.float32),
            'mlp_w2': w((hid, dim)).astype(jnp.bfloat16), 'mlp_b2': jnp.zeros((dim,), jnp.float32),
        })
    return params


# ----------------------------- main -----------------------------

if __name__ == "__main__":
    cfg = dict(
        img_dim=16, frames=2, num_classes=5, in_channels=3, patch_dim=8,
        dim=32, blocks=2, heads=4, dim_linear_block=64,
    )
    cfg['patches'] = (cfg['img_dim'] // cfg['patch_dim']) ** 2          # 4
    cfg['token_dim'] = cfg['in_channels'] * cfg['patch_dim'] ** 2       # 192

    key = jax.random.PRNGKey(0)
    k_vid, k_par = jax.random.split(key)
    vid = jax.random.normal(
        k_vid, (2, cfg['frames'], cfg['in_channels'], cfg['img_dim'], cfg['img_dim']),
        jnp.float32)
    params = init_params(k_par, cfg)

    fwd = jax.jit(functools.partial(timesformer_forward, cfg=cfg))
    logits = fwd(vid, params)
    jax.block_until_ready(logits)
    assert logits.shape == (2, cfg['num_classes'])
    print("KERNEL_OK")
</pallas_src>

<mosaic_0001>
module attributes {stable_mosaic.version = 11 : i64} {
  func.func @kernel(%arg0: i32, %arg1: i32, %arg2: memref<16x192xbf16, #tpu.memory_space<vmem>>, %arg3: memref<192x32xbf16, #tpu.memory_space<vmem>>, %arg4: memref<1x32xf32, #tpu.memory_space<vmem>>, %arg5: memref<16x32xbf16, #tpu.memory_space<vmem>>) attributes {dimension_semantics = [#tpu.dimension_semantics<parallel>, #tpu.dimension_semantics<parallel>], iteration_bounds = array<i64: 1, 1>, scalar_prefetch = 0 : i64, scratch_operands = 0 : i64, tpu.core_type = #tpu.core_type<tc>, window_params = [{transform_indices = @transform_0, window_bounds = array<i64: 16, 192>}, {transform_indices = @transform_1, window_bounds = array<i64: 192, 32>}, {transform_indices = @transform_2, window_bounds = array<i64: 1, 32>}, {transform_indices = @transform_3, window_bounds = array<i64: 16, 32>}]} {
    %c0 = arith.constant 0 : index
    %c0_0 = arith.constant 0 : index
    %0 = vector.load %arg2[%c0, %c0_0] : memref<16x192xbf16, #tpu.memory_space<vmem>>, vector<16x192xbf16>
    %c0_1 = arith.constant 0 : index
    %c0_2 = arith.constant 0 : index
    %1 = vector.load %arg3[%c0_1, %c0_2] : memref<192x32xbf16, #tpu.memory_space<vmem>>, vector<192x32xbf16>
    %cst = arith.constant dense<0.000000e+00> : vector<16x32xf32>
    %2 = tpu.matmul %0, %1, %cst {dimension_numbers = #tpu.dot_dimension_numbers<[1], [0], [0], [1], [0, 0, 1, 1], [], []>} : vector<16x192xbf16>, vector<192x32xbf16>, vector<16x32xf32> -> vector<16x32xf32>
    %c0_3 = arith.constant 0 : index
    %c0_4 = arith.constant 0 : index
    %3 = vector.load %arg4[%c0_3, %c0_4] : memref<1x32xf32, #tpu.memory_space<vmem>>, vector<1x32xf32>
    %4 = vector.broadcast %3 : vector<1x32xf32> to vector<16x32xf32>
    %5 = arith.addf %2, %4 : vector<16x32xf32>
    %6 = arith.truncf %5 : vector<16x32xf32> to vector<16x32xbf16>
    %c0_5 = arith.constant 0 : index
    %c0_6 = arith.constant 0 : index
    %7 = vector.load %arg5[%c0_5, %c0_6] : memref<16x32xbf16, #tpu.memory_space<vmem>>, vector<16x32xbf16>
    tpu.vector_store %arg5[%c0_5, %c0_6], %6 {strides = array<i32>} : memref<16x32xbf16, #tpu.memory_space<vmem>>, vector<16x32xbf16>,
    return
  }
  func.func @transform_0(%arg0: i32, %arg1: i32) -> (i32, i32) {
    %c0_i32 = arith.constant 0 : i32
    %c0_i32_0 = arith.constant 0 : i32
    return %arg0, %c0_i32 : i32, i32
  }
  func.func @transform_1(%arg0: i32, %arg1: i32) -> (i32, i32) {
    %c0_i32 = arith.constant 0 : i32
    %c0_i32_0 = arith.constant 0 : i32
    return %c0_i32, %arg1 : i32, i32
  }
  func.func @transform_2(%arg0: i32, %arg1: i32) -> (i32, i32) {
    %c0_i32 = arith.constant 0 : i32
    %c0_i32_0 = arith.constant 0 : i32
    return %c0_i32, %arg1 : i32, i32
  }
  func.func @transform_3(%arg0: i32, %arg1: i32) -> (i32, i32) {
    %c0_i32 = arith.constant 0 : i32
    return %arg0, %arg1 : i32, i32
  }
}

module attributes {stable_mosaic.version = 11 : i64} {
  func.func @kernel(%arg0: i32, %arg1: i32, %arg2: memref<18x32xbf16, #tpu.memory_space<vmem>>, %arg3: memref<32x96xbf16, #tpu.memory_space<vmem>>, %arg4: memref<1x32xf32, #tpu.memory_space<vmem>>, %arg5: memref<1x32xf32, #tpu.memory_space<vmem>>, %arg6: memref<18x96xbf16, #tpu.memory_space<vmem>>) attributes {dimension_semantics = [#tpu.dimension_semantics<parallel>, #tpu.dimension_semantics<parallel>], iteration_bounds = array<i64: 1, 1>, scalar_prefetch = 0 : i64, scratch_operands = 0 : i64, tpu.core_type = #tpu.core_type<tc>, window_params = [{transform_indices = @transform_0, window_bounds = array<i64: 18, 32>}, {transform_indices = @transform_1, window_bounds = array<i64: 32, 96>}, {pipeline_mode = #tpu.pipeline_mode<synchronous>, transform_indices = @transform_2, window_bounds = array<i64: 1, 32>}, {pipeline_mode = #tpu.pipeline_mode<synchronous>, transform_indices = @transform_3, window_bounds = array<i64: 1, 32>}, {transform_indices = @transform_4, window_bounds = array<i64: 18, 96>}]} {
    %c0 = arith.constant 0 : index
    %c0_0 = arith.constant 0 : index
    %0 = vector.load %arg2[%c0, %c0_0] : memref<18x32xbf16, #tpu.memory_space<vmem>>, vector<18x32xbf16>
    %1 = arith.extf %0 : vector<18x32xbf16> to vector<18x32xf32>
    %cst = arith.constant dense<0.000000e+00> : vector<18xf32>
    %2 = vector.multi_reduction <add>, %1, %cst [1] : vector<18x32xf32> to vector<18xf32>
    %3 = vector.shape_cast %2 : vector<18xf32> to vector<18x1xf32>
    %cst_1 = arith.constant 3.200000e+01 : f32
    %4 = vector.broadcast %cst_1 : f32 to vector<18x1xf32>
    %5 = arith.divf %3, %4 : vector<18x1xf32>
    %6 = vector.broadcast %5 : vector<18x1xf32> to vector<18x32xf32>
    %7 = arith.subf %1, %6 : vector<18x32xf32>
    %8 = arith.mulf %7, %7 : vector<18x32xf32>
    %cst_2 = arith.constant dense<0.000000e+00> : vector<18xf32>
    %9 = vector.multi_reduction <add>, %8, %cst_2 [1] : vector<18x32xf32> to vector<18xf32>
    %10 = vector.shape_cast %9 : vector<18xf32> to vector<18x1xf32>
    %cst_3 = arith.constant 3.200000e+01 : f32
    %11 = vector.broadcast %cst_3 : f32 to vector<18x1xf32>
    %12 = arith.divf %10, %11 : vector<18x1xf32>
    %cst_4 = arith.constant 9.99999974E-6 : f32
    %13 = vector.broadcast %cst_4 : f32 to vector<18x1xf32>
    %14 = arith.addf %12, %13 : vector<18x1xf32>
    %15 = math.rsqrt %14 : vector<18x1xf32>
    %16 = vector.broadcast %15 : vector<18x1xf32> to vector<18x32xf32>
    %17 = arith.mulf %7, %16 : vector<18x32xf32>
    %c0_5 = arith.constant 0 : index
    %c0_6 = arith.constant 0 : index
    %18 = vector.load %arg4[%c0_5, %c0_6] : memref<1x32xf32, #tpu.memory_space<vmem>>, vector<1x32xf32>
    %19 = vector.broadcast %18 : vector<1x32xf32> to vector<18x32xf32>
    %20 = arith.mulf %17, %19 : vector<18x32xf32>
    %c0_7 = arith.constant 0 : index
    %c0_8 = arith.constant 0 : index
    %21 = vector.load %arg5[%c0_7, %c0_8] : memref<1x32xf32, #tpu.memory_space<vmem>>, vector<1x32xf32>
    %22 = vector.broadcast %21 : vector<1x32xf32> to vector<18x32xf32>
    %23 = arith.addf %20, %22 : vector<18x32xf32>
    %24 = arith.truncf %23 : vector<18x32xf32> to vector<18x32xbf16>
    %c0_9 = arith.constant 0 : index
    %c0_10 = arith.constant 0 : index
    %25 = vector.load %arg3[%c0_9, %c0_10] : memref<32x96xbf16, #tpu.memory_space<vmem>>, vector<32x96xbf16>
    %cst_11 = arith.constant dense<0.000000e+00> : vector<18x96xf32>
    %26 = tpu.matmul %24, %25, %cst_11 {dimension_numbers = #tpu.dot_dimension_numbers<[1], [0], [0], [1], [0, 0, 1, 1], [], []>} : vector<18x32xbf16>, vector<32x96xbf16>, vector<18x96xf32> -> vector<18x96xf32>
    %27 = arith.truncf %26 : vector<18x96xf32> to vector<18x96xbf16>
    %c0_12 = arith.constant 0 : index
    %c0_13 = arith.constant 0 : index
    %28 = vector.load %arg6[%c0_12, %c0_13] : memref<18x96xbf16, #tpu.memory_space<vmem>>, vector<18x96xbf16>
    tpu.vector_store %arg6[%c0_12, %c0_13], %27 {strides = array<i32>} : memref<18x96xbf16, #tpu.memory_space<vmem>>, vector<18x96xbf16>,
    return
  }
  func.func @transform_0(%arg0: i32, %arg1: i32) -> (i32, i32) {
    %c0_i32 = arith.constant 0 : i32
    %c0_i32_0 = arith.constant 0 : i32
    return %arg0, %c0_i32 : i32, i32
  }
  func.func @transform_1(%arg0: i32, %arg1: i32) -> (i32, i32) {
    %c0_i32 = arith.constant 0 : i32
    %c0_i32_0 = arith.constant 0 : i32
    return %c0_i32, %arg1 : i32, i32
  }
  func.func @transform_2(%arg0: i32, %arg1: i32) -> (i32, i32) {
    %c0_i32 = arith.constant 0 : i32
    %c0_i32_0 = arith.constant 0 : i32
    %c0_i32_1 = arith.constant 0 : i32
    return %c0_i32, %c0_i32_0 : i32, i32
  }
  func.func @transform_3(%arg0: i32, %arg1: i32) -> (i32, i32) {
    %c0_i32 = arith.constant 0 : i32
    %c0_i32_0 = arith.constant 0 : i32
    %c0_i32_1 = arith.constant 0 : i32
    return %c0_i32, %c0_i32_0 : i32, i32
  }
  func.func @transform_4(%arg0: i32, %arg1: i32) -> (i32, i32) {
    %c0_i32 = arith.constant 0 : i32
    return %arg0, %arg1 : i32, i32
  }
}

module attributes {stable_mosaic.version = 11 : i64} {
  func.func @_divided_attn_kernel(%arg0: i32, %arg1: memref<1x4x2x96xbf16, #tpu.memory_space<vmem>>, %arg2: memref<1x1x96xbf16, #tpu.memory_space<vmem>>, %arg3: memref<1x4x2x32xbf16, #tpu.memory_space<vmem>>, %arg4: memref<1x1x32xbf16, #tpu.memory_space<vmem>>) attributes {dimension_semantics = [#tpu.dimension_semantics<parallel>], iteration_bounds = array<i64: 2>, scalar_prefetch = 0 : i64, scratch_operands = 0 : i64, tpu.core_type = #tpu.core_type<tc>, window_params = [{transform_indices = @transform_0, window_bounds = array<i64: 1, 4, 2, 96>}, {transform_indices = @transform_1, window_bounds = array<i64: 1, 1, 96>}, {transform_indices = @transform_2, window_bounds = array<i64: 1, 4, 2, 32>}, {transform_indices = @transform_3, window_bounds = array<i64: 1, 1, 32>}]} {
    %c0 = arith.constant 0 : index
    %c0_0 = arith.constant 0 : index
    %c0_1 = arith.constant 0 : index
    %c0_2 = arith.constant 0 : index
    %0 = vector.load %arg1[%c0, %c0_0, %c0_1, %c0_2] : memref<1x4x2x96xbf16, #tpu.memory_space<vmem>>, vector<1x4x2x8xbf16>
    %1 = vector.shape_cast %0 : vector<1x4x2x8xbf16> to vector<4x2x8xbf16>
    %c0_3 = arith.constant 0 : index
    %c0_4 = arith.constant 0 : index
    %c0_5 = arith.constant 0 : index
    %c32 = arith.constant 32 : index
    %2 = vector.load %arg1[%c0_3, %c0_4, %c0_5, %c32] : memref<1x4x2x96xbf16, #tpu.memory_space<vmem>>, vector<1x4x2x8xbf16>
    %3 = vector.shape_cast %2 : vector<1x4x2x8xbf16> to vector<4x2x8xbf16>
    %c0_6 = arith.constant 0 : index
    %c0_7 = arith.constant 0 : index
    %c0_8 = arith.constant 0 : index
    %c64 = arith.constant 64 : index
    %4 = vector.load %arg1[%c0_6, %c0_7, %c0_8, %c64] : memref<1x4x2x96xbf16, #tpu.memory_space<vmem>>, vector<1x4x2x8xbf16>
    %5 = vector.shape_cast %4 : vector<1x4x2x8xbf16> to vector<4x2x8xbf16>
    %c0_9 = arith.constant 0 : index
    %c0_10 = arith.constant 0 : index
    %c0_11 = arith.constant 0 : index
    %6 = vector.load %arg2[%c0_9, %c0_10, %c0_11] : memref<1x1x96xbf16, #tpu.memory_space<vmem>>, vector<1x1x8xbf16>
    %7 = vector.shape_cast %6 : vector<1x1x8xbf16> to vector<1x8xbf16>
    %c0_12 = arith.constant 0 : index
    %c0_13 = arith.constant 0 : index
    %c32_14 = arith.constant 32 : index
    %8 = vector.load %arg2[%c0_12, %c0_13, %c32_14] : memref<1x1x96xbf16, #tpu.memory_space<vmem>>, vector<1x1x8xbf16>
    %9 = vector.shape_cast %8 : vector<1x1x8xbf16> to vector<1x8xbf16>
    %c0_15 = arith.constant 0 : index
    %c0_16 = arith.constant 0 : index
    %c64_17 = arith.constant 64 : index
    %10 = vector.load %arg2[%c0_15, %c0_16, %c64_17] : memref<1x1x96xbf16, #tpu.memory_space<vmem>>, vector<1x1x8xbf16>
    %11 = vector.shape_cast %10 : vector<1x1x8xbf16> to vector<1x8xbf16>
    %12 = arith.extf %9 : vector<1x8xbf16> to vector<1x8xf32>
    %13 = arith.extf %11 : vector<1x8xbf16> to vector<1x8xf32>
    "tpu.trace_start"() <{level = 10 : i32, message = "gqd,gkd->gqk"}> : () -> ()
    %cst = arith.constant dense<0.000000e+00> : vector<4x2x2xf32>
    %14 = tpu.matmul %1, %3, %cst {dimension_numbers = #tpu.dot_dimension_numbers<[2], [2], [1], [1], [0, 0, 0, 1, 1, 1], [0], [0]>} : vector<4x2x8xbf16>, vector<4x2x8xbf16>, vector<4x2x2xf32> -> vector<4x2x2xf32>
    "tpu.trace_stop"() : () -> ()
    %15 = arith.extf %1 : vector<4x2x8xbf16> to vector<4x2x8xf32>
    %16 = vector.shape_cast %12 : vector<1x8xf32> to vector<1x1x8xf32>
    %17 = vector.broadcast %16 : vector<1x1x8xf32> to vector<4x2x8xf32>
    %18 = arith.mulf %15, %17 : vector<4x2x8xf32>
    %cst_18 = arith.constant dense<0.000000e+00> : vector<4x2xf32>
    %19 = vector.multi_reduction <add>, %18, %cst_18 [2] : vector<4x2x8xf32> to vector<4x2xf32>
    %20 = vector.shape_cast %19 : vector<4x2xf32> to vector<4x2x1xf32>
    %cst_19 = arith.constant dense<0xFF800000> : vector<4x2xf32>
    %21 = vector.multi_reduction <maximumf>, %14, %cst_19 [2] : vector<4x2x2xf32> to vector<4x2xf32>
    %22 = vector.shape_cast %21 : vector<4x2xf32> to vector<4x2x1xf32>
    %23 = arith.maximumf %22, %20 : vector<4x2x1xf32>
    %24 = vector.broadcast %23 : vector<4x2x1xf32> to vector<4x2x2xf32>
    %25 = arith.subf %14, %24 : vector<4x2x2xf32>
    %26 = math.exp %25 : vector<4x2x2xf32>
    %27 = arith.subf %20, %23 : vector<4x2x1xf32>
    %28 = math.exp %27 : vector<4x2x1xf32>
    %cst_20 = arith.constant dense<0.000000e+00> : vector<4x2xf32>
    %29 = vector.multi_reduction <add>, %26, %cst_20 [2] : vector<4x2x2xf32> to vector<4x2xf32>
    %30 = vector.shape_cast %29 : vector<4x2xf32> to vector<4x2x1xf32>
    %31 = arith.addf %30, %28 : vector<4x2x1xf32>
    %32 = arith.truncf %26 : vector<4x2x2xf32> to vector<4x2x2xbf16>
    "tpu.trace_start"() <{level = 10 : i32, message = "gqk,gkd->gqd"}> : () -> ()
    %cst_21 = arith.constant dense<0.000000e+00> : vector<4x2x8xf32>
    %33 = tpu.matmul %32, %5, %cst_21 {dimension_numbers = #tpu.dot_dimension_numbers<[2], [1], [1], [2], [0, 0, 0, 1, 1, 2], [0], [0]>} : vector<4x2x2xbf16>, vector<4x2x8xbf16>, vector<4x2x8xf32> -> vector<4x2x8xf32>
    "tpu.trace_stop"() : () -> ()
    %34 = vector.shape_cast %13 : vector<1x8xf32> to vector<1x1x8xf32>
    %35 = vector.broadcast %28 : vector<4x2x1xf32> to vector<4x2x8xf32>
    %36 = vector.broadcast %34 : vector<1x1x8xf32> to vector<4x2x8xf32>
    %37 = arith.mulf %35, %36 : vector<4x2x8xf32>
    %38 = arith.addf %33, %37 : vector<4x2x8xf32>
    %39 = tpu.reciprocal %31 {approx = true} : vector<4x2x1xf32> -> vector<4x2x1xf32>
    %40 = vector.broadcast %39 : vector<4x2x1xf32> to vector<4x2x8xf32>
    %41 = arith.mulf %38, %40 : vector<4x2x8xf32>
    %42 = arith.truncf %41 : vector<4x2x8xf32> to vector<4x2x8xbf16>
    %43 = arith.extf %7 : vector<1x8xbf16> to vector<1x8xf32>
    %44 = vector.shape_cast %7 : vector<1x8xbf16> to vector<1x1x8xbf16>
    %45 = vector.shape_cast %44 : vector<1x1x8xbf16> to vector<1x1x8xbf16>
    %46 = vector.broadcast %45 : vector<1x1x8xbf16> to vector<4x1x8xbf16>
    "tpu.trace_start"() <{level = 10 : i32, message = "gqd,gkd->gqk"}> : () -> ()
    %cst_22 = arith.constant dense<0.000000e+00> : vector<4x1x2xf32>
    %47 = tpu.matmul %46, %3, %cst_22 {dimension_numbers = #tpu.dot_dimension_numbers<[2], [2], [1], [1], [0, 0, 0, 1, 1, 1], [0], [0]>} : vector<4x1x8xbf16>, vector<4x2x8xbf16>, vector<4x1x2xf32> -> vector<4x1x2xf32>
    "tpu.trace_stop"() : () -> ()
    %48 = arith.mulf %43, %12 : vector<1x8xf32>
    %49 = vector.shape_cast %48 : vector<1x8xf32> to vector<1x1x8xf32>
    %cst_23 = arith.constant dense<0.000000e+00> : vector<1xf32>
    %50 = vector.multi_reduction <add>, %49, %cst_23 [1, 2] : vector<1x1x8xf32> to vector<1xf32>
    %51 = vector.shape_cast %50 : vector<1xf32> to vector<1x1x1xf32>
    %52 = vector.extract %51[0, 0, 0] : f32 from vector<1x1x1xf32>
    %53 = vector.shape_cast %47 : vector<4x1x2xf32> to vector<1x4x1x2xf32>
    %cst_24 = arith.constant dense<0xFF800000> : vector<1xf32>
    %54 = vector.multi_reduction <maximumf>, %53, %cst_24 [1, 2, 3] : vector<1x4x1x2xf32> to vector<1xf32>
    %55 = vector.shape_cast %54 : vector<1xf32> to vector<1x1x1x1xf32>
    %56 = vector.extract %55[0, 0, 0, 0] : f32 from vector<1x1x1x1xf32>
    %57 = arith.maximumf %56, %52 : f32
    %58 = vector.broadcast %57 : f32 to vector<4x1x2xf32>
    %59 = arith.subf %47, %58 : vector<4x1x2xf32>
    %60 = math.exp %59 : vector<4x1x2xf32>
    %61 = arith.subf %52, %57 : f32
    %62 = math.exp %61 : f32
    %63 = vector.shape_cast %60 : vector<4x1x2xf32> to vector<1x4x1x2xf32>
    %cst_25 = arith.constant dense<0.000000e+00> : vector<1xf32>
    %64 = vector.multi_reduction <add>, %63, %cst_25 [1, 2, 3] : vector<1x4x1x2xf32> to vector<1xf32>
    %65 = vector.shape_cast %64 : vector<1xf32> to vector<1x1x1x1xf32>
    %66 = vector.extract %65[0, 0, 0, 0] : f32 from vector<1x1x1x1xf32>
    %67 = arith.addf %66, %62 : f32
    %68 = arith.truncf %60 : vector<4x1x2xf32> to vector<4x1x2xbf16>
    "tpu.trace_start"() <{level = 10 : i32, message = "gqk,gkd->gqd"}> : () -> ()
    %cst_26 = arith.constant dense<0.000000e+00> : vector<4x1x8xf32>
    %69 = tpu.matmul %68, %5, %cst_26 {dimension_numbers = #tpu.dot_dimension_numbers<[2], [1], [1], [2], [0, 0, 0, 1, 1, 2], [0], [0]>} : vector<4x1x2xbf16>, vector<4x2x8xbf16>, vector<4x1x8xf32> -> vector<4x1x8xf32>
    "tpu.trace_stop"() : () -> ()
    %cst_27 = arith.constant dense<0.000000e+00> : vector<1x8xf32>
    %70 = vector.multi_reduction <add>, %69, %cst_27 [0] : vector<4x1x8xf32> to vector<1x8xf32>
    %71 = vector.broadcast %62 : f32 to vector<1x8xf32>
    %72 = arith.mulf %71, %13 : vector<1x8xf32>
    %73 = arith.addf %70, %72 : vector<1x8xf32>
    %74 = vector.broadcast %67 : f32 to vector<1x8xf32>
    %75 = arith.divf %73, %74 : vector<1x8xf32>
    %c0_28 = arith.constant 0 : index
    %c0_29 = arith.constant 0 : index
    %c0_30 = arith.constant 0 : index
    %c8 = arith.constant 8 : index
    %76 = vector.load %arg1[%c0_28, %c0_29, %c0_30, %c8] : memref<1x4x2x96xbf16, #tpu.memory_space<vmem>>, vector<1x4x2x8xbf16>
    %77 = vector.shape_cast %76 : vector<1x4x2x8xbf16> to vector<4x2x8xbf16>
    %c0_31 = arith.constant 0 : index
    %c0_32 = arith.constant 0 : index
    %c0_33 = arith.constant 0 : index
    %c40 = arith.constant 40 : index
    %78 = vector.load %arg1[%c0_31, %c0_32, %c0_33, %c40] : memref<1x4x2x96xbf16, #tpu.memory_space<vmem>>, vector<1x4x2x8xbf16>
    %79 = vector.shape_cast %78 : vector<1x4x2x8xbf16> to vector<4x2x8xbf16>
    %c0_34 = arith.constant 0 : index
    %c0_35 = arith.constant 0 : index
    %c0_36 = arith.constant 0 : index
    %c72 = arith.constant 72 : index
    %80 = vector.load %arg1[%c0_34, %c0_35, %c0_36, %c72] : memref<1x4x2x96xbf16, #tpu.memory_space<vmem>>, vector<1x4x2x8xbf16>
    %81 = vector.shape_cast %80 : vector<1x4x2x8xbf16> to vector<4x2x8xbf16>
    %c0_37 = arith.constant 0 : index
    %c0_38 = arith.constant 0 : index
    %c8_39 = arith.constant 8 : index
    %82 = vector.load %arg2[%c0_37, %c0_38, %c8_39] : memref<1x1x96xbf16, #tpu.memory_space<vmem>>, vector<1x1x8xbf16>
    %83 = vector.shape_cast %82 : vector<1x1x8xbf16> to vector<1x8xbf16>
    %c0_40 = arith.constant 0 : index
    %c0_41 = arith.constant 0 : index
    %c40_42 = arith.constant 40 : index
    %84 = vector.load %arg2[%c0_40, %c0_41, %c40_42] : memref<1x1x96xbf16, #tpu.memory_space<vmem>>, vector<1x1x8xbf16>
    %85 = vector.shape_cast %84 : vector<1x1x8xbf16> to vector<1x8xbf16>
    %c0_43 = arith.constant 0 : index
    %c0_44 = arith.constant 0 : index
    %c72_45 = arith.constant 72 : index
    %86 = vector.load %arg2[%c0_43, %c0_44, %c72_45] : memref<1x1x96xbf16, #tpu.memory_space<vmem>>, vector<1x1x8xbf16>
    %87 = vector.shape_cast %86 : vector<1x1x8xbf16> to vector<1x8xbf16>
    %88 = arith.extf %85 : vector<1x8xbf16> to vector<1x8xf32>
    %89 = arith.extf %87 : vector<1x8xbf16> to vector<1x8xf32>
    "tpu.trace_start"() <{level = 10 : i32, message = "gqd,gkd->gqk"}> : () -> ()
    %cst_46 = arith.constant dense<0.000000e+00> : vector<4x2x2xf32>
    %90 = tpu.matmul %77, %79, %cst_46 {dimension_numbers = #tpu.dot_dimension_numbers<[2], [2], [1], [1], [0, 0, 0, 1, 1, 1], [0], [0]>} : vector<4x2x8xbf16>, vector<4x2x8xbf16>, vector<4x2x2xf32> -> vector<4x2x2xf32>
    "tpu.trace_stop"() : () -> ()
    %91 = arith.extf %77 : vector<4x2x8xbf16> to vector<4x2x8xf32>
    %92 = vector.shape_cast %88 : vector<1x8xf32> to vector<1x1x8xf32>
    %93 = vector.broadcast %92 : vector<1x1x8xf32> to vector<4x2x8xf32>
    %94 = arith.mulf %91, %93 : vector<4x2x8xf32>
    %cst_47 = arith.constant dense<0.000000e+00> : vector<4x2xf32>
    %95 = vector.multi_reduction <add>, %94, %cst_47 [2] : vector<4x2x8xf32> to vector<4x2xf32>
    %96 = vector.shape_cast %95 : vector<4x2xf32> to vector<4x2x1xf32>
    %cst_48 = arith.constant dense<0xFF800000> : vector<4x2xf32>
    %97 = vector.multi_reduction <maximumf>, %90, %cst_48 [2] : vector<4x2x2xf32> to vector<4x2xf32>
    %98 = vector.shape_cast %97 : vector<4x2xf32> to vector<4x2x1xf32>
    %99 = arith.maximumf %98, %96 : vector<4x2x1xf32>
    %100 = vector.broadcast %99 : vector<4x2x1xf32> to vector<4x2x2xf32>
    %101 = arith.subf %90, %100 : vector<4x2x2xf32>
    %102 = math.exp %101 : vector<4x2x2xf32>
    %103 = arith.subf %96, %99 : vector<4x2x1xf32>
    %104 = math.exp %103 : vector<4x2x1xf32>
    %cst_49 = arith.constant dense<0.000000e+00> : vector<4x2xf32>
    %105 = vector.multi_reduction <add>, %102, %cst_49 [2] : vector<4x2x2xf32> to vector<4x2xf32>
    %106 = vector.shape_cast %105 : vector<4x2xf32> to vector<4x2x1xf32>
    %107 = arith.addf %106, %104 : vector<4x2x1xf32>
    %108 = arith.truncf %102 : vector<4x2x2xf32> to vector<4x2x2xbf16>
    "tpu.trace_start"() <{level = 10 : i32, message = "gqk,gkd->gqd"}> : () -> ()
    %cst_50 = arith.constant dense<0.000000e+00> : vector<4x2x8xf32>
    %109 = tpu.matmul %108, %81, %cst_50 {dimension_numbers = #tpu.dot_dimension_numbers<[2], [1], [1], [2], [0, 0, 0, 1, 1, 2], [0], [0]>} : vector<4x2x2xbf16>, vector<4x2x8xbf16>, vector<4x2x8xf32> -> vector<4x2x8xf32>
    "tpu.trace_stop"() : () -> ()
    %110 = vector.shape_cast %89 : vector<1x8xf32> to vector<1x1x8xf32>
    %111 = vector.broadcast %104 : vector<4x2x1xf32> to vector<4x2x8xf32>
    %112 = vector.broadcast %110 : vector<1x1x8xf32> to vector<4x2x8xf32>
    %113 = arith.mulf %111, %112 : vector<4x2x8xf32>
    %114 = arith.addf %109, %113 : vector<4x2x8xf32>
    %115 = tpu.reciprocal %107 {approx = true} : vector<4x2x1xf32> -> vector<4x2x1xf32>
    %116 = vector.broadcast %115 : vector<4x2x1xf32> to vector<4x2x8xf32>
    %117 = arith.mulf %114, %116 : vector<4x2x8xf32>
    %118 = arith.truncf %117 : vector<4x2x8xf32> to vector<4x2x8xbf16>
    %119 = arith.extf %83 : vector<1x8xbf16> to vector<1x8xf32>
    %120 = vector.shape_cast %83 : vector<1x8xbf16> to vector<1x1x8xbf16>
    %121 = vector.shape_cast %120 : vector<1x1x8xbf16> to vector<1x1x8xbf16>
    %122 = vector.broadcast %121 : vector<1x1x8xbf16> to vector<4x1x8xbf16>
    "tpu.trace_start"() <{level = 10 : i32, message = "gqd,gkd->gqk"}> : () -> ()
    %cst_51 = arith.constant dense<0.000000e+00> : vector<4x1x2xf32>
    %123 = tpu.matmul %122, %79, %cst_51 {dimension_numbers = #tpu.dot_dimension_numbers<[2], [2], [1], [1], [0, 0, 0, 1, 1, 1], [0], [0]>} : vector<4x1x8xbf16>, vector<4x2x8xbf16>, vector<4x1x2xf32> -> vector<4x1x2xf32>
    "tpu.trace_stop"() : () -> ()
    %124 = arith.mulf %119, %88 : vector<1x8xf32>
    %125 = vector.shape_cast %124 : vector<1x8xf32> to vector<1x1x8xf32>
    %cst_52 = arith.constant dense<0.000000e+00> : vector<1xf32>
    %126 = vector.multi_reduction <add>, %125, %cst_52 [1, 2] : vector<1x1x8xf32> to vector<1xf32>
    %127 = vector.shape_cast %126 : vector<1xf32> to vector<1x1x1xf32>
    %128 = vector.extract %127[0, 0, 0] : f32 from vector<1x1x1xf32>
    %129 = vector.shape_cast %123 : vector<4x1x2xf32> to vector<1x4x1x2xf32>
    %cst_53 = arith.constant dense<0xFF800000> : vector<1xf32>
    %130 = vector.multi_reduction <maximumf>, %129, %cst_53 [1, 2, 3] : vector<1x4x1x2xf32> to vector<1xf32>
    %131 = vector.shape_cast %130 : vector<1xf32> to vector<1x1x1x1xf32>
    %132 = vector.extract %131[0, 0, 0, 0] : f32 from vector<1x1x1x1xf32>
    %133 = arith.maximumf %132, %128 : f32
    %134 = vector.broadcast %133 : f32 to vector<4x1x2xf32>
    %135 = arith.subf %123, %134 : vector<4x1x2xf32>
    %136 = math.exp %135 : vector<4x1x2xf32>
    %137 = arith.subf %128, %133 : f32
    %138 = math.exp %137 : f32
    %139 = vector.shape_cast %136 : vector<4x1x2xf32> to vector<1x4x1x2xf32>
    %cst_54 = arith.constant dense<0.000000e+00> : vector<1xf32>
    %140 = vector.multi_reduction <add>, %139, %cst_54 [1, 2, 3] : vector<1x4x1x2xf32> to vector<1xf32>
    %141 = vector.shape_cast %140 : vector<1xf32> to vector<1x1x1x1xf32>
    %142 = vector.extract %141[0, 0, 0, 0] : f32 from vector<1x1x1x1xf32>
    %143 = arith.addf %142, %138 : f32
    %144 = arith.truncf %136 : vector<4x1x2xf32> to vector<4x1x2xbf16>
    "tpu.trace_start"() <{level = 10 : i32, message = "gqk,gkd->gqd"}> : () -> ()
    %cst_55 = arith.constant dense<0.000000e+00> : vector<4x1x8xf32>
    %145 = tpu.matmul %144, %81, %cst_55 {dimension_numbers = #tpu.dot_dimension_numbers<[2], [1], [1], [2], [0, 0, 0, 1, 1, 2], [0], [0]>} : vector<4x1x2xbf16>, vector<4x2x8xbf16>, vector<4x1x8xf32> -> vector<4x1x8xf32>
    "tpu.trace_stop"() : () -> ()
    %cst_56 = arith.constant dense<0.000000e+00> : vector<1x8xf32>
    %146 = vector.multi_reduction <add>, %145, %cst_56 [0] : vector<4x1x8xf32> to vector<1x8xf32>
    %147 = vector.broadcast %138 : f32 to vector<1x8xf32>
    %148 = arith.mulf %147, %89 : vector<1x8xf32>
    %149 = arith.addf %146, %148 : vector<1x8xf32>
    %150 = vector.broadcast %143 : f32 to vector<1x8xf32>
    %151 = arith.divf %149, %150 : vector<1x8xf32>
    %c0_57 = arith.constant 0 : index
    %c0_58 = arith.constant 0 : index
    %c0_59 = arith.constant 0 : index
    %c16 = arith.constant 16 : index
    %152 = vector.load %arg1[%c0_57, %c0_58, %c0_59, %c16] : memref<1x4x2x96xbf16, #tpu.memory_space<vmem>>, vector<1x4x2x8xbf16>
    %153 = vector.shape_cast %152 : vector<1x4x2x8xbf16> to vector<4x2x8xbf16>
    %c0_60 = arith.constant 0 : index
    %c0_61 = arith.constant 0 : index
    %c0_62 = arith.constant 0 : index
    %c48 = arith.constant 48 : index
    %154 = vector.load %arg1[%c0_60, %c0_61, %c0_62, %c48] : memref<1x4x2x96xbf16, #tpu.memory_space<vmem>>, vector<1x4x2x8xbf16>
    %155 = vector.shape_cast %154 : vector<1x4x2x8xbf16> to vector<4x2x8xbf16>
    %c0_63 = arith.constant 0 : index
    %c0_64 = arith.constant 0 : index
    %c0_65 = arith.constant 0 : index
    %c80 = arith.constant 80 : index
    %156 = vector.load %arg1[%c0_63, %c0_64, %c0_65, %c80] : memref<1x4x2x96xbf16, #tpu.memory_space<vmem>>, vector<1x4x2x8xbf16>
    %157 = vector.shape_cast %156 : vector<1x4x2x8xbf16> to vector<4x2x8xbf16>
    %c0_66 = arith.constant 0 : index
    %c0_67 = arith.constant 0 : index
    %c16_68 = arith.constant 16 : index
    %158 = vector.load %arg2[%c0_66, %c0_67, %c16_68] : memref<1x1x96xbf16, #tpu.memory_space<vmem>>, vector<1x1x8xbf16>
    %159 = vector.shape_cast %158 : vector<1x1x8xbf16> to vector<1x8xbf16>
    %c0_69 = arith.constant 0 : index
    %c0_70 = arith.constant 0 : index
    %c48_71 = arith.constant 48 : index
    %160 = vector.load %arg2[%c0_69, %c0_70, %c48_71] : memref<1x1x96xbf16, #tpu.memory_space<vmem>>, vector<1x1x8xbf16>
    %161 = vector.shape_cast %160 : vector<1x1x8xbf16> to vector<1x8xbf16>
    %c0_72 = arith.constant 0 : index
    %c0_73 = arith.constant 0 : index
    %c80_74 = arith.constant 80 : index
    %162 = vector.load %arg2[%c0_72, %c0_73, %c80_74] : memref<1x1x96xbf16, #tpu.memory_space<vmem>>, vector<1x1x8xbf16>
    %163 = vector.shape_cast %162 : vector<1x1x8xbf16> to vector<1x8xbf16>
    %164 = arith.extf %161 : vector<1x8xbf16> to vector<1x8xf32>
    %165 = arith.extf %163 : vector<1x8xbf16> to vector<1x8xf32>
    "tpu.trace_start"() <{level = 10 : i32, message = "gqd,gkd->gqk"}> : () -> ()
    %cst_75 = arith.constant dense<0.000000e+00> : vector<4x2x2xf32>
    %166 = tpu.matmul %153, %155, %cst_75 {dimension_numbers = #tpu.dot_dimension_numbers<[2], [2], [1], [1], [0, 0, 0, 1, 1, 1], [0], [0]>} : vector<4x2x8xbf16>, vector<4x2x8xbf16>, vector<4x2x2xf32> -> vector<4x2x2xf32>
    "tpu.trace_stop"() : () -> ()
    %167 = arith.extf %153 : vector<4x2x8xbf16> to vector<4x2x8xf32>
    %168 = vector.shape_cast %164 : vector<1x8xf32> to vector<1x1x8xf32>
    %169 = vector.broadcast %168 : vector<1x1x8xf32> to vector<4x2x8xf32>
    %170 = arith.mulf %167, %169 : vector<4x2x8xf32>
    %cst_76 = arith.constant dense<0.000000e+00> : vector<4x2xf32>
    %171 = vector.multi_reduction <add>, %170, %cst_76 [2] : vector<4x2x8xf32> to vector<4x2xf32>
    %172 = vector.shape_cast %171 : vector<4x2xf32> to vector<4x2x1xf32>
    %cst_77 = arith.constant dense<0xFF800000> : vector<4x2xf32>
    %173 = vector.multi_reduction <maximumf>, %166, %cst_77 [2] : vector<4x2x2xf32> to vector<4x2xf32>
    %174 = vector.shape_cast %173 : vector<4x2xf32> to vector<4x2x1xf32>
    %175 = arith.maximumf %174, %172 : vector<4x2x1xf32>
    %176 = vector.broadcast %175 : vector<4x2x1xf32> to vector<4x2x2xf32>
    %177 = arith.subf %166, %176 : vector<4x2x2xf32>
    %178 = math.exp %177 : vector<4x2x2xf32>
    %179 = arith.subf %172, %175 : vector<4x2x1xf32>
    %180 = math.exp %179 : vector<4x2x1xf32>
    %cst_78 = arith.constant dense<0.000000e+00> : vector<4x2xf32>
    %181 = vector.multi_reduction <add>, %178, %cst_78 [2] : vector<4x2x2xf32> to vector<4x2xf32>
    %182 = vector.shape_cast %181 : vector<4x2xf32> to vector<4x2x1xf32>
    %183 = arith.addf %182, %180 : vector<4x2x1xf32>
    %184 = arith.truncf %178 : vector<4x2x2xf32> to vector<4x2x2xbf16>
    "tpu.trace_start"() <{level = 10 : i32, message = "gqk,gkd->gqd"}> : () -> ()
    %cst_79 = arith.constant dense<0.000000e+00> : vector<4x2x8xf32>
    %185 = tpu.matmul %184, %157, %cst_79 {dimension_numbers = #tpu.dot_dimension_numbers<[2], [1], [1], [2], [0, 0, 0, 1, 1, 2], [0], [0]>} : vector<4x2x2xbf16>, vector<4x2x8xbf16>, vector<4x2x8xf32> -> vector<4x2x8xf32>
    "tpu.trace_stop"() : () -> ()
    %186 = vector.shape_cast %165 : vector<1x8xf32> to vector<1x1x8xf32>
    %187 = vector.broadcast %180 : vector<4x2x1xf32> to vector<4x2x8xf32>
    %188 = vector.broadcast %186 : vector<1x1x8xf32> to vector<4x2x8xf32>
    %189 = arith.mulf %187, %188 : vector<4x2x8xf32>
    %190 = arith.addf %185, %189 : vector<4x2x8xf32>
    %191 = tpu.reciprocal %183 {approx = true} : vector<4x2x1xf32> -> vector<4x2x1xf32>
    %192 = vector.broadcast %191 : vector<4x2x1xf32> to vector<4x2x8xf32>
    %193 = arith.mulf %190, %192 : vector<4x2x8xf32>
    %194 = arith.truncf %193 : vector<4x2x8xf32> to vector<4x2x8xbf16>
    %195 = arith.extf %159 : vector<1x8xbf16> to vector<1x8xf32>
    %196 = vector.shape_cast %159 : vector<1x8xbf16> to vector<1x1x8xbf16>
    %197 = vector.shape_cast %196 : vector<1x1x8xbf16> to vector<1x1x8xbf16>
    %198 = vector.broadcast %197 : vector<1x1x8xbf16> to vector<4x1x8xbf16>
    "tpu.trace_start"() <{level = 10 : i32, message = "gqd,gkd->gqk"}> : () -> ()
    %cst_80 = arith.constant dense<0.000000e+00> : vector<4x1x2xf32>
    %199 = tpu.matmul %198, %155, %cst_80 {dimension_numbers = #tpu.dot_dimension_numbers<[2], [2], [1], [1], [0, 0, 0, 1, 1, 1], [0], [0]>} : vector<4x1x8xbf16>, vector<4x2x8xbf16>, vector<4x1x2xf32> -> vector<4x1x2xf32>
    "tpu.trace_stop"() : () -> ()
    %200 = arith.mulf %195, %164 : vector<1x8xf32>
    %201 = vector.shape_cast %200 : vector<1x8xf32> to vector<1x1x8xf32>
    %cst_81 = arith.constant dense<0.000000e+00> : vector<1xf32>
    %202 = vector.multi_reduction <add>, %201, %cst_81 [1, 2] : vector<1x1x8xf32> to vector<1xf32>
    %203 = vector.shape_cast %202 : vector<1xf32> to vector<1x1x1xf32>
    %204 = vector.extract %203[0, 0, 0] : f32 from vector<1x1x1xf32>
    %205 = vector.shape_cast %199 : vector<4x1x2xf32> to vector<1x4x1x2xf32>
    %cst_82 = arith.constant dense<0xFF800000> : vector<1xf32>
    %206 = vector.multi_reduction <maximumf>, %205, %cst_82 [1, 2, 3] : vector<1x4x1x2xf32> to vector<1xf32>
    %207 = vector.shape_cast %206 : vector<1xf32> to vector<1x1x1x1xf32>
    %208 = vector.extract %207[0, 0, 0, 0] : f32 from vector<1x1x1x1xf32>
    %209 = arith.maximumf %208, %204 : f32
    %210 = vector.broadcast %209 : f32 to vector<4x1x2xf32>
    %211 = arith.subf %199, %210 : vector<4x1x2xf32>
    %212 = math.exp %211 : vector<4x1x2xf32>
    %213 = arith.subf %204, %209 : f32
    %214 = math.exp %213 : f32
    %215 = vector.shape_cast %212 : vector<4x1x2xf32> to vector<1x4x1x2xf32>
    %cst_83 = arith.constant dense<0.000000e+00> : vector<1xf32>
    %216 = vector.multi_reduction <add>, %215, %cst_83 [1, 2, 3] : vector<1x4x1x2xf32> to vector<1xf32>
    %217 = vector.shape_cast %216 : vector<1xf32> to vector<1x1x1x1xf32>
    %218 = vector.extract %217[0, 0, 0, 0] : f32 from vector<1x1x1x1xf32>
    %219 = arith.addf %218, %214 : f32
    %220 = arith.truncf %212 : vector<4x1x2xf32> to vector<4x1x2xbf16>
    "tpu.trace_start"() <{level = 10 : i32, message = "gqk,gkd->gqd"}> : () -> ()
    %cst_84 = arith.constant dense<0.000000e+00> : vector<4x1x8xf32>
    %221 = tpu.matmul %220, %157, %cst_84 {dimension_numbers = #tpu.dot_dimension_numbers<[2], [1], [1], [2], [0, 0, 0, 1, 1, 2], [0], [0]>} : vector<4x1x2xbf16>, vector<4x2x8xbf16>, vector<4x1x8xf32> -> vector<4x1x8xf32>
    "tpu.trace_stop"() : () -> ()
    %cst_85 = arith.constant dense<0.000000e+00> : vector<1x8xf32>
    %222 = vector.multi_reduction <add>, %221, %cst_85 [0] : vector<4x1x8xf32> to vector<1x8xf32>
    %223 = vector.broadcast %214 : f32 to vector<1x8xf32>
    %224 = arith.mulf %223, %165 : vector<1x8xf32>
    %225 = arith.addf %222, %224 : vector<1x8xf32>
    %226 = vector.broadcast %219 : f32 to vector<1x8xf32>
    %227 = arith.divf %225, %226 : vector<1x8xf32>
    %c0_86 = arith.constant 0 : index
    %c0_87 = arith.constant 0 : index
    %c0_88 = arith.constant 0 : index
    %c24 = arith.constant 24 : index
    %228 = vector.load %arg1[%c0_86, %c0_87, %c0_88, %c24] : memref<1x4x2x96xbf16, #tpu.memory_space<vmem>>, vector<1x4x2x8xbf16>
    %229 = vector.shape_cast %228 : vector<1x4x2x8xbf16> to vector<4x2x8xbf16>
    %c0_89 = arith.constant 0 : index
    %c0_90 = arith.constant 0 : index
    %c0_91 = arith.constant 0 : index
    %c56 = arith.constant 56 : index
    %230 = vector.load %arg1[%c0_89, %c0_90, %c0_91, %c56] : memref<1x4x2x96xbf16, #tpu.memory_space<vmem>>, vector<1x4x2x8xbf16>
    %231 = vector.shape_cast %230 : vector<1x4x2x8xbf16> to vector<4x2x8xbf16>
    %c0_92 = arith.constant 0 : index
    %c0_93 = arith.constant 0 : index
    %c0_94 = arith.constant 0 : index
    %c88 = arith.constant 88 : index
    %232 = vector.load %arg1[%c0_92, %c0_93, %c0_94, %c88] : memref<1x4x2x96xbf16, #tpu.memory_space<vmem>>, vector<1x4x2x8xbf16>
    %233 = vector.shape_cast %232 : vector<1x4x2x8xbf16> to vector<4x2x8xbf16>
    %c0_95 = arith.constant 0 : index
    %c0_96 = arith.constant 0 : index
    %c24_97 = arith.constant 24 : index
    %234 = vector.load %arg2[%c0_95, %c0_96, %c24_97] : memref<1x1x96xbf16, #tpu.memory_space<vmem>>, vector<1x1x8xbf16>
    %235 = vector.shape_cast %234 : vector<1x1x8xbf16> to vector<1x8xbf16>
    %c0_98 = arith.constant 0 : index
    %c0_99 = arith.constant 0 : index
    %c56_100 = arith.constant 56 : index
    %236 = vector.load %arg2[%c0_98, %c0_99, %c56_100] : memref<1x1x96xbf16, #tpu.memory_space<vmem>>, vector<1x1x8xbf16>
    %237 = vector.shape_cast %236 : vector<1x1x8xbf16> to vector<1x8xbf16>
    %c0_101 = arith.constant 0 : index
    %c0_102 = arith.constant 0 : index
    %c88_103 = arith.constant 88 : index
    %238 = vector.load %arg2[%c0_101, %c0_102, %c88_103] : memref<1x1x96xbf16, #tpu.memory_space<vmem>>, vector<1x1x8xbf16>
    %239 = vector.shape_cast %238 : vector<1x1x8xbf16> to vector<1x8xbf16>
    %240 = arith.extf %237 : vector<1x8xbf16> to vector<1x8xf32>
    %241 = arith.extf %239 : vector<1x8xbf16> to vector<1x8xf32>
    "tpu.trace_start"() <{level = 10 : i32, message = "gqd,gkd->gqk"}> : () -> ()
    %cst_104 = arith.constant dense<0.000000e+00> : vector<4x2x2xf32>
    %242 = tpu.matmul %229, %231, %cst_104 {dimension_numbers = #tpu.dot_dimension_numbers<[2], [2], [1], [1], [0, 0, 0, 1, 1, 1], [0], [0]>} : vector<4x2x8xbf16>, vector<4x2x8xbf16>, vector<4x2x2xf32> -> vector<4x2x2xf32>
    "tpu.trace_stop"() : () -> ()
    %243 = arith.extf %229 : vector<4x2x8xbf16> to vector<4x2x8xf32>
    %244 = vector.shape_cast %240 : vector<1x8xf32> to vector<1x1x8xf32>
    %245 = vector.broadcast %244 : vector<1x1x8xf32> to vector<4x2x8xf32>
    %246 = arith.mulf %243, %245 : vector<4x2x8xf32>
    %cst_105 = arith.constant dense<0.000000e+00> : vector<4x2xf32>
    %247 = vector.multi_reduction <add>, %246, %cst_105 [2] : vector<4x2x8xf32> to vector<4x2xf32>
    %248 = vector.shape_cast %247 : vector<4x2xf32> to vector<4x2x1xf32>
    %cst_106 = arith.constant dense<0xFF800000> : vector<4x2xf32>
    %249 = vector.multi_reduction <maximumf>, %242, %cst_106 [2] : vector<4x2x2xf32> to vector<4x2xf32>
    %250 = vector.shape_cast %249 : vector<4x2xf32> to vector<4x2x1xf32>
    %251 = arith.maximumf %250, %248 : vector<4x2x1xf32>
    %252 = vector.broadcast %251 : vector<4x2x1xf32> to vector<4x2x2xf32>
    %253 = arith.subf %242, %252 : vector<4x2x2xf32>
    %254 = math.exp %253 : vector<4x2x2xf32>
    %255 = arith.subf %248, %251 : vector<4x2x1xf32>
    %256 = math.exp %255 : vector<4x2x1xf32>
    %cst_107 = arith.constant dense<0.000000e+00> : vector<4x2xf32>
    %257 = vector.multi_reduction <add>, %254, %cst_107 [2] : vector<4x2x2xf32> to vector<4x2xf32>
    %258 = vector.shape_cast %257 : vector<4x2xf32> to vector<4x2x1xf32>
    %259 = arith.addf %258, %256 : vector<4x2x1xf32>
    %260 = arith.truncf %254 : vector<4x2x2xf32> to vector<4x2x2xbf16>
    "tpu.trace_start"() <{level = 10 : i32, message = "gqk,gkd->gqd"}> : () -> ()
    %cst_108 = arith.constant dense<0.000000e+00> : vector<4x2x8xf32>
    %261 = tpu.matmul %260, %233, %cst_108 {dimension_numbers = #tpu.dot_dimension_numbers<[2], [1], [1], [2], [0, 0, 0, 1, 1, 2], [0], [0]>} : vector<4x2x2xbf16>, vector<4x2x8xbf16>, vector<4x2x8xf32> -> vector<4x2x8xf32>
    "tpu.trace_stop"() : () -> ()
    %262 = vector.shape_cast %241 : vector<1x8xf32> to vector<1x1x8xf32>
    %263 = vector.broadcast %256 : vector<4x2x1xf32> to vector<4x2x8xf32>
    %264 = vector.broadcast %262 : vector<1x1x8xf32> to vector<4x2x8xf32>
    %265 = arith.mulf %263, %264 : vector<4x2x8xf32>
    %266 = arith.addf %261, %265 : vector<4x2x8xf32>
    %267 = tpu.reciprocal %259 {approx = true} : vector<4x2x1xf32> -> vector<4x2x1xf32>
    %268 = vector.broadcast %267 : vector<4x2x1xf32> to vector<4x2x8xf32>
    %269 = arith.mulf %266, %268 : vector<4x2x8xf32>
    %270 = arith.truncf %269 : vector<4x2x8xf32> to vector<4x2x8xbf16>
    %271 = arith.extf %235 : vector<1x8xbf16> to vector<1x8xf32>
    %272 = vector.shape_cast %235 : vector<1x8xbf16> to vector<1x1x8xbf16>
    %273 = vector.shape_cast %272 : vector<1x1x8xbf16> to vector<1x1x8xbf16>
    %274 = vector.broadcast %273 : vector<1x1x8xbf16> to vector<4x1x8xbf16>
    "tpu.trace_start"() <{level = 10 : i32, message = "gqd,gkd->gqk"}> : () -> ()
    %cst_109 = arith.constant dense<0.000000e+00> : vector<4x1x2xf32>
    %275 = tpu.matmul %274, %231, %cst_109 {dimension_numbers = #tpu.dot_dimension_numbers<[2], [2], [1], [1], [0, 0, 0, 1, 1, 1], [0], [0]>} : vector<4x1x8xbf16>, vector<4x2x8xbf16>, vector<4x1x2xf32> -> vector<4x1x2xf32>
    "tpu.trace_stop"() : () -> ()
    %276 = arith.mulf %271, %240 : vector<1x8xf32>
    %277 = vector.shape_cast %276 : vector<1x8xf32> to vector<1x1x8xf32>
    %cst_110 = arith.constant dense<0.000000e+00> : vector<1xf32>
    %278 = vector.multi_reduction <add>, %277, %cst_110 [1, 2] : vector<1x1x8xf32> to vector<1xf32>
    %279 = vector.shape_cast %278 : vector<1xf32> to vector<1x1x1xf32>
    %280 = vector.extract %279[0, 0, 0] : f32 from vector<1x1x1xf32>
    %281 = vector.shape_cast %275 : vector<4x1x2xf32> to vector<1x4x1x2xf32>
    %cst_111 = arith.constant dense<0xFF800000> : vector<1xf32>
    %282 = vector.multi_reduction <maximumf>, %281, %cst_111 [1, 2, 3] : vector<1x4x1x2xf32> to vector<1xf32>
    %283 = vector.shape_cast %282 : vector<1xf32> to vector<1x1x1x1xf32>
    %284 = vector.extract %283[0, 0, 0, 0] : f32 from vector<1x1x1x1xf32>
    %285 = arith.maximumf %284, %280 : f32
    %286 = vector.broadcast %285 : f32 to vector<4x1x2xf32>
    %287 = arith.subf %275, %286 : vector<4x1x2xf32>
    %288 = math.exp %287 : vector<4x1x2xf32>
    %289 = arith.subf %280, %285 : f32
    %290 = math.exp %289 : f32
    %291 = vector.shape_cast %288 : vector<4x1x2xf32> to vector<1x4x1x2xf32>
    %cst_112 = arith.constant dense<0.000000e+00> : vector<1xf32>
    %292 = vector.multi_reduction <add>, %291, %cst_112 [1, 2, 3] : vector<1x4x1x2xf32> to vector<1xf32>
    %293 = vector.shape_cast %292 : vector<1xf32> to vector<1x1x1x1xf32>
    %294 = vector.extract %293[0, 0, 0, 0] : f32 from vector<1x1x1x1xf32>
    %295 = arith.addf %294, %290 : f32
    %296 = arith.truncf %288 : vector<4x1x2xf32> to vector<4x1x2xbf16>
    "tpu.trace_start"() <{level = 10 : i32, message = "gqk,gkd->gqd"}> : () -> ()
    %cst_113 = arith.constant dense<0.000000e+00> : vector<4x1x8xf32>
    %297 = tpu.matmul %296, %233, %cst_113 {dimension_numbers = #tpu.dot_dimension_numbers<[2], [1], [1], [2], [0, 0, 0, 1, 1, 2], [0], [0]>} : vector<4x1x2xbf16>, vector<4x2x8xbf16>, vector<4x1x8xf32> -> vector<4x1x8xf32>
    "tpu.trace_stop"() : () -> ()
    %cst_114 = arith.constant dense<0.000000e+00> : vector<1x8xf32>
    %298 = vector.multi_reduction <add>, %297, %cst_114 [0] : vector<4x1x8xf32> to vector<1x8xf32>
    %299 = vector.broadcast %290 : f32 to vector<1x8xf32>
    %300 = arith.mulf %299, %241 : vector<1x8xf32>
    %301 = arith.addf %298, %300 : vector<1x8xf32>
    %302 = vector.broadcast %295 : f32 to vector<1x8xf32>
    %303 = arith.divf %301, %302 : vector<1x8xf32>
    %304 = tpu.concatenate %42, %118, %194, %270 in 2 : vector<4x2x8xbf16>, vector<4x2x8xbf16>, vector<4x2x8xbf16>, vector<4x2x8xbf16> -> vector<4x2x32xbf16>
    %c0_115 = arith.constant 0 : index
    %c0_116 = arith.constant 0 : index
    %c0_117 = arith.constant 0 : index
    %c0_118 = arith.constant 0 : index
    %305 = vector.load %arg3[%c0_115, %c0_116, %c0_117, %c0_118] : memref<1x4x2x32xbf16, #tpu.memory_space<vmem>>, vector<1x4x2x32xbf16>
    %306 = vector.shape_cast %305 : vector<1x4x2x32xbf16> to vector<4x2x32xbf16>
    %307 = vector.shape_cast %304 : vector<4x2x32xbf16> to vector<1x4x2x32xbf16>
    tpu.vector_store %arg3[%c0_115, %c0_116, %c0_117, %c0_118], %307 {strides = array<i32>} : memref<1x4x2x32xbf16, #tpu.memory_space<vmem>>, vector<1x4x2x32xbf16>,
    %308 = tpu.concatenate %75, %151, %227, %303 in 1 : vector<1x8xf32>, vector<1x8xf32>, vector<1x8xf32>, vector<1x8xf32> -> vector<1x32xf32>
    %309 = arith.truncf %308 : vector<1x32xf32> to vector<1x32xbf16>
    %c0_119 = arith.constant 0 : index
    %c0_120 = arith.constant 0 : index
    %c0_121 = arith.constant 0 : index
    %310 = vector.load %arg4[%c0_119, %c0_120, %c0_121] : memref<1x1x32xbf16, #tpu.memory_space<vmem>>, vector<1x1x32xbf16>
    %311 = vector.shape_cast %310 : vector<1x1x32xbf16> to vector<1x32xbf16>
    %312 = vector.shape_cast %309 : vector<1x32xbf16> to vector<1x1x32xbf16>
    tpu.vector_store %arg4[%c0_119, %c0_120, %c0_121], %312 {strides = array<i32>} : memref<1x1x32xbf16, #tpu.memory_space<vmem>>, vector<1x1x32xbf16>,
    return
  }
  func.func @transform_0(%arg0: i32) -> (i32, i32, i32, i32) {
    %c0_i32 = arith.constant 0 : i32
    %c0_i32_0 = arith.constant 0 : i32
    %c0_i32_1 = arith.constant 0 : i32
    %c0_i32_2 = arith.constant 0 : i32
    return %arg0, %c0_i32, %c0_i32_0, %c0_i32_1 : i32, i32, i32, i32
  }
  func.func @transform_1(%arg0: i32) -> (i32, i32, i32) {
    %c0_i32 = arith.constant 0 : i32
    %c0_i32_0 = arith.constant 0 : i32
    %c0_i32_1 = arith.constant 0 : i32
    return %arg0, %c0_i32, %c0_i32_0 : i32, i32, i32
  }
  func.func @transform_2(%arg0: i32) -> (i32, i32, i32, i32) {
    %c0_i32 = arith.constant 0 : i32
    %c0_i32_0 = arith.constant 0 : i32
    %c0_i32_1 = arith.constant 0 : i32
    %c0_i32_2 = arith.constant 0 : i32
    return %arg0, %c0_i32, %c0_i32_0, %c0_i32_1 : i32, i32, i32, i32
  }
  func.func @transform_3(%arg0: i32) -> (i32, i32, i32) {
    %c0_i32 = arith.constant 0 : i32
    %c0_i32_0 = arith.constant 0 : i32
    %c0_i32_1 = arith.constant 0 : i32
    return %arg0, %c0_i32, %c0_i32_0 : i32, i32, i32
  }
}

module attributes {stable_mosaic.version = 11 : i64} {
  func.func @kernel(%arg0: i32, %arg1: i32, %arg2: memref<18x32xbf16, #tpu.memory_space<vmem>>, %arg3: memref<32x32xbf16, #tpu.memory_space<vmem>>, %arg4: memref<18x32xbf16, #tpu.memory_space<vmem>>, %arg5: memref<18x32xbf16, #tpu.memory_space<vmem>>) attributes {dimension_semantics = [#tpu.dimension_semantics<parallel>, #tpu.dimension_semantics<parallel>], iteration_bounds = array<i64: 1, 1>, scalar_prefetch = 0 : i64, scratch_operands = 0 : i64, tpu.core_type = #tpu.core_type<tc>, window_params = [{transform_indices = @transform_0, window_bounds = array<i64: 18, 32>}, {transform_indices = @transform_1, window_bounds = array<i64: 32, 32>}, {transform_indices = @transform_2, window_bounds = array<i64: 18, 32>}, {transform_indices = @transform_3, window_bounds = array<i64: 18, 32>}]} {
    %c0 = arith.constant 0 : index
    %c0_0 = arith.constant 0 : index
    %0 = vector.load %arg2[%c0, %c0_0] : memref<18x32xbf16, #tpu.memory_space<vmem>>, vector<18x32xbf16>
    %c0_1 = arith.constant 0 : index
    %c0_2 = arith.constant 0 : index
    %1 = vector.load %arg3[%c0_1, %c0_2] : memref<32x32xbf16, #tpu.memory_space<vmem>>, vector<32x32xbf16>
    %cst = arith.constant dense<0.000000e+00> : vector<18x32xf32>
    %2 = tpu.matmul %0, %1, %cst {dimension_numbers = #tpu.dot_dimension_numbers<[1], [0], [0], [1], [0, 0, 1, 1], [], []>} : vector<18x32xbf16>, vector<32x32xbf16>, vector<18x32xf32> -> vector<18x32xf32>
    %c0_3 = arith.constant 0 : index
    %c0_4 = arith.constant 0 : index
    %3 = vector.load %arg4[%c0_3, %c0_4] : memref<18x32xbf16, #tpu.memory_space<vmem>>, vector<18x32xbf16>
    %4 = arith.extf %3 : vector<18x32xbf16> to vector<18x32xf32>
    %5 = arith.addf %2, %4 : vector<18x32xf32>
    %6 = arith.truncf %5 : vector<18x32xf32> to vector<18x32xbf16>
    %c0_5 = arith.constant 0 : index
    %c0_6 = arith.constant 0 : index
    %7 = vector.load %arg5[%c0_5, %c0_6] : memref<18x32xbf16, #tpu.memory_space<vmem>>, vector<18x32xbf16>
    tpu.vector_store %arg5[%c0_5, %c0_6], %6 {strides = array<i32>} : memref<18x32xbf16, #tpu.memory_space<vmem>>, vector<18x32xbf16>,
    return
  }
  func.func @transform_0(%arg0: i32, %arg1: i32) -> (i32, i32) {
    %c0_i32 = arith.constant 0 : i32
    %c0_i32_0 = arith.constant 0 : i32
    return %arg0, %c0_i32 : i32, i32
  }
  func.func @transform_1(%arg0: i32, %arg1: i32) -> (i32, i32) {
    %c0_i32 = arith.constant 0 : i32
    %c0_i32_0 = arith.constant 0 : i32
    return %c0_i32, %arg1 : i32, i32
  }
  func.func @transform_2(%arg0: i32, %arg1: i32) -> (i32, i32) {
    %c0_i32 = arith.constant 0 : i32
    return %arg0, %arg1 : i32, i32
  }
  func.func @transform_3(%arg0: i32, %arg1: i32) -> (i32, i32) {
    %c0_i32 = arith.constant 0 : i32
    return %arg0, %arg1 : i32, i32
  }
}

module attributes {stable_mosaic.version = 11 : i64} {
  func.func @kernel(%arg0: i32, %arg1: i32, %arg2: memref<18x32xbf16, #tpu.memory_space<vmem>>, %arg3: memref<32x64xbf16, #tpu.memory_space<vmem>>, %arg4: memref<1x64xf32, #tpu.memory_space<vmem>>, %arg5: memref<1x32xf32, #tpu.memory_space<vmem>>, %arg6: memref<1x32xf32, #tpu.memory_space<vmem>>, %arg7: memref<18x64xbf16, #tpu.memory_space<vmem>>) attributes {dimension_semantics = [#tpu.dimension_semantics<parallel>, #tpu.dimension_semantics<parallel>], iteration_bounds = array<i64: 1, 1>, scalar_prefetch = 0 : i64, scratch_operands = 0 : i64, tpu.core_type = #tpu.core_type<tc>, window_params = [{transform_indices = @transform_0, window_bounds = array<i64: 18, 32>}, {transform_indices = @transform_1, window_bounds = array<i64: 32, 64>}, {transform_indices = @transform_2, window_bounds = array<i64: 1, 64>}, {pipeline_mode = #tpu.pipeline_mode<synchronous>, transform_indices = @transform_3, window_bounds = array<i64: 1, 32>}, {pipeline_mode = #tpu.pipeline_mode<synchronous>, transform_indices = @transform_4, window_bounds = array<i64: 1, 32>}, {transform_indices = @transform_5, window_bounds = array<i64: 18, 64>}]} {
    %c0 = arith.constant 0 : index
    %c0_0 = arith.constant 0 : index
    %0 = vector.load %arg2[%c0, %c0_0] : memref<18x32xbf16, #tpu.memory_space<vmem>>, vector<18x32xbf16>
    %1 = arith.extf %0 : vector<18x32xbf16> to vector<18x32xf32>
    %cst = arith.constant dense<0.000000e+00> : vector<18xf32>
    %2 = vector.multi_reduction <add>, %1, %cst [1] : vector<18x32xf32> to vector<18xf32>
    %3 = vector.shape_cast %2 : vector<18xf32> to vector<18x1xf32>
    %cst_1 = arith.constant 3.200000e+01 : f32
    %4 = vector.broadcast %cst_1 : f32 to vector<18x1xf32>
    %5 = arith.divf %3, %4 : vector<18x1xf32>
    %6 = vector.broadcast %5 : vector<18x1xf32> to vector<18x32xf32>
    %7 = arith.subf %1, %6 : vector<18x32xf32>
    %8 = arith.mulf %7, %7 : vector<18x32xf32>
    %cst_2 = arith.constant dense<0.000000e+00> : vector<18xf32>
    %9 = vector.multi_reduction <add>, %8, %cst_2 [1] : vector<18x32xf32> to vector<18xf32>
    %10 = vector.shape_cast %9 : vector<18xf32> to vector<18x1xf32>
    %cst_3 = arith.constant 3.200000e+01 : f32
    %11 = vector.broadcast %cst_3 : f32 to vector<18x1xf32>
    %12 = arith.divf %10, %11 : vector<18x1xf32>
    %cst_4 = arith.constant 9.99999974E-6 : f32
    %13 = vector.broadcast %cst_4 : f32 to vector<18x1xf32>
    %14 = arith.addf %12, %13 : vector<18x1xf32>
    %15 = math.rsqrt %14 : vector<18x1xf32>
    %16 = vector.broadcast %15 : vector<18x1xf32> to vector<18x32xf32>
    %17 = arith.mulf %7, %16 : vector<18x32xf32>
    %c0_5 = arith.constant 0 : index
    %c0_6 = arith.constant 0 : index
    %18 = vector.load %arg5[%c0_5, %c0_6] : memref<1x32xf32, #tpu.memory_space<vmem>>, vector<1x32xf32>
    %19 = vector.broadcast %18 : vector<1x32xf32> to vector<18x32xf32>
    %20 = arith.mulf %17, %19 : vector<18x32xf32>
    %c0_7 = arith.constant 0 : index
    %c0_8 = arith.constant 0 : index
    %21 = vector.load %arg6[%c0_7, %c0_8] : memref<1x32xf32, #tpu.memory_space<vmem>>, vector<1x32xf32>
    %22 = vector.broadcast %21 : vector<1x32xf32> to vector<18x32xf32>
    %23 = arith.addf %20, %22 : vector<18x32xf32>
    %24 = arith.truncf %23 : vector<18x32xf32> to vector<18x32xbf16>
    %c0_9 = arith.constant 0 : index
    %c0_10 = arith.constant 0 : index
    %25 = vector.load %arg3[%c0_9, %c0_10] : memref<32x64xbf16, #tpu.memory_space<vmem>>, vector<32x64xbf16>
    %cst_11 = arith.constant dense<0.000000e+00> : vector<18x64xf32>
    %26 = tpu.matmul %24, %25, %cst_11 {dimension_numbers = #tpu.dot_dimension_numbers<[1], [0], [0], [1], [0, 0, 1, 1], [], []>} : vector<18x32xbf16>, vector<32x64xbf16>, vector<18x64xf32> -> vector<18x64xf32>
    %c0_12 = arith.constant 0 : index
    %c0_13 = arith.constant 0 : index
    %27 = vector.load %arg4[%c0_12, %c0_13] : memref<1x64xf32, #tpu.memory_space<vmem>>, vector<1x64xf32>
    %28 = vector.broadcast %27 : vector<1x64xf32> to vector<18x64xf32>
    %29 = arith.addf %26, %28 : vector<18x64xf32>
    %cst_14 = arith.constant 5.000000e-01 : f32
    %30 = vector.broadcast %cst_14 : f32 to vector<18x64xf32>
    %31 = arith.mulf %30, %29 : vector<18x64xf32>
    %cst_15 = arith.constant 0.707106769 : f32
    %32 = vector.broadcast %cst_15 : f32 to vector<18x64xf32>
    %33 = arith.mulf %29, %32 : vector<18x64xf32>
    %34 = math.erf %33 : vector<18x64xf32>
    %cst_16 = arith.constant 1.000000e+00 : f32
    %35 = vector.broadcast %cst_16 : f32 to vector<18x64xf32>
    %36 = arith.addf %35, %34 : vector<18x64xf32>
    %37 = arith.mulf %31, %36 : vector<18x64xf32>
    %38 = arith.truncf %37 : vector<18x64xf32> to vector<18x64xbf16>
    %c0_17 = arith.constant 0 : index
    %c0_18 = arith.constant 0 : index
    %39 = vector.load %arg7[%c0_17, %c0_18] : memref<18x64xbf16, #tpu.memory_space<vmem>>, vector<18x64xbf16>
    tpu.vector_store %arg7[%c0_17, %c0_18], %38 {strides = array<i32>} : memref<18x64xbf16, #tpu.memory_space<vmem>>, vector<18x64xbf16>,
    return
  }
  func.func @transform_0(%arg0: i32, %arg1: i32) -> (i32, i32) {
    %c0_i32 = arith.constant 0 : i32
    %c0_i32_0 = arith.constant 0 : i32
    return %arg0, %c0_i32 : i32, i32
  }
  func.func @transform_1(%arg0: i32, %arg1: i32) -> (i32, i32) {
    %c0_i32 = arith.constant 0 : i32
    %c0_i32_0 = arith.constant 0 : i32
    return %c0_i32, %arg1 : i32, i32
  }
  func.func @transform_2(%arg0: i32, %arg1: i32) -> (i32, i32) {
    %c0_i32 = arith.constant 0 : i32
    %c0_i32_0 = arith.constant 0 : i32
    return %c0_i32, %arg1 : i32, i32
  }
  func.func @transform_3(%arg0: i32, %arg1: i32) -> (i32, i32) {
    %c0_i32 = arith.constant 0 : i32
    %c0_i32_0 = arith.constant 0 : i32
    %c0_i32_1 = arith.constant 0 : i32
    return %c0_i32, %c0_i32_0 : i32, i32
  }
  func.func @transform_4(%arg0: i32, %arg1: i32) -> (i32, i32) {
    %c0_i32 = arith.constant 0 : i32
    %c0_i32_0 = arith.constant 0 : i32
    %c0_i32_1 = arith.constant 0 : i32
    return %c0_i32, %c0_i32_0 : i32, i32
  }
  func.func @transform_5(%arg0: i32, %arg1: i32) -> (i32, i32) {
    %c0_i32 = arith.constant 0 : i32
    return %arg0, %arg1 : i32, i32
  }
}

module attributes {stable_mosaic.version = 11 : i64} {
  func.func @_divided_attn_kernel(%arg0: i32, %arg1: memref<1x2x4x96xbf16, #tpu.memory_space<vmem>>, %arg2: memref<1x1x96xbf16, #tpu.memory_space<vmem>>, %arg3: memref<1x2x4x32xbf16, #tpu.memory_space<vmem>>, %arg4: memref<1x1x32xbf16, #tpu.memory_space<vmem>>) attributes {dimension_semantics = [#tpu.dimension_semantics<parallel>], iteration_bounds = array<i64: 2>, scalar_prefetch = 0 : i64, scratch_operands = 0 : i64, tpu.core_type = #tpu.core_type<tc>, window_params = [{transform_indices = @transform_0, window_bounds = array<i64: 1, 2, 4, 96>}, {transform_indices = @transform_1, window_bounds = array<i64: 1, 1, 96>}, {transform_indices = @transform_2, window_bounds = array<i64: 1, 2, 4, 32>}, {transform_indices = @transform_3, window_bounds = array<i64: 1, 1, 32>}]} {
    %c0 = arith.constant 0 : index
    %c0_0 = arith.constant 0 : index
    %c0_1 = arith.constant 0 : index
    %c0_2 = arith.constant 0 : index
    %0 = vector.load %arg1[%c0, %c0_0, %c0_1, %c0_2] : memref<1x2x4x96xbf16, #tpu.memory_space<vmem>>, vector<1x2x4x8xbf16>
    %1 = vector.shape_cast %0 : vector<1x2x4x8xbf16> to vector<2x4x8xbf16>
    %c0_3 = arith.constant 0 : index
    %c0_4 = arith.constant 0 : index
    %c0_5 = arith.constant 0 : index
    %c32 = arith.constant 32 : index
    %2 = vector.load %arg1[%c0_3, %c0_4, %c0_5, %c32] : memref<1x2x4x96xbf16, #tpu.memory_space<vmem>>, vector<1x2x4x8xbf16>
    %3 = vector.shape_cast %2 : vector<1x2x4x8xbf16> to vector<2x4x8xbf16>
    %c0_6 = arith.constant 0 : index
    %c0_7 = arith.constant 0 : index
    %c0_8 = arith.constant 0 : index
    %c64 = arith.constant 64 : index
    %4 = vector.load %arg1[%c0_6, %c0_7, %c0_8, %c64] : memref<1x2x4x96xbf16, #tpu.memory_space<vmem>>, vector<1x2x4x8xbf16>
    %5 = vector.shape_cast %4 : vector<1x2x4x8xbf16> to vector<2x4x8xbf16>
    %c0_9 = arith.constant 0 : index
    %c0_10 = arith.constant 0 : index
    %c0_11 = arith.constant 0 : index
    %6 = vector.load %arg2[%c0_9, %c0_10, %c0_11] : memref<1x1x96xbf16, #tpu.memory_space<vmem>>, vector<1x1x8xbf16>
    %7 = vector.shape_cast %6 : vector<1x1x8xbf16> to vector<1x8xbf16>
    %c0_12 = arith.constant 0 : index
    %c0_13 = arith.constant 0 : index
    %c32_14 = arith.constant 32 : index
    %8 = vector.load %arg2[%c0_12, %c0_13, %c32_14] : memref<1x1x96xbf16, #tpu.memory_space<vmem>>, vector<1x1x8xbf16>
    %9 = vector.shape_cast %8 : vector<1x1x8xbf16> to vector<1x8xbf16>
    %c0_15 = arith.constant 0 : index
    %c0_16 = arith.constant 0 : index
    %c64_17 = arith.constant 64 : index
    %10 = vector.load %arg2[%c0_15, %c0_16, %c64_17] : memref<1x1x96xbf16, #tpu.memory_space<vmem>>, vector<1x1x8xbf16>
    %11 = vector.shape_cast %10 : vector<1x1x8xbf16> to vector<1x8xbf16>
    %12 = arith.extf %9 : vector<1x8xbf16> to vector<1x8xf32>
    %13 = arith.extf %11 : vector<1x8xbf16> to vector<1x8xf32>
    "tpu.trace_start"() <{level = 10 : i32, message = "gqd,gkd->gqk"}> : () -> ()
    %cst = arith.constant dense<0.000000e+00> : vector<2x4x4xf32>
    %14 = tpu.matmul %1, %3, %cst {dimension_numbers = #tpu.dot_dimension_numbers<[2], [2], [1], [1], [0, 0, 0, 1, 1, 1], [0], [0]>} : vector<2x4x8xbf16>, vector<2x4x8xbf16>, vector<2x4x4xf32> -> vector<2x4x4xf32>
    "tpu.trace_stop"() : () -> ()
    %15 = arith.extf %1 : vector<2x4x8xbf16> to vector<2x4x8xf32>
    %16 = vector.shape_cast %12 : vector<1x8xf32> to vector<1x1x8xf32>
    %17 = vector.broadcast %16 : vector<1x1x8xf32> to vector<2x4x8xf32>
    %18 = arith.mulf %15, %17 : vector<2x4x8xf32>
    %cst_18 = arith.constant dense<0.000000e+00> : vector<2x4xf32>
    %19 = vector.multi_reduction <add>, %18, %cst_18 [2] : vector<2x4x8xf32> to vector<2x4xf32>
    %20 = vector.shape_cast %19 : vector<2x4xf32> to vector<2x4x1xf32>
    %cst_19 = arith.constant dense<0xFF800000> : vector<2x4xf32>
    %21 = vector.multi_reduction <maximumf>, %14, %cst_19 [2] : vector<2x4x4xf32> to vector<2x4xf32>
    %22 = vector.shape_cast %21 : vector<2x4xf32> to vector<2x4x1xf32>
    %23 = arith.maximumf %22, %20 : vector<2x4x1xf32>
    %24 = vector.broadcast %23 : vector<2x4x1xf32> to vector<2x4x4xf32>
    %25 = arith.subf %14, %24 : vector<2x4x4xf32>
    %26 = math.exp %25 : vector<2x4x4xf32>
    %27 = arith.subf %20, %23 : vector<2x4x1xf32>
    %28 = math.exp %27 : vector<2x4x1xf32>
    %cst_20 = arith.constant dense<0.000000e+00> : vector<2x4xf32>
    %29 = vector.multi_reduction <add>, %26, %cst_20 [2] : vector<2x4x4xf32> to vector<2x4xf32>
    %30 = vector.shape_cast %29 : vector<2x4xf32> to vector<2x4x1xf32>
    %31 = arith.addf %30, %28 : vector<2x4x1xf32>
    %32 = arith.truncf %26 : vector<2x4x4xf32> to vector<2x4x4xbf16>
    "tpu.trace_start"() <{level = 10 : i32, message = "gqk,gkd->gqd"}> : () -> ()
    %cst_21 = arith.constant dense<0.000000e+00> : vector<2x4x8xf32>
    %33 = tpu.matmul %32, %5, %cst_21 {dimension_numbers = #tpu.dot_dimension_numbers<[2], [1], [1], [2], [0, 0, 0, 1, 1, 2], [0], [0]>} : vector<2x4x4xbf16>, vector<2x4x8xbf16>, vector<2x4x8xf32> -> vector<2x4x8xf32>
    "tpu.trace_stop"() : () -> ()
    %34 = vector.shape_cast %13 : vector<1x8xf32> to vector<1x1x8xf32>
    %35 = vector.broadcast %28 : vector<2x4x1xf32> to vector<2x4x8xf32>
    %36 = vector.broadcast %34 : vector<1x1x8xf32> to vector<2x4x8xf32>
    %37 = arith.mulf %35, %36 : vector<2x4x8xf32>
    %38 = arith.addf %33, %37 : vector<2x4x8xf32>
    %39 = tpu.reciprocal %31 {approx = true} : vector<2x4x1xf32> -> vector<2x4x1xf32>
    %40 = vector.broadcast %39 : vector<2x4x1xf32> to vector<2x4x8xf32>
    %41 = arith.mulf %38, %40 : vector<2x4x8xf32>
    %42 = arith.truncf %41 : vector<2x4x8xf32> to vector<2x4x8xbf16>
    %43 = arith.extf %7 : vector<1x8xbf16> to vector<1x8xf32>
    %44 = vector.shape_cast %7 : vector<1x8xbf16> to vector<1x1x8xbf16>
    %45 = vector.shape_cast %44 : vector<1x1x8xbf16> to vector<1x1x8xbf16>
    %46 = vector.broadcast %45 : vector<1x1x8xbf16> to vector<2x1x8xbf16>
    "tpu.trace_start"() <{level = 10 : i32, message = "gqd,gkd->gqk"}> : () -> ()
    %cst_22 = arith.constant dense<0.000000e+00> : vector<2x1x4xf32>
    %47 = tpu.matmul %46, %3, %cst_22 {dimension_numbers = #tpu.dot_dimension_numbers<[2], [2], [1], [1], [0, 0, 0, 1, 1, 1], [0], [0]>} : vector<2x1x8xbf16>, vector<2x4x8xbf16>, vector<2x1x4xf32> -> vector<2x1x4xf32>
    "tpu.trace_stop"() : () -> ()
    %48 = arith.mulf %43, %12 : vector<1x8xf32>
    %49 = vector.shape_cast %48 : vector<1x8xf32> to vector<1x1x8xf32>
    %cst_23 = arith.constant dense<0.000000e+00> : vector<1xf32>
    %50 = vector.multi_reduction <add>, %49, %cst_23 [1, 2] : vector<1x1x8xf32> to vector<1xf32>
    %51 = vector.shape_cast %50 : vector<1xf32> to vector<1x1x1xf32>
    %52 = vector.extract %51[0, 0, 0] : f32 from vector<1x1x1xf32>
    %53 = vector.shape_cast %47 : vector<2x1x4xf32> to vector<1x2x1x4xf32>
    %cst_24 = arith.constant dense<0xFF800000> : vector<1xf32>
    %54 = vector.multi_reduction <maximumf>, %53, %cst_24 [1, 2, 3] : vector<1x2x1x4xf32> to vector<1xf32>
    %55 = vector.shape_cast %54 : vector<1xf32> to vector<1x1x1x1xf32>
    %56 = vector.extract %55[0, 0, 0, 0] : f32 from vector<1x1x1x1xf32>
    %57 = arith.maximumf %56, %52 : f32
    %58 = vector.broadcast %57 : f32 to vector<2x1x4xf32>
    %59 = arith.subf %47, %58 : vector<2x1x4xf32>
    %60 = math.exp %59 : vector<2x1x4xf32>
    %61 = arith.subf %52, %57 : f32
    %62 = math.exp %61 : f32
    %63 = vector.shape_cast %60 : vector<2x1x4xf32> to vector<1x2x1x4xf32>
    %cst_25 = arith.constant dense<0.000000e+00> : vector<1xf32>
    %64 = vector.multi_reduction <add>, %63, %cst_25 [1, 2, 3] : vector<1x2x1x4xf32> to vector<1xf32>
    %65 = vector.shape_cast %64 : vector<1xf32> to vector<1x1x1x1xf32>
    %66 = vector.extract %65[0, 0, 0, 0] : f32 from vector<1x1x1x1xf32>
    %67 = arith.addf %66, %62 : f32
    %68 = arith.truncf %60 : vector<2x1x4xf32> to vector<2x1x4xbf16>
    "tpu.trace_start"() <{level = 10 : i32, message = "gqk,gkd->gqd"}> : () -> ()
    %cst_26 = arith.constant dense<0.000000e+00> : vector<2x1x8xf32>
    %69 = tpu.matmul %68, %5, %cst_26 {dimension_numbers = #tpu.dot_dimension_numbers<[2], [1], [1], [2], [0, 0, 0, 1, 1, 2], [0], [0]>} : vector<2x1x4xbf16>, vector<2x4x8xbf16>, vector<2x1x8xf32> -> vector<2x1x8xf32>
    "tpu.trace_stop"() : () -> ()
    %cst_27 = arith.constant dense<0.000000e+00> : vector<1x8xf32>
    %70 = vector.multi_reduction <add>, %69, %cst_27 [0] : vector<2x1x8xf32> to vector<1x8xf32>
    %71 = vector.broadcast %62 : f32 to vector<1x8xf32>
    %72 = arith.mulf %71, %13 : vector<1x8xf32>
    %73 = arith.addf %70, %72 : vector<1x8xf32>
    %74 = vector.broadcast %67 : f32 to vector<1x8xf32>
    %75 = arith.divf %73, %74 : vector<1x8xf32>
    %c0_28 = arith.constant 0 : index
    %c0_29 = arith.constant 0 : index
    %c0_30 = arith.constant 0 : index
    %c8 = arith.constant 8 : index
    %76 = vector.load %arg1[%c0_28, %c0_29, %c0_30, %c8] : memref<1x2x4x96xbf16, #tpu.memory_space<vmem>>, vector<1x2x4x8xbf16>
    %77 = vector.shape_cast %76 : vector<1x2x4x8xbf16> to vector<2x4x8xbf16>
    %c0_31 = arith.constant 0 : index
    %c0_32 = arith.constant 0 : index
    %c0_33 = arith.constant 0 : index
    %c40 = arith.constant 40 : index
    %78 = vector.load %arg1[%c0_31, %c0_32, %c0_33, %c40] : memref<1x2x4x96xbf16, #tpu.memory_space<vmem>>, vector<1x2x4x8xbf16>
    %79 = vector.shape_cast %78 : vector<1x2x4x8xbf16> to vector<2x4x8xbf16>
    %c0_34 = arith.constant 0 : index
    %c0_35 = arith.constant 0 : index
    %c0_36 = arith.constant 0 : index
    %c72 = arith.constant 72 : index
    %80 = vector.load %arg1[%c0_34, %c0_35, %c0_36, %c72] : memref<1x2x4x96xbf16, #tpu.memory_space<vmem>>, vector<1x2x4x8xbf16>
    %81 = vector.shape_cast %80 : vector<1x2x4x8xbf16> to vector<2x4x8xbf16>
    %c0_37 = arith.constant 0 : index
    %c0_38 = arith.constant 0 : index
    %c8_39 = arith.constant 8 : index
    %82 = vector.load %arg2[%c0_37, %c0_38, %c8_39] : memref<1x1x96xbf16, #tpu.memory_space<vmem>>, vector<1x1x8xbf16>
    %83 = vector.shape_cast %82 : vector<1x1x8xbf16> to vector<1x8xbf16>
    %c0_40 = arith.constant 0 : index
    %c0_41 = arith.constant 0 : index
    %c40_42 = arith.constant 40 : index
    %84 = vector.load %arg2[%c0_40, %c0_41, %c40_42] : memref<1x1x96xbf16, #tpu.memory_space<vmem>>, vector<1x1x8xbf16>
    %85 = vector.shape_cast %84 : vector<1x1x8xbf16> to vector<1x8xbf16>
    %c0_43 = arith.constant 0 : index
    %c0_44 = arith.constant 0 : index
    %c72_45 = arith.constant 72 : index
    %86 = vector.load %arg2[%c0_43, %c0_44, %c72_45] : memref<1x1x96xbf16, #tpu.memory_space<vmem>>, vector<1x1x8xbf16>
    %87 = vector.shape_cast %86 : vector<1x1x8xbf16> to vector<1x8xbf16>
    %88 = arith.extf %85 : vector<1x8xbf16> to vector<1x8xf32>
    %89 = arith.extf %87 : vector<1x8xbf16> to vector<1x8xf32>
    "tpu.trace_start"() <{level = 10 : i32, message = "gqd,gkd->gqk"}> : () -> ()
    %cst_46 = arith.constant dense<0.000000e+00> : vector<2x4x4xf32>
    %90 = tpu.matmul %77, %79, %cst_46 {dimension_numbers = #tpu.dot_dimension_numbers<[2], [2], [1], [1], [0, 0, 0, 1, 1, 1], [0], [0]>} : vector<2x4x8xbf16>, vector<2x4x8xbf16>, vector<2x4x4xf32> -> vector<2x4x4xf32>
    "tpu.trace_stop"() : () -> ()
    %91 = arith.extf %77 : vector<2x4x8xbf16> to vector<2x4x8xf32>
    %92 = vector.shape_cast %88 : vector<1x8xf32> to vector<1x1x8xf32>
    %93 = vector.broadcast %92 : vector<1x1x8xf32> to vector<2x4x8xf32>
    %94 = arith.mulf %91, %93 : vector<2x4x8xf32>
    %cst_47 = arith.constant dense<0.000000e+00> : vector<2x4xf32>
    %95 = vector.multi_reduction <add>, %94, %cst_47 [2] : vector<2x4x8xf32> to vector<2x4xf32>
    %96 = vector.shape_cast %95 : vector<2x4xf32> to vector<2x4x1xf32>
    %cst_48 = arith.constant dense<0xFF800000> : vector<2x4xf32>
    %97 = vector.multi_reduction <maximumf>, %90, %cst_48 [2] : vector<2x4x4xf32> to vector<2x4xf32>
    %98 = vector.shape_cast %97 : vector<2x4xf32> to vector<2x4x1xf32>
    %99 = arith.maximumf %98, %96 : vector<2x4x1xf32>
    %100 = vector.broadcast %99 : vector<2x4x1xf32> to vector<2x4x4xf32>
    %101 = arith.subf %90, %100 : vector<2x4x4xf32>
    %102 = math.exp %101 : vector<2x4x4xf32>
    %103 = arith.subf %96, %99 : vector<2x4x1xf32>
    %104 = math.exp %103 : vector<2x4x1xf32>
    %cst_49 = arith.constant dense<0.000000e+00> : vector<2x4xf32>
    %105 = vector.multi_reduction <add>, %102, %cst_49 [2] : vector<2x4x4xf32> to vector<2x4xf32>
    %106 = vector.shape_cast %105 : vector<2x4xf32> to vector<2x4x1xf32>
    %107 = arith.addf %106, %104 : vector<2x4x1xf32>
    %108 = arith.truncf %102 : vector<2x4x4xf32> to vector<2x4x4xbf16>
    "tpu.trace_start"() <{level = 10 : i32, message = "gqk,gkd->gqd"}> : () -> ()
    %cst_50 = arith.constant dense<0.000000e+00> : vector<2x4x8xf32>
    %109 = tpu.matmul %108, %81, %cst_50 {dimension_numbers = #tpu.dot_dimension_numbers<[2], [1], [1], [2], [0, 0, 0, 1, 1, 2], [0], [0]>} : vector<2x4x4xbf16>, vector<2x4x8xbf16>, vector<2x4x8xf32> -> vector<2x4x8xf32>
    "tpu.trace_stop"() : () -> ()
    %110 = vector.shape_cast %89 : vector<1x8xf32> to vector<1x1x8xf32>
    %111 = vector.broadcast %104 : vector<2x4x1xf32> to vector<2x4x8xf32>
    %112 = vector.broadcast %110 : vector<1x1x8xf32> to vector<2x4x8xf32>
    %113 = arith.mulf %111, %112 : vector<2x4x8xf32>
    %114 = arith.addf %109, %113 : vector<2x4x8xf32>
    %115 = tpu.reciprocal %107 {approx = true} : vector<2x4x1xf32> -> vector<2x4x1xf32>
    %116 = vector.broadcast %115 : vector<2x4x1xf32> to vector<2x4x8xf32>
    %117 = arith.mulf %114, %116 : vector<2x4x8xf32>
    %118 = arith.truncf %117 : vector<2x4x8xf32> to vector<2x4x8xbf16>
    %119 = arith.extf %83 : vector<1x8xbf16> to vector<1x8xf32>
    %120 = vector.shape_cast %83 : vector<1x8xbf16> to vector<1x1x8xbf16>
    %121 = vector.shape_cast %120 : vector<1x1x8xbf16> to vector<1x1x8xbf16>
    %122 = vector.broadcast %121 : vector<1x1x8xbf16> to vector<2x1x8xbf16>
    "tpu.trace_start"() <{level = 10 : i32, message = "gqd,gkd->gqk"}> : () -> ()
    %cst_51 = arith.constant dense<0.000000e+00> : vector<2x1x4xf32>
    %123 = tpu.matmul %122, %79, %cst_51 {dimension_numbers = #tpu.dot_dimension_numbers<[2], [2], [1], [1], [0, 0, 0, 1, 1, 1], [0], [0]>} : vector<2x1x8xbf16>, vector<2x4x8xbf16>, vector<2x1x4xf32> -> vector<2x1x4xf32>
    "tpu.trace_stop"() : () -> ()
    %124 = arith.mulf %119, %88 : vector<1x8xf32>
    %125 = vector.shape_cast %124 : vector<1x8xf32> to vector<1x1x8xf32>
    %cst_52 = arith.constant dense<0.000000e+00> : vector<1xf32>
    %126 = vector.multi_reduction <add>, %125, %cst_52 [1, 2] : vector<1x1x8xf32> to vector<1xf32>
    %127 = vector.shape_cast %126 : vector<1xf32> to vector<1x1x1xf32>
    %128 = vector.extract %127[0, 0, 0] : f32 from vector<1x1x1xf32>
    %129 = vector.shape_cast %123 : vector<2x1x4xf32> to vector<1x2x1x4xf32>
    %cst_53 = arith.constant dense<0xFF800000> : vector<1xf32>
    %130 = vector.multi_reduction <maximumf>, %129, %cst_53 [1, 2, 3] : vector<1x2x1x4xf32> to vector<1xf32>
    %131 = vector.shape_cast %130 : vector<1xf32> to vector<1x1x1x1xf32>
    %132 = vector.extract %131[0, 0, 0, 0] : f32 from vector<1x1x1x1xf32>
    %133 = arith.maximumf %132, %128 : f32
    %134 = vector.broadcast %133 : f32 to vector<2x1x4xf32>
    %135 = arith.subf %123, %134 : vector<2x1x4xf32>
    %136 = math.exp %135 : vector<2x1x4xf32>
    %137 = arith.subf %128, %133 : f32
    %138 = math.exp %137 : f32
    %139 = vector.shape_cast %136 : vector<2x1x4xf32> to vector<1x2x1x4xf32>
    %cst_54 = arith.constant dense<0.000000e+00> : vector<1xf32>
    %140 = vector.multi_reduction <add>, %139, %cst_54 [1, 2, 3] : vector<1x2x1x4xf32> to vector<1xf32>
    %141 = vector.shape_cast %140 : vector<1xf32> to vector<1x1x1x1xf32>
    %142 = vector.extract %141[0, 0, 0, 0] : f32 from vector<1x1x1x1xf32>
    %143 = arith.addf %142, %138 : f32
    %144 = arith.truncf %136 : vector<2x1x4xf32> to vector<2x1x4xbf16>
    "tpu.trace_start"() <{level = 10 : i32, message = "gqk,gkd->gqd"}> : () -> ()
    %cst_55 = arith.constant dense<0.000000e+00> : vector<2x1x8xf32>
    %145 = tpu.matmul %144, %81, %cst_55 {dimension_numbers = #tpu.dot_dimension_numbers<[2], [1], [1], [2], [0, 0, 0, 1, 1, 2], [0], [0]>} : vector<2x1x4xbf16>, vector<2x4x8xbf16>, vector<2x1x8xf32> -> vector<2x1x8xf32>
    "tpu.trace_stop"() : () -> ()
    %cst_56 = arith.constant dense<0.000000e+00> : vector<1x8xf32>
    %146 = vector.multi_reduction <add>, %145, %cst_56 [0] : vector<2x1x8xf32> to vector<1x8xf32>
    %147 = vector.broadcast %138 : f32 to vector<1x8xf32>
    %148 = arith.mulf %147, %89 : vector<1x8xf32>
    %149 = arith.addf %146, %148 : vector<1x8xf32>
    %150 = vector.broadcast %143 : f32 to vector<1x8xf32>
    %151 = arith.divf %149, %150 : vector<1x8xf32>
    %c0_57 = arith.constant 0 : index
    %c0_58 = arith.constant 0 : index
    %c0_59 = arith.constant 0 : index
    %c16 = arith.constant 16 : index
    %152 = vector.load %arg1[%c0_57, %c0_58, %c0_59, %c16] : memref<1x2x4x96xbf16, #tpu.memory_space<vmem>>, vector<1x2x4x8xbf16>
    %153 = vector.shape_cast %152 : vector<1x2x4x8xbf16> to vector<2x4x8xbf16>
    %c0_60 = arith.constant 0 : index
    %c0_61 = arith.constant 0 : index
    %c0_62 = arith.constant 0 : index
    %c48 = arith.constant 48 : index
    %154 = vector.load %arg1[%c0_60, %c0_61, %c0_62, %c48] : memref<1x2x4x96xbf16, #tpu.memory_space<vmem>>, vector<1x2x4x8xbf16>
    %155 = vector.shape_cast %154 : vector<1x2x4x8xbf16> to vector<2x4x8xbf16>
    %c0_63 = arith.constant 0 : index
    %c0_64 = arith.constant 0 : index
    %c0_65 = arith.constant 0 : index
    %c80 = arith.constant 80 : index
    %156 = vector.load %arg1[%c0_63, %c0_64, %c0_65, %c80] : memref<1x2x4x96xbf16, #tpu.memory_space<vmem>>, vector<1x2x4x8xbf16>
    %157 = vector.shape_cast %156 : vector<1x2x4x8xbf16> to vector<2x4x8xbf16>
    %c0_66 = arith.constant 0 : index
    %c0_67 = arith.constant 0 : index
    %c16_68 = arith.constant 16 : index
    %158 = vector.load %arg2[%c0_66, %c0_67, %c16_68] : memref<1x1x96xbf16, #tpu.memory_space<vmem>>, vector<1x1x8xbf16>
    %159 = vector.shape_cast %158 : vector<1x1x8xbf16> to vector<1x8xbf16>
    %c0_69 = arith.constant 0 : index
    %c0_70 = arith.constant 0 : index
    %c48_71 = arith.constant 48 : index
    %160 = vector.load %arg2[%c0_69, %c0_70, %c48_71] : memref<1x1x96xbf16, #tpu.memory_space<vmem>>, vector<1x1x8xbf16>
    %161 = vector.shape_cast %160 : vector<1x1x8xbf16> to vector<1x8xbf16>
    %c0_72 = arith.constant 0 : index
    %c0_73 = arith.constant 0 : index
    %c80_74 = arith.constant 80 : index
    %162 = vector.load %arg2[%c0_72, %c0_73, %c80_74] : memref<1x1x96xbf16, #tpu.memory_space<vmem>>, vector<1x1x8xbf16>
    %163 = vector.shape_cast %162 : vector<1x1x8xbf16> to vector<1x8xbf16>
    %164 = arith.extf %161 : vector<1x8xbf16> to vector<1x8xf32>
    %165 = arith.extf %163 : vector<1x8xbf16> to vector<1x8xf32>
    "tpu.trace_start"() <{level = 10 : i32, message = "gqd,gkd->gqk"}> : () -> ()
    %cst_75 = arith.constant dense<0.000000e+00> : vector<2x4x4xf32>
    %166 = tpu.matmul %153, %155, %cst_75 {dimension_numbers = #tpu.dot_dimension_numbers<[2], [2], [1], [1], [0, 0, 0, 1, 1, 1], [0], [0]>} : vector<2x4x8xbf16>, vector<2x4x8xbf16>, vector<2x4x4xf32> -> vector<2x4x4xf32>
    "tpu.trace_stop"() : () -> ()
    %167 = arith.extf %153 : vector<2x4x8xbf16> to vector<2x4x8xf32>
    %168 = vector.shape_cast %164 : vector<1x8xf32> to vector<1x1x8xf32>
    %169 = vector.broadcast %168 : vector<1x1x8xf32> to vector<2x4x8xf32>
    %170 = arith.mulf %167, %169 : vector<2x4x8xf32>
    %cst_76 = arith.constant dense<0.000000e+00> : vector<2x4xf32>
    %171 = vector.multi_reduction <add>, %170, %cst_76 [2] : vector<2x4x8xf32> to vector<2x4xf32>
    %172 = vector.shape_cast %171 : vector<2x4xf32> to vector<2x4x1xf32>
    %cst_77 = arith.constant dense<0xFF800000> : vector<2x4xf32>
    %173 = vector.multi_reduction <maximumf>, %166, %cst_77 [2] : vector<2x4x4xf32> to vector<2x4xf32>
    %174 = vector.shape_cast %173 : vector<2x4xf32> to vector<2x4x1xf32>
    %175 = arith.maximumf %174, %172 : vector<2x4x1xf32>
    %176 = vector.broadcast %175 : vector<2x4x1xf32> to vector<2x4x4xf32>
    %177 = arith.subf %166, %176 : vector<2x4x4xf32>
    %178 = math.exp %177 : vector<2x4x4xf32>
    %179 = arith.subf %172, %175 : vector<2x4x1xf32>
    %180 = math.exp %179 : vector<2x4x1xf32>
    %cst_78 = arith.constant dense<0.000000e+00> : vector<2x4xf32>
    %181 = vector.multi_reduction <add>, %178, %cst_78 [2] : vector<2x4x4xf32> to vector<2x4xf32>
    %182 = vector.shape_cast %181 : vector<2x4xf32> to vector<2x4x1xf32>
    %183 = arith.addf %182, %180 : vector<2x4x1xf32>
    %184 = arith.truncf %178 : vector<2x4x4xf32> to vector<2x4x4xbf16>
    "tpu.trace_start"() <{level = 10 : i32, message = "gqk,gkd->gqd"}> : () -> ()
    %cst_79 = arith.constant dense<0.000000e+00> : vector<2x4x8xf32>
    %185 = tpu.matmul %184, %157, %cst_79 {dimension_numbers = #tpu.dot_dimension_numbers<[2], [1], [1], [2], [0, 0, 0, 1, 1, 2], [0], [0]>} : vector<2x4x4xbf16>, vector<2x4x8xbf16>, vector<2x4x8xf32> -> vector<2x4x8xf32>
    "tpu.trace_stop"() : () -> ()
    %186 = vector.shape_cast %165 : vector<1x8xf32> to vector<1x1x8xf32>
    %187 = vector.broadcast %180 : vector<2x4x1xf32> to vector<2x4x8xf32>
    %188 = vector.broadcast %186 : vector<1x1x8xf32> to vector<2x4x8xf32>
    %189 = arith.mulf %187, %188 : vector<2x4x8xf32>
    %190 = arith.addf %185, %189 : vector<2x4x8xf32>
    %191 = tpu.reciprocal %183 {approx = true} : vector<2x4x1xf32> -> vector<2x4x1xf32>
    %192 = vector.broadcast %191 : vector<2x4x1xf32> to vector<2x4x8xf32>
    %193 = arith.mulf %190, %192 : vector<2x4x8xf32>
    %194 = arith.truncf %193 : vector<2x4x8xf32> to vector<2x4x8xbf16>
    %195 = arith.extf %159 : vector<1x8xbf16> to vector<1x8xf32>
    %196 = vector.shape_cast %159 : vector<1x8xbf16> to vector<1x1x8xbf16>
    %197 = vector.shape_cast %196 : vector<1x1x8xbf16> to vector<1x1x8xbf16>
    %198 = vector.broadcast %197 : vector<1x1x8xbf16> to vector<2x1x8xbf16>
    "tpu.trace_start"() <{level = 10 : i32, message = "gqd,gkd->gqk"}> : () -> ()
    %cst_80 = arith.constant dense<0.000000e+00> : vector<2x1x4xf32>
    %199 = tpu.matmul %198, %155, %cst_80 {dimension_numbers = #tpu.dot_dimension_numbers<[2], [2], [1], [1], [0, 0, 0, 1, 1, 1], [0], [0]>} : vector<2x1x8xbf16>, vector<2x4x8xbf16>, vector<2x1x4xf32> -> vector<2x1x4xf32>
    "tpu.trace_stop"() : () -> ()
    %200 = arith.mulf %195, %164 : vector<1x8xf32>
    %201 = vector.shape_cast %200 : vector<1x8xf32> to vector<1x1x8xf32>
    %cst_81 = arith.constant dense<0.000000e+00> : vector<1xf32>
    %202 = vector.multi_reduction <add>, %201, %cst_81 [1, 2] : vector<1x1x8xf32> to vector<1xf32>
    %203 = vector.shape_cast %202 : vector<1xf32> to vector<1x1x1xf32>
    %204 = vector.extract %203[0, 0, 0] : f32 from vector<1x1x1xf32>
    %205 = vector.shape_cast %199 : vector<2x1x4xf32> to vector<1x2x1x4xf32>
    %cst_82 = arith.constant dense<0xFF800000> : vector<1xf32>
    %206 = vector.multi_reduction <maximumf>, %205, %cst_82 [1, 2, 3] : vector<1x2x1x4xf32> to vector<1xf32>
    %207 = vector.shape_cast %206 : vector<1xf32> to vector<1x1x1x1xf32>
    %208 = vector.extract %207[0, 0, 0, 0] : f32 from vector<1x1x1x1xf32>
    %209 = arith.maximumf %208, %204 : f32
    %210 = vector.broadcast %209 : f32 to vector<2x1x4xf32>
    %211 = arith.subf %199, %210 : vector<2x1x4xf32>
    %212 = math.exp %211 : vector<2x1x4xf32>
    %213 = arith.subf %204, %209 : f32
    %214 = math.exp %213 : f32
    %215 = vector.shape_cast %212 : vector<2x1x4xf32> to vector<1x2x1x4xf32>
    %cst_83 = arith.constant dense<0.000000e+00> : vector<1xf32>
    %216 = vector.multi_reduction <add>, %215, %cst_83 [1, 2, 3] : vector<1x2x1x4xf32> to vector<1xf32>
    %217 = vector.shape_cast %216 : vector<1xf32> to vector<1x1x1x1xf32>
    %218 = vector.extract %217[0, 0, 0, 0] : f32 from vector<1x1x1x1xf32>
    %219 = arith.addf %218, %214 : f32
    %220 = arith.truncf %212 : vector<2x1x4xf32> to vector<2x1x4xbf16>
    "tpu.trace_start"() <{level = 10 : i32, message = "gqk,gkd->gqd"}> : () -> ()
    %cst_84 = arith.constant dense<0.000000e+00> : vector<2x1x8xf32>
    %221 = tpu.matmul %220, %157, %cst_84 {dimension_numbers = #tpu.dot_dimension_numbers<[2], [1], [1], [2], [0, 0, 0, 1, 1, 2], [0], [0]>} : vector<2x1x4xbf16>, vector<2x4x8xbf16>, vector<2x1x8xf32> -> vector<2x1x8xf32>
    "tpu.trace_stop"() : () -> ()
    %cst_85 = arith.constant dense<0.000000e+00> : vector<1x8xf32>
    %222 = vector.multi_reduction <add>, %221, %cst_85 [0] : vector<2x1x8xf32> to vector<1x8xf32>
    %223 = vector.broadcast %214 : f32 to vector<1x8xf32>
    %224 = arith.mulf %223, %165 : vector<1x8xf32>
    %225 = arith.addf %222, %224 : vector<1x8xf32>
    %226 = vector.broadcast %219 : f32 to vector<1x8xf32>
    %227 = arith.divf %225, %226 : vector<1x8xf32>
    %c0_86 = arith.constant 0 : index
    %c0_87 = arith.constant 0 : index
    %c0_88 = arith.constant 0 : index
    %c24 = arith.constant 24 : index
    %228 = vector.load %arg1[%c0_86, %c0_87, %c0_88, %c24] : memref<1x2x4x96xbf16, #tpu.memory_space<vmem>>, vector<1x2x4x8xbf16>
    %229 = vector.shape_cast %228 : vector<1x2x4x8xbf16> to vector<2x4x8xbf16>
    %c0_89 = arith.constant 0 : index
    %c0_90 = arith.constant 0 : index
    %c0_91 = arith.constant 0 : index
    %c56 = arith.constant 56 : index
    %230 = vector.load %arg1[%c0_89, %c0_90, %c0_91, %c56] : memref<1x2x4x96xbf16, #tpu.memory_space<vmem>>, vector<1x2x4x8xbf16>
    %231 = vector.shape_cast %230 : vector<1x2x4x8xbf16> to vector<2x4x8xbf16>
    %c0_92 = arith.constant 0 : index
    %c0_93 = arith.constant 0 : index
    %c0_94 = arith.constant 0 : index
    %c88 = arith.constant 88 : index
    %232 = vector.load %arg1[%c0_92, %c0_93, %c0_94, %c88] : memref<1x2x4x96xbf16, #tpu.memory_space<vmem>>, vector<1x2x4x8xbf16>
    %233 = vector.shape_cast %232 : vector<1x2x4x8xbf16> to vector<2x4x8xbf16>
    %c0_95 = arith.constant 0 : index
    %c0_96 = arith.constant 0 : index
    %c24_97 = arith.constant 24 : index
    %234 = vector.load %arg2[%c0_95, %c0_96, %c24_97] : memref<1x1x96xbf16, #tpu.memory_space<vmem>>, vector<1x1x8xbf16>
    %235 = vector.shape_cast %234 : vector<1x1x8xbf16> to vector<1x8xbf16>
    %c0_98 = arith.constant 0 : index
    %c0_99 = arith.constant 0 : index
    %c56_100 = arith.constant 56 : index
    %236 = vector.load %arg2[%c0_98, %c0_99, %c56_100] : memref<1x1x96xbf16, #tpu.memory_space<vmem>>, vector<1x1x8xbf16>
    %237 = vector.shape_cast %236 : vector<1x1x8xbf16> to vector<1x8xbf16>
    %c0_101 = arith.constant 0 : index
    %c0_102 = arith.constant 0 : index
    %c88_103 = arith.constant 88 : index
    %238 = vector.load %arg2[%c0_101, %c0_102, %c88_103] : memref<1x1x96xbf16, #tpu.memory_space<vmem>>, vector<1x1x8xbf16>
    %239 = vector.shape_cast %238 : vector<1x1x8xbf16> to vector<1x8xbf16>
    %240 = arith.extf %237 : vector<1x8xbf16> to vector<1x8xf32>
    %241 = arith.extf %239 : vector<1x8xbf16> to vector<1x8xf32>
    "tpu.trace_start"() <{level = 10 : i32, message = "gqd,gkd->gqk"}> : () -> ()
    %cst_104 = arith.constant dense<0.000000e+00> : vector<2x4x4xf32>
    %242 = tpu.matmul %229, %231, %cst_104 {dimension_numbers = #tpu.dot_dimension_numbers<[2], [2], [1], [1], [0, 0, 0, 1, 1, 1], [0], [0]>} : vector<2x4x8xbf16>, vector<2x4x8xbf16>, vector<2x4x4xf32> -> vector<2x4x4xf32>
    "tpu.trace_stop"() : () -> ()
    %243 = arith.extf %229 : vector<2x4x8xbf16> to vector<2x4x8xf32>
    %244 = vector.shape_cast %240 : vector<1x8xf32> to vector<1x1x8xf32>
    %245 = vector.broadcast %244 : vector<1x1x8xf32> to vector<2x4x8xf32>
    %246 = arith.mulf %243, %245 : vector<2x4x8xf32>
    %cst_105 = arith.constant dense<0.000000e+00> : vector<2x4xf32>
    %247 = vector.multi_reduction <add>, %246, %cst_105 [2] : vector<2x4x8xf32> to vector<2x4xf32>
    %248 = vector.shape_cast %247 : vector<2x4xf32> to vector<2x4x1xf32>
    %cst_106 = arith.constant dense<0xFF800000> : vector<2x4xf32>
    %249 = vector.multi_reduction <maximumf>, %242, %cst_106 [2] : vector<2x4x4xf32> to vector<2x4xf32>
    %250 = vector.shape_cast %249 : vector<2x4xf32> to vector<2x4x1xf32>
    %251 = arith.maximumf %250, %248 : vector<2x4x1xf32>
    %252 = vector.broadcast %251 : vector<2x4x1xf32> to vector<2x4x4xf32>
    %253 = arith.subf %242, %252 : vector<2x4x4xf32>
    %254 = math.exp %253 : vector<2x4x4xf32>
    %255 = arith.subf %248, %251 : vector<2x4x1xf32>
    %256 = math.exp %255 : vector<2x4x1xf32>
    %cst_107 = arith.constant dense<0.000000e+00> : vector<2x4xf32>
    %257 = vector.multi_reduction <add>, %254, %cst_107 [2] : vector<2x4x4xf32> to vector<2x4xf32>
    %258 = vector.shape_cast %257 : vector<2x4xf32> to vector<2x4x1xf32>
    %259 = arith.addf %258, %256 : vector<2x4x1xf32>
    %260 = arith.truncf %254 : vector<2x4x4xf32> to vector<2x4x4xbf16>
    "tpu.trace_start"() <{level = 10 : i32, message = "gqk,gkd->gqd"}> : () -> ()
    %cst_108 = arith.constant dense<0.000000e+00> : vector<2x4x8xf32>
    %261 = tpu.matmul %260, %233, %cst_108 {dimension_numbers = #tpu.dot_dimension_numbers<[2], [1], [1], [2], [0, 0, 0, 1, 1, 2], [0], [0]>} : vector<2x4x4xbf16>, vector<2x4x8xbf16>, vector<2x4x8xf32> -> vector<2x4x8xf32>
    "tpu.trace_stop"() : () -> ()
    %262 = vector.shape_cast %241 : vector<1x8xf32> to vector<1x1x8xf32>
    %263 = vector.broadcast %256 : vector<2x4x1xf32> to vector<2x4x8xf32>
    %264 = vector.broadcast %262 : vector<1x1x8xf32> to vector<2x4x8xf32>
    %265 = arith.mulf %263, %264 : vector<2x4x8xf32>
    %266 = arith.addf %261, %265 : vector<2x4x8xf32>
    %267 = tpu.reciprocal %259 {approx = true} : vector<2x4x1xf32> -> vector<2x4x1xf32>
    %268 = vector.broadcast %267 : vector<2x4x1xf32> to vector<2x4x8xf32>
    %269 = arith.mulf %266, %268 : vector<2x4x8xf32>
    %270 = arith.truncf %269 : vector<2x4x8xf32> to vector<2x4x8xbf16>
    %271 = arith.extf %235 : vector<1x8xbf16> to vector<1x8xf32>
    %272 = vector.shape_cast %235 : vector<1x8xbf16> to vector<1x1x8xbf16>
    %273 = vector.shape_cast %272 : vector<1x1x8xbf16> to vector<1x1x8xbf16>
    %274 = vector.broadcast %273 : vector<1x1x8xbf16> to vector<2x1x8xbf16>
    "tpu.trace_start"() <{level = 10 : i32, message = "gqd,gkd->gqk"}> : () -> ()
    %cst_109 = arith.constant dense<0.000000e+00> : vector<2x1x4xf32>
    %275 = tpu.matmul %274, %231, %cst_109 {dimension_numbers = #tpu.dot_dimension_numbers<[2], [2], [1], [1], [0, 0, 0, 1, 1, 1], [0], [0]>} : vector<2x1x8xbf16>, vector<2x4x8xbf16>, vector<2x1x4xf32> -> vector<2x1x4xf32>
    "tpu.trace_stop"() : () -> ()
    %276 = arith.mulf %271, %240 : vector<1x8xf32>
    %277 = vector.shape_cast %276 : vector<1x8xf32> to vector<1x1x8xf32>
    %cst_110 = arith.constant dense<0.000000e+00> : vector<1xf32>
    %278 = vector.multi_reduction <add>, %277, %cst_110 [1, 2] : vector<1x1x8xf32> to vector<1xf32>
    %279 = vector.shape_cast %278 : vector<1xf32> to vector<1x1x1xf32>
    %280 = vector.extract %279[0, 0, 0] : f32 from vector<1x1x1xf32>
    %281 = vector.shape_cast %275 : vector<2x1x4xf32> to vector<1x2x1x4xf32>
    %cst_111 = arith.constant dense<0xFF800000> : vector<1xf32>
    %282 = vector.multi_reduction <maximumf>, %281, %cst_111 [1, 2, 3] : vector<1x2x1x4xf32> to vector<1xf32>
    %283 = vector.shape_cast %282 : vector<1xf32> to vector<1x1x1x1xf32>
    %284 = vector.extract %283[0, 0, 0, 0] : f32 from vector<1x1x1x1xf32>
    %285 = arith.maximumf %284, %280 : f32
    %286 = vector.broadcast %285 : f32 to vector<2x1x4xf32>
    %287 = arith.subf %275, %286 : vector<2x1x4xf32>
    %288 = math.exp %287 : vector<2x1x4xf32>
    %289 = arith.subf %280, %285 : f32
    %290 = math.exp %289 : f32
    %291 = vector.shape_cast %288 : vector<2x1x4xf32> to vector<1x2x1x4xf32>
    %cst_112 = arith.constant dense<0.000000e+00> : vector<1xf32>
    %292 = vector.multi_reduction <add>, %291, %cst_112 [1, 2, 3] : vector<1x2x1x4xf32> to vector<1xf32>
    %293 = vector.shape_cast %292 : vector<1xf32> to vector<1x1x1x1xf32>
    %294 = vector.extract %293[0, 0, 0, 0] : f32 from vector<1x1x1x1xf32>
    %295 = arith.addf %294, %290 : f32
    %296 = arith.truncf %288 : vector<2x1x4xf32> to vector<2x1x4xbf16>
    "tpu.trace_start"() <{level = 10 : i32, message = "gqk,gkd->gqd"}> : () -> ()
    %cst_113 = arith.constant dense<0.000000e+00> : vector<2x1x8xf32>
    %297 = tpu.matmul %296, %233, %cst_113 {dimension_numbers = #tpu.dot_dimension_numbers<[2], [1], [1], [2], [0, 0, 0, 1, 1, 2], [0], [0]>} : vector<2x1x4xbf16>, vector<2x4x8xbf16>, vector<2x1x8xf32> -> vector<2x1x8xf32>
    "tpu.trace_stop"() : () -> ()
    %cst_114 = arith.constant dense<0.000000e+00> : vector<1x8xf32>
    %298 = vector.multi_reduction <add>, %297, %cst_114 [0] : vector<2x1x8xf32> to vector<1x8xf32>
    %299 = vector.broadcast %290 : f32 to vector<1x8xf32>
    %300 = arith.mulf %299, %241 : vector<1x8xf32>
    %301 = arith.addf %298, %300 : vector<1x8xf32>
    %302 = vector.broadcast %295 : f32 to vector<1x8xf32>
    %303 = arith.divf %301, %302 : vector<1x8xf32>
    %304 = tpu.concatenate %42, %118, %194, %270 in 2 : vector<2x4x8xbf16>, vector<2x4x8xbf16>, vector<2x4x8xbf16>, vector<2x4x8xbf16> -> vector<2x4x32xbf16>
    %c0_115 = arith.constant 0 : index
    %c0_116 = arith.constant 0 : index
    %c0_117 = arith.constant 0 : index
    %c0_118 = arith.constant 0 : index
    %305 = vector.load %arg3[%c0_115, %c0_116, %c0_117, %c0_118] : memref<1x2x4x32xbf16, #tpu.memory_space<vmem>>, vector<1x2x4x32xbf16>
    %306 = vector.shape_cast %305 : vector<1x2x4x32xbf16> to vector<2x4x32xbf16>
    %307 = vector.shape_cast %304 : vector<2x4x32xbf16> to vector<1x2x4x32xbf16>
    tpu.vector_store %arg3[%c0_115, %c0_116, %c0_117, %c0_118], %307 {strides = array<i32>} : memref<1x2x4x32xbf16, #tpu.memory_space<vmem>>, vector<1x2x4x32xbf16>,
    %308 = tpu.concatenate %75, %151, %227, %303 in 1 : vector<1x8xf32>, vector<1x8xf32>, vector<1x8xf32>, vector<1x8xf32> -> vector<1x32xf32>
    %309 = arith.truncf %308 : vector<1x32xf32> to vector<1x32xbf16>
    %c0_119 = arith.constant 0 : index
    %c0_120 = arith.constant 0 : index
    %c0_121 = arith.constant 0 : index
    %310 = vector.load %arg4[%c0_119, %c0_120, %c0_121] : memref<1x1x32xbf16, #tpu.memory_space<vmem>>, vector<1x1x32xbf16>
    %311 = vector.shape_cast %310 : vector<1x1x32xbf16> to vector<1x32xbf16>
    %312 = vector.shape_cast %309 : vector<1x32xbf16> to vector<1x1x32xbf16>
    tpu.vector_store %arg4[%c0_119, %c0_120, %c0_121], %312 {strides = array<i32>} : memref<1x1x32xbf16, #tpu.memory_space<vmem>>, vector<1x1x32xbf16>,
    return
  }
  func.func @transform_0(%arg0: i32) -> (i32, i32, i32, i32) {
    %c0_i32 = arith.constant 0 : i32
    %c0_i32_0 = arith.constant 0 : i32
    %c0_i32_1 = arith.constant 0 : i32
    %c0_i32_2 = arith.constant 0 : i32
    return %arg0, %c0_i32, %c0_i32_0, %c0_i32_1 : i32, i32, i32, i32
  }
  func.func @transform_1(%arg0: i32) -> (i32, i32, i32) {
    %c0_i32 = arith.constant 0 : i32
    %c0_i32_0 = arith.constant 0 : i32
    %c0_i32_1 = arith.constant 0 : i32
    return %arg0, %c0_i32, %c0_i32_0 : i32, i32, i32
  }
  func.func @transform_2(%arg0: i32) -> (i32, i32, i32, i32) {
    %c0_i32 = arith.constant 0 : i32
    %c0_i32_0 = arith.constant 0 : i32
    %c0_i32_1 = arith.constant 0 : i32
    %c0_i32_2 = arith.constant 0 : i32
    return %arg0, %c0_i32, %c0_i32_0, %c0_i32_1 : i32, i32, i32, i32
  }
  func.func @transform_3(%arg0: i32) -> (i32, i32, i32) {
    %c0_i32 = arith.constant 0 : i32
    %c0_i32_0 = arith.constant 0 : i32
    %c0_i32_1 = arith.constant 0 : i32
    return %arg0, %c0_i32, %c0_i32_0 : i32, i32, i32
  }
}

module attributes {stable_mosaic.version = 11 : i64} {
  func.func @kernel(%arg0: i32, %arg1: i32, %arg2: memref<18x64xbf16, #tpu.memory_space<vmem>>, %arg3: memref<64x32xbf16, #tpu.memory_space<vmem>>, %arg4: memref<1x32xf32, #tpu.memory_space<vmem>>, %arg5: memref<18x32xbf16, #tpu.memory_space<vmem>>, %arg6: memref<18x32xbf16, #tpu.memory_space<vmem>>) attributes {dimension_semantics = [#tpu.dimension_semantics<parallel>, #tpu.dimension_semantics<parallel>], iteration_bounds = array<i64: 1, 1>, scalar_prefetch = 0 : i64, scratch_operands = 0 : i64, tpu.core_type = #tpu.core_type<tc>, window_params = [{transform_indices = @transform_0, window_bounds = array<i64: 18, 64>}, {transform_indices = @transform_1, window_bounds = array<i64: 64, 32>}, {transform_indices = @transform_2, window_bounds = array<i64: 1, 32>}, {transform_indices = @transform_3, window_bounds = array<i64: 18, 32>}, {transform_indices = @transform_4, window_bounds = array<i64: 18, 32>}]} {
    %c0 = arith.constant 0 : index
    %c0_0 = arith.constant 0 : index
    %0 = vector.load %arg2[%c0, %c0_0] : memref<18x64xbf16, #tpu.memory_space<vmem>>, vector<18x64xbf16>
    %c0_1 = arith.constant 0 : index
    %c0_2 = arith.constant 0 : index
    %1 = vector.load %arg3[%c0_1, %c0_2] : memref<64x32xbf16, #tpu.memory_space<vmem>>, vector<64x32xbf16>
    %cst = arith.constant dense<0.000000e+00> : vector<18x32xf32>
    %2 = tpu.matmul %0, %1, %cst {dimension_numbers = #tpu.dot_dimension_numbers<[1], [0], [0], [1], [0, 0, 1, 1], [], []>} : vector<18x64xbf16>, vector<64x32xbf16>, vector<18x32xf32> -> vector<18x32xf32>
    %c0_3 = arith.constant 0 : index
    %c0_4 = arith.constant 0 : index
    %3 = vector.load %arg4[%c0_3, %c0_4] : memref<1x32xf32, #tpu.memory_space<vmem>>, vector<1x32xf32>
    %4 = vector.broadcast %3 : vector<1x32xf32> to vector<18x32xf32>
    %5 = arith.addf %2, %4 : vector<18x32xf32>
    %c0_5 = arith.constant 0 : index
    %c0_6 = arith.constant 0 : index
    %6 = vector.load %arg5[%c0_5, %c0_6] : memref<18x32xbf16, #tpu.memory_space<vmem>>, vector<18x32xbf16>
    %7 = arith.extf %6 : vector<18x32xbf16> to vector<18x32xf32>
    %8 = arith.addf %5, %7 : vector<18x32xf32>
    %9 = arith.truncf %8 : vector<18x32xf32> to vector<18x32xbf16>
    %c0_7 = arith.constant 0 : index
    %c0_8 = arith.constant 0 : index
    %10 = vector.load %arg6[%c0_7, %c0_8] : memref<18x32xbf16, #tpu.memory_space<vmem>>, vector<18x32xbf16>
    tpu.vector_store %arg6[%c0_7, %c0_8], %9 {strides = array<i32>} : memref<18x32xbf16, #tpu.memory_space<vmem>>, vector<18x32xbf16>,
    return
  }
  func.func @transform_0(%arg0: i32, %arg1: i32) -> (i32, i32) {
    %c0_i32 = arith.constant 0 : i32
    %c0_i32_0 = arith.constant 0 : i32
    return %arg0, %c0_i32 : i32, i32
  }
  func.func @transform_1(%arg0: i32, %arg1: i32) -> (i32, i32) {
    %c0_i32 = arith.constant 0 : i32
    %c0_i32_0 = arith.constant 0 : i32
    return %c0_i32, %arg1 : i32, i32
  }
  func.func @transform_2(%arg0: i32, %arg1: i32) -> (i32, i32) {
    %c0_i32 = arith.constant 0 : i32
    %c0_i32_0 = arith.constant 0 : i32
    return %c0_i32, %arg1 : i32, i32
  }
  func.func @transform_3(%arg0: i32, %arg1: i32) -> (i32, i32) {
    %c0_i32 = arith.constant 0 : i32
    return %arg0, %arg1 : i32, i32
  }
  func.func @transform_4(%arg0: i32, %arg1: i32) -> (i32, i32) {
    %c0_i32 = arith.constant 0 : i32
    return %arg0, %arg1 : i32, i32
  }
}

module attributes {stable_mosaic.version = 11 : i64} {
  func.func @kernel(%arg0: i32, %arg1: i32, %arg2: memref<2x32xbf16, #tpu.memory_space<vmem>>, %arg3: memref<32x128xbf16, #tpu.memory_space<vmem>>, %arg4: memref<1x128xf32, #tpu.memory_space<vmem>>, %arg5: memref<1x32xf32, #tpu.memory_space<vmem>>, %arg6: memref<1x32xf32, #tpu.memory_space<vmem>>, %arg7: memref<2x128xf32, #tpu.memory_space<vmem>>) attributes {dimension_semantics = [#tpu.dimension_semantics<parallel>, #tpu.dimension_semantics<parallel>], iteration_bounds = array<i64: 1, 1>, scalar_prefetch = 0 : i64, scratch_operands = 0 : i64, tpu.core_type = #tpu.core_type<tc>, window_params = [{transform_indices = @transform_0, window_bounds = array<i64: 2, 32>}, {transform_indices = @transform_1, window_bounds = array<i64: 32, 128>}, {transform_indices = @transform_2, window_bounds = array<i64: 1, 128>}, {pipeline_mode = #tpu.pipeline_mode<synchronous>, transform_indices = @transform_3, window_bounds = array<i64: 1, 32>}, {pipeline_mode = #tpu.pipeline_mode<synchronous>, transform_indices = @transform_4, window_bounds = array<i64: 1, 32>}, {transform_indices = @transform_5, window_bounds = array<i64: 2, 128>}]} {
    %c0 = arith.constant 0 : index
    %c0_0 = arith.constant 0 : index
    %0 = vector.load %arg2[%c0, %c0_0] : memref<2x32xbf16, #tpu.memory_space<vmem>>, vector<2x32xbf16>
    %1 = arith.extf %0 : vector<2x32xbf16> to vector<2x32xf32>
    %cst = arith.constant dense<0.000000e+00> : vector<2xf32>
    %2 = vector.multi_reduction <add>, %1, %cst [1] : vector<2x32xf32> to vector<2xf32>
    %3 = vector.shape_cast %2 : vector<2xf32> to vector<2x1xf32>
    %cst_1 = arith.constant 3.200000e+01 : f32
    %4 = vector.broadcast %cst_1 : f32 to vector<2x1xf32>
    %5 = arith.divf %3, %4 : vector<2x1xf32>
    %6 = vector.broadcast %5 : vector<2x1xf32> to vector<2x32xf32>
    %7 = arith.subf %1, %6 : vector<2x32xf32>
    %8 = arith.mulf %7, %7 : vector<2x32xf32>
    %cst_2 = arith.constant dense<0.000000e+00> : vector<2xf32>
    %9 = vector.multi_reduction <add>, %8, %cst_2 [1] : vector<2x32xf32> to vector<2xf32>
    %10 = vector.shape_cast %9 : vector<2xf32> to vector<2x1xf32>
    %cst_3 = arith.constant 3.200000e+01 : f32
    %11 = vector.broadcast %cst_3 : f32 to vector<2x1xf32>
    %12 = arith.divf %10, %11 : vector<2x1xf32>
    %cst_4 = arith.constant 9.99999974E-6 : f32
    %13 = vector.broadcast %cst_4 : f32 to vector<2x1xf32>
    %14 = arith.addf %12, %13 : vector<2x1xf32>
    %15 = math.rsqrt %14 : vector<2x1xf32>
    %16 = vector.broadcast %15 : vector<2x1xf32> to vector<2x32xf32>
    %17 = arith.mulf %7, %16 : vector<2x32xf32>
    %c0_5 = arith.constant 0 : index
    %c0_6 = arith.constant 0 : index
    %18 = vector.load %arg5[%c0_5, %c0_6] : memref<1x32xf32, #tpu.memory_space<vmem>>, vector<1x32xf32>
    %19 = vector.broadcast %18 : vector<1x32xf32> to vector<2x32xf32>
    %20 = arith.mulf %17, %19 : vector<2x32xf32>
    %c0_7 = arith.constant 0 : index
    %c0_8 = arith.constant 0 : index
    %21 = vector.load %arg6[%c0_7, %c0_8] : memref<1x32xf32, #tpu.memory_space<vmem>>, vector<1x32xf32>
    %22 = vector.broadcast %21 : vector<1x32xf32> to vector<2x32xf32>
    %23 = arith.addf %20, %22 : vector<2x32xf32>
    %24 = arith.truncf %23 : vector<2x32xf32> to vector<2x32xbf16>
    %c0_9 = arith.constant 0 : index
    %c0_10 = arith.constant 0 : index
    %25 = vector.load %arg3[%c0_9, %c0_10] : memref<32x128xbf16, #tpu.memory_space<vmem>>, vector<32x128xbf16>
    %cst_11 = arith.constant dense<0.000000e+00> : vector<2x128xf32>
    %26 = tpu.matmul %24, %25, %cst_11 {dimension_numbers = #tpu.dot_dimension_numbers<[1], [0], [0], [1], [0, 0, 1, 1], [], []>} : vector<2x32xbf16>, vector<32x128xbf16>, vector<2x128xf32> -> vector<2x128xf32>
    %c0_12 = arith.constant 0 : index
    %c0_13 = arith.constant 0 : index
    %27 = vector.load %arg4[%c0_12, %c0_13] : memref<1x128xf32, #tpu.memory_space<vmem>>, vector<1x128xf32>
    %28 = vector.broadcast %27 : vector<1x128xf32> to vector<2x128xf32>
    %29 = arith.addf %26, %28 : vector<2x128xf32>
    %c0_14 = arith.constant 0 : index
    %c0_15 = arith.constant 0 : index
    %30 = vector.load %arg7[%c0_14, %c0_15] : memref<2x128xf32, #tpu.memory_space<vmem>>, vector<2x128xf32>
    tpu.vector_store %arg7[%c0_14, %c0_15], %29 {strides = array<i32>} : memref<2x128xf32, #tpu.memory_space<vmem>>, vector<2x128xf32>,
    return
  }
  func.func @transform_0(%arg0: i32, %arg1: i32) -> (i32, i32) {
    %c0_i32 = arith.constant 0 : i32
    %c0_i32_0 = arith.constant 0 : i32
    return %arg0, %c0_i32 : i32, i32
  }
  func.func @transform_1(%arg0: i32, %arg1: i32) -> (i32, i32) {
    %c0_i32 = arith.constant 0 : i32
    %c0_i32_0 = arith.constant 0 : i32
    return %c0_i32, %arg1 : i32, i32
  }
  func.func @transform_2(%arg0: i32, %arg1: i32) -> (i32, i32) {
    %c0_i32 = arith.constant 0 : i32
    %c0_i32_0 = arith.constant 0 : i32
    return %c0_i32, %arg1 : i32, i32
  }
  func.func @transform_3(%arg0: i32, %arg1: i32) -> (i32, i32) {
    %c0_i32 = arith.constant 0 : i32
    %c0_i32_0 = arith.constant 0 : i32
    %c0_i32_1 = arith.constant 0 : i32
    return %c0_i32, %c0_i32_0 : i32, i32
  }
  func.func @transform_4(%arg0: i32, %arg1: i32) -> (i32, i32) {
    %c0_i32 = arith.constant 0 : i32
    %c0_i32_0 = arith.constant 0 : i32
    %c0_i32_1 = arith.constant 0 : i32
    return %c0_i32, %c0_i32_0 : i32, i32
  }
  func.func @transform_5(%arg0: i32, %arg1: i32) -> (i32, i32) {
    %c0_i32 = arith.constant 0 : i32
    return %arg0, %arg1 : i32, i32
  }
}

</mosaic_0001>

<llo_original>
// kernel: timesformer_forward.18
$region0: #{timesformer_forward.18}
  #allocation0 [shape = 'u32[]', space=smem, size = 0x4, offset = 0x4, fixed_abs, tag = 'smem constant byte address 0x4 - core index']
  #allocation1 [shape = 'u32[144,128]{1,0:T(1,128)}', space=vmem, size = 0x12000, scoped, tag = 'internal scratch']
  %s0 = inlined_call_operand.vmem [shape: bf16[16,192], index: 0, kind: input, shape index: {}]
  %s1 = inlined_call_operand.vmem [shape: bf16[192,32], index: 1, kind: input, shape index: {}]
  %s2 = inlined_call_operand.vmem [shape: f32[1,32], index: 2, kind: input, shape index: {}]
  %s3 = inlined_call_operand.vmem [shape: bf16[16,32], index: 3, kind: output, shape index: {}]
  %s4 = sld [smem:[#allocation0]]
  $region22: #{timesformer_forward.18} parent=0
    _
  %s6 = ssub.s32 1, %s4
  %s7 = scalar_select 0, %s6, %s4
  // Predicated region
  $region2: #{timesformer_forward.18} parent=0 // pred_check
    _
  $region3: #{timesformer_forward.18} parent=0 // pred_check_branch
    %9 = sbr.rel (0) target = $region5
  $region4: #{timesformer_forward.18} parent=0 // pred_region
    _
  $region5: #{timesformer_forward.18} parent=0 // pred_fallthru
    _
  // Predicated region
  $region6: #{timesformer_forward.18} parent=0 // pred_check
    _
  $region7: #{timesformer_forward.18} parent=0 // pred_check_branch
    %11 = sbr.rel (0) target = $region9
  $region8: #{timesformer_forward.18} parent=0 // pred_region
    _
  $region9: #{timesformer_forward.18} parent=0 // pred_fallthru
    _
  // Predicated region
  $region10: #{timesformer_forward.18} parent=0 // pred_check
    _
  $region11: #{timesformer_forward.18} parent=0 // pred_check_branch
    %13 = sbr.rel (0) target = $region13
  $region12: #{timesformer_forward.18} parent=0 // pred_region
    _
  $region13: #{timesformer_forward.18} parent=0 // pred_fallthru
    _
  %v15 = vld [vmem:[%s0] sm:$0xff]
  %v16 = vld [vmem:[%s0 + $0x8] sm:$0xff]
  %v17 = vld [vmem:[%s1] sm:$0xf]
  %v18 = vld [vmem:[%s1 + $0x4] sm:$0xf]
  %v19 = vld [vmem:[%s1 + $0x8] sm:$0xf]
  %v20 = vld [vmem:[%s1 + $0xc] sm:$0xf]
  %v21 = vld [vmem:[%s1 + $0x10] sm:$0xf]
  %v22 = vld [vmem:[%s1 + $0x14] sm:$0xf]
  %v23 = vld [vmem:[%s1 + $0x18] sm:$0xf]
  %v24 = vld [vmem:[%s1 + $0x1c] sm:$0xf]
  %v25 = vld [vmem:[%s1 + $0x20] sm:$0xf]
  %v26 = vld [vmem:[%s1 + $0x24] sm:$0xf]
  %v27 = vld [vmem:[%s1 + $0x28] sm:$0xf]
  %v28 = vld [vmem:[%s1 + $0x2c] sm:$0xf]
  %v29 = vld [vmem:[%s1 + $0x30] sm:$0xf]
  %v30 = vld [vmem:[%s1 + $0x34] sm:$0xf]
  %v31 = vld [vmem:[%s1 + $0x38] sm:$0xf]
  %v32 = vld [vmem:[%s1 + $0x3c] sm:$0xf]
  %v33 = vld [vmem:[%s1 + $0x40] sm:$0xf]
  %v34 = vld [vmem:[%s1 + $0x44] sm:$0xf]
  %v35 = vld [vmem:[%s1 + $0x48] sm:$0xf]
  %v36 = vld [vmem:[%s1 + $0x4c] sm:$0xf]
  %v37 = vld [vmem:[%s1 + $0x50] sm:$0xf]
  %v38 = vld [vmem:[%s1 + $0x54] sm:$0xf]
  %v39 = vld [vmem:[%s1 + $0x58] sm:$0xf]
  %v40 = vld [vmem:[%s1 + $0x5c] sm:$0xf]
  %v41 = vld [vmem:[%s2] sm:$0x1]
  %v43 = vlaneseq
  %v44 = vshrl.u32 %v43, 7
  %v45 = vsub.s32 0, %v44
  %v46 = vrot.slane %v41, %v45
  %v50 = vunpack.c.l.b16 %v15
  %v51 = vunpack.c.h.b16 %v15
  %v52 = vunpack.c.l.b16 %v16
  %v53 = vunpack.c.h.b16 %v16
  %v54 = vpack.c.b16 %v52, %v50
  %v55 = vpack.c.b16 %v53, %v51
  %v81 = vunpack.c.l.b16 %v17
  %v82 = vunpack.c.l.b16 %v18
  %v83 = vunpack.c.l.b16 %v19
  %v84 = vunpack.c.l.b16 %v20
  %v85 = vunpack.c.l.b16 %v21
  %v86 = vunpack.c.l.b16 %v22
  %v87 = vunpack.c.l.b16 %v23
  %v88 = vunpack.c.l.b16 %v24
  %v89 = vunpack.c.l.b16 %v25
  %v90 = vunpack.c.l.b16 %v26
  %v91 = vunpack.c.l.b16 %v27
  %v92 = vunpack.c.l.b16 %v28
  %v93 = vunpack.c.l.b16 %v29
  %v94 = vunpack.c.l.b16 %v30
  %v95 = vunpack.c.l.b16 %v31
  %v96 = vunpack.c.l.b16 %v32
  %v97 = vunpack.c.l.b16 %v33
  %v98 = vunpack.c.l.b16 %v34
  %v99 = vunpack.c.l.b16 %v35
  %v100 = vunpack.c.l.b16 %v36
  %v101 = vunpack.c.l.b16 %v37
  %v102 = vunpack.c.l.b16 %v38
  %v103 = vunpack.c.l.b16 %v39
  %v104 = vunpack.c.l.b16 %v40
  %v105 = vpack.c.b16 %v82, %v81
  %v106 = vpack.c.b16 %v84, %v83
  %v107 = vpack.c.b16 %v86, %v85
  %v108 = vpack.c.b16 %v88, %v87
  %v109 = vpack.c.b16 %v90, %v89
  %v110 = vpack.c.b16 %v92, %v91
  %v111 = vpack.c.b16 %v94, %v93
  %v112 = vpack.c.b16 %v96, %v95
  %v113 = vpack.c.b16 %v98, %v97
  %v114 = vpack.c.b16 %v100, %v99
  %v115 = vpack.c.b16 %v102, %v101
  %v116 = vpack.c.b16 %v104, %v103
  %vm129 = vcmask 523264
  %v131 = vsel %vm129, %v55, 0
  %133 = vmatprep.subr.bf16.mxu0 0
  %134 = vmatpush1.bf16.msra.mxu0 %v112
  %135 = vmatprep.subr.bf16.mxu0 0
  %136 = vmatpush1.bf16.msra.mxu0 %v111
  %137 = vmatprep.subr.bf16.mxu0 0
  %138 = vmatpush1.bf16.msra.mxu0 %v110
  %139 = vmatprep.subr.bf16.mxu0 0
  %140 = vmatpush1.bf16.msra.mxu0 %v109
  %141 = vmatprep.subr.bf16.mxu0 0
  %142 = vmatpush1.bf16.msra.mxu0 %v108
  %143 = vmatprep.subr.bf16.mxu0 0
  %144 = vmatpush1.bf16.msra.mxu0 %v107
  %145 = vmatprep.subr.bf16.mxu0 0
  %146 = vmatpush1.bf16.msra.mxu0 %v106
  %147 = vmatprep.subr.bf16.mxu0 0
  %148 = vmatpush1.bf16.msra.mxu0 %v105
  %149 = vmatprep.subr.bf16.mxu0 0
  %150 = vmatpush2.bf16.msra.mxu0 0
  %151 = vmatprep.subr.bf16.mxu0 0
  %152 = vmatpush2.bf16.msra.mxu0 0
  %153 = vmatprep.subr.bf16.mxu0 0
  %154 = vmatpush2.bf16.msra.mxu0 0
  %155 = vmatprep.subr.bf16.mxu0 0
  %156 = vmatpush2.bf16.msra.mxu0 0
  %157 = vmatprep.subr.bf16.mxu0 0
  %158 = vmatpush2.bf16.msra.mxu0 %v116
  %159 = vmatprep.subr.bf16.mxu0 0
  %160 = vmatpush2.bf16.msra.mxu0 %v115
  %161 = vmatprep.subr.bf16.mxu0 0
  %162 = vmatpush2.bf16.msra.mxu0 %v114
  %163 = vmatprep.subr.bf16.mxu0 0
  %164 = vmatpush2.bf16.msra.mxu0 %v113
  %165 = vmatprep.mubr.bf16.mxu0 %v131
  %166 = vmatmul.mubr.bf16.gmra.mxu0 %v54
  %v167 = vpop.f32.mrf.mxu0
  %v168 = vadd.f32 %v46, %v167
  %v169 = vpop.f32.mrf.mxu0
  %v170 = vpop.f32.mrf.mxu0
  %v171 = vadd.f32 %v46, %v170
  %v172 = vpop.f32.mrf.mxu0
  %173 = vdwg.mxu0
  %v174 = vpack.c.bf16 %v171, %v168
  %v176 = vunpack.c.l.b16 %v174
  %v177 = vunpack.c.h.b16 %v174
  %v178 = vpack.c.b16 %v176, %v176
  %v179 = vpack.c.b16 %v177, %v177
  %vm182 = vcmask 257024
  %183 = vst.msk [vmem:[%s3] sm:$0xf] %vm182, %v178
  %184 = vst.msk [vmem:[%s3 + $0x4] sm:$0xf] %vm182, %v179
  // Predicated region
  $region14: #{timesformer_forward.18} parent=0 // pred_check
    _
  $region15: #{timesformer_forward.18} parent=0 // pred_check_branch
    %186 = sbr.rel (0) target = $region17
  $region16: #{timesformer_forward.18} parent=0 // pred_region
    _
  $region17: #{timesformer_forward.18} parent=0 // pred_fallthru
    _
  // Predicated region
  $region18: #{timesformer_forward.18} parent=0 // pred_check
    _
  $region19: #{timesformer_forward.18} parent=0 // pred_check_branch
    %188 = sbr.rel (0) target = $region21
  $region20: #{timesformer_forward.18} parent=0 // pred_region
    _
  $region21: #{timesformer_forward.18} parent=0 // pred_fallthru
    _

// kernel: timesformer_forward.19
$region0: #{timesformer_forward.19}
  #allocation0 [shape = 'u32[]', space=smem, size = 0x4, offset = 0x4, fixed_abs, tag = 'smem constant byte address 0x4 - core index']
  #allocation1 [shape = 'u32[144,128]{1,0:T(1,128)}', space=vmem, size = 0x12000, scoped, tag = 'internal scratch']
  %s0 = inlined_call_operand.vmem [shape: bf16[18,32], index: 0, kind: input, shape index: {}]
  %s1 = inlined_call_operand.vmem [shape: bf16[32,96], index: 1, kind: input, shape index: {}]
  %s2 = inlined_call_operand.vmem [shape: f32[1,32], index: 2, kind: input, shape index: {}]
  %s3 = inlined_call_operand.vmem [shape: f32[1,32], index: 3, kind: input, shape index: {}]
  %s4 = inlined_call_operand.vmem [shape: bf16[18,96], index: 4, kind: output, shape index: {}]
  %s5 = sld [smem:[#allocation0]]
  $region26: #{timesformer_forward.19} parent=0
    _
  %s7 = ssub.s32 1, %s5
  %s8 = scalar_select 0, %s7, %s5
  // Predicated region
  $region2: #{timesformer_forward.19} parent=0 // pred_check
    _
  $region3: #{timesformer_forward.19} parent=0 // pred_check_branch
    %10 = sbr.rel (0) target = $region5
  $region4: #{timesformer_forward.19} parent=0 // pred_region
    _
  $region5: #{timesformer_forward.19} parent=0 // pred_fallthru
    _
  // Predicated region
  $region6: #{timesformer_forward.19} parent=0 // pred_check
    _
  $region7: #{timesformer_forward.19} parent=0 // pred_check_branch
    %12 = sbr.rel (0) target = $region9
  $region8: #{timesformer_forward.19} parent=0 // pred_region
    _
  $region9: #{timesformer_forward.19} parent=0 // pred_fallthru
    _
  // Predicated region
  $region10: #{timesformer_forward.19} parent=0 // pred_check
    _
  $region11: #{timesformer_forward.19} parent=0 // pred_check_branch
    %14 = sbr.rel (0) target = $region13
  $region12: #{timesformer_forward.19} parent=0 // pred_region
    _
  $region13: #{timesformer_forward.19} parent=0 // pred_fallthru
    _
  // Predicated region
  $region14: #{timesformer_forward.19} parent=0 // pred_check
    _
  $region15: #{timesformer_forward.19} parent=0 // pred_check_branch
    %16 = sbr.rel (0) target = $region17
  $region16: #{timesformer_forward.19} parent=0 // pred_region
    _
  $region17: #{timesformer_forward.19} parent=0 // pred_fallthru
    _
  %v18 = vld [vmem:[%s0] sm:$0xf]
  %v19 = vld [vmem:[%s0 + $0x4] sm:$0xf]
  %v20 = vld [vmem:[%s0 + $0x8] sm:$0x1]
  %v21 = vunpack.c.l.bf16 %v18
  %v22 = vunpack.c.l.bf16 %v19
  %v23 = vunpack.c.l.bf16 %v20
  %vm24 = vcmask 261120
  %v25 = vsel %vm24, %v21, 0.0
  %26 = vadd.xlane.f32.xlu0 %v25
  %v27 = vpop.xlane.xlu0 %26
  %v28 = vsel %vm24, %v22, 0.0
  %29 = vadd.xlane.f32.xlu0 %v28
  %v30 = vpop.xlane.xlu0 %29
  %vm31 = vcmask 254976
  %v32 = vsel %vm31, %v23, 0.0
  %33 = vadd.xlane.f32.xlu0 %v32
  %v34 = vpop.xlane.xlu0 %33
  %v35 = vrcp.pop 32.0
  %v36 = vmul.f32 %v27, %v35
  %v37 = vmul.f32 %v30, %v35
  %v38 = vmul.f32 %v34, %v35
  %v39 = vsub.f32 %v21, %v36
  %v40 = vsub.f32 %v22, %v37
  %v41 = vsub.f32 %v23, %v38
  %v42 = vmul.f32 %v39, %v39
  %v43 = vmul.f32 %v40, %v40
  %v44 = vmul.f32 %v41, %v41
  %v45 = vsel %vm24, %v42, 0.0
  %46 = vadd.xlane.f32.xlu0 %v45
  %v47 = vpop.xlane.xlu0 %46
  %v48 = vsel %vm24, %v43, 0.0
  %49 = vadd.xlane.f32.xlu0 %v48
  %v50 = vpop.xlane.xlu0 %49
  %v51 = vsel %vm31, %v44, 0.0
  %52 = vadd.xlane.f32.xlu0 %v51
  %v53 = vpop.xlane.xlu0 %52
  %v54 = vmul.f32 %v47, %v35
  %v55 = vmul.f32 %v50, %v35
  %v56 = vmul.f32 %v53, %v35
  %v57 = vadd.f32 %v54, 1e-05
  %v58 = vadd.f32 %v55, 1e-05
  %v59 = vadd.f32 %v56, 1e-05
  %v60 = vrsqrt.pop %v57
  %v61 = vrsqrt.pop %v58
  %v62 = vrsqrt.pop %v59
  %v63 = vmul.f32 %v39, %v60
  %v64 = vmul.f32 %v40, %v61
  %v65 = vmul.f32 %v41, %v62
  %v66 = vld [vmem:[%s2] sm:$0x1]
  %v68 = vlaneseq
  %v69 = vshrl.u32 %v68, 7
  %v70 = vsub.s32 0, %v69
  %v71 = vrot.slane %v66, %v70
  %v73 = vmul.f32 %v63, %v71
  %v74 = vmul.f32 %v64, %v71
  %v75 = vmul.f32 %v65, %v71
  %v76 = vld [vmem:[%s3] sm:$0x1]
  %v78 = vlaneseq
  %v79 = vshrl.u32 %v78, 7
  %v80 = vsub.s32 0, %v79
  %v81 = vrot.slane %v76, %v80
  %v83 = vadd.f32 %v73, %v81
  %v84 = vadd.f32 %v74, %v81
  %v85 = vadd.f32 %v75, %v81
  %v86 = vpack.c.bf16 %v84, %v83
  %v87 = vpack.c.bf16 %v85, %v85
  %v88 = vld [vmem:[%s1] sm:$0xf]
  %v89 = vld [vmem:[%s1 + $0x4] sm:$0xf]
  %v90 = vld [vmem:[%s1 + $0x8] sm:$0xf]
  %v91 = vld [vmem:[%s1 + $0xc] sm:$0xf]
  %v96 = vunpack.c.l.b16 %v88
  %v97 = vunpack.c.l.b16 %v89
  %v98 = vunpack.c.l.b16 %v90
  %v99 = vunpack.c.l.b16 %v91
  %v100 = vpack.c.b16 %v97, %v96
  %v101 = vpack.c.b16 %v99, %v98
  %v105 = vsel %vm24, %v86, 0
  %v108 = vsel %vm24, %v87, 0
  %110 = vmatprep.subr.bf16.mxu0 0
  %111 = vmatpush1.bf16.msra.mxu0 0
  %112 = vmatprep.subr.bf16.mxu0 0
  %113 = vmatpush1.bf16.msra.mxu0 0
  %114 = vmatprep.subr.bf16.mxu0 0
  %115 = vmatpush1.bf16.msra.mxu0 0
  %116 = vmatprep.subr.bf16.mxu0 0
  %117 = vmatpush1.bf16.msra.mxu0 0
  %118 = vmatprep.subr.bf16.mxu0 0
  %119 = vmatpush1.bf16.msra.mxu0 0
  %120 = vmatprep.subr.bf16.mxu0 0
  %121 = vmatpush1.bf16.msra.mxu0 0
  %122 = vmatprep.subr.bf16.mxu0 0
  %123 = vmatpush1.bf16.msra.mxu0 %v101
  %124 = vmatprep.subr.bf16.mxu0 0
  %125 = vmatpush1.bf16.msra.mxu0 %v100
  %126 = vmatprep.subr.bf16.mxu0 0
  %127 = vmatpush2.bf16.msra.mxu0 0
  %128 = vmatprep.subr.bf16.mxu0 0
  %129 = vmatpush2.bf16.msra.mxu0 0
  %130 = vmatprep.subr.bf16.mxu0 0
  %131 = vmatpush2.bf16.msra.mxu0 0
  %132 = vmatprep.subr.bf16.mxu0 0
  %133 = vmatpush2.bf16.msra.mxu0 0
  %134 = vmatprep.subr.bf16.mxu0 0
  %135 = vmatpush2.bf16.msra.mxu0 0
  %136 = vmatprep.subr.bf16.mxu0 0
  %137 = vmatpush2.bf16.msra.mxu0 0
  %138 = vmatprep.subr.bf16.mxu0 0
  %139 = vmatpush2.bf16.msra.mxu0 0
  %140 = vmatprep.subr.bf16.mxu0 0
  %141 = vmatpush2.bf16.msra.mxu0 0
  %142 = vmatprep.mubr.bf16.mxu0 0
  %143 = vmatmul.mubr.bf16.gmra.mxu0 %v105
  %v144 = vpop.f32.mrf.mxu0
  %v145 = vadd.f32 0.0, %v144
  %v146 = vpop.f32.mrf.mxu0
  %v147 = vpop.f32.mrf.mxu0
  %v148 = vadd.f32 0.0, %v147
  %v149 = vpop.f32.mrf.mxu0
  %150 = vmatprep.mubr.bf16.mxu0 0
  %151 = vmatmul.mubr.bf16.gmra.mxu0 %v108
  %v152 = vpop.f32.mrf.mxu0
  %v153 = vadd.f32 0.0, %v152
  %v154 = vpop.f32.mrf.mxu0
  %v155 = vpop.f32.mrf.mxu0
  %v156 = vpop.f32.mrf.mxu0
  %157 = vdwg.mxu0
  %v158 = vpack.c.bf16 %v148, %v145
  %v159 = vpack.c.bf16 %v153, %v153
  %v162 = vunpack.c.l.b16 %v158
  %v163 = vunpack.c.h.b16 %v158
  %v164 = vunpack.c.l.b16 %v159
  %v165 = vpack.c.b16 %v162, %v162
  %v166 = vpack.c.b16 %v163, %v163
  %v167 = vpack.c.b16 %v164, %v164
  %vm171 = vcmask 781312
  %172 = vst.msk [vmem:[%s4] sm:$0xf] %vm171, %v165
  %173 = vst.msk [vmem:[%s4 + $0x4] sm:$0xf] %vm171, %v166
  %vm174 = vcmask 778240
  %175 = vst.msk [vmem:[%s4 + $0x8] sm:$0x1] %vm174, %v167
  // Predicated region
  $region18: #{timesformer_forward.19} parent=0 // pred_check
    _
  $region19: #{timesformer_forward.19} parent=0 // pred_check_branch
    %177 = sbr.rel (0) target = $region21
  $region20: #{timesformer_forward.19} parent=0 // pred_region
    _
  $region21: #{timesformer_forward.19} parent=0 // pred_fallthru
    _
  // Predicated region
  $region22: #{timesformer_forward.19} parent=0 // pred_check
    _
  $region23: #{timesformer_forward.19} parent=0 // pred_check_branch
    %179 = sbr.rel (0) target = $region25
  $region24: #{timesformer_forward.19} parent=0 // pred_region
    _
  $region25: #{timesformer_forward.19} parent=0 // pred_fallthru
    _

// kernel: timesformer_forward.21
$region0: #{timesformer_forward.21}
  #allocation0 [shape = 'u32[]', space=smem, size = 0x4, offset = 0x4, fixed_abs, tag = 'smem constant byte address 0x4 - core index']
  #allocation1 [shape = 'u32[144,128]{1,0:T(1,128)}', space=vmem, size = 0x12000, scoped, tag = 'internal scratch']
  %s0 = inlined_call_operand.vmem [shape: bf16[18,32], index: 0, kind: input, shape index: {}]
  %s1 = inlined_call_operand.vmem [shape: bf16[32,32], index: 1, kind: input, shape index: {}]
  %s2 = inlined_call_operand.vmem [shape: bf16[18,32], index: 2, kind: input, shape index: {}]
  %s3 = inlined_call_operand.vmem [shape: bf16[18,32], index: 3, kind: output, shape index: {}]
  %s4 = sld [smem:[#allocation0]]
  $region22: #{timesformer_forward.21} parent=0
    _
  %s6 = ssub.s32 1, %s4
  %s7 = scalar_select 0, %s6, %s4
  // Predicated region
  $region2: #{timesformer_forward.21} parent=0 // pred_check
    _
  $region3: #{timesformer_forward.21} parent=0 // pred_check_branch
    %9 = sbr.rel (0) target = $region5
  $region4: #{timesformer_forward.21} parent=0 // pred_region
    _
  $region5: #{timesformer_forward.21} parent=0 // pred_fallthru
    _
  // Predicated region
  $region6: #{timesformer_forward.21} parent=0 // pred_check
    _
  $region7: #{timesformer_forward.21} parent=0 // pred_check_branch
    %11 = sbr.rel (0) target = $region9
  $region8: #{timesformer_forward.21} parent=0 // pred_region
    _
  $region9: #{timesformer_forward.21} parent=0 // pred_fallthru
    _
  // Predicated region
  $region10: #{timesformer_forward.21} parent=0 // pred_check
    _
  $region11: #{timesformer_forward.21} parent=0 // pred_check_branch
    %13 = sbr.rel (0) target = $region13
  $region12: #{timesformer_forward.21} parent=0 // pred_region
    _
  $region13: #{timesformer_forward.21} parent=0 // pred_fallthru
    _
  %v15 = vld [vmem:[%s0] sm:$0xf]
  %v16 = vld [vmem:[%s0 + $0x4] sm:$0xf]
  %v17 = vld [vmem:[%s0 + $0x8] sm:$0x1]
  %v18 = vld [vmem:[%s1] sm:$0xf]
  %v19 = vld [vmem:[%s1 + $0x4] sm:$0xf]
  %v20 = vld [vmem:[%s1 + $0x8] sm:$0xf]
  %v21 = vld [vmem:[%s1 + $0xc] sm:$0xf]
  %v22 = vld [vmem:[%s2] sm:$0xf]
  %v23 = vld [vmem:[%s2 + $0x4] sm:$0xf]
  %v24 = vld [vmem:[%s2 + $0x8] sm:$0x1]
  %v25 = vunpack.c.l.bf16 %v22
  %v26 = vunpack.c.l.bf16 %v23
  %v27 = vunpack.c.l.bf16 %v24
  %v31 = vunpack.c.l.b16 %v15
  %v32 = vunpack.c.l.b16 %v16
  %v33 = vunpack.c.l.b16 %v17
  %v34 = vpack.c.b16 %v32, %v31
  %v35 = vpack.c.b16 %v33, %v33
  %v40 = vunpack.c.l.b16 %v18
  %v41 = vunpack.c.l.b16 %v19
  %v42 = vunpack.c.l.b16 %v20
  %v43 = vunpack.c.l.b16 %v21
  %v44 = vpack.c.b16 %v41, %v40
  %v45 = vpack.c.b16 %v43, %v42
  %vm48 = vcmask 261120
  %v50 = vsel %vm48, %v34, 0
  %v53 = vsel %vm48, %v35, 0
  %55 = vmatprep.subr.bf16.mxu0 0
  %56 = vmatpush1.bf16.msra.mxu0 0
  %57 = vmatprep.subr.bf16.mxu0 0
  %58 = vmatpush1.bf16.msra.mxu0 0
  %59 = vmatprep.subr.bf16.mxu0 0
  %60 = vmatpush1.bf16.msra.mxu0 0
  %61 = vmatprep.subr.bf16.mxu0 0
  %62 = vmatpush1.bf16.msra.mxu0 0
  %63 = vmatprep.subr.bf16.mxu0 0
  %64 = vmatpush1.bf16.msra.mxu0 0
  %65 = vmatprep.subr.bf16.mxu0 0
  %66 = vmatpush1.bf16.msra.mxu0 0
  %67 = vmatprep.subr.bf16.mxu0 0
  %68 = vmatpush1.bf16.msra.mxu0 %v45
  %69 = vmatprep.subr.bf16.mxu0 0
  %70 = vmatpush1.bf16.msra.mxu0 %v44
  %71 = vmatprep.subr.bf16.mxu0 0
  %72 = vmatpush2.bf16.msra.mxu0 0
  %73 = vmatprep.subr.bf16.mxu0 0
  %74 = vmatpush2.bf16.msra.mxu0 0
  %75 = vmatprep.subr.bf16.mxu0 0
  %76 = vmatpush2.bf16.msra.mxu0 0
  %77 = vmatprep.subr.bf16.mxu0 0
  %78 = vmatpush2.bf16.msra.mxu0 0
  %79 = vmatprep.subr.bf16.mxu0 0
  %80 = vmatpush2.bf16.msra.mxu0 0
  %81 = vmatprep.subr.bf16.mxu0 0
  %82 = vmatpush2.bf16.msra.mxu0 0
  %83 = vmatprep.subr.bf16.mxu0 0
  %84 = vmatpush2.bf16.msra.mxu0 0
  %85 = vmatprep.subr.bf16.mxu0 0
  %86 = vmatpush2.bf16.msra.mxu0 0
  %87 = vmatprep.mubr.bf16.mxu0 0
  %88 = vmatmul.mubr.bf16.gmra.mxu0 %v50
  %v89 = vpop.f32.mrf.mxu0
  %v90 = vadd.f32 %v25, %v89
  %v91 = vpop.f32.mrf.mxu0
  %v92 = vpop.f32.mrf.mxu0
  %v93 = vadd.f32 %v26, %v92
  %v94 = vpop.f32.mrf.mxu0
  %95 = vmatprep.mubr.bf16.mxu0 0
  %96 = vmatmul.mubr.bf16.gmra.mxu0 %v53
  %v97 = vpop.f32.mrf.mxu0
  %v98 = vadd.f32 %v27, %v97
  %v99 = vpop.f32.mrf.mxu0
  %v100 = vpop.f32.mrf.mxu0
  %v101 = vpop.f32.mrf.mxu0
  %102 = vdwg.mxu0
  %v103 = vpack.c.bf16 %v93, %v90
  %v104 = vpack.c.bf16 %v98, %v98
  %v107 = vunpack.c.l.b16 %v103
  %v108 = vunpack.c.h.b16 %v103
  %v109 = vunpack.c.l.b16 %v104
  %v110 = vpack.c.b16 %v107, %v107
  %v111 = vpack.c.b16 %v108, %v108
  %v112 = vpack.c.b16 %v109, %v109
  %vm116 = vcmask 257024
  %117 = vst.msk [vmem:[%s3] sm:$0xf] %vm116, %v110
  %118 = vst.msk [vmem:[%s3 + $0x4] sm:$0xf] %vm116, %v111
  %vm119 = vcmask 253952
  %120 = vst.msk [vmem:[%s3 + $0x8] sm:$0x1] %vm119, %v112
  // Predicated region
  $region14: #{timesformer_forward.21} parent=0 // pred_check
    _
  $region15: #{timesformer_forward.21} parent=0 // pred_check_branch
    %122 = sbr.rel (0) target = $region17
  $region16: #{timesformer_forward.21} parent=0 // pred_region
    _
  $region17: #{timesformer_forward.21} parent=0 // pred_fallthru
    _
  // Predicated region
  $region18: #{timesformer_forward.21} parent=0 // pred_check
    _
  $region19: #{timesformer_forward.21} parent=0 // pred_check_branch
    %124 = sbr.rel (0) target = $region21
  $region20: #{timesformer_forward.21} parent=0 // pred_region
    _
  $region21: #{timesformer_forward.21} parent=0 // pred_fallthru
    _

// kernel: timesformer_forward.25
$region0: #{timesformer_forward.25}
  #allocation0 [shape = 'u32[]', space=smem, size = 0x4, offset = 0x4, fixed_abs, tag = 'smem constant byte address 0x4 - core index']
  #allocation1 [shape = 'u32[144,128]{1,0:T(1,128)}', space=vmem, size = 0x12000, scoped, tag = 'internal scratch']
  %s0 = inlined_call_operand.vmem [shape: bf16[18,32], index: 0, kind: input, shape index: {}]
  %s1 = inlined_call_operand.vmem [shape: bf16[32,64], index: 1, kind: input, shape index: {}]
  %s2 = inlined_call_operand.vmem [shape: f32[1,64], index: 2, kind: input, shape index: {}]
  %s3 = inlined_call_operand.vmem [shape: f32[1,32], index: 3, kind: input, shape index: {}]
  %s4 = inlined_call_operand.vmem [shape: f32[1,32], index: 4, kind: input, shape index: {}]
  %s5 = inlined_call_operand.vmem [shape: bf16[18,64], index: 5, kind: output, shape index: {}]
  %s6 = sld [smem:[#allocation0]]
  $region30: #{timesformer_forward.25} parent=0
    _
  %s8 = ssub.s32 1, %s6
  %s9 = scalar_select 0, %s8, %s6
  // Predicated region
  $region2: #{timesformer_forward.25} parent=0 // pred_check
    _
  $region3: #{timesformer_forward.25} parent=0 // pred_check_branch
    %11 = sbr.rel (0) target = $region5
  $region4: #{timesformer_forward.25} parent=0 // pred_region
    _
  $region5: #{timesformer_forward.25} parent=0 // pred_fallthru
    _
  // Predicated region
  $region6: #{timesformer_forward.25} parent=0 // pred_check
    _
  $region7: #{timesformer_forward.25} parent=0 // pred_check_branch
    %13 = sbr.rel (0) target = $region9
  $region8: #{timesformer_forward.25} parent=0 // pred_region
    _
  $region9: #{timesformer_forward.25} parent=0 // pred_fallthru
    _
  // Predicated region
  $region10: #{timesformer_forward.25} parent=0 // pred_check
    _
  $region11: #{timesformer_forward.25} parent=0 // pred_check_branch
    %15 = sbr.rel (0) target = $region13
  $region12: #{timesformer_forward.25} parent=0 // pred_region
    _
  $region13: #{timesformer_forward.25} parent=0 // pred_fallthru
    _
  // Predicated region
  $region14: #{timesformer_forward.25} parent=0 // pred_check
    _
  $region15: #{timesformer_forward.25} parent=0 // pred_check_branch
    %17 = sbr.rel (0) target = $region17
  $region16: #{timesformer_forward.25} parent=0 // pred_region
    _
  $region17: #{timesformer_forward.25} parent=0 // pred_fallthru
    _
  // Predicated region
  $region18: #{timesformer_forward.25} parent=0 // pred_check
    _
  $region19: #{timesformer_forward.25} parent=0 // pred_check_branch
    %19 = sbr.rel (0) target = $region21
  $region20: #{timesformer_forward.25} parent=0 // pred_region
    _
  $region21: #{timesformer_forward.25} parent=0 // pred_fallthru
    _
  %v21 = vld [vmem:[%s0] sm:$0xf]
  %v22 = vld [vmem:[%s0 + $0x4] sm:$0xf]
  %v23 = vld [vmem:[%s0 + $0x8] sm:$0x1]
  %v24 = vunpack.c.l.bf16 %v21
  %v25 = vunpack.c.l.bf16 %v22
  %v26 = vunpack.c.l.bf16 %v23
  %vm27 = vcmask 261120
  %v28 = vsel %vm27, %v24, 0.0
  %29 = vadd.xlane.f32.xlu0 %v28
  %v30 = vpop.xlane.xlu0 %29
  %v31 = vsel %vm27, %v25, 0.0
  %32 = vadd.xlane.f32.xlu0 %v31
  %v33 = vpop.xlane.xlu0 %32
  %vm34 = vcmask 254976
  %v35 = vsel %vm34, %v26, 0.0
  %36 = vadd.xlane.f32.xlu0 %v35
  %v37 = vpop.xlane.xlu0 %36
  %v38 = vrcp.pop 32.0
  %v39 = vmul.f32 %v30, %v38
  %v40 = vmul.f32 %v33, %v38
  %v41 = vmul.f32 %v37, %v38
  %v42 = vsub.f32 %v24, %v39
  %v43 = vsub.f32 %v25, %v40
  %v44 = vsub.f32 %v26, %v41
  %v45 = vmul.f32 %v42, %v42
  %v46 = vmul.f32 %v43, %v43
  %v47 = vmul.f32 %v44, %v44
  %v48 = vsel %vm27, %v45, 0.0
  %49 = vadd.xlane.f32.xlu0 %v48
  %v50 = vpop.xlane.xlu0 %49
  %v51 = vsel %vm27, %v46, 0.0
  %52 = vadd.xlane.f32.xlu0 %v51
  %v53 = vpop.xlane.xlu0 %52
  %v54 = vsel %vm34, %v47, 0.0
  %55 = vadd.xlane.f32.xlu0 %v54
  %v56 = vpop.xlane.xlu0 %55
  %v57 = vmul.f32 %v50, %v38
  %v58 = vmul.f32 %v53, %v38
  %v59 = vmul.f32 %v56, %v38
  %v60 = vadd.f32 %v57, 1e-05
  %v61 = vadd.f32 %v58, 1e-05
  %v62 = vadd.f32 %v59, 1e-05
  %v63 = vrsqrt.pop %v60
  %v64 = vrsqrt.pop %v61
  %v65 = vrsqrt.pop %v62
  %v66 = vmul.f32 %v42, %v63
  %v67 = vmul.f32 %v43, %v64
  %v68 = vmul.f32 %v44, %v65
  %v69 = vld [vmem:[%s3] sm:$0x1]
  %v71 = vlaneseq
  %v72 = vshrl.u32 %v71, 7
  %v73 = vsub.s32 0, %v72
  %v74 = vrot.slane %v69, %v73
  %v76 = vmul.f32 %v66, %v74
  %v77 = vmul.f32 %v67, %v74
  %v78 = vmul.f32 %v68, %v74
  %v79 = vld [vmem:[%s4] sm:$0x1]
  %v81 = vlaneseq
  %v82 = vshrl.u32 %v81, 7
  %v83 = vsub.s32 0, %v82
  %v84 = vrot.slane %v79, %v83
  %v86 = vadd.f32 %v76, %v84
  %v87 = vadd.f32 %v77, %v84
  %v88 = vadd.f32 %v78, %v84
  %v89 = vpack.c.bf16 %v87, %v86
  %v90 = vpack.c.bf16 %v88, %v88
  %v91 = vld [vmem:[%s1] sm:$0xf]
  %v92 = vld [vmem:[%s1 + $0x4] sm:$0xf]
  %v93 = vld [vmem:[%s1 + $0x8] sm:$0xf]
  %v94 = vld [vmem:[%s1 + $0xc] sm:$0xf]
  %v95 = vld [vmem:[%s2] sm:$0x1]
  %v97 = vlaneseq
  %v98 = vshrl.u32 %v97, 7
  %v99 = vsub.s32 0, %v98
  %v100 = vrot.slane %v95, %v99
  %v106 = vunpack.c.l.b16 %v91
  %v107 = vunpack.c.l.b16 %v92
  %v108 = vunpack.c.l.b16 %v93
  %v109 = vunpack.c.l.b16 %v94
  %v110 = vpack.c.b16 %v107, %v106
  %v111 = vpack.c.b16 %v109, %v108
  %v115 = vsel %vm27, %v89, 0
  %v118 = vsel %vm27, %v90, 0
  %120 = vmatprep.subr.bf16.mxu0 0
  %121 = vmatpush1.bf16.msra.mxu0 0
  %122 = vmatprep.subr.bf16.mxu0 0
  %123 = vmatpush1.bf16.msra.mxu0 0
  %124 = vmatprep.subr.bf16.mxu0 0
  %125 = vmatpush1.bf16.msra.mxu0 0
  %126 = vmatprep.subr.bf16.mxu0 0
  %127 = vmatpush1.bf16.msra.mxu0 0
  %128 = vmatprep.subr.bf16.mxu0 0
  %129 = vmatpush1.bf16.msra.mxu0 0
  %130 = vmatprep.subr.bf16.mxu0 0
  %131 = vmatpush1.bf16.msra.mxu0 0
  %132 = vmatprep.subr.bf16.mxu0 0
  %133 = vmatpush1.bf16.msra.mxu0 %v111
  %134 = vmatprep.subr.bf16.mxu0 0
  %135 = vmatpush1.bf16.msra.mxu0 %v110
  %136 = vmatprep.subr.bf16.mxu0 0
  %137 = vmatpush2.bf16.msra.mxu0 0
  %138 = vmatprep.subr.bf16.mxu0 0
  %139 = vmatpush2.bf16.msra.mxu0 0
  %140 = vmatprep.subr.bf16.mxu0 0
  %141 = vmatpush2.bf16.msra.mxu0 0
  %142 = vmatprep.subr.bf16.mxu0 0
  %143 = vmatpush2.bf16.msra.mxu0 0
  %144 = vmatprep.subr.bf16.mxu0 0
  %145 = vmatpush2.bf16.msra.mxu0 0
  %146 = vmatprep.subr.bf16.mxu0 0
  %147 = vmatpush2.bf16.msra.mxu0 0
  %148 = vmatprep.subr.bf16.mxu0 0
  %149 = vmatpush2.bf16.msra.mxu0 0
  %150 = vmatprep.subr.bf16.mxu0 0
  %151 = vmatpush2.bf16.msra.mxu0 0
  %152 = vmatprep.mubr.bf16.mxu0 0
  %153 = vmatmul.mubr.bf16.gmra.mxu0 %v115
  %v154 = vpop.f32.mrf.mxu0
  %v155 = vadd.f32 %v100, %v154
  %v156 = vpop.f32.mrf.mxu0
  %v157 = vpop.f32.mrf.mxu0
  %v158 = vadd.f32 %v100, %v157
  %v159 = vpop.f32.mrf.mxu0
  %160 = vmatprep.mubr.bf16.mxu0 0
  %161 = vmatmul.mubr.bf16.gmra.mxu0 %v118
  %v162 = vpop.f32.mrf.mxu0
  %v163 = vadd.f32 %v100, %v162
  %v164 = vpop.f32.mrf.mxu0
  %v165 = vpop.f32.mrf.mxu0
  %v166 = vpop.f32.mrf.mxu0
  %167 = vdwg.mxu0
  %v168 = vmul.f32 %v155, 0.5
  %v169 = vmul.f32 %v158, 0.5
  %v170 = vmul.f32 %v163, 0.5
  %v171 = vmul.f32 %v155, 0.70710677
  %v172 = vmul.f32 %v158, 0.70710677
  %v173 = vmul.f32 %v163, 0.70710677
  %v174 = verf.f32.pop %v171
  %v175 = verf.f32.pop %v172
  %v176 = verf.f32.pop %v173
  %v177 = vadd.f32 %v174, 1.0
  %v178 = vadd.f32 %v175, 1.0
  %v179 = vadd.f32 %v176, 1.0
  %v180 = vmul.f32 %v168, %v177
  %v181 = vmul.f32 %v169, %v178
  %v182 = vmul.f32 %v170, %v179
  %v183 = vpack.c.bf16 %v181, %v180
  %v184 = vpack.c.bf16 %v182, %v182
  %v187 = vunpack.c.l.b16 %v183
  %v188 = vunpack.c.h.b16 %v183
  %v189 = vunpack.c.l.b16 %v184
  %v190 = vpack.c.b16 %v187, %v187
  %v191 = vpack.c.b16 %v188, %v188
  %v192 = vpack.c.b16 %v189, %v189
  %vm196 = vcmask 519168
  %197 = vst.msk [vmem:[%s5] sm:$0xf] %vm196, %v190
  %198 = vst.msk [vmem:[%s5 + $0x4] sm:$0xf] %vm196, %v191
  %vm199 = vcmask 516096
  %200 = vst.msk [vmem:[%s5 + $0x8] sm:$0x1] %vm199, %v192
  // Predicated region
  $region22: #{timesformer_forward.25} parent=0 // pred_check
    _
  $region23: #{timesformer_forward.25} parent=0 // pred_check_branch
    %202 = sbr.rel (0) target = $region25
  $region24: #{timesformer_forward.25} parent=0 // pred_region
    _
  $region25: #{timesformer_forward.25} parent=0 // pred_fallthru
    _
  // Predicated region
  $region26: #{timesformer_forward.25} parent=0 // pred_check
    _
  $region27: #{timesformer_forward.25} parent=0 // pred_check_branch
    %204 = sbr.rel (0) target = $region29
  $region28: #{timesformer_forward.25} parent=0 // pred_region
    _
  $region29: #{timesformer_forward.25} parent=0 // pred_fallthru
    _

// kernel: timesformer_forward.26
$region0: #{timesformer_forward.26}
  #allocation0 [shape = 'u32[]', space=smem, size = 0x4, offset = 0x4, fixed_abs, tag = 'smem constant byte address 0x4 - core index']
  #allocation1 [shape = 'u32[144,128]{1,0:T(1,128)}', space=vmem, size = 0x12000, scoped, tag = 'internal scratch']
  %s0 = inlined_call_operand.vmem [shape: bf16[18,64], index: 0, kind: input, shape index: {}]
  %s1 = inlined_call_operand.vmem [shape: bf16[64,32], index: 1, kind: input, shape index: {}]
  %s2 = inlined_call_operand.vmem [shape: f32[1,32], index: 2, kind: input, shape index: {}]
  %s3 = inlined_call_operand.vmem [shape: bf16[18,32], index: 3, kind: input, shape index: {}]
  %s4 = inlined_call_operand.vmem [shape: bf16[18,32], index: 4, kind: output, shape index: {}]
  %s5 = sld [smem:[#allocation0]]
  $region26: #{timesformer_forward.26} parent=0
    _
  %s7 = ssub.s32 1, %s5
  %s8 = scalar_select 0, %s7, %s5
  // Predicated region
  $region2: #{timesformer_forward.26} parent=0 // pred_check
    _
  $region3: #{timesformer_forward.26} parent=0 // pred_check_branch
    %10 = sbr.rel (0) target = $region5
  $region4: #{timesformer_forward.26} parent=0 // pred_region
    _
  $region5: #{timesformer_forward.26} parent=0 // pred_fallthru
    _
  // Predicated region
  $region6: #{timesformer_forward.26} parent=0 // pred_check
    _
  $region7: #{timesformer_forward.26} parent=0 // pred_check_branch
    %12 = sbr.rel (0) target = $region9
  $region8: #{timesformer_forward.26} parent=0 // pred_region
    _
  $region9: #{timesformer_forward.26} parent=0 // pred_fallthru
    _
  // Predicated region
  $region10: #{timesformer_forward.26} parent=0 // pred_check
    _
  $region11: #{timesformer_forward.26} parent=0 // pred_check_branch
    %14 = sbr.rel (0) target = $region13
  $region12: #{timesformer_forward.26} parent=0 // pred_region
    _
  $region13: #{timesformer_forward.26} parent=0 // pred_fallthru
    _
  // Predicated region
  $region14: #{timesformer_forward.26} parent=0 // pred_check
    _
  $region15: #{timesformer_forward.26} parent=0 // pred_check_branch
    %16 = sbr.rel (0) target = $region17
  $region16: #{timesformer_forward.26} parent=0 // pred_region
    _
  $region17: #{timesformer_forward.26} parent=0 // pred_fallthru
    _
  %v18 = vld [vmem:[%s0] sm:$0xf]
  %v19 = vld [vmem:[%s0 + $0x4] sm:$0xf]
  %v20 = vld [vmem:[%s0 + $0x8] sm:$0x1]
  %v21 = vld [vmem:[%s1] sm:$0xf]
  %v22 = vld [vmem:[%s1 + $0x4] sm:$0xf]
  %v23 = vld [vmem:[%s1 + $0x8] sm:$0xf]
  %v24 = vld [vmem:[%s1 + $0xc] sm:$0xf]
  %v25 = vld [vmem:[%s1 + $0x10] sm:$0xf]
  %v26 = vld [vmem:[%s1 + $0x14] sm:$0xf]
  %v27 = vld [vmem:[%s1 + $0x18] sm:$0xf]
  %v28 = vld [vmem:[%s1 + $0x1c] sm:$0xf]
  %v29 = vld [vmem:[%s2] sm:$0x1]
  %v31 = vlaneseq
  %v32 = vshrl.u32 %v31, 7
  %v33 = vsub.s32 0, %v32
  %v34 = vrot.slane %v29, %v33
  %v39 = vunpack.c.l.b16 %v18
  %v40 = vunpack.c.l.b16 %v19
  %v41 = vunpack.c.l.b16 %v20
  %v42 = vpack.c.b16 %v40, %v39
  %v43 = vpack.c.b16 %v41, %v41
  %v52 = vunpack.c.l.b16 %v21
  %v53 = vunpack.c.l.b16 %v22
  %v54 = vunpack.c.l.b16 %v23
  %v55 = vunpack.c.l.b16 %v24
  %v56 = vunpack.c.l.b16 %v25
  %v57 = vunpack.c.l.b16 %v26
  %v58 = vunpack.c.l.b16 %v27
  %v59 = vunpack.c.l.b16 %v28
  %v60 = vpack.c.b16 %v53, %v52
  %v61 = vpack.c.b16 %v55, %v54
  %v62 = vpack.c.b16 %v57, %v56
  %v63 = vpack.c.b16 %v59, %v58
  %vm68 = vcmask 523264
  %v70 = vsel %vm68, %v42, 0
  %v73 = vsel %vm68, %v43, 0
  %75 = vmatprep.subr.bf16.mxu0 0
  %76 = vmatpush1.bf16.msra.mxu0 0
  %77 = vmatprep.subr.bf16.mxu0 0
  %78 = vmatpush1.bf16.msra.mxu0 0
  %79 = vmatprep.subr.bf16.mxu0 0
  %80 = vmatpush1.bf16.msra.mxu0 0
  %81 = vmatprep.subr.bf16.mxu0 0
  %82 = vmatpush1.bf16.msra.mxu0 0
  %83 = vmatprep.subr.bf16.mxu0 0
  %84 = vmatpush1.bf16.msra.mxu0 %v63
  %85 = vmatprep.subr.bf16.mxu0 0
  %86 = vmatpush1.bf16.msra.mxu0 %v62
  %87 = vmatprep.subr.bf16.mxu0 0
  %88 = vmatpush1.bf16.msra.mxu0 %v61
  %89 = vmatprep.subr.bf16.mxu0 0
  %90 = vmatpush1.bf16.msra.mxu0 %v60
  %91 = vmatprep.subr.bf16.mxu0 0
  %92 = vmatpush2.bf16.msra.mxu0 0
  %93 = vmatprep.subr.bf16.mxu0 0
  %94 = vmatpush2.bf16.msra.mxu0 0
  %95 = vmatprep.subr.bf16.mxu0 0
  %96 = vmatpush2.bf16.msra.mxu0 0
  %97 = vmatprep.subr.bf16.mxu0 0
  %98 = vmatpush2.bf16.msra.mxu0 0
  %99 = vmatprep.subr.bf16.mxu0 0
  %100 = vmatpush2.bf16.msra.mxu0 0
  %101 = vmatprep.subr.bf16.mxu0 0
  %102 = vmatpush2.bf16.msra.mxu0 0
  %103 = vmatprep.subr.bf16.mxu0 0
  %104 = vmatpush2.bf16.msra.mxu0 0
  %105 = vmatprep.subr.bf16.mxu0 0
  %106 = vmatpush2.bf16.msra.mxu0 0
  %107 = vmatprep.mubr.bf16.mxu0 0
  %108 = vmatmul.mubr.bf16.gmra.mxu0 %v70
  %v109 = vpop.f32.mrf.mxu0
  %v110 = vadd.f32 %v34, %v109
  %v111 = vpop.f32.mrf.mxu0
  %v112 = vpop.f32.mrf.mxu0
  %v113 = vadd.f32 %v34, %v112
  %v114 = vpop.f32.mrf.mxu0
  %115 = vmatprep.mubr.bf16.mxu0 0
  %116 = vmatmul.mubr.bf16.gmra.mxu0 %v73
  %v117 = vpop.f32.mrf.mxu0
  %v118 = vadd.f32 %v34, %v117
  %v119 = vpop.f32.mrf.mxu0
  %v120 = vpop.f32.mrf.mxu0
  %v121 = vpop.f32.mrf.mxu0
  %122 = vdwg.mxu0
  %v123 = vld [vmem:[%s3] sm:$0xf]
  %v124 = vld [vmem:[%s3 + $0x4] sm:$0xf]
  %v125 = vld [vmem:[%s3 + $0x8] sm:$0x1]
  %v126 = vunpack.c.l.bf16 %v123
  %v127 = vunpack.c.l.bf16 %v124
  %v128 = vunpack.c.l.bf16 %v125
  %v129 = vadd.f32 %v110, %v126
  %v130 = vadd.f32 %v113, %v127
  %v131 = vadd.f32 %v118, %v128
  %v132 = vpack.c.bf16 %v130, %v129
  %v133 = vpack.c.bf16 %v131, %v131
  %v136 = vunpack.c.l.b16 %v132
  %v137 = vunpack.c.h.b16 %v132
  %v138 = vunpack.c.l.b16 %v133
  %v139 = vpack.c.b16 %v136, %v136
  %v140 = vpack.c.b16 %v137, %v137
  %v141 = vpack.c.b16 %v138, %v138
  %vm145 = vcmask 257024
  %146 = vst.msk [vmem:[%s4] sm:$0xf] %vm145, %v139
  %147 = vst.msk [vmem:[%s4 + $0x4] sm:$0xf] %vm145, %v140
  %vm148 = vcmask 253952
  %149 = vst.msk [vmem:[%s4 + $0x8] sm:$0x1] %vm148, %v141
  // Predicated region
  $region18: #{timesformer_forward.26} parent=0 // pred_check
    _
  $region19: #{timesformer_forward.26} parent=0 // pred_check_branch
    %151 = sbr.rel (0) target = $region21
  $region20: #{timesformer_forward.26} parent=0 // pred_region
    _
  $region21: #{timesformer_forward.26} parent=0 // pred_fallthru
    _
  // Predicated region
  $region22: #{timesformer_forward.26} parent=0 // pred_check
    _
  $region23: #{timesformer_forward.26} parent=0 // pred_check_branch
    %153 = sbr.rel (0) target = $region25
  $region24: #{timesformer_forward.26} parent=0 // pred_region
    _
  $region25: #{timesformer_forward.26} parent=0 // pred_fallthru
    _

// kernel: timesformer_forward.23
$region0: #{timesformer_forward.23}
  #allocation0 [shape = 'u32[]', space=smem, size = 0x4, offset = 0x4, fixed_abs, tag = 'smem constant byte address 0x4 - core index']
  #allocation1 [shape = 'u32[144,128]{1,0:T(1,128)}', space=vmem, size = 0x12000, scoped, tag = 'internal scratch']
  %s0 = inlined_call_operand.vmem [shape: bf16[2,2,4,96], index: 0, kind: input, shape index: {}]
  %s1 = inlined_call_operand.vmem [shape: bf16[2,1,96], index: 1, kind: input, shape index: {}]
  %s2 = inlined_call_operand.vmem [shape: bf16[2,2,4,32], index: 2, kind: output, shape index: {0}]
  %s3 = inlined_call_operand.vmem [shape: bf16[2,1,32], index: 3, kind: output, shape index: {1}]
  %4 = xla_tuple %s2, %s3
  %s5 = sld [smem:[#allocation0]]
  $region49: #{timesformer_forward.23} parent=0
    _
  %s7 = ssub.s32 1, %s5
  %s8 = scalar_select 0, %s7, %s5
  loop: start=0, step=1, limit=4
  $region2: #{timesformer_forward.23} parent=0 // loop_pre_header
    _
  $region3: #{timesformer_forward.23} parent=0 // loop_header
    %s10 = sphi 0, %s14
    %p11 = scmp.ge.s32.totalorder %s10, 4
    %s20 = sphi 0, %s22
    %s23 = sphi 0, %s20
    %s24 = sphi 0, %s23
    %s40 = sphi 0, %s24
    %s46 = sphi 0, %s48
    %s49 = sphi 0, %s46
    %s50 = sphi 0, %s49
    %s66 = sphi 0, %s50
    %s72 = sphi 0, %s74
    %s75 = sphi 0, %s72
    %s76 = sphi 0, %s75
    %s92 = sphi 0, %s76
    %s98 = sphi 0, %s100
    %s101 = sphi 0, %s98
    %s102 = sphi 0, %s101
    %s118 = sphi 0, %s102
  $region4: #{timesformer_forward.23} parent=0 // loop_header_branch
    %13 = sbr.rel (%p11) target = $region8
  $region5: #{timesformer_forward.23} parent=0 // loop_body
    %s15 = ssub.s32 %s10, 1
    %s16 = ssub.s32 %s10, 2
    %s17 = sadd.s32 %s10, 1
    %s18 = ssub.s32 %s10, %s17
    %p19 = scmp.eq.s32.totalorder %s18, 0
    %s21 = sadd.s32 %s20, 1
    %s22 = scalar_select %p19, %s20, %s21
    %p25 = pneg %p19
    %p26 = scmp.eq.s32.totalorder %s10, 1
    %p27 = por %p25, %p26
    %p28 = scmp.ne.s32.totalorder %s20, %s23
    %p29 = scmp.eq.s32.totalorder %s10, 0
    %p30 = por %p28, %p29
    %p31 = scmp.ne.s32.totalorder %s20, %s23
    %p32 = scmp.eq.s32.totalorder %s15, 1
    %p33 = por %p31, %p32
    %p34 = scmp.ne.s32.totalorder %s23, %s24
    %p35 = scmp.eq.s32.totalorder %s15, 0
    %p36 = por %p34, %p35
    %p37 = scmp.ne.s32.totalorder %s23, %s24
    %p38 = scmp.eq.s32.totalorder %s16, 1
    %p39 = por %p37, %p38
    %p41 = scmp.ne.s32.totalorder %s24, %s40
    %p42 = scmp.eq.s32.totalorder %s16, 0
    %p43 = por %p41, %p42
    %s44 = ssub.s32 %s10, %s17
    %p45 = scmp.eq.s32.totalorder %s44, 0
    %s47 = sadd.s32 %s46, 1
    %s48 = scalar_select %p45, %s46, %s47
    %p51 = pneg %p45
    %p52 = scmp.eq.s32.totalorder %s10, 1
    %p53 = por %p51, %p52
    %p54 = scmp.ne.s32.totalorder %s46, %s49
    %p55 = scmp.eq.s32.totalorder %s10, 0
    %p56 = por %p54, %p55
    %p57 = scmp.ne.s32.totalorder %s46, %s49
    %p58 = scmp.eq.s32.totalorder %s15, 1
    %p59 = por %p57, %p58
    %p60 = scmp.ne.s32.totalorder %s49, %s50
    %p61 = scmp.eq.s32.totalorder %s15, 0
    %p62 = por %p60, %p61
    %p63 = scmp.ne.s32.totalorder %s49, %s50
    %p64 = scmp.eq.s32.totalorder %s16, 1
    %p65 = por %p63, %p64
    %p67 = scmp.ne.s32.totalorder %s50, %s66
    %p68 = scmp.eq.s32.totalorder %s16, 0
    %p69 = por %p67, %p68
    %s70 = ssub.s32 %s10, %s17
    %p71 = scmp.eq.s32.totalorder %s70, 0
    %s73 = sadd.s32 %s72, 1
    %s74 = scalar_select %p71, %s72, %s73
    %p77 = pneg %p71
    %p78 = scmp.eq.s32.totalorder %s10, 1
    %p79 = por %p77, %p78
    %p80 = scmp.ne.s32.totalorder %s72, %s75
    %p81 = scmp.eq.s32.totalorder %s10, 0
    %p82 = por %p80, %p81
    %p83 = scmp.ne.s32.totalorder %s72, %s75
    %p84 = scmp.eq.s32.totalorder %s15, 1
    %p85 = por %p83, %p84
    %p86 = scmp.ne.s32.totalorder %s75, %s76
    %p87 = scmp.eq.s32.totalorder %s15, 0
    %p88 = por %p86, %p87
    %p89 = scmp.ne.s32.totalorder %s75, %s76
    %p90 = scmp.eq.s32.totalorder %s16, 1
    %p91 = por %p89, %p90
    %p93 = scmp.ne.s32.totalorder %s76, %s92
    %p94 = scmp.eq.s32.totalorder %s16, 0
    %p95 = por %p93, %p94
    %s96 = ssub.s32 %s10, %s17
    %p97 = scmp.eq.s32.totalorder %s96, 0
    %s99 = sadd.s32 %s98, 1
    %s100 = scalar_select %p97, %s98, %s99
    %p103 = pneg %p97
    %p104 = scmp.eq.s32.totalorder %s10, 1
    %p105 = por %p103, %p104
    %p106 = scmp.ne.s32.totalorder %s98, %s101
    %p107 = scmp.eq.s32.totalorder %s10, 0
    %p108 = por %p106, %p107
    %p109 = scmp.ne.s32.totalorder %s98, %s101
    %p110 = scmp.eq.s32.totalorder %s15, 1
    %p111 = por %p109, %p110
    %p112 = scmp.ne.s32.totalorder %s101, %s102
    %p113 = scmp.eq.s32.totalorder %s15, 0
    %p114 = por %p112, %p113
    %p115 = scmp.ne.s32.totalorder %s101, %s102
    %p116 = scmp.eq.s32.totalorder %s16, 1
    %p117 = por %p115, %p116
    %p119 = scmp.ne.s32.totalorder %s102, %s118
    %p120 = scmp.eq.s32.totalorder %s16, 0
    %p121 = por %p119, %p120
    %p122 = scmp.le.s32.totalorder 1, %s10
    %p123 = scmp.lt.s32.totalorder %s10, 3
    %p124 = pnand %p122, %p123
    %p125 = pneg %p124
    // Predicated region
    $region9: #{timesformer_forward.23} parent=5 // pred_check
      _
    $region10: #{timesformer_forward.23} parent=5 // pred_check_branch
      %127 = sbr.rel (%p124) target = $region12
    $region11: #{timesformer_forward.23} parent=5 // pred_region
      %s128 = ssub.s32 %s10, 1
    $region12: #{timesformer_forward.23} parent=5 // pred_fallthru
      _
    %p129 = scmp.lt.s32.totalorder %s10, 2
    // Predicated region
    $region13: #{timesformer_forward.23} parent=5 // pred_check
      %p130 = pneg %p129
    $region14: #{timesformer_forward.23} parent=5 // pred_check_branch
      %132 = sbr.rel (%p130) target = $region16
    $region15: #{timesformer_forward.23} parent=5 // pred_region
      // Predicated region
      $region17: #{timesformer_forward.23} parent=15 // pred_check
        %p133 = pneg %p30
      $region18: #{timesformer_forward.23} parent=15 // pred_check_branch
        %135 = sbr.rel (%p133) target = $region20
      $region19: #{timesformer_forward.23} parent=15 // pred_region
        %p136 = scmp.lt.s32.totalorder %s10, 1
        %s137 = scalar_select %p136, %s10, 1
        %s138 = smul.addr %s137, 2
        %s139 = smul.addr %s138, 2
        %s140 = scalar_lea.vmem %s0, %s139
      $region20: #{timesformer_forward.23} parent=15 // pred_fallthru
        _
      // Predicated region
      $region21: #{timesformer_forward.23} parent=15 // pred_check
        %p141 = pneg %p56
      $region22: #{timesformer_forward.23} parent=15 // pred_check_branch
        %143 = sbr.rel (%p141) target = $region24
      $region23: #{timesformer_forward.23} parent=15 // pred_region
        %p144 = scmp.lt.s32.totalorder %s10, 1
        %s145 = scalar_select %p144, %s10, 1
        %s146 = scalar_lea.vmem %s1, %s145
      $region24: #{timesformer_forward.23} parent=15 // pred_fallthru
        _
    $region16: #{timesformer_forward.23} parent=5 // pred_fallthru
      _
    %p147 = scmp.le.s32.totalorder 1, %s10
    %p148 = scmp.lt.s32.totalorder %s10, 3
    %p149 = pnand %p147, %p148
    %p150 = pneg %p149
    // Predicated region
    $region25: #{timesformer_forward.23} parent=5 // pred_check
      _
    $region26: #{timesformer_forward.23} parent=5 // pred_check_branch
      %152 = sbr.rel (%p149) target = $region28
    $region27: #{timesformer_forward.23} parent=5 // pred_region
      %s153 = ssub.s32 %s10, 1
      %p154 = scmp.lt.s32.totalorder %s15, 1
      %s155 = scalar_select %p154, %s15, 1
      %s156 = smul.addr %s155, 2
      %s157 = smul.addr %s156, 2
      %s158 = scalar_lea.vmem %s0, %s157
      %p159 = pneg %p36
      %p160 = pneg %p33
      %p161 = scmp.lt.s32.totalorder %s15, 1
      %s162 = scalar_select %p161, %s15, 1
      %s163 = scalar_lea.vmem %s1, %s162
      %p164 = pneg %p62
      %p165 = pneg %p59
      %p166 = pneg %p88
      %p167 = pneg %p85
      %p168 = scmp.lt.s32.totalorder %s15, 1
      %s169 = scalar_select %p168, %s15, 1
      %s170 = smul.addr %s169, 2
      %s171 = smul.addr %s170, 2
      %s172 = scalar_lea.vmem %s2, %s171
      %p173 = pneg %p114
      %p174 = pneg %p111
      %p175 = scmp.lt.s32.totalorder %s15, 1
      %s176 = scalar_select %p175, %s15, 1
      %s177 = scalar_lea.vmem %s3, %s176
      %p178 = scmp.lt.s32.totalorder %s15, 1
      %s179 = scalar_select %p178, %s15, 1
      %s180 = smul.addr %s179, 2
      %s181 = smul.addr %s180, 2
      %s182 = scalar_lea.vmem %s0, %s181
      %p183 = scmp.lt.s32.totalorder %s15, 1
      %s184 = scalar_select %p183, %s15, 1
      %s185 = scalar_lea.vmem %s1, %s184
      %p186 = scmp.lt.s32.totalorder %s15, 1
      %s187 = scalar_select %p186, %s15, 1
      %s188 = smul.addr %s187, 2
      %s189 = smul.addr %s188, 2
      %s190 = scalar_lea.vmem %s2, %s189
      %p191 = scmp.lt.s32.totalorder %s15, 1
      %s192 = scalar_select %p191, %s15, 1
      %s193 = scalar_lea.vmem %s3, %s192
      %v195 = vld [vmem:[%s182] sm:$0x3]
      %v196 = vld [vmem:[%s182 + $0x2] sm:$0x3]
      %v197 = vld [vmem:[%s185] sm:$0x1]
      %v198 = vunpack.c.l.bf16 %v197
      %v201 = vunpack.c.l.s4 1983009808
      %v202 = vunpack.c.0.s8 %v201
      %v203 = vlaneseq
      %v204 = vshrl.u32 %v203, 7
      %v205 = vsub.s32 %v202, %v204
      %v206 = vrot.slane %v195, %v205
      %207 = vrot.lane.b32.xlu0 %v206, 96
      %v208 = vpop.permute.xlu0 %207
      %vm209 = vcmask 64512
      %v211 = vsel %vm209, %v195, 0
      %v214 = vsel %vm209, %v208, 0
      %216 = vmatprep.subr.bf16.mxu0 0
      %217 = vmatpush1.bf16.xpose.msra.mxu0 0
      %218 = vmatprep.subr.bf16.mxu0 0
      %219 = vmatpush1.bf16.xpose.msra.mxu0 0
      %220 = vmatprep.subr.bf16.mxu0 0
      %221 = vmatpush1.bf16.xpose.msra.mxu0 0
      %222 = vmatprep.subr.bf16.mxu0 0
      %223 = vmatpush1.bf16.xpose.msra.mxu0 0
      %224 = vmatprep.subr.bf16.mxu0 0
      %225 = vmatpush1.bf16.xpose.msra.mxu0 0
      %226 = vmatprep.subr.bf16.mxu0 0
      %227 = vmatpush1.bf16.xpose.msra.mxu0 0
      %228 = vmatprep.subr.bf16.mxu0 0
      %229 = vmatpush1.bf16.xpose.msra.mxu0 0
      %230 = vmatprep.subr.bf16.mxu0 0
      %231 = vmatpush1.bf16.xpose.msra.mxu0 %v214
      %232 = vmatprep.subr.bf16.mxu0 0
      %233 = vmatpush2.bf16.xpose.msra.mxu0 0
      %234 = vmatprep.subr.bf16.mxu0 0
      %235 = vmatpush2.bf16.xpose.msra.mxu0 0
      %236 = vmatprep.subr.bf16.mxu0 0
      %237 = vmatpush2.bf16.xpose.msra.mxu0 0
      %238 = vmatprep.subr.bf16.mxu0 0
      %239 = vmatpush2.bf16.xpose.msra.mxu0 0
      %240 = vmatprep.subr.bf16.mxu0 0
      %241 = vmatpush2.bf16.xpose.msra.mxu0 0
      %242 = vmatprep.subr.bf16.mxu0 0
      %243 = vmatpush2.bf16.xpose.msra.mxu0 0
      %244 = vmatprep.subr.bf16.mxu0 0
      %245 = vmatpush2.bf16.xpose.msra.mxu0 0
      %246 = vmatprep.subr.bf16.mxu0 0
      %247 = vmatpush2.bf16.xpose.msra.mxu0 0
      %248 = vmatprep.mubr.bf16.mxu0 0
      %249 = vmatmul.mubr.bf16.gmra.mxu0 %v211
      %v250 = vpop.f32.mrf.mxu0
      %v251 = vadd.f32 0.0, %v250
      %v252 = vpop.f32.mrf.mxu0
      %v253 = vpop.f32.mrf.mxu0
      %v254 = vpop.f32.mrf.mxu0
      %255 = vdwg.mxu0
      %v258 = vunpack.c.l.s4 1983009808
      %v259 = vunpack.c.0.s8 %v258
      %v260 = vlaneseq
      %v261 = vshrl.u32 %v260, 7
      %v262 = vsub.s32 %v259, %v261
      %v263 = vrot.slane %v196, %v262
      %264 = vrot.lane.b32.xlu0 %v263, 96
      %v265 = vpop.permute.xlu0 %264
      %v267 = vsel %vm209, %v196, 0
      %v270 = vsel %vm209, %v265, 0
      %272 = vmatprep.subr.bf16.mxu0 0
      %273 = vmatpush1.bf16.xpose.msra.mxu0 0
      %274 = vmatprep.subr.bf16.mxu0 0
      %275 = vmatpush1.bf16.xpose.msra.mxu0 0
      %276 = vmatprep.subr.bf16.mxu0 0
      %277 = vmatpush1.bf16.xpose.msra.mxu0 0
      %278 = vmatprep.subr.bf16.mxu0 0
      %279 = vmatpush1.bf16.xpose.msra.mxu0 0
      %280 = vmatprep.subr.bf16.mxu0 0
      %281 = vmatpush1.bf16.xpose.msra.mxu0 0
      %282 = vmatprep.subr.bf16.mxu0 0
      %283 = vmatpush1.bf16.xpose.msra.mxu0 0
      %284 = vmatprep.subr.bf16.mxu0 0
      %285 = vmatpush1.bf16.xpose.msra.mxu0 0
      %286 = vmatprep.subr.bf16.mxu0 0
      %287 = vmatpush1.bf16.xpose.msra.mxu0 %v270
      %288 = vmatprep.subr.bf16.mxu0 0
      %289 = vmatpush2.bf16.xpose.msra.mxu0 0
      %290 = vmatprep.subr.bf16.mxu0 0
      %291 = vmatpush2.bf16.xpose.msra.mxu0 0
      %292 = vmatprep.subr.bf16.mxu0 0
      %293 = vmatpush2.bf16.xpose.msra.mxu0 0
      %294 = vmatprep.subr.bf16.mxu0 0
      %295 = vmatpush2.bf16.xpose.msra.mxu0 0
      %296 = vmatprep.subr.bf16.mxu0 0
      %297 = vmatpush2.bf16.xpose.msra.mxu0 0
      %298 = vmatprep.subr.bf16.mxu0 0
      %299 = vmatpush2.bf16.xpose.msra.mxu0 0
      %300 = vmatprep.subr.bf16.mxu0 0
      %301 = vmatpush2.bf16.xpose.msra.mxu0 0
      %302 = vmatprep.subr.bf16.mxu0 0
      %303 = vmatpush2.bf16.xpose.msra.mxu0 0
      %304 = vmatprep.mubr.bf16.mxu0 0
      %305 = vmatmul.mubr.bf16.gmra.mxu0 %v267
      %v306 = vpop.f32.mrf.mxu0
      %v307 = vadd.f32 0.0, %v306
      %v308 = vpop.f32.mrf.mxu0
      %v309 = vpop.f32.mrf.mxu0
      %v310 = vpop.f32.mrf.mxu0
      %311 = vdwg.mxu0
      %v312 = vunpack.c.l.bf16 %v195
      %v313 = vunpack.c.l.bf16 %v196
      %v314 = vlaneseq
      %v315 = vshrl.u32 %v314, 7
      %v316 = vsub.s32 0, %v315
      %v317 = vrot.slane %v198, %v316
      %319 = vrot.lane.b32.xlu0 %v317, 96
      %v320 = vpop.permute.xlu0 %319
      %v322 = vmul.f32 %v312, %v320
      %v323 = vmul.f32 %v313, %v320
      %vm324 = vcmask 60416
      %v325 = vsel %vm324, %v322, 0.0
      %326 = vadd.xlane.f32.xlu0 %v325
      %v327 = vpop.xlane.xlu0 %326
      %v328 = vsel %vm324, %v323, 0.0
      %329 = vadd.xlane.f32.xlu0 %v328
      %v330 = vpop.xlane.xlu0 %329
      %vm331 = vcmask 27648
      %v332 = vsel %vm331, %v251, -inf
      %333 = vmax.xlane.f32.xlu0 %v332
      %v334 = vpop.xlane.xlu0 %333
      %v335 = vsel %vm331, %v307, -inf
      %336 = vmax.xlane.f32.xlu0 %v335
      %v337 = vpop.xlane.xlu0 %336
      %v338 = vmax.f32 %v334, %v327
      %v339 = vmax.f32 %v337, %v330
      %v340 = vsub.f32 %v251, %v338
      %v341 = vsub.f32 %v307, %v339
      %v342 = vmul.f32 %v340, 1.442695
      %v343 = vpow.pop %v342
      %v344 = vmul.f32 %v341, 1.442695
      %v345 = vpow.pop %v344
      %v346 = vsub.f32 %v327, %v338
      %v347 = vsub.f32 %v330, %v339
      %v348 = vmul.f32 %v346, 1.442695
      %v349 = vpow.pop %v348
      %v350 = vmul.f32 %v347, 1.442695
      %v351 = vpow.pop %v350
      %v352 = vsel %vm331, %v343, 0.0
      %353 = vadd.xlane.f32.xlu0 %v352
      %v354 = vpop.xlane.xlu0 %353
      %v355 = vsel %vm331, %v345, 0.0
      %356 = vadd.xlane.f32.xlu0 %v355
      %v357 = vpop.xlane.xlu0 %356
      %v358 = vadd.f32 %v354, %v349
      %v359 = vadd.f32 %v357, %v351
      %v360 = vpack.c.bf16 %v343, %v343
      %v361 = vpack.c.bf16 %v345, %v345
      %v362 = vmul.f32 %v349, %v317
      %v363 = vmul.f32 %v351, %v317
      %364 = vrot.lane.b32.xlu0 %v206, 64
      %v365 = vpop.permute.xlu0 %364
      %367 = vrot.lane.b32.xlu0 %v362, 64
      %v368 = vpop.permute.xlu0 %367
      %vm370 = vcmask 31744
      %v372 = vsel %vm370, %v360, 0
      %vm374 = vcmask 1041408
      %v376 = vsel %vm374, %v365, 0
      %378 = vmatprep.subr.bf16.mxu0 0
      %379 = vmatpush1.bf16.msra.mxu0 0
      %380 = vmatprep.subr.bf16.mxu0 0
      %381 = vmatpush1.bf16.msra.mxu0 0
      %382 = vmatprep.subr.bf16.mxu0 0
      %383 = vmatpush1.bf16.msra.mxu0 0
      %384 = vmatprep.subr.bf16.mxu0 0
      %385 = vmatpush1.bf16.msra.mxu0 0
      %386 = vmatprep.subr.bf16.mxu0 0
      %387 = vmatpush1.bf16.msra.mxu0 0
      %388 = vmatprep.subr.bf16.mxu0 0
      %389 = vmatpush1.bf16.msra.mxu0 0
      %390 = vmatprep.subr.bf16.mxu0 0
      %391 = vmatpush1.bf16.msra.mxu0 0
      %392 = vmatprep.subr.bf16.mxu0 0
      %393 = vmatpush1.bf16.msra.mxu0 %v376
      %394 = vmatprep.subr.bf16.mxu0 0
      %395 = vmatpush2.bf16.msra.mxu0 0
      %396 = vmatprep.subr.bf16.mxu0 0
      %397 = vmatpush2.bf16.msra.mxu0 0
      %398 = vmatprep.subr.bf16.mxu0 0
      %399 = vmatpush2.bf16.msra.mxu0 0
      %400 = vmatprep.subr.bf16.mxu0 0
      %401 = vmatpush2.bf16.msra.mxu0 0
      %402 = vmatprep.subr.bf16.mxu0 0
      %403 = vmatpush2.bf16.msra.mxu0 0
      %404 = vmatprep.subr.bf16.mxu0 0
      %405 = vmatpush2.bf16.msra.mxu0 0
      %406 = vmatprep.subr.bf16.mxu0 0
      %407 = vmatpush2.bf16.msra.mxu0 0
      %408 = vmatprep.subr.bf16.mxu0 0
      %409 = vmatpush2.bf16.msra.mxu0 0
      %410 = vmatprep.mubr.bf16.mxu0 0
      %411 = vmatmul.mubr.bf16.gmra.mxu0 %v372
      %v412 = vpop.f32.mrf.mxu0
      %v413 = vadd.f32 %v368, %v412
      %v414 = vpop.f32.mrf.mxu0
      %v415 = vpop.f32.mrf.mxu0
      %v416 = vpop.f32.mrf.mxu0
      %417 = vdwg.mxu0
      %418 = vrot.lane.b32.xlu0 %v263, 64
      %v419 = vpop.permute.xlu0 %418
      %421 = vrot.lane.b32.xlu0 %v363, 64
      %v422 = vpop.permute.xlu0 %421
      %v425 = vsel %vm370, %v361, 0
      %v428 = vsel %vm374, %v419, 0
      %430 = vmatprep.subr.bf16.mxu0 0
      %431 = vmatpush1.bf16.msra.mxu0 0
      %432 = vmatprep.subr.bf16.mxu0 0
      %433 = vmatpush1.bf16.msra.mxu0 0
      %434 = vmatprep.subr.bf16.mxu0 0
      %435 = vmatpush1.bf16.msra.mxu0 0
      %436 = vmatprep.subr.bf16.mxu0 0
      %437 = vmatpush1.bf16.msra.mxu0 0
      %438 = vmatprep.subr.bf16.mxu0 0
      %439 = vmatpush1.bf16.msra.mxu0 0
      %440 = vmatprep.subr.bf16.mxu0 0
      %441 = vmatpush1.bf16.msra.mxu0 0
      %442 = vmatprep.subr.bf16.mxu0 0
      %443 = vmatpush1.bf16.msra.mxu0 0
      %444 = vmatprep.subr.bf16.mxu0 0
      %445 = vmatpush1.bf16.msra.mxu0 %v428
      %446 = vmatprep.subr.bf16.mxu0 0
      %447 = vmatpush2.bf16.msra.mxu0 0
      %448 = vmatprep.subr.bf16.mxu0 0
      %449 = vmatpush2.bf16.msra.mxu0 0
      %450 = vmatprep.subr.bf16.mxu0 0
      %451 = vmatpush2.bf16.msra.mxu0 0
      %452 = vmatprep.subr.bf16.mxu0 0
      %453 = vmatpush2.bf16.msra.mxu0 0
      %454 = vmatprep.subr.bf16.mxu0 0
      %455 = vmatpush2.bf16.msra.mxu0 0
      %456 = vmatprep.subr.bf16.mxu0 0
      %457 = vmatpush2.bf16.msra.mxu0 0
      %458 = vmatprep.subr.bf16.mxu0 0
      %459 = vmatpush2.bf16.msra.mxu0 0
      %460 = vmatprep.subr.bf16.mxu0 0
      %461 = vmatpush2.bf16.msra.mxu0 0
      %462 = vmatprep.mubr.bf16.mxu0 0
      %463 = vmatmul.mubr.bf16.gmra.mxu0 %v425
      %v464 = vpop.f32.mrf.mxu0
      %v465 = vadd.f32 %v422, %v464
      %v466 = vpop.f32.mrf.mxu0
      %v467 = vpop.f32.mrf.mxu0
      %v468 = vpop.f32.mrf.mxu0
      %469 = vdwg.mxu0
      %v470 = vrcp.pop %v358
      %v471 = vrcp.pop %v359
      %v472 = vmul.f32 %v413, %v470
      %v473 = vmul.f32 %v465, %v471
      %v474 = vpack.c.bf16 %v472, %v472
      %v475 = vpack.c.bf16 %v473, %v473
      %v477 = vsel %vm209, %v197, 0
      %479 = vmatprep.subr.bf16.mxu0 0
      %480 = vmatpush1.bf16.xpose.msra.mxu0 0
      %481 = vmatprep.subr.bf16.mxu0 0
      %482 = vmatpush1.bf16.xpose.msra.mxu0 0
      %483 = vmatprep.subr.bf16.mxu0 0
      %484 = vmatpush1.bf16.xpose.msra.mxu0 0
      %485 = vmatprep.subr.bf16.mxu0 0
      %486 = vmatpush1.bf16.xpose.msra.mxu0 0
      %487 = vmatprep.subr.bf16.mxu0 0
      %488 = vmatpush1.bf16.xpose.msra.mxu0 0
      %489 = vmatprep.subr.bf16.mxu0 0
      %490 = vmatpush1.bf16.xpose.msra.mxu0 0
      %491 = vmatprep.subr.bf16.mxu0 0
      %492 = vmatpush1.bf16.xpose.msra.mxu0 0
      %493 = vmatprep.subr.bf16.mxu0 0
      %494 = vmatpush1.bf16.xpose.msra.mxu0 %v214
      %495 = vmatprep.subr.bf16.mxu0 0
      %496 = vmatpush2.bf16.xpose.msra.mxu0 0
      %497 = vmatprep.subr.bf16.mxu0 0
      %498 = vmatpush2.bf16.xpose.msra.mxu0 0
      %499 = vmatprep.subr.bf16.mxu0 0
      %500 = vmatpush2.bf16.xpose.msra.mxu0 0
      %501 = vmatprep.subr.bf16.mxu0 0
      %502 = vmatpush2.bf16.xpose.msra.mxu0 0
      %503 = vmatprep.subr.bf16.mxu0 0
      %504 = vmatpush2.bf16.xpose.msra.mxu0 0
      %505 = vmatprep.subr.bf16.mxu0 0
      %506 = vmatpush2.bf16.xpose.msra.mxu0 0
      %507 = vmatprep.subr.bf16.mxu0 0
      %508 = vmatpush2.bf16.xpose.msra.mxu0 0
      %509 = vmatprep.subr.bf16.mxu0 0
      %510 = vmatpush2.bf16.xpose.msra.mxu0 0
      %511 = vmatprep.mubr.bf16.mxu0 0
      %512 = vmatmul.mubr.bf16.gmra.mxu0 %v477
      %v513 = vpop.f32.mrf.mxu0
      %v514 = vadd.f32 0.0, %v513
      %v515 = vpop.f32.mrf.mxu0
      %v516 = vpop.f32.mrf.mxu0
      %v517 = vpop.f32.mrf.mxu0
      %518 = vdwg.mxu0
      %519 = vmatprep.subr.bf16.mxu0 0
      %520 = vmatpush1.bf16.xpose.msra.mxu0 0
      %521 = vmatprep.subr.bf16.mxu0 0
      %522 = vmatpush1.bf16.xpose.msra.mxu0 0
      %523 = vmatprep.subr.bf16.mxu0 0
      %524 = vmatpush1.bf16.xpose.msra.mxu0 0
      %525 = vmatprep.subr.bf16.mxu0 0
      %526 = vmatpush1.bf16.xpose.msra.mxu0 0
      %527 = vmatprep.subr.bf16.mxu0 0
      %528 = vmatpush1.bf16.xpose.msra.mxu0 0
      %529 = vmatprep.subr.bf16.mxu0 0
      %530 = vmatpush1.bf16.xpose.msra.mxu0 0
      %531 = vmatprep.subr.bf16.mxu0 0
      %532 = vmatpush1.bf16.xpose.msra.mxu0 0
      %533 = vmatprep.subr.bf16.mxu0 0
      %534 = vmatpush1.bf16.xpose.msra.mxu0 %v270
      %535 = vmatprep.subr.bf16.mxu0 0
      %536 = vmatpush2.bf16.xpose.msra.mxu0 0
      %537 = vmatprep.subr.bf16.mxu0 0
      %538 = vmatpush2.bf16.xpose.msra.mxu0 0
      %539 = vmatprep.subr.bf16.mxu0 0
      %540 = vmatpush2.bf16.xpose.msra.mxu0 0
      %541 = vmatprep.subr.bf16.mxu0 0
      %542 = vmatpush2.bf16.xpose.msra.mxu0 0
      %543 = vmatprep.subr.bf16.mxu0 0
      %544 = vmatpush2.bf16.xpose.msra.mxu0 0
      %545 = vmatprep.subr.bf16.mxu0 0
      %546 = vmatpush2.bf16.xpose.msra.mxu0 0
      %547 = vmatprep.subr.bf16.mxu0 0
      %548 = vmatpush2.bf16.xpose.msra.mxu0 0
      %549 = vmatprep.subr.bf16.mxu0 0
      %550 = vmatpush2.bf16.xpose.msra.mxu0 0
      %551 = vmatprep.mubr.bf16.mxu0 0
      %552 = vmatmul.mubr.bf16.gmra.mxu0 %v477
      %v553 = vpop.f32.mrf.mxu0
      %v554 = vadd.f32 0.0, %v553
      %v555 = vpop.f32.mrf.mxu0
      %v556 = vpop.f32.mrf.mxu0
      %v557 = vpop.f32.mrf.mxu0
      %558 = vdwg.mxu0
      %560 = vrot.lane.b32.xlu0 %v198, 96
      %v561 = vpop.permute.xlu0 %560
      %v563 = vmul.f32 %v198, %v561
      %vm564 = vcmask 57344
      %v565 = vsel %vm564, %v563, 0.0
      %566 = vadd.xlane.f32.xlu0 %v565
      %v567 = vpop.xlane.xlu0 %566
      %v568 = vrot.slane %v567, 4
      %v569 = vadd.f32 %v567, %v568
      %v570 = vrot.slane %v569, 2
      %v571 = vadd.f32 %v569, %v570
      %v572 = vrot.slane %v571, 1
      %v573 = vadd.f32 %v571, %v572
      %s574 = vtos %v573
      %vm575 = vcmask 24576
      %v576 = vsel %vm575, %v514, -inf
      %v577 = vsel %vm575, %v554, -inf
      %v578 = vmax.f32 %v576, %v577
      %579 = vmax.xlane.f32.xlu0 %v578
      %v580 = vpop.xlane.xlu0 %579
      %v581 = vrot.slane %v580, 4
      %v582 = vmax.f32 %v580, %v581
      %v583 = vrot.slane %v582, 2
      %v584 = vmax.f32 %v582, %v583
      %v585 = vrot.slane %v584, 1
      %v586 = vmax.f32 %v584, %v585
      %s587 = vtos %v586
      %s588 = smax.f32 %s587, %s574
      %v589 = vstv %s588
      %v590 = vsub.f32 %v514, %v589
      %v591 = vsub.f32 %v554, %v589
      %v592 = vmul.f32 %v590, 1.442695
      %v593 = vpow.pop %v592
      %v594 = vmul.f32 %v591, 1.442695
      %v595 = vpow.pop %v594
      %s596 = ssub.f32 %s574, %s588
      %v597 = vstv %s596
      %v598 = vmul.f32 %v597, 1.442695
      %v599 = vpow.pop %v598
      %s600 = vtos %v599
      %v601 = vsel %vm575, %v593, 0.0
      %v602 = vsel %vm575, %v595, 0.0
      %v603 = vadd.f32 %v601, %v602
      %604 = vadd.xlane.f32.xlu0 %v603
      %v605 = vpop.xlane.xlu0 %604
      %v606 = vrot.slane %v605, 4
      %v607 = vadd.f32 %v605, %v606
      %v608 = vrot.slane %v607, 2
      %v609 = vadd.f32 %v607, %v608
      %v610 = vrot.slane %v609, 1
      %v611 = vadd.f32 %v609, %v610
      %s612 = vtos %v611
      %s613 = sadd.f32 %s612, %s600
      %v614 = vpack.c.bf16 %v593, %v593
      %v615 = vpack.c.bf16 %v595, %v595
      %v617 = vsel %vm370, %v614, 0
      %619 = vmatprep.subr.bf16.mxu0 0
      %620 = vmatpush1.bf16.msra.mxu0 0
      %621 = vmatprep.subr.bf16.mxu0 0
      %622 = vmatpush1.bf16.msra.mxu0 0
      %623 = vmatprep.subr.bf16.mxu0 0
      %624 = vmatpush1.bf16.msra.mxu0 0
      %625 = vmatprep.subr.bf16.mxu0 0
      %626 = vmatpush1.bf16.msra.mxu0 0
      %627 = vmatprep.subr.bf16.mxu0 0
      %628 = vmatpush1.bf16.msra.mxu0 0
      %629 = vmatprep.subr.bf16.mxu0 0
      %630 = vmatpush1.bf16.msra.mxu0 0
      %631 = vmatprep.subr.bf16.mxu0 0
      %632 = vmatpush1.bf16.msra.mxu0 0
      %633 = vmatprep.subr.bf16.mxu0 0
      %634 = vmatpush1.bf16.msra.mxu0 %v376
      %635 = vmatprep.subr.bf16.mxu0 0
      %636 = vmatpush2.bf16.msra.mxu0 0
      %637 = vmatprep.subr.bf16.mxu0 0
      %638 = vmatpush2.bf16.msra.mxu0 0
      %639 = vmatprep.subr.bf16.mxu0 0
      %640 = vmatpush2.bf16.msra.mxu0 0
      %641 = vmatprep.subr.bf16.mxu0 0
      %642 = vmatpush2.bf16.msra.mxu0 0
      %643 = vmatprep.subr.bf16.mxu0 0
      %644 = vmatpush2.bf16.msra.mxu0 0
      %645 = vmatprep.subr.bf16.mxu0 0
      %646 = vmatpush2.bf16.msra.mxu0 0
      %647 = vmatprep.subr.bf16.mxu0 0
      %648 = vmatpush2.bf16.msra.mxu0 0
      %649 = vmatprep.subr.bf16.mxu0 0
      %650 = vmatpush2.bf16.msra.mxu0 0
      %651 = vmatprep.mubr.bf16.mxu0 0
      %652 = vmatmul.mubr.bf16.gmra.mxu0 %v617
      %v653 = vpop.f32.mrf.mxu0
      %v654 = vadd.f32 0.0, %v653
      %v655 = vpop.f32.mrf.mxu0
      %v656 = vpop.f32.mrf.mxu0
      %v657 = vpop.f32.mrf.mxu0
      %658 = vdwg.mxu0
      %v660 = vsel %vm370, %v615, 0
      %662 = vmatprep.subr.bf16.mxu0 0
      %663 = vmatpush1.bf16.msra.mxu0 0
      %664 = vmatprep.subr.bf16.mxu0 0
      %665 = vmatpush1.bf16.msra.mxu0 0
      %666 = vmatprep.subr.bf16.mxu0 0
      %667 = vmatpush1.bf16.msra.mxu0 0
      %668 = vmatprep.subr.bf16.mxu0 0
      %669 = vmatpush1.bf16.msra.mxu0 0
      %670 = vmatprep.subr.bf16.mxu0 0
      %671 = vmatpush1.bf16.msra.mxu0 0
      %672 = vmatprep.subr.bf16.mxu0 0
      %673 = vmatpush1.bf16.msra.mxu0 0
      %674 = vmatprep.subr.bf16.mxu0 0
      %675 = vmatpush1.bf16.msra.mxu0 0
      %676 = vmatprep.subr.bf16.mxu0 0
      %677 = vmatpush1.bf16.msra.mxu0 %v428
      %678 = vmatprep.subr.bf16.mxu0 0
      %679 = vmatpush2.bf16.msra.mxu0 0
      %680 = vmatprep.subr.bf16.mxu0 0
      %681 = vmatpush2.bf16.msra.mxu0 0
      %682 = vmatprep.subr.bf16.mxu0 0
      %683 = vmatpush2.bf16.msra.mxu0 0
      %684 = vmatprep.subr.bf16.mxu0 0
      %685 = vmatpush2.bf16.msra.mxu0 0
      %686 = vmatprep.subr.bf16.mxu0 0
      %687 = vmatpush2.bf16.msra.mxu0 0
      %688 = vmatprep.subr.bf16.mxu0 0
      %689 = vmatpush2.bf16.msra.mxu0 0
      %690 = vmatprep.subr.bf16.mxu0 0
      %691 = vmatpush2.bf16.msra.mxu0 0
      %692 = vmatprep.subr.bf16.mxu0 0
      %693 = vmatpush2.bf16.msra.mxu0 0
      %694 = vmatprep.mubr.bf16.mxu0 0
      %695 = vmatmul.mubr.bf16.gmra.mxu0 %v660
      %v696 = vpop.f32.mrf.mxu0
      %v697 = vadd.f32 0.0, %v696
      %v698 = vpop.f32.mrf.mxu0
      %v699 = vpop.f32.mrf.mxu0
      %v700 = vpop.f32.mrf.mxu0
      %701 = vdwg.mxu0
      %v702 = vsel %vm564, %v654, 0.0
      %v703 = vsel %vm564, %v697, 0.0
      %v704 = vadd.f32 %v702, %v703
      %v705 = vstv %s600
      %v706 = vmul.f32 %v705, %v198
      %v708 = vlaneseq
      %v709 = vshrl.u32 %v708, 7
      %v710 = vsub.s32 0, %v709
      %v711 = vrot.slane %v706, %v710
      %712 = vrot.lane.b32.xlu0 %v711, 64
      %v713 = vpop.permute.xlu0 %712
      %v715 = vadd.f32 %v704, %v713
      %v716 = vstv %s613
      %v717 = vrcp.pop %v716
      %v718 = vmul.f32 %v715, %v717
      %v719 = vld [vmem:[%s182] sm:$0x3]
      %v720 = vld [vmem:[%s182 + $0x2] sm:$0x3]
      %v721 = vld [vmem:[%s185] sm:$0x1]
      %v722 = vunpack.c.l.bf16 %v721
      %v725 = vunpack.c.l.s4 1983009808
      %v726 = vunpack.c.0.s8 %v725
      %v727 = vlaneseq
      %v728 = vshrl.u32 %v727, 7
      %v729 = vsub.s32 %v726, %v728
      %v730 = vrot.slane %v719, %v729
      %731 = vrot.lane.b32.xlu0 %v730, 120
      %v732 = vpop.permute.xlu0 %731
      %733 = vrot.lane.b32.xlu0 %v730, 88
      %v734 = vpop.permute.xlu0 %733
      %v736 = vsel %vm209, %v732, 0
      %v739 = vsel %vm209, %v734, 0
      %741 = vmatprep.subr.bf16.mxu0 0
      %742 = vmatpush1.bf16.xpose.msra.mxu0 0
      %743 = vmatprep.subr.bf16.mxu0 0
      %744 = vmatpush1.bf16.xpose.msra.mxu0 0
      %745 = vmatprep.subr.bf16.mxu0 0
      %746 = vmatpush1.bf16.xpose.msra.mxu0 0
      %747 = vmatprep.subr.bf16.mxu0 0
      %748 = vmatpush1.bf16.xpose.msra.mxu0 0
      %749 = vmatprep.subr.bf16.mxu0 0
      %750 = vmatpush1.bf16.xpose.msra.mxu0 0
      %751 = vmatprep.subr.bf16.mxu0 0
      %752 = vmatpush1.bf16.xpose.msra.mxu0 0
      %753 = vmatprep.subr.bf16.mxu0 0
      %754 = vmatpush1.bf16.xpose.msra.mxu0 0
      %755 = vmatprep.subr.bf16.mxu0 0
      %756 = vmatpush1.bf16.xpose.msra.mxu0 %v739
      %757 = vmatprep.subr.bf16.mxu0 0
      %758 = vmatpush2.bf16.xpose.msra.mxu0 0
      %759 = vmatprep.subr.bf16.mxu0 0
      %760 = vmatpush2.bf16.xpose.msra.mxu0 0
      %761 = vmatprep.subr.bf16.mxu0 0
      %762 = vmatpush2.bf16.xpose.msra.mxu0 0
      %763 = vmatprep.subr.bf16.mxu0 0
      %764 = vmatpush2.bf16.xpose.msra.mxu0 0
      %765 = vmatprep.subr.bf16.mxu0 0
      %766 = vmatpush2.bf16.xpose.msra.mxu0 0
      %767 = vmatprep.subr.bf16.mxu0 0
      %768 = vmatpush2.bf16.xpose.msra.mxu0 0
      %769 = vmatprep.subr.bf16.mxu0 0
      %770 = vmatpush2.bf16.xpose.msra.mxu0 0
      %771 = vmatprep.subr.bf16.mxu0 0
      %772 = vmatpush2.bf16.xpose.msra.mxu0 0
      %773 = vmatprep.mubr.bf16.mxu0 0
      %774 = vmatmul.mubr.bf16.gmra.mxu0 %v736
      %v775 = vpop.f32.mrf.mxu0
      %v776 = vadd.f32 0.0, %v775
      %v777 = vpop.f32.mrf.mxu0
      %v778 = vpop.f32.mrf.mxu0
      %v779 = vpop.f32.mrf.mxu0
      %780 = vdwg.mxu0
      %v783 = vunpack.c.l.s4 1983009808
      %v784 = vunpack.c.0.s8 %v783
      %v785 = vlaneseq
      %v786 = vshrl.u32 %v785, 7
      %v787 = vsub.s32 %v784, %v786
      %v788 = vrot.slane %v720, %v787
      %789 = vrot.lane.b32.xlu0 %v788, 120
      %v790 = vpop.permute.xlu0 %789
      %791 = vrot.lane.b32.xlu0 %v788, 88
      %v792 = vpop.permute.xlu0 %791
      %v794 = vsel %vm209, %v790, 0
      %v797 = vsel %vm209, %v792, 0
      %799 = vmatprep.subr.bf16.mxu0 0
      %800 = vmatpush1.bf16.xpose.msra.mxu0 0
      %801 = vmatprep.subr.bf16.mxu0 0
      %802 = vmatpush1.bf16.xpose.msra.mxu0 0
      %803 = vmatprep.subr.bf16.mxu0 0
      %804 = vmatpush1.bf16.xpose.msra.mxu0 0
      %805 = vmatprep.subr.bf16.mxu0 0
      %806 = vmatpush1.bf16.xpose.msra.mxu0 0
      %807 = vmatprep.subr.bf16.mxu0 0
      %808 = vmatpush1.bf16.xpose.msra.mxu0 0
      %809 = vmatprep.subr.bf16.mxu0 0
      %810 = vmatpush1.bf16.xpose.msra.mxu0 0
      %811 = vmatprep.subr.bf16.mxu0 0
      %812 = vmatpush1.bf16.xpose.msra.mxu0 0
      %813 = vmatprep.subr.bf16.mxu0 0
      %814 = vmatpush1.bf16.xpose.msra.mxu0 %v797
      %815 = vmatprep.subr.bf16.mxu0 0
      %816 = vmatpush2.bf16.xpose.msra.mxu0 0
      %817 = vmatprep.subr.bf16.mxu0 0
      %818 = vmatpush2.bf16.xpose.msra.mxu0 0
      %819 = vmatprep.subr.bf16.mxu0 0
      %820 = vmatpush2.bf16.xpose.msra.mxu0 0
      %821 = vmatprep.subr.bf16.mxu0 0
      %822 = vmatpush2.bf16.xpose.msra.mxu0 0
      %823 = vmatprep.subr.bf16.mxu0 0
      %824 = vmatpush2.bf16.xpose.msra.mxu0 0
      %825 = vmatprep.subr.bf16.mxu0 0
      %826 = vmatpush2.bf16.xpose.msra.mxu0 0
      %827 = vmatprep.subr.bf16.mxu0 0
      %828 = vmatpush2.bf16.xpose.msra.mxu0 0
      %829 = vmatprep.subr.bf16.mxu0 0
      %830 = vmatpush2.bf16.xpose.msra.mxu0 0
      %831 = vmatprep.mubr.bf16.mxu0 0
      %832 = vmatmul.mubr.bf16.gmra.mxu0 %v794
      %v833 = vpop.f32.mrf.mxu0
      %v834 = vadd.f32 0.0, %v833
      %v835 = vpop.f32.mrf.mxu0
      %v836 = vpop.f32.mrf.mxu0
      %v837 = vpop.f32.mrf.mxu0
      %838 = vdwg.mxu0
      %v839 = vunpack.c.l.bf16 %v719
      %v840 = vunpack.c.l.bf16 %v720
      %v841 = vlaneseq
      %v842 = vshrl.u32 %v841, 7
      %v843 = vsub.s32 0, %v842
      %v844 = vrot.slane %v722, %v843
      %846 = vrot.lane.b32.xlu0 %v844, 96
      %v847 = vpop.permute.xlu0 %846
      %v849 = vmul.f32 %v839, %v847
      %v850 = vmul.f32 %v840, %v847
      %853 = vrot.lane.b32.xlu0 %v849, 120
      %v854 = vpop.permute.xlu0 %853
      %855 = vrot.lane.b32.xlu0 %v850, 120
      %v856 = vpop.permute.xlu0 %855
      %v859 = vsel %vm324, %v854, 0.0
      %860 = vadd.xlane.f32.xlu0 %v859
      %v861 = vpop.xlane.xlu0 %860
      %v862 = vsel %vm324, %v856, 0.0
      %863 = vadd.xlane.f32.xlu0 %v862
      %v864 = vpop.xlane.xlu0 %863
      %v865 = vsel %vm331, %v776, -inf
      %866 = vmax.xlane.f32.xlu0 %v865
      %v867 = vpop.xlane.xlu0 %866
      %v868 = vsel %vm331, %v834, -inf
      %869 = vmax.xlane.f32.xlu0 %v868
      %v870 = vpop.xlane.xlu0 %869
      %v871 = vmax.f32 %v867, %v861
      %v872 = vmax.f32 %v870, %v864
      %v873 = vsub.f32 %v776, %v871
      %v874 = vsub.f32 %v834, %v872
      %v875 = vmul.f32 %v873, 1.442695
      %v876 = vpow.pop %v875
      %v877 = vmul.f32 %v874, 1.442695
      %v878 = vpow.pop %v877
      %v879 = vsub.f32 %v861, %v871
      %v880 = vsub.f32 %v864, %v872
      %v881 = vmul.f32 %v879, 1.442695
      %v882 = vpow.pop %v881
      %v883 = vmul.f32 %v880, 1.442695
      %v884 = vpow.pop %v883
      %v885 = vsel %vm331, %v876, 0.0
      %886 = vadd.xlane.f32.xlu0 %v885
      %v887 = vpop.xlane.xlu0 %886
      %v888 = vsel %vm331, %v878, 0.0
      %889 = vadd.xlane.f32.xlu0 %v888
      %v890 = vpop.xlane.xlu0 %889
      %v891 = vadd.f32 %v887, %v882
      %v892 = vadd.f32 %v890, %v884
      %v893 = vpack.c.bf16 %v876, %v876
      %v894 = vpack.c.bf16 %v878, %v878
      %v895 = vmul.f32 %v882, %v844
      %v896 = vmul.f32 %v884, %v844
      %897 = vrot.lane.b32.xlu0 %v730, 56
      %v898 = vpop.permute.xlu0 %897
      %900 = vrot.lane.b32.xlu0 %v895, 56
      %v901 = vpop.permute.xlu0 %900
      %v904 = vsel %vm370, %v893, 0
      %v907 = vsel %vm374, %v898, 0
      %909 = vmatprep.subr.bf16.mxu0 0
      %910 = vmatpush1.bf16.msra.mxu0 0
      %911 = vmatprep.subr.bf16.mxu0 0
      %912 = vmatpush1.bf16.msra.mxu0 0
      %913 = vmatprep.subr.bf16.mxu0 0
      %914 = vmatpush1.bf16.msra.mxu0 0
      %915 = vmatprep.subr.bf16.mxu0 0
      %916 = vmatpush1.bf16.msra.mxu0 0
      %917 = vmatprep.subr.bf16.mxu0 0
      %918 = vmatpush1.bf16.msra.mxu0 0
      %919 = vmatprep.subr.bf16.mxu0 0
      %920 = vmatpush1.bf16.msra.mxu0 0
      %921 = vmatprep.subr.bf16.mxu0 0
      %922 = vmatpush1.bf16.msra.mxu0 0
      %923 = vmatprep.subr.bf16.mxu0 0
      %924 = vmatpush1.bf16.msra.mxu0 %v907
      %925 = vmatprep.subr.bf16.mxu0 0
      %926 = vmatpush2.bf16.msra.mxu0 0
      %927 = vmatprep.subr.bf16.mxu0 0
      %928 = vmatpush2.bf16.msra.mxu0 0
      %929 = vmatprep.subr.bf16.mxu0 0
      %930 = vmatpush2.bf16.msra.mxu0 0
      %931 = vmatprep.subr.bf16.mxu0 0
      %932 = vmatpush2.bf16.msra.mxu0 0
      %933 = vmatprep.subr.bf16.mxu0 0
      %934 = vmatpush2.bf16.msra.mxu0 0
      %935 = vmatprep.subr.bf16.mxu0 0
      %936 = vmatpush2.bf16.msra.mxu0 0
      %937 = vmatprep.subr.bf16.mxu0 0
      %938 = vmatpush2.bf16.msra.mxu0 0
      %939 = vmatprep.subr.bf16.mxu0 0
      %940 = vmatpush2.bf16.msra.mxu0 0
      %941 = vmatprep.mubr.bf16.mxu0 0
      %942 = vmatmul.mubr.bf16.gmra.mxu0 %v904
      %v943 = vpop.f32.mrf.mxu0
      %v944 = vadd.f32 %v901, %v943
      %v945 = vpop.f32.mrf.mxu0
      %v946 = vpop.f32.mrf.mxu0
      %v947 = vpop.f32.mrf.mxu0
      %948 = vdwg.mxu0
      %949 = vrot.lane.b32.xlu0 %v788, 56
      %v950 = vpop.permute.xlu0 %949
      %952 = vrot.lane.b32.xlu0 %v896, 56
      %v953 = vpop.permute.xlu0 %952
      %v956 = vsel %vm370, %v894, 0
      %v959 = vsel %vm374, %v950, 0
      %961 = vmatprep.subr.bf16.mxu0 0
      %962 = vmatpush1.bf16.msra.mxu0 0
      %963 = vmatprep.subr.bf16.mxu0 0
      %964 = vmatpush1.bf16.msra.mxu0 0
      %965 = vmatprep.subr.bf16.mxu0 0
      %966 = vmatpush1.bf16.msra.mxu0 0
      %967 = vmatprep.subr.bf16.mxu0 0
      %968 = vmatpush1.bf16.msra.mxu0 0
      %969 = vmatprep.subr.bf16.mxu0 0
      %970 = vmatpush1.bf16.msra.mxu0 0
      %971 = vmatprep.subr.bf16.mxu0 0
      %972 = vmatpush1.bf16.msra.mxu0 0
      %973 = vmatprep.subr.bf16.mxu0 0
      %974 = vmatpush1.bf16.msra.mxu0 0
      %975 = vmatprep.subr.bf16.mxu0 0
      %976 = vmatpush1.bf16.msra.mxu0 %v959
      %977 = vmatprep.subr.bf16.mxu0 0
      %978 = vmatpush2.bf16.msra.mxu0 0
      %979 = vmatprep.subr.bf16.mxu0 0
      %980 = vmatpush2.bf16.msra.mxu0 0
      %981 = vmatprep.subr.bf16.mxu0 0
      %982 = vmatpush2.bf16.msra.mxu0 0
      %983 = vmatprep.subr.bf16.mxu0 0
      %984 = vmatpush2.bf16.msra.mxu0 0
      %985 = vmatprep.subr.bf16.mxu0 0
      %986 = vmatpush2.bf16.msra.mxu0 0
      %987 = vmatprep.subr.bf16.mxu0 0
      %988 = vmatpush2.bf16.msra.mxu0 0
      %989 = vmatprep.subr.bf16.mxu0 0
      %990 = vmatpush2.bf16.msra.mxu0 0
      %991 = vmatprep.subr.bf16.mxu0 0
      %992 = vmatpush2.bf16.msra.mxu0 0
      %993 = vmatprep.mubr.bf16.mxu0 0
      %994 = vmatmul.mubr.bf16.gmra.mxu0 %v956
      %v995 = vpop.f32.mrf.mxu0
      %v996 = vadd.f32 %v953, %v995
      %v997 = vpop.f32.mrf.mxu0
      %v998 = vpop.f32.mrf.mxu0
      %v999 = vpop.f32.mrf.mxu0
      %1000 = vdwg.mxu0
      %v1001 = vrcp.pop %v891
      %v1002 = vrcp.pop %v892
      %v1003 = vmul.f32 %v944, %v1001
      %v1004 = vmul.f32 %v996, %v1002
      %v1005 = vpack.c.bf16 %v1003, %v1003
      %v1006 = vpack.c.bf16 %v1004, %v1004
      %v1009 = vunpack.c.l.s4 1966171168
      %v1010 = vunpack.c.0.s8 %v1009
      %v1011 = vlaneseq
      %v1012 = vshrl.u32 %v1011, 7
      %v1013 = vsub.s32 %v1010, %v1012
      %v1014 = vrot.slane %v721, %v1013
      %v1016 = vunpack.c.l.s4 1966171168
      %v1017 = vunpack.c.0.s8 %v1016
      %v1018 = vlaneseq
      %v1019 = vshrl.u32 %v1018, 7
      %v1020 = vsub.s32 %v1017, %v1019
      %v1021 = vrot.slane %v1014, %v1020
      %1022 = vrot.lane.b32.xlu0 %v1021, 120
      %v1023 = vpop.permute.xlu0 %1022
      %v1025 = vsel %vm209, %v1023, 0
      %1027 = vmatprep.subr.bf16.mxu0 0
      %1028 = vmatpush1.bf16.xpose.msra.mxu0 0
      %1029 = vmatprep.subr.bf16.mxu0 0
      %1030 = vmatpush1.bf16.xpose.msra.mxu0 0
      %1031 = vmatprep.subr.bf16.mxu0 0
      %1032 = vmatpush1.bf16.xpose.msra.mxu0 0
      %1033 = vmatprep.subr.bf16.mxu0 0
      %1034 = vmatpush1.bf16.xpose.msra.mxu0 0
      %1035 = vmatprep.subr.bf16.mxu0 0
      %1036 = vmatpush1.bf16.xpose.msra.mxu0 0
      %1037 = vmatprep.subr.bf16.mxu0 0
      %1038 = vmatpush1.bf16.xpose.msra.mxu0 0
      %1039 = vmatprep.subr.bf16.mxu0 0
      %1040 = vmatpush1.bf16.xpose.msra.mxu0 0
      %1041 = vmatprep.subr.bf16.mxu0 0
      %1042 = vmatpush1.bf16.xpose.msra.mxu0 %v739
      %1043 = vmatprep.subr.bf16.mxu0 0
      %1044 = vmatpush2.bf16.xpose.msra.mxu0 0
      %1045 = vmatprep.subr.bf16.mxu0 0
      %1046 = vmatpush2.bf16.xpose.msra.mxu0 0
      %1047 = vmatprep.subr.bf16.mxu0 0
      %1048 = vmatpush2.bf16.xpose.msra.mxu0 0
      %1049 = vmatprep.subr.bf16.mxu0 0
      %1050 = vmatpush2.bf16.xpose.msra.mxu0 0
      %1051 = vmatprep.subr.bf16.mxu0 0
      %1052 = vmatpush2.bf16.xpose.msra.mxu0 0
      %1053 = vmatprep.subr.bf16.mxu0 0
      %1054 = vmatpush2.bf16.xpose.msra.mxu0 0
      %1055 = vmatprep.subr.bf16.mxu0 0
      %1056 = vmatpush2.bf16.xpose.msra.mxu0 0
      %1057 = vmatprep.subr.bf16.mxu0 0
      %1058 = vmatpush2.bf16.xpose.msra.mxu0 0
      %1059 = vmatprep.mubr.bf16.mxu0 0
      %1060 = vmatmul.mubr.bf16.gmra.mxu0 %v1025
      %v1061 = vpop.f32.mrf.mxu0
      %v1062 = vadd.f32 0.0, %v1061
      %v1063 = vpop.f32.mrf.mxu0
      %v1064 = vpop.f32.mrf.mxu0
      %v1065 = vpop.f32.mrf.mxu0
      %1066 = vdwg.mxu0
      %1067 = vmatprep.subr.bf16.mxu0 0
      %1068 = vmatpush1.bf16.xpose.msra.mxu0 0
      %1069 = vmatprep.subr.bf16.mxu0 0
      %1070 = vmatpush1.bf16.xpose.msra.mxu0 0
      %1071 = vmatprep.subr.bf16.mxu0 0
      %1072 = vmatpush1.bf16.xpose.msra.mxu0 0
      %1073 = vmatprep.subr.bf16.mxu0 0
      %1074 = vmatpush1.bf16.xpose.msra.mxu0 0
      %1075 = vmatprep.subr.bf16.mxu0 0
      %1076 = vmatpush1.bf16.xpose.msra.mxu0 0
      %1077 = vmatprep.subr.bf16.mxu0 0
      %1078 = vmatpush1.bf16.xpose.msra.mxu0 0
      %1079 = vmatprep.subr.bf16.mxu0 0
      %1080 = vmatpush1.bf16.xpose.msra.mxu0 0
      %1081 = vmatprep.subr.bf16.mxu0 0
      %1082 = vmatpush1.bf16.xpose.msra.mxu0 %v797
      %1083 = vmatprep.subr.bf16.mxu0 0
      %1084 = vmatpush2.bf16.xpose.msra.mxu0 0
      %1085 = vmatprep.subr.bf16.mxu0 0
      %1086 = vmatpush2.bf16.xpose.msra.mxu0 0
      %1087 = vmatprep.subr.bf16.mxu0 0
      %1088 = vmatpush2.bf16.xpose.msra.mxu0 0
      %1089 = vmatprep.subr.bf16.mxu0 0
      %1090 = vmatpush2.bf16.xpose.msra.mxu0 0
      %1091 = vmatprep.subr.bf16.mxu0 0
      %1092 = vmatpush2.bf16.xpose.msra.mxu0 0
      %1093 = vmatprep.subr.bf16.mxu0 0
      %1094 = vmatpush2.bf16.xpose.msra.mxu0 0
      %1095 = vmatprep.subr.bf16.mxu0 0
      %1096 = vmatpush2.bf16.xpose.msra.mxu0 0
      %1097 = vmatprep.subr.bf16.mxu0 0
      %1098 = vmatpush2.bf16.xpose.msra.mxu0 0
      %1099 = vmatprep.mubr.bf16.mxu0 0
      %1100 = vmatmul.mubr.bf16.gmra.mxu0 %v1025
      %v1101 = vpop.f32.mrf.mxu0
      %v1102 = vadd.f32 0.0, %v1101
      %v1103 = vpop.f32.mrf.mxu0
      %v1104 = vpop.f32.mrf.mxu0
      %v1105 = vpop.f32.mrf.mxu0
      %1106 = vdwg.mxu0
      %1108 = vrot.lane.b32.xlu0 %v722, 96
      %v1109 = vpop.permute.xlu0 %1108
      %v1111 = vmul.f32 %v722, %v1109
      %v1113 = vlaneseq
      %v1114 = vshrl.u32 %v1113, 7
      %v1115 = vsub.s32 0, %v1114
      %v1116 = vrot.slane %v1111, %v1115
      %1117 = vrot.lane.b32.xlu0 %v1116, 120
      %v1118 = vpop.permute.xlu0 %1117
      %v1120 = vsel %vm564, %v1118, 0.0
      %1121 = vadd.xlane.f32.xlu0 %v1120
      %v1122 = vpop.xlane.xlu0 %1121
      %v1123 = vrot.slane %v1122, 4
      %v1124 = vadd.f32 %v1122, %v1123
      %v1125 = vrot.slane %v1124, 2
      %v1126 = vadd.f32 %v1124, %v1125
      %v1127 = vrot.slane %v1126, 1
      %v1128 = vadd.f32 %v1126, %v1127
      %s1129 = vtos %v1128
      %v1130 = vsel %vm575, %v1062, -inf
      %v1131 = vsel %vm575, %v1102, -inf
      %v1132 = vmax.f32 %v1130, %v1131
      %1133 = vmax.xlane.f32.xlu0 %v1132
      %v1134 = vpop.xlane.xlu0 %1133
      %v1135 = vrot.slane %v1134, 4
      %v1136 = vmax.f32 %v1134, %v1135
      %v1137 = vrot.slane %v1136, 2
      %v1138 = vmax.f32 %v1136, %v1137
      %v1139 = vrot.slane %v1138, 1
      %v1140 = vmax.f32 %v1138, %v1139
      %s1141 = vtos %v1140
      %s1142 = smax.f32 %s1141, %s1129
      %v1143 = vstv %s1142
      %v1144 = vsub.f32 %v1062, %v1143
      %v1145 = vsub.f32 %v1102, %v1143
      %v1146 = vmul.f32 %v1144, 1.442695
      %v1147 = vpow.pop %v1146
      %v1148 = vmul.f32 %v1145, 1.442695
      %v1149 = vpow.pop %v1148
      %s1150 = ssub.f32 %s1129, %s1142
      %v1151 = vstv %s1150
      %v1152 = vmul.f32 %v1151, 1.442695
      %v1153 = vpow.pop %v1152
      %s1154 = vtos %v1153
      %v1155 = vsel %vm575, %v1147, 0.0
      %v1156 = vsel %vm575, %v1149, 0.0
      %v1157 = vadd.f32 %v1155, %v1156
      %1158 = vadd.xlane.f32.xlu0 %v1157
      %v1159 = vpop.xlane.xlu0 %1158
      %v1160 = vrot.slane %v1159, 4
      %v1161 = vadd.f32 %v1159, %v1160
      %v1162 = vrot.slane %v1161, 2
      %v1163 = vadd.f32 %v1161, %v1162
      %v1164 = vrot.slane %v1163, 1
      %v1165 = vadd.f32 %v1163, %v1164
      %s1166 = vtos %v1165
      %s1167 = sadd.f32 %s1166, %s1154
      %v1168 = vpack.c.bf16 %v1147, %v1147
      %v1169 = vpack.c.bf16 %v1149, %v1149
      %v1171 = vsel %vm370, %v1168, 0
      %1173 = vmatprep.subr.bf16.mxu0 0
      %1174 = vmatpush1.bf16.msra.mxu0 0
      %1175 = vmatprep.subr.bf16.mxu0 0
      %1176 = vmatpush1.bf16.msra.mxu0 0
      %1177 = vmatprep.subr.bf16.mxu0 0
      %1178 = vmatpush1.bf16.msra.mxu0 0
      %1179 = vmatprep.subr.bf16.mxu0 0
      %1180 = vmatpush1.bf16.msra.mxu0 0
      %1181 = vmatprep.subr.bf16.mxu0 0
      %1182 = vmatpush1.bf16.msra.mxu0 0
      %1183 = vmatprep.subr.bf16.mxu0 0
      %1184 = vmatpush1.bf16.msra.mxu0 0
      %1185 = vmatprep.subr.bf16.mxu0 0
      %1186 = vmatpush1.bf16.msra.mxu0 0
      %1187 = vmatprep.subr.bf16.mxu0 0
      %1188 = vmatpush1.bf16.msra.mxu0 %v907
      %1189 = vmatprep.subr.bf16.mxu0 0
      %1190 = vmatpush2.bf16.msra.mxu0 0
      %1191 = vmatprep.subr.bf16.mxu0 0
      %1192 = vmatpush2.bf16.msra.mxu0 0
      %1193 = vmatprep.subr.bf16.mxu0 0
      %1194 = vmatpush2.bf16.msra.mxu0 0
      %1195 = vmatprep.subr.bf16.mxu0 0
      %1196 = vmatpush2.bf16.msra.mxu0 0
      %1197 = vmatprep.subr.bf16.mxu0 0
      %1198 = vmatpush2.bf16.msra.mxu0 0
      %1199 = vmatprep.subr.bf16.mxu0 0
      %1200 = vmatpush2.bf16.msra.mxu0 0
      %1201 = vmatprep.subr.bf16.mxu0 0
      %1202 = vmatpush2.bf16.msra.mxu0 0
      %1203 = vmatprep.subr.bf16.mxu0 0
      %1204 = vmatpush2.bf16.msra.mxu0 0
      %1205 = vmatprep.mubr.bf16.mxu0 0
      %1206 = vmatmul.mubr.bf16.gmra.mxu0 %v1171
      %v1207 = vpop.f32.mrf.mxu0
      %v1208 = vadd.f32 0.0, %v1207
      %v1209 = vpop.f32.mrf.mxu0
      %v1210 = vpop.f32.mrf.mxu0
      %v1211 = vpop.f32.mrf.mxu0
      %1212 = vdwg.mxu0
      %v1214 = vsel %vm370, %v1169, 0
      %1216 = vmatprep.subr.bf16.mxu0 0
      %1217 = vmatpush1.bf16.msra.mxu0 0
      %1218 = vmatprep.subr.bf16.mxu0 0
      %1219 = vmatpush1.bf16.msra.mxu0 0
      %1220 = vmatprep.subr.bf16.mxu0 0
      %1221 = vmatpush1.bf16.msra.mxu0 0
      %1222 = vmatprep.subr.bf16.mxu0 0
      %1223 = vmatpush1.bf16.msra.mxu0 0
      %1224 = vmatprep.subr.bf16.mxu0 0
      %1225 = vmatpush1.bf16.msra.mxu0 0
      %1226 = vmatprep.subr.bf16.mxu0 0
      %1227 = vmatpush1.bf16.msra.mxu0 0
      %1228 = vmatprep.subr.bf16.mxu0 0
      %1229 = vmatpush1.bf16.msra.mxu0 0
      %1230 = vmatprep.subr.bf16.mxu0 0
      %1231 = vmatpush1.bf16.msra.mxu0 %v959
      %1232 = vmatprep.subr.bf16.mxu0 0
      %1233 = vmatpush2.bf16.msra.mxu0 0
      %1234 = vmatprep.subr.bf16.mxu0 0
      %1235 = vmatpush2.bf16.msra.mxu0 0
      %1236 = vmatprep.subr.bf16.mxu0 0
      %1237 = vmatpush2.bf16.msra.mxu0 0
      %1238 = vmatprep.subr.bf16.mxu0 0
      %1239 = vmatpush2.bf16.msra.mxu0 0
      %1240 = vmatprep.subr.bf16.mxu0 0
      %1241 = vmatpush2.bf16.msra.mxu0 0
      %1242 = vmatprep.subr.bf16.mxu0 0
      %1243 = vmatpush2.bf16.msra.mxu0 0
      %1244 = vmatprep.subr.bf16.mxu0 0
      %1245 = vmatpush2.bf16.msra.mxu0 0
      %1246 = vmatprep.subr.bf16.mxu0 0
      %1247 = vmatpush2.bf16.msra.mxu0 0
      %1248 = vmatprep.mubr.bf16.mxu0 0
      %1249 = vmatmul.mubr.bf16.gmra.mxu0 %v1214
      %v1250 = vpop.f32.mrf.mxu0
      %v1251 = vadd.f32 0.0, %v1250
      %v1252 = vpop.f32.mrf.mxu0
      %v1253 = vpop.f32.mrf.mxu0
      %v1254 = vpop.f32.mrf.mxu0
      %1255 = vdwg.mxu0
      %v1256 = vsel %vm564, %v1208, 0.0
      %v1257 = vsel %vm564, %v1251, 0.0
      %v1258 = vadd.f32 %v1256, %v1257
      %v1259 = vstv %s1154
      %v1260 = vmul.f32 %v1259, %v722
      %v1262 = vlaneseq
      %v1263 = vshrl.u32 %v1262, 7
      %v1264 = vsub.s32 0, %v1263
      %v1265 = vrot.slane %v1260, %v1264
      %1266 = vrot.lane.b32.xlu0 %v1265, 56
      %v1267 = vpop.permute.xlu0 %1266
      %v1269 = vadd.f32 %v1258, %v1267
      %v1270 = vstv %s1167
      %v1271 = vrcp.pop %v1270
      %v1272 = vmul.f32 %v1269, %v1271
      %v1273 = vld [vmem:[%s182] sm:$0x3]
      %v1274 = vld [vmem:[%s182 + $0x2] sm:$0x3]
      %v1275 = vld [vmem:[%s185] sm:$0x1]
      %v1276 = vunpack.c.l.bf16 %v1275
      %v1279 = vunpack.c.l.s4 1983009808
      %v1280 = vunpack.c.0.s8 %v1279
      %v1281 = vlaneseq
      %v1282 = vshrl.u32 %v1281, 7
      %v1283 = vsub.s32 %v1280, %v1282
      %v1284 = vrot.slane %v1273, %v1283
      %1285 = vrot.lane.b32.xlu0 %v1284, 112
      %v1286 = vpop.permute.xlu0 %1285
      %1287 = vrot.lane.b32.xlu0 %v1284, 80
      %v1288 = vpop.permute.xlu0 %1287
      %v1290 = vsel %vm209, %v1286, 0
      %v1293 = vsel %vm209, %v1288, 0
      %1295 = vmatprep.subr.bf16.mxu0 0
      %1296 = vmatpush1.bf16.xpose.msra.mxu0 0
      %1297 = vmatprep.subr.bf16.mxu0 0
      %1298 = vmatpush1.bf16.xpose.msra.mxu0 0
      %1299 = vmatprep.subr.bf16.mxu0 0
      %1300 = vmatpush1.bf16.xpose.msra.mxu0 0
      %1301 = vmatprep.subr.bf16.mxu0 0
      %1302 = vmatpush1.bf16.xpose.msra.mxu0 0
      %1303 = vmatprep.subr.bf16.mxu0 0
      %1304 = vmatpush1.bf16.xpose.msra.mxu0 0
      %1305 = vmatprep.subr.bf16.mxu0 0
      %1306 = vmatpush1.bf16.xpose.msra.mxu0 0
      %1307 = vmatprep.subr.bf16.mxu0 0
      %1308 = vmatpush1.bf16.xpose.msra.mxu0 0
      %1309 = vmatprep.subr.bf16.mxu0 0
      %1310 = vmatpush1.bf16.xpose.msra.mxu0 %v1293
      %1311 = vmatprep.subr.bf16.mxu0 0
      %1312 = vmatpush2.bf16.xpose.msra.mxu0 0
      %1313 = vmatprep.subr.bf16.mxu0 0
      %1314 = vmatpush2.bf16.xpose.msra.mxu0 0
      %1315 = vmatprep.subr.bf16.mxu0 0
      %1316 = vmatpush2.bf16.xpose.msra.mxu0 0
      %1317 = vmatprep.subr.bf16.mxu0 0
      %1318 = vmatpush2.bf16.xpose.msra.mxu0 0
      %1319 = vmatprep.subr.bf16.mxu0 0
      %1320 = vmatpush2.bf16.xpose.msra.mxu0 0
      %1321 = vmatprep.subr.bf16.mxu0 0
      %1322 = vmatpush2.bf16.xpose.msra.mxu0 0
      %1323 = vmatprep.subr.bf16.mxu0 0
      %1324 = vmatpush2.bf16.xpose.msra.mxu0 0
      %1325 = vmatprep.subr.bf16.mxu0 0
      %1326 = vmatpush2.bf16.xpose.msra.mxu0 0
      %1327 = vmatprep.mubr.bf16.mxu0 0
      %1328 = vmatmul.mubr.bf16.gmra.mxu0 %v1290
      %v1329 = vpop.f32.mrf.mxu0
      %v1330 = vadd.f32 0.0, %v1329
      %v1331 = vpop.f32.mrf.mxu0
      %v1332 = vpop.f32.mrf.mxu0
      %v1333 = vpop.f32.mrf.mxu0
      %1334 = vdwg.mxu0
      %v1337 = vunpack.c.l.s4 1983009808
      %v1338 = vunpack.c.0.s8 %v1337
      %v1339 = vlaneseq
      %v1340 = vshrl.u32 %v1339, 7
      %v1341 = vsub.s32 %v1338, %v1340
      %v1342 = vrot.slane %v1274, %v1341
      %1343 = vrot.lane.b32.xlu0 %v1342, 112
      %v1344 = vpop.permute.xlu0 %1343
      %1345 = vrot.lane.b32.xlu0 %v1342, 80
      %v1346 = vpop.permute.xlu0 %1345
      %v1348 = vsel %vm209, %v1344, 0
      %v1351 = vsel %vm209, %v1346, 0
      %1353 = vmatprep.subr.bf16.mxu0 0
      %1354 = vmatpush1.bf16.xpose.msra.mxu0 0
      %1355 = vmatprep.subr.bf16.mxu0 0
      %1356 = vmatpush1.bf16.xpose.msra.mxu0 0
      %1357 = vmatprep.subr.bf16.mxu0 0
      %1358 = vmatpush1.bf16.xpose.msra.mxu0 0
      %1359 = vmatprep.subr.bf16.mxu0 0
      %1360 = vmatpush1.bf16.xpose.msra.mxu0 0
      %1361 = vmatprep.subr.bf16.mxu0 0
      %1362 = vmatpush1.bf16.xpose.msra.mxu0 0
      %1363 = vmatprep.subr.bf16.mxu0 0
      %1364 = vmatpush1.bf16.xpose.msra.mxu0 0
      %1365 = vmatprep.subr.bf16.mxu0 0
      %1366 = vmatpush1.bf16.xpose.msra.mxu0 0
      %1367 = vmatprep.subr.bf16.mxu0 0
      %1368 = vmatpush1.bf16.xpose.msra.mxu0 %v1351
      %1369 = vmatprep.subr.bf16.mxu0 0
      %1370 = vmatpush2.bf16.xpose.msra.mxu0 0
      %1371 = vmatprep.subr.bf16.mxu0 0
      %1372 = vmatpush2.bf16.xpose.msra.mxu0 0
      %1373 = vmatprep.subr.bf16.mxu0 0
      %1374 = vmatpush2.bf16.xpose.msra.mxu0 0
      %1375 = vmatprep.subr.bf16.mxu0 0
      %1376 = vmatpush2.bf16.xpose.msra.mxu0 0
      %1377 = vmatprep.subr.bf16.mxu0 0
      %1378 = vmatpush2.bf16.xpose.msra.mxu0 0
      %1379 = vmatprep.subr.bf16.mxu0 0
      %1380 = vmatpush2.bf16.xpose.msra.mxu0 0
      %1381 = vmatprep.subr.bf16.mxu0 0
      %1382 = vmatpush2.bf16.xpose.msra.mxu0 0
      %1383 = vmatprep.subr.bf16.mxu0 0
      %1384 = vmatpush2.bf16.xpose.msra.mxu0 0
      %1385 = vmatprep.mubr.bf16.mxu0 0
      %1386 = vmatmul.mubr.bf16.gmra.mxu0 %v1348
      %v1387 = vpop.f32.mrf.mxu0
      %v1388 = vadd.f32 0.0, %v1387
      %v1389 = vpop.f32.mrf.mxu0
      %v1390 = vpop.f32.mrf.mxu0
      %v1391 = vpop.f32.mrf.mxu0
      %1392 = vdwg.mxu0
      %v1393 = vunpack.c.l.bf16 %v1273
      %v1394 = vunpack.c.l.bf16 %v1274
      %v1395 = vlaneseq
      %v1396 = vshrl.u32 %v1395, 7
      %v1397 = vsub.s32 0, %v1396
      %v1398 = vrot.slane %v1276, %v1397
      %1400 = vrot.lane.b32.xlu0 %v1398, 96
      %v1401 = vpop.permute.xlu0 %1400
      %v1403 = vmul.f32 %v1393, %v1401
      %v1404 = vmul.f32 %v1394, %v1401
      %1407 = vrot.lane.b32.xlu0 %v1403, 112
      %v1408 = vpop.permute.xlu0 %1407
      %1409 = vrot.lane.b32.xlu0 %v1404, 112
      %v1410 = vpop.permute.xlu0 %1409
      %v1413 = vsel %vm324, %v1408, 0.0
      %1414 = vadd.xlane.f32.xlu0 %v1413
      %v1415 = vpop.xlane.xlu0 %1414
      %v1416 = vsel %vm324, %v1410, 0.0
      %1417 = vadd.xlane.f32.xlu0 %v1416
      %v1418 = vpop.xlane.xlu0 %1417
      %v1419 = vsel %vm331, %v1330, -inf
      %1420 = vmax.xlane.f32.xlu0 %v1419
      %v1421 = vpop.xlane.xlu0 %1420
      %v1422 = vsel %vm331, %v1388, -inf
      %1423 = vmax.xlane.f32.xlu0 %v1422
      %v1424 = vpop.xlane.xlu0 %1423
      %v1425 = vmax.f32 %v1421, %v1415
      %v1426 = vmax.f32 %v1424, %v1418
      %v1427 = vsub.f32 %v1330, %v1425
      %v1428 = vsub.f32 %v1388, %v1426
      %v1429 = vmul.f32 %v1427, 1.442695
      %v1430 = vpow.pop %v1429
      %v1431 = vmul.f32 %v1428, 1.442695
      %v1432 = vpow.pop %v1431
      %v1433 = vsub.f32 %v1415, %v1425
      %v1434 = vsub.f32 %v1418, %v1426
      %v1435 = vmul.f32 %v1433, 1.442695
      %v1436 = vpow.pop %v1435
      %v1437 = vmul.f32 %v1434, 1.442695
      %v1438 = vpow.pop %v1437
      %v1439 = vsel %vm331, %v1430, 0.0
      %1440 = vadd.xlane.f32.xlu0 %v1439
      %v1441 = vpop.xlane.xlu0 %1440
      %v1442 = vsel %vm331, %v1432, 0.0
      %1443 = vadd.xlane.f32.xlu0 %v1442
      %v1444 = vpop.xlane.xlu0 %1443
      %v1445 = vadd.f32 %v1441, %v1436
      %v1446 = vadd.f32 %v1444, %v1438
      %v1447 = vpack.c.bf16 %v1430, %v1430
      %v1448 = vpack.c.bf16 %v1432, %v1432
      %v1449 = vmul.f32 %v1436, %v1398
      %v1450 = vmul.f32 %v1438, %v1398
      %1451 = vrot.lane.b32.xlu0 %v1284, 48
      %v1452 = vpop.permute.xlu0 %1451
      %1454 = vrot.lane.b32.xlu0 %v1449, 48
      %v1455 = vpop.permute.xlu0 %1454
      %v1458 = vsel %vm370, %v1447, 0
      %v1461 = vsel %vm374, %v1452, 0
      %1463 = vmatprep.subr.bf16.mxu0 0
      %1464 = vmatpush1.bf16.msra.mxu0 0
      %1465 = vmatprep.subr.bf16.mxu0 0
      %1466 = vmatpush1.bf16.msra.mxu0 0
      %1467 = vmatprep.subr.bf16.mxu0 0
      %1468 = vmatpush1.bf16.msra.mxu0 0
      %1469 = vmatprep.subr.bf16.mxu0 0
      %1470 = vmatpush1.bf16.msra.mxu0 0
      %1471 = vmatprep.subr.bf16.mxu0 0
      %1472 = vmatpush1.bf16.msra.mxu0 0
      %1473 = vmatprep.subr.bf16.mxu0 0
      %1474 = vmatpush1.bf16.msra.mxu0 0
      %1475 = vmatprep.subr.bf16.mxu0 0
      %1476 = vmatpush1.bf16.msra.mxu0 0
      %1477 = vmatprep.subr.bf16.mxu0 0
      %1478 = vmatpush1.bf16.msra.mxu0 %v1461
      %1479 = vmatprep.subr.bf16.mxu0 0
      %1480 = vmatpush2.bf16.msra.mxu0 0
      %1481 = vmatprep.subr.bf16.mxu0 0
      %1482 = vmatpush2.bf16.msra.mxu0 0
      %1483 = vmatprep.subr.bf16.mxu0 0
      %1484 = vmatpush2.bf16.msra.mxu0 0
      %1485 = vmatprep.subr.bf16.mxu0 0
      %1486 = vmatpush2.bf16.msra.mxu0 0
      %1487 = vmatprep.subr.bf16.mxu0 0
      %1488 = vmatpush2.bf16.msra.mxu0 0
      %1489 = vmatprep.subr.bf16.mxu0 0
      %1490 = vmatpush2.bf16.msra.mxu0 0
      %1491 = vmatprep.subr.bf16.mxu0 0
      %1492 = vmatpush2.bf16.msra.mxu0 0
      %1493 = vmatprep.subr.bf16.mxu0 0
      %1494 = vmatpush2.bf16.msra.mxu0 0
      %1495 = vmatprep.mubr.bf16.mxu0 0
      %1496 = vmatmul.mubr.bf16.gmra.mxu0 %v1458
      %v1497 = vpop.f32.mrf.mxu0
      %v1498 = vadd.f32 %v1455, %v1497
      %v1499 = vpop.f32.mrf.mxu0
      %v1500 = vpop.f32.mrf.mxu0
      %v1501 = vpop.f32.mrf.mxu0
      %1502 = vdwg.mxu0
      %1503 = vrot.lane.b32.xlu0 %v1342, 48
      %v1504 = vpop.permute.xlu0 %1503
      %1506 = vrot.lane.b32.xlu0 %v1450, 48
      %v1507 = vpop.permute.xlu0 %1506
      %v1510 = vsel %vm370, %v1448, 0
      %v1513 = vsel %vm374, %v1504, 0
      %1515 = vmatprep.subr.bf16.mxu0 0
      %1516 = vmatpush1.bf16.msra.mxu0 0
      %1517 = vmatprep.subr.bf16.mxu0 0
      %1518 = vmatpush1.bf16.msra.mxu0 0
      %1519 = vmatprep.subr.bf16.mxu0 0
      %1520 = vmatpush1.bf16.msra.mxu0 0
      %1521 = vmatprep.subr.bf16.mxu0 0
      %1522 = vmatpush1.bf16.msra.mxu0 0
      %1523 = vmatprep.subr.bf16.mxu0 0
      %1524 = vmatpush1.bf16.msra.mxu0 0
      %1525 = vmatprep.subr.bf16.mxu0 0
      %1526 = vmatpush1.bf16.msra.mxu0 0
      %1527 = vmatprep.subr.bf16.mxu0 0
      %1528 = vmatpush1.bf16.msra.mxu0 0
      %1529 = vmatprep.subr.bf16.mxu0 0
      %1530 = vmatpush1.bf16.msra.mxu0 %v1513
      %1531 = vmatprep.subr.bf16.mxu0 0
      %1532 = vmatpush2.bf16.msra.mxu0 0
      %1533 = vmatprep.subr.bf16.mxu0 0
      %1534 = vmatpush2.bf16.msra.mxu0 0
      %1535 = vmatprep.subr.bf16.mxu0 0
      %1536 = vmatpush2.bf16.msra.mxu0 0
      %1537 = vmatprep.subr.bf16.mxu0 0
      %1538 = vmatpush2.bf16.msra.mxu0 0
      %1539 = vmatprep.subr.bf16.mxu0 0
      %1540 = vmatpush2.bf16.msra.mxu0 0
      %1541 = vmatprep.subr.bf16.mxu0 0
      %1542 = vmatpush2.bf16.msra.mxu0 0
      %1543 = vmatprep.subr.bf16.mxu0 0
      %1544 = vmatpush2.bf16.msra.mxu0 0
      %1545 = vmatprep.subr.bf16.mxu0 0
      %1546 = vmatpush2.bf16.msra.mxu0 0
      %1547 = vmatprep.mubr.bf16.mxu0 0
      %1548 = vmatmul.mubr.bf16.gmra.mxu0 %v1510
      %v1549 = vpop.f32.mrf.mxu0
      %v1550 = vadd.f32 %v1507, %v1549
      %v1551 = vpop.f32.mrf.mxu0
      %v1552 = vpop.f32.mrf.mxu0
      %v1553 = vpop.f32.mrf.mxu0
      %1554 = vdwg.mxu0
      %v1555 = vrcp.pop %v1445
      %v1556 = vrcp.pop %v1446
      %v1557 = vmul.f32 %v1498, %v1555
      %v1558 = vmul.f32 %v1550, %v1556
      %v1559 = vpack.c.bf16 %v1557, %v1557
      %v1560 = vpack.c.bf16 %v1558, %v1558
      %v1563 = vunpack.c.l.s4 1966171168
      %v1564 = vunpack.c.0.s8 %v1563
      %v1565 = vlaneseq
      %v1566 = vshrl.u32 %v1565, 7
      %v1567 = vsub.s32 %v1564, %v1566
      %v1568 = vrot.slane %v1275, %v1567
      %v1570 = vunpack.c.l.s4 1966171168
      %v1571 = vunpack.c.0.s8 %v1570
      %v1572 = vlaneseq
      %v1573 = vshrl.u32 %v1572, 7
      %v1574 = vsub.s32 %v1571, %v1573
      %v1575 = vrot.slane %v1568, %v1574
      %1576 = vrot.lane.b32.xlu0 %v1575, 112
      %v1577 = vpop.permute.xlu0 %1576
      %v1579 = vsel %vm209, %v1577, 0
      %1581 = vmatprep.subr.bf16.mxu0 0
      %1582 = vmatpush1.bf16.xpose.msra.mxu0 0
      %1583 = vmatprep.subr.bf16.mxu0 0
      %1584 = vmatpush1.bf16.xpose.msra.mxu0 0
      %1585 = vmatprep.subr.bf16.mxu0 0
      %1586 = vmatpush1.bf16.xpose.msra.mxu0 0
      %1587 = vmatprep.subr.bf16.mxu0 0
      %1588 = vmatpush1.bf16.xpose.msra.mxu0 0
      %1589 = vmatprep.subr.bf16.mxu0 0
      %1590 = vmatpush1.bf16.xpose.msra.mxu0 0
      %1591 = vmatprep.subr.bf16.mxu0 0
      %1592 = vmatpush1.bf16.xpose.msra.mxu0 0
      %1593 = vmatprep.subr.bf16.mxu0 0
      %1594 = vmatpush1.bf16.xpose.msra.mxu0 0
      %1595 = vmatprep.subr.bf16.mxu0 0
      %1596 = vmatpush1.bf16.xpose.msra.mxu0 %v1293
      %1597 = vmatprep.subr.bf16.mxu0 0
      %1598 = vmatpush2.bf16.xpose.msra.mxu0 0
      %1599 = vmatprep.subr.bf16.mxu0 0
      %1600 = vmatpush2.bf16.xpose.msra.mxu0 0
      %1601 = vmatprep.subr.bf16.mxu0 0
      %1602 = vmatpush2.bf16.xpose.msra.mxu0 0
      %1603 = vmatprep.subr.bf16.mxu0 0
      %1604 = vmatpush2.bf16.xpose.msra.mxu0 0
      %1605 = vmatprep.subr.bf16.mxu0 0
      %1606 = vmatpush2.bf16.xpose.msra.mxu0 0
      %1607 = vmatprep.subr.bf16.mxu0 0
      %1608 = vmatpush2.bf16.xpose.msra.mxu0 0
      %1609 = vmatprep.subr.bf16.mxu0 0
      %1610 = vmatpush2.bf16.xpose.msra.mxu0 0
      %1611 = vmatprep.subr.bf16.mxu0 0
      %1612 = vmatpush2.bf16.xpose.msra.mxu0 0
      %1613 = vmatprep.mubr.bf16.mxu0 0
      %1614 = vmatmul.mubr.bf16.gmra.mxu0 %v1579
      %v1615 = vpop.f32.mrf.mxu0
      %v1616 = vadd.f32 0.0, %v1615
      %v1617 = vpop.f32.mrf.mxu0
      %v1618 = vpop.f32.mrf.mxu0
      %v1619 = vpop.f32.mrf.mxu0
      %1620 = vdwg.mxu0
      %1621 = vmatprep.subr.bf16.mxu0 0
      %1622 = vmatpush1.bf16.xpose.msra.mxu0 0
      %1623 = vmatprep.subr.bf16.mxu0 0
      %1624 = vmatpush1.bf16.xpose.msra.mxu0 0
      %1625 = vmatprep.subr.bf16.mxu0 0
      %1626 = vmatpush1.bf16.xpose.msra.mxu0 0
      %1627 = vmatprep.subr.bf16.mxu0 0
      %1628 = vmatpush1.bf16.xpose.msra.mxu0 0
      %1629 = vmatprep.subr.bf16.mxu0 0
      %1630 = vmatpush1.bf16.xpose.msra.mxu0 0
      %1631 = vmatprep.subr.bf16.mxu0 0
      %1632 = vmatpush1.bf16.xpose.msra.mxu0 0
      %1633 = vmatprep.subr.bf16.mxu0 0
      %1634 = vmatpush1.bf16.xpose.msra.mxu0 0
      %1635 = vmatprep.subr.bf16.mxu0 0
      %1636 = vmatpush1.bf16.xpose.msra.mxu0 %v1351
      %1637 = vmatprep.subr.bf16.mxu0 0
      %1638 = vmatpush2.bf16.xpose.msra.mxu0 0
      %1639 = vmatprep.subr.bf16.mxu0 0
      %1640 = vmatpush2.bf16.xpose.msra.mxu0 0
      %1641 = vmatprep.subr.bf16.mxu0 0
      %1642 = vmatpush2.bf16.xpose.msra.mxu0 0
      %1643 = vmatprep.subr.bf16.mxu0 0
      %1644 = vmatpush2.bf16.xpose.msra.mxu0 0
      %1645 = vmatprep.subr.bf16.mxu0 0
      %1646 = vmatpush2.bf16.xpose.msra.mxu0 0
      %1647 = vmatprep.subr.bf16.mxu0 0
      %1648 = vmatpush2.bf16.xpose.msra.mxu0 0
      %1649 = vmatprep.subr.bf16.mxu0 0
      %1650 = vmatpush2.bf16.xpose.msra.mxu0 0
      %1651 = vmatprep.subr.bf16.mxu0 0
      %1652 = vmatpush2.bf16.xpose.msra.mxu0 0
      %1653 = vmatprep.mubr.bf16.mxu0 0
      %1654 = vmatmul.mubr.bf16.gmra.mxu0 %v1579
      %v1655 = vpop.f32.mrf.mxu0
      %v1656 = vadd.f32 0.0, %v1655
      %v1657 = vpop.f32.mrf.mxu0
      %v1658 = vpop.f32.mrf.mxu0
      %v1659 = vpop.f32.mrf.mxu0
      %1660 = vdwg.mxu0
      %1662 = vrot.lane.b32.xlu0 %v1276, 96
      %v1663 = vpop.permute.xlu0 %1662
      %v1665 = vmul.f32 %v1276, %v1663
      %v1667 = vlaneseq
      %v1668 = vshrl.u32 %v1667, 7
      %v1669 = vsub.s32 0, %v1668
      %v1670 = vrot.slane %v1665, %v1669
      %1671 = vrot.lane.b32.xlu0 %v1670, 112
      %v1672 = vpop.permute.xlu0 %1671
      %v1674 = vsel %vm564, %v1672, 0.0
      %1675 = vadd.xlane.f32.xlu0 %v1674
      %v1676 = vpop.xlane.xlu0 %1675
      %v1677 = vrot.slane %v1676, 4
      %v1678 = vadd.f32 %v1676, %v1677
      %v1679 = vrot.slane %v1678, 2
      %v1680 = vadd.f32 %v1678, %v1679
      %v1681 = vrot.slane %v1680, 1
      %v1682 = vadd.f32 %v1680, %v1681
      %s1683 = vtos %v1682
      %v1684 = vsel %vm575, %v1616, -inf
      %v1685 = vsel %vm575, %v1656, -inf
      %v1686 = vmax.f32 %v1684, %v1685
      %1687 = vmax.xlane.f32.xlu0 %v1686
      %v1688 = vpop.xlane.xlu0 %1687
      %v1689 = vrot.slane %v1688, 4
      %v1690 = vmax.f32 %v1688, %v1689
      %v1691 = vrot.slane %v1690, 2
      %v1692 = vmax.f32 %v1690, %v1691
      %v1693 = vrot.slane %v1692, 1
      %v1694 = vmax.f32 %v1692, %v1693
      %s1695 = vtos %v1694
      %s1696 = smax.f32 %s1695, %s1683
      %v1697 = vstv %s1696
      %v1698 = vsub.f32 %v1616, %v1697
      %v1699 = vsub.f32 %v1656, %v1697
      %v1700 = vmul.f32 %v1698, 1.442695
      %v1701 = vpow.pop %v1700
      %v1702 = vmul.f32 %v1699, 1.442695
      %v1703 = vpow.pop %v1702
      %s1704 = ssub.f32 %s1683, %s1696
      %v1705 = vstv %s1704
      %v1706 = vmul.f32 %v1705, 1.442695
      %v1707 = vpow.pop %v1706
      %s1708 = vtos %v1707
      %v1709 = vsel %vm575, %v1701, 0.0
      %v1710 = vsel %vm575, %v1703, 0.0
      %v1711 = vadd.f32 %v1709, %v1710
      %1712 = vadd.xlane.f32.xlu0 %v1711
      %v1713 = vpop.xlane.xlu0 %1712
      %v1714 = vrot.slane %v1713, 4
      %v1715 = vadd.f32 %v1713, %v1714
      %v1716 = vrot.slane %v1715, 2
      %v1717 = vadd.f32 %v1715, %v1716
      %v1718 = vrot.slane %v1717, 1
      %v1719 = vadd.f32 %v1717, %v1718
      %s1720 = vtos %v1719
      %s1721 = sadd.f32 %s1720, %s1708
      %v1722 = vpack.c.bf16 %v1701, %v1701
      %v1723 = vpack.c.bf16 %v1703, %v1703
      %v1725 = vsel %vm370, %v1722, 0
      %1727 = vmatprep.subr.bf16.mxu0 0
      %1728 = vmatpush1.bf16.msra.mxu0 0
      %1729 = vmatprep.subr.bf16.mxu0 0
      %1730 = vmatpush1.bf16.msra.mxu0 0
      %1731 = vmatprep.subr.bf16.mxu0 0
      %1732 = vmatpush1.bf16.msra.mxu0 0
      %1733 = vmatprep.subr.bf16.mxu0 0
      %1734 = vmatpush1.bf16.msra.mxu0 0
      %1735 = vmatprep.subr.bf16.mxu0 0
      %1736 = vmatpush1.bf16.msra.mxu0 0
      %1737 = vmatprep.subr.bf16.mxu0 0
      %1738 = vmatpush1.bf16.msra.mxu0 0
      %1739 = vmatprep.subr.bf16.mxu0 0
      %1740 = vmatpush1.bf16.msra.mxu0 0
      %1741 = vmatprep.subr.bf16.mxu0 0
      %1742 = vmatpush1.bf16.msra.mxu0 %v1461
      %1743 = vmatprep.subr.bf16.mxu0 0
      %1744 = vmatpush2.bf16.msra.mxu0 0
      %1745 = vmatprep.subr.bf16.mxu0 0
      %1746 = vmatpush2.bf16.msra.mxu0 0
      %1747 = vmatprep.subr.bf16.mxu0 0
      %1748 = vmatpush2.bf16.msra.mxu0 0
      %1749 = vmatprep.subr.bf16.mxu0 0
      %1750 = vmatpush2.bf16.msra.mxu0 0
      %1751 = vmatprep.subr.bf16.mxu0 0
      %1752 = vmatpush2.bf16.msra.mxu0 0
      %1753 = vmatprep.subr.bf16.mxu0 0
      %1754 = vmatpush2.bf16.msra.mxu0 0
      %1755 = vmatprep.subr.bf16.mxu0 0
      %1756 = vmatpush2.bf16.msra.mxu0 0
      %1757 = vmatprep.subr.bf16.mxu0 0
      %1758 = vmatpush2.bf16.msra.mxu0 0
      %1759 = vmatprep.mubr.bf16.mxu0 0
      %1760 = vmatmul.mubr.bf16.gmra.mxu0 %v1725
      %v1761 = vpop.f32.mrf.mxu0
      %v1762 = vadd.f32 0.0, %v1761
      %v1763 = vpop.f32.mrf.mxu0
      %v1764 = vpop.f32.mrf.mxu0
      %v1765 = vpop.f32.mrf.mxu0
      %1766 = vdwg.mxu0
      %v1768 = vsel %vm370, %v1723, 0
      %1770 = vmatprep.subr.bf16.mxu0 0
      %1771 = vmatpush1.bf16.msra.mxu0 0
      %1772 = vmatprep.subr.bf16.mxu0 0
      %1773 = vmatpush1.bf16.msra.mxu0 0
      %1774 = vmatprep.subr.bf16.mxu0 0
      %1775 = vmatpush1.bf16.msra.mxu0 0
      %1776 = vmatprep.subr.bf16.mxu0 0
      %1777 = vmatpush1.bf16.msra.mxu0 0
      %1778 = vmatprep.subr.bf16.mxu0 0
      %1779 = vmatpush1.bf16.msra.mxu0 0
      %1780 = vmatprep.subr.bf16.mxu0 0
      %1781 = vmatpush1.bf16.msra.mxu0 0
      %1782 = vmatprep.subr.bf16.mxu0 0
      %1783 = vmatpush1.bf16.msra.mxu0 0
      %1784 = vmatprep.subr.bf16.mxu0 0
      %1785 = vmatpush1.bf16.msra.mxu0 %v1513
      %1786 = vmatprep.subr.bf16.mxu0 0
      %1787 = vmatpush2.bf16.msra.mxu0 0
      %1788 = vmatprep.subr.bf16.mxu0 0
      %1789 = vmatpush2.bf16.msra.mxu0 0
      %1790 = vmatprep.subr.bf16.mxu0 0
      %1791 = vmatpush2.bf16.msra.mxu0 0
      %1792 = vmatprep.subr.bf16.mxu0 0
      %1793 = vmatpush2.bf16.msra.mxu0 0
      %1794 = vmatprep.subr.bf16.mxu0 0
      %1795 = vmatpush2.bf16.msra.mxu0 0
      %1796 = vmatprep.subr.bf16.mxu0 0
      %1797 = vmatpush2.bf16.msra.mxu0 0
      %1798 = vmatprep.subr.bf16.mxu0 0
      %1799 = vmatpush2.bf16.msra.mxu0 0
      %1800 = vmatprep.subr.bf16.mxu0 0
      %1801 = vmatpush2.bf16.msra.mxu0 0
      %1802 = vmatprep.mubr.bf16.mxu0 0
      %1803 = vmatmul.mubr.bf16.gmra.mxu0 %v1768
      %v1804 = vpop.f32.mrf.mxu0
      %v1805 = vadd.f32 0.0, %v1804
      %v1806 = vpop.f32.mrf.mxu0
      %v1807 = vpop.f32.mrf.mxu0
      %v1808 = vpop.f32.mrf.mxu0
      %1809 = vdwg.mxu0
      %v1810 = vsel %vm564, %v1762, 0.0
      %v1811 = vsel %vm564, %v1805, 0.0
      %v1812 = vadd.f32 %v1810, %v1811
      %v1813 = vstv %s1708
      %v1814 = vmul.f32 %v1813, %v1276
      %v1816 = vlaneseq
      %v1817 = vshrl.u32 %v1816, 7
      %v1818 = vsub.s32 0, %v1817
      %v1819 = vrot.slane %v1814, %v1818
      %1820 = vrot.lane.b32.xlu0 %v1819, 48
      %v1821 = vpop.permute.xlu0 %1820
      %v1823 = vadd.f32 %v1812, %v1821
      %v1824 = vstv %s1721
      %v1825 = vrcp.pop %v1824
      %v1826 = vmul.f32 %v1823, %v1825
      %v1827 = vld [vmem:[%s182] sm:$0x3]
      %v1828 = vld [vmem:[%s182 + $0x2] sm:$0x3]
      %v1829 = vld [vmem:[%s185] sm:$0x1]
      %v1830 = vunpack.c.l.bf16 %v1829
      %v1833 = vunpack.c.l.s4 1983009808
      %v1834 = vunpack.c.0.s8 %v1833
      %v1835 = vlaneseq
      %v1836 = vshrl.u32 %v1835, 7
      %v1837 = vsub.s32 %v1834, %v1836
      %v1838 = vrot.slane %v1827, %v1837
      %1839 = vrot.lane.b32.xlu0 %v1838, 104
      %v1840 = vpop.permute.xlu0 %1839
      %1841 = vrot.lane.b32.xlu0 %v1838, 72
      %v1842 = vpop.permute.xlu0 %1841
      %v1844 = vsel %vm209, %v1840, 0
      %v1847 = vsel %vm209, %v1842, 0
      %1849 = vmatprep.subr.bf16.mxu0 0
      %1850 = vmatpush1.bf16.xpose.msra.mxu0 0
      %1851 = vmatprep.subr.bf16.mxu0 0
      %1852 = vmatpush1.bf16.xpose.msra.mxu0 0
      %1853 = vmatprep.subr.bf16.mxu0 0
      %1854 = vmatpush1.bf16.xpose.msra.mxu0 0
      %1855 = vmatprep.subr.bf16.mxu0 0
      %1856 = vmatpush1.bf16.xpose.msra.mxu0 0
      %1857 = vmatprep.subr.bf16.mxu0 0
      %1858 = vmatpush1.bf16.xpose.msra.mxu0 0
      %1859 = vmatprep.subr.bf16.mxu0 0
      %1860 = vmatpush1.bf16.xpose.msra.mxu0 0
      %1861 = vmatprep.subr.bf16.mxu0 0
      %1862 = vmatpush1.bf16.xpose.msra.mxu0 0
      %1863 = vmatprep.subr.bf16.mxu0 0
      %1864 = vmatpush1.bf16.xpose.msra.mxu0 %v1847
      %1865 = vmatprep.subr.bf16.mxu0 0
      %1866 = vmatpush2.bf16.xpose.msra.mxu0 0
      %1867 = vmatprep.subr.bf16.mxu0 0
      %1868 = vmatpush2.bf16.xpose.msra.mxu0 0
      %1869 = vmatprep.subr.bf16.mxu0 0
      %1870 = vmatpush2.bf16.xpose.msra.mxu0 0
      %1871 = vmatprep.subr.bf16.mxu0 0
      %1872 = vmatpush2.bf16.xpose.msra.mxu0 0
      %1873 = vmatprep.subr.bf16.mxu0 0
      %1874 = vmatpush2.bf16.xpose.msra.mxu0 0
      %1875 = vmatprep.subr.bf16.mxu0 0
      %1876 = vmatpush2.bf16.xpose.msra.mxu0 0
      %1877 = vmatprep.subr.bf16.mxu0 0
      %1878 = vmatpush2.bf16.xpose.msra.mxu0 0
      %1879 = vmatprep.subr.bf16.mxu0 0
      %1880 = vmatpush2.bf16.xpose.msra.mxu0 0
      %1881 = vmatprep.mubr.bf16.mxu0 0
      %1882 = vmatmul.mubr.bf16.gmra.mxu0 %v1844
      %v1883 = vpop.f32.mrf.mxu0
      %v1884 = vadd.f32 0.0, %v1883
      %v1885 = vpop.f32.mrf.mxu0
      %v1886 = vpop.f32.mrf.mxu0
      %v1887 = vpop.f32.mrf.mxu0
      %1888 = vdwg.mxu0
      %v1891 = vunpack.c.l.s4 1983009808
      %v1892 = vunpack.c.0.s8 %v1891
      %v1893 = vlaneseq
      %v1894 = vshrl.u32 %v1893, 7
      %v1895 = vsub.s32 %v1892, %v1894
      %v1896 = vrot.slane %v1828, %v1895
      %1897 = vrot.lane.b32.xlu0 %v1896, 104
      %v1898 = vpop.permute.xlu0 %1897
      %1899 = vrot.lane.b32.xlu0 %v1896, 72
      %v1900 = vpop.permute.xlu0 %1899
      %v1902 = vsel %vm209, %v1898, 0
      %v1905 = vsel %vm209, %v1900, 0
      %1907 = vmatprep.subr.bf16.mxu0 0
      %1908 = vmatpush1.bf16.xpose.msra.mxu0 0
      %1909 = vmatprep.subr.bf16.mxu0 0
      %1910 = vmatpush1.bf16.xpose.msra.mxu0 0
      %1911 = vmatprep.subr.bf16.mxu0 0
      %1912 = vmatpush1.bf16.xpose.msra.mxu0 0
      %1913 = vmatprep.subr.bf16.mxu0 0
      %1914 = vmatpush1.bf16.xpose.msra.mxu0 0
      %1915 = vmatprep.subr.bf16.mxu0 0
      %1916 = vmatpush1.bf16.xpose.msra.mxu0 0
      %1917 = vmatprep.subr.bf16.mxu0 0
      %1918 = vmatpush1.bf16.xpose.msra.mxu0 0
      %1919 = vmatprep.subr.bf16.mxu0 0
      %1920 = vmatpush1.bf16.xpose.msra.mxu0 0
      %1921 = vmatprep.subr.bf16.mxu0 0
      %1922 = vmatpush1.bf16.xpose.msra.mxu0 %v1905
      %1923 = vmatprep.subr.bf16.mxu0 0
      %1924 = vmatpush2.bf16.xpose.msra.mxu0 0
      %1925 = vmatprep.subr.bf16.mxu0 0
      %1926 = vmatpush2.bf16.xpose.msra.mxu0 0
      %1927 = vmatprep.subr.bf16.mxu0 0
      %1928 = vmatpush2.bf16.xpose.msra.mxu0 0
      %1929 = vmatprep.subr.bf16.mxu0 0
      %1930 = vmatpush2.bf16.xpose.msra.mxu0 0
      %1931 = vmatprep.subr.bf16.mxu0 0
      %1932 = vmatpush2.bf16.xpose.msra.mxu0 0
      %1933 = vmatprep.subr.bf16.mxu0 0
      %1934 = vmatpush2.bf16.xpose.msra.mxu0 0
      %1935 = vmatprep.subr.bf16.mxu0 0
      %1936 = vmatpush2.bf16.xpose.msra.mxu0 0
      %1937 = vmatprep.subr.bf16.mxu0 0
      %1938 = vmatpush2.bf16.xpose.msra.mxu0 0
      %1939 = vmatprep.mubr.bf16.mxu0 0
      %1940 = vmatmul.mubr.bf16.gmra.mxu0 %v1902
      %v1941 = vpop.f32.mrf.mxu0
      %v1942 = vadd.f32 0.0, %v1941
      %v1943 = vpop.f32.mrf.mxu0
      %v1944 = vpop.f32.mrf.mxu0
      %v1945 = vpop.f32.mrf.mxu0
      %1946 = vdwg.mxu0
      %v1947 = vunpack.c.l.bf16 %v1827
      %v1948 = vunpack.c.l.bf16 %v1828
      %v1949 = vlaneseq
      %v1950 = vshrl.u32 %v1949, 7
      %v1951 = vsub.s32 0, %v1950
      %v1952 = vrot.slane %v1830, %v1951
      %1954 = vrot.lane.b32.xlu0 %v1952, 96
      %v1955 = vpop.permute.xlu0 %1954
      %v1957 = vmul.f32 %v1947, %v1955
      %v1958 = vmul.f32 %v1948, %v1955
      %1961 = vrot.lane.b32.xlu0 %v1957, 104
      %v1962 = vpop.permute.xlu0 %1961
      %1963 = vrot.lane.b32.xlu0 %v1958, 104
      %v1964 = vpop.permute.xlu0 %1963
      %v1967 = vsel %vm324, %v1962, 0.0
      %1968 = vadd.xlane.f32.xlu0 %v1967
      %v1969 = vpop.xlane.xlu0 %1968
      %v1970 = vsel %vm324, %v1964, 0.0
      %1971 = vadd.xlane.f32.xlu0 %v1970
      %v1972 = vpop.xlane.xlu0 %1971
      %v1973 = vsel %vm331, %v1884, -inf
      %1974 = vmax.xlane.f32.xlu0 %v1973
      %v1975 = vpop.xlane.xlu0 %1974
      %v1976 = vsel %vm331, %v1942, -inf
      %1977 = vmax.xlane.f32.xlu0 %v1976
      %v1978 = vpop.xlane.xlu0 %1977
      %v1979 = vmax.f32 %v1975, %v1969
      %v1980 = vmax.f32 %v1978, %v1972
      %v1981 = vsub.f32 %v1884, %v1979
      %v1982 = vsub.f32 %v1942, %v1980
      %v1983 = vmul.f32 %v1981, 1.442695
      %v1984 = vpow.pop %v1983
      %v1985 = vmul.f32 %v1982, 1.442695
      %v1986 = vpow.pop %v1985
      %v1987 = vsub.f32 %v1969, %v1979
      %v1988 = vsub.f32 %v1972, %v1980
      %v1989 = vmul.f32 %v1987, 1.442695
      %v1990 = vpow.pop %v1989
      %v1991 = vmul.f32 %v1988, 1.442695
      %v1992 = vpow.pop %v1991
      %v1993 = vsel %vm331, %v1984, 0.0
      %1994 = vadd.xlane.f32.xlu0 %v1993
      %v1995 = vpop.xlane.xlu0 %1994
      %v1996 = vsel %vm331, %v1986, 0.0
      %1997 = vadd.xlane.f32.xlu0 %v1996
      %v1998 = vpop.xlane.xlu0 %1997
      %v1999 = vadd.f32 %v1995, %v1990
      %v2000 = vadd.f32 %v1998, %v1992
      %v2001 = vpack.c.bf16 %v1984, %v1984
      %v2002 = vpack.c.bf16 %v1986, %v1986
      %v2003 = vmul.f32 %v1990, %v1952
      %v2004 = vmul.f32 %v1992, %v1952
      %2005 = vrot.lane.b32.xlu0 %v1838, 40
      %v2006 = vpop.permute.xlu0 %2005
      %2008 = vrot.lane.b32.xlu0 %v2003, 40
      %v2009 = vpop.permute.xlu0 %2008
      %v2012 = vsel %vm370, %v2001, 0
      %v2015 = vsel %vm374, %v2006, 0
      %2017 = vmatprep.subr.bf16.mxu0 0
      %2018 = vmatpush1.bf16.msra.mxu0 0
      %2019 = vmatprep.subr.bf16.mxu0 0
      %2020 = vmatpush1.bf16.msra.mxu0 0
      %2021 = vmatprep.subr.bf16.mxu0 0
      %2022 = vmatpush1.bf16.msra.mxu0 0
      %2023 = vmatprep.subr.bf16.mxu0 0
      %2024 = vmatpush1.bf16.msra.mxu0 0
      %2025 = vmatprep.subr.bf16.mxu0 0
      %2026 = vmatpush1.bf16.msra.mxu0 0
      %2027 = vmatprep.subr.bf16.mxu0 0
      %2028 = vmatpush1.bf16.msra.mxu0 0
      %2029 = vmatprep.subr.bf16.mxu0 0
      %2030 = vmatpush1.bf16.msra.mxu0 0
      %2031 = vmatprep.subr.bf16.mxu0 0
      %2032 = vmatpush1.bf16.msra.mxu0 %v2015
      %2033 = vmatprep.subr.bf16.mxu0 0
      %2034 = vmatpush2.bf16.msra.mxu0 0
      %2035 = vmatprep.subr.bf16.mxu0 0
      %2036 = vmatpush2.bf16.msra.mxu0 0
      %2037 = vmatprep.subr.bf16.mxu0 0
      %2038 = vmatpush2.bf16.msra.mxu0 0
      %2039 = vmatprep.subr.bf16.mxu0 0
      %2040 = vmatpush2.bf16.msra.mxu0 0
      %2041 = vmatprep.subr.bf16.mxu0 0
      %2042 = vmatpush2.bf16.msra.mxu0 0
      %2043 = vmatprep.subr.bf16.mxu0 0
      %2044 = vmatpush2.bf16.msra.mxu0 0
      %2045 = vmatprep.subr.bf16.mxu0 0
      %2046 = vmatpush2.bf16.msra.mxu0 0
      %2047 = vmatprep.subr.bf16.mxu0 0
      %2048 = vmatpush2.bf16.msra.mxu0 0
      %2049 = vmatprep.mubr.bf16.mxu0 0
      %2050 = vmatmul.mubr.bf16.gmra.mxu0 %v2012
      %v2051 = vpop.f32.mrf.mxu0
      %v2052 = vadd.f32 %v2009, %v2051
      %v2053 = vpop.f32.mrf.mxu0
      %v2054 = vpop.f32.mrf.mxu0
      %v2055 = vpop.f32.mrf.mxu0
      %2056 = vdwg.mxu0
      %2057 = vrot.lane.b32.xlu0 %v1896, 40
      %v2058 = vpop.permute.xlu0 %2057
      %2060 = vrot.lane.b32.xlu0 %v2004, 40
      %v2061 = vpop.permute.xlu0 %2060
      %v2064 = vsel %vm370, %v2002, 0
      %v2067 = vsel %vm374, %v2058, 0
      %2069 = vmatprep.subr.bf16.mxu0 0
      %2070 = vmatpush1.bf16.msra.mxu0 0
      %2071 = vmatprep.subr.bf16.mxu0 0
      %2072 = vmatpush1.bf16.msra.mxu0 0
      %2073 = vmatprep.subr.bf16.mxu0 0
      %2074 = vmatpush1.bf16.msra.mxu0 0
      %2075 = vmatprep.subr.bf16.mxu0 0
      %2076 = vmatpush1.bf16.msra.mxu0 0
      %2077 = vmatprep.subr.bf16.mxu0 0
      %2078 = vmatpush1.bf16.msra.mxu0 0
      %2079 = vmatprep.subr.bf16.mxu0 0
      %2080 = vmatpush1.bf16.msra.mxu0 0
      %2081 = vmatprep.subr.bf16.mxu0 0
      %2082 = vmatpush1.bf16.msra.mxu0 0
      %2083 = vmatprep.subr.bf16.mxu0 0
      %2084 = vmatpush1.bf16.msra.mxu0 %v2067
      %2085 = vmatprep.subr.bf16.mxu0 0
      %2086 = vmatpush2.bf16.msra.mxu0 0
      %2087 = vmatprep.subr.bf16.mxu0 0
      %2088 = vmatpush2.bf16.msra.mxu0 0
      %2089 = vmatprep.subr.bf16.mxu0 0
      %2090 = vmatpush2.bf16.msra.mxu0 0
      %2091 = vmatprep.subr.bf16.mxu0 0
      %2092 = vmatpush2.bf16.msra.mxu0 0
      %2093 = vmatprep.subr.bf16.mxu0 0
      %2094 = vmatpush2.bf16.msra.mxu0 0
      %2095 = vmatprep.subr.bf16.mxu0 0
      %2096 = vmatpush2.bf16.msra.mxu0 0
      %2097 = vmatprep.subr.bf16.mxu0 0
      %2098 = vmatpush2.bf16.msra.mxu0 0
      %2099 = vmatprep.subr.bf16.mxu0 0
      %2100 = vmatpush2.bf16.msra.mxu0 0
      %2101 = vmatprep.mubr.bf16.mxu0 0
      %2102 = vmatmul.mubr.bf16.gmra.mxu0 %v2064
      %v2103 = vpop.f32.mrf.mxu0
      %v2104 = vadd.f32 %v2061, %v2103
      %v2105 = vpop.f32.mrf.mxu0
      %v2106 = vpop.f32.mrf.mxu0
      %v2107 = vpop.f32.mrf.mxu0
      %2108 = vdwg.mxu0
      %v2109 = vrcp.pop %v1999
      %v2110 = vrcp.pop %v2000
      %v2111 = vmul.f32 %v2052, %v2109
      %v2112 = vmul.f32 %v2104, %v2110
      %v2113 = vpack.c.bf16 %v2111, %v2111
      %v2114 = vpack.c.bf16 %v2112, %v2112
      %v2117 = vunpack.c.l.s4 1966171168
      %v2118 = vunpack.c.0.s8 %v2117
      %v2119 = vlaneseq
      %v2120 = vshrl.u32 %v2119, 7
      %v2121 = vsub.s32 %v2118, %v2120
      %v2122 = vrot.slane %v1829, %v2121
      %v2124 = vunpack.c.l.s4 1966171168
      %v2125 = vunpack.c.0.s8 %v2124
      %v2126 = vlaneseq
      %v2127 = vshrl.u32 %v2126, 7
      %v2128 = vsub.s32 %v2125, %v2127
      %v2129 = vrot.slane %v2122, %v2128
      %2130 = vrot.lane.b32.xlu0 %v2129, 104
      %v2131 = vpop.permute.xlu0 %2130
      %v2133 = vsel %vm209, %v2131, 0
      %2135 = vmatprep.subr.bf16.mxu0 0
      %2136 = vmatpush1.bf16.xpose.msra.mxu0 0
      %2137 = vmatprep.subr.bf16.mxu0 0
      %2138 = vmatpush1.bf16.xpose.msra.mxu0 0
      %2139 = vmatprep.subr.bf16.mxu0 0
      %2140 = vmatpush1.bf16.xpose.msra.mxu0 0
      %2141 = vmatprep.subr.bf16.mxu0 0
      %2142 = vmatpush1.bf16.xpose.msra.mxu0 0
      %2143 = vmatprep.subr.bf16.mxu0 0
      %2144 = vmatpush1.bf16.xpose.msra.mxu0 0
      %2145 = vmatprep.subr.bf16.mxu0 0
      %2146 = vmatpush1.bf16.xpose.msra.mxu0 0
      %2147 = vmatprep.subr.bf16.mxu0 0
      %2148 = vmatpush1.bf16.xpose.msra.mxu0 0
      %2149 = vmatprep.subr.bf16.mxu0 0
      %2150 = vmatpush1.bf16.xpose.msra.mxu0 %v1847
      %2151 = vmatprep.subr.bf16.mxu0 0
      %2152 = vmatpush2.bf16.xpose.msra.mxu0 0
      %2153 = vmatprep.subr.bf16.mxu0 0
      %2154 = vmatpush2.bf16.xpose.msra.mxu0 0
      %2155 = vmatprep.subr.bf16.mxu0 0
      %2156 = vmatpush2.bf16.xpose.msra.mxu0 0
      %2157 = vmatprep.subr.bf16.mxu0 0
      %2158 = vmatpush2.bf16.xpose.msra.mxu0 0
      %2159 = vmatprep.subr.bf16.mxu0 0
      %2160 = vmatpush2.bf16.xpose.msra.mxu0 0
      %2161 = vmatprep.subr.bf16.mxu0 0
      %2162 = vmatpush2.bf16.xpose.msra.mxu0 0
      %2163 = vmatprep.subr.bf16.mxu0 0
      %2164 = vmatpush2.bf16.xpose.msra.mxu0 0
      %2165 = vmatprep.subr.bf16.mxu0 0
      %2166 = vmatpush2.bf16.xpose.msra.mxu0 0
      %2167 = vmatprep.mubr.bf16.mxu0 0
      %2168 = vmatmul.mubr.bf16.gmra.mxu0 %v2133
      %v2169 = vpop.f32.mrf.mxu0
      %v2170 = vadd.f32 0.0, %v2169
      %v2171 = vpop.f32.mrf.mxu0
      %v2172 = vpop.f32.mrf.mxu0
      %v2173 = vpop.f32.mrf.mxu0
      %2174 = vdwg.mxu0
      %2175 = vmatprep.subr.bf16.mxu0 0
      %2176 = vmatpush1.bf16.xpose.msra.mxu0 0
      %2177 = vmatprep.subr.bf16.mxu0 0
      %2178 = vmatpush1.bf16.xpose.msra.mxu0 0
      %2179 = vmatprep.subr.bf16.mxu0 0
      %2180 = vmatpush1.bf16.xpose.msra.mxu0 0
      %2181 = vmatprep.subr.bf16.mxu0 0
      %2182 = vmatpush1.bf16.xpose.msra.mxu0 0
      %2183 = vmatprep.subr.bf16.mxu0 0
      %2184 = vmatpush1.bf16.xpose.msra.mxu0 0
      %2185 = vmatprep.subr.bf16.mxu0 0
      %2186 = vmatpush1.bf16.xpose.msra.mxu0 0
      %2187 = vmatprep.subr.bf16.mxu0 0
      %2188 = vmatpush1.bf16.xpose.msra.mxu0 0
      %2189 = vmatprep.subr.bf16.mxu0 0
      %2190 = vmatpush1.bf16.xpose.msra.mxu0 %v1905
      %2191 = vmatprep.subr.bf16.mxu0 0
      %2192 = vmatpush2.bf16.xpose.msra.mxu0 0
      %2193 = vmatprep.subr.bf16.mxu0 0
      %2194 = vmatpush2.bf16.xpose.msra.mxu0 0
      %2195 = vmatprep.subr.bf16.mxu0 0
      %2196 = vmatpush2.bf16.xpose.msra.mxu0 0
      %2197 = vmatprep.subr.bf16.mxu0 0
      %2198 = vmatpush2.bf16.xpose.msra.mxu0 0
      %2199 = vmatprep.subr.bf16.mxu0 0
      %2200 = vmatpush2.bf16.xpose.msra.mxu0 0
      %2201 = vmatprep.subr.bf16.mxu0 0
      %2202 = vmatpush2.bf16.xpose.msra.mxu0 0
      %2203 = vmatprep.subr.bf16.mxu0 0
      %2204 = vmatpush2.bf16.xpose.msra.mxu0 0
      %2205 = vmatprep.subr.bf16.mxu0 0
      %2206 = vmatpush2.bf16.xpose.msra.mxu0 0
      %2207 = vmatprep.mubr.bf16.mxu0 0
      %2208 = vmatmul.mubr.bf16.gmra.mxu0 %v2133
      %v2209 = vpop.f32.mrf.mxu0
      %v2210 = vadd.f32 0.0, %v2209
      %v2211 = vpop.f32.mrf.mxu0
      %v2212 = vpop.f32.mrf.mxu0
      %v2213 = vpop.f32.mrf.mxu0
      %2214 = vdwg.mxu0
      %2216 = vrot.lane.b32.xlu0 %v1830, 96
      %v2217 = vpop.permute.xlu0 %2216
      %v2219 = vmul.f32 %v1830, %v2217
      %v2221 = vlaneseq
      %v2222 = vshrl.u32 %v2221, 7
      %v2223 = vsub.s32 0, %v2222
      %v2224 = vrot.slane %v2219, %v2223
      %2225 = vrot.lane.b32.xlu0 %v2224, 104
      %v2226 = vpop.permute.xlu0 %2225
      %v2228 = vsel %vm564, %v2226, 0.0
      %2229 = vadd.xlane.f32.xlu0 %v2228
      %v2230 = vpop.xlane.xlu0 %2229
      %v2231 = vrot.slane %v2230, 4
      %v2232 = vadd.f32 %v2230, %v2231
      %v2233 = vrot.slane %v2232, 2
      %v2234 = vadd.f32 %v2232, %v2233
      %v2235 = vrot.slane %v2234, 1
      %v2236 = vadd.f32 %v2234, %v2235
      %s2237 = vtos %v2236
      %v2238 = vsel %vm575, %v2170, -inf
      %v2239 = vsel %vm575, %v2210, -inf
      %v2240 = vmax.f32 %v2238, %v2239
      %2241 = vmax.xlane.f32.xlu0 %v2240
      %v2242 = vpop.xlane.xlu0 %2241
      %v2243 = vrot.slane %v2242, 4
      %v2244 = vmax.f32 %v2242, %v2243
      %v2245 = vrot.slane %v2244, 2
      %v2246 = vmax.f32 %v2244, %v2245
      %v2247 = vrot.slane %v2246, 1
      %v2248 = vmax.f32 %v2246, %v2247
      %s2249 = vtos %v2248
      %s2250 = smax.f32 %s2249, %s2237
      %v2251 = vstv %s2250
      %v2252 = vsub.f32 %v2170, %v2251
      %v2253 = vsub.f32 %v2210, %v2251
      %v2254 = vmul.f32 %v2252, 1.442695
      %v2255 = vpow.pop %v2254
      %v2256 = vmul.f32 %v2253, 1.442695
      %v2257 = vpow.pop %v2256
      %s2258 = ssub.f32 %s2237, %s2250
      %v2259 = vstv %s2258
      %v2260 = vmul.f32 %v2259, 1.442695
      %v2261 = vpow.pop %v2260
      %s2262 = vtos %v2261
      %v2263 = vsel %vm575, %v2255, 0.0
      %v2264 = vsel %vm575, %v2257, 0.0
      %v2265 = vadd.f32 %v2263, %v2264
      %2266 = vadd.xlane.f32.xlu0 %v2265
      %v2267 = vpop.xlane.xlu0 %2266
      %v2268 = vrot.slane %v2267, 4
      %v2269 = vadd.f32 %v2267, %v2268
      %v2270 = vrot.slane %v2269, 2
      %v2271 = vadd.f32 %v2269, %v2270
      %v2272 = vrot.slane %v2271, 1
      %v2273 = vadd.f32 %v2271, %v2272
      %s2274 = vtos %v2273
      %s2275 = sadd.f32 %s2274, %s2262
      %v2276 = vpack.c.bf16 %v2255, %v2255
      %v2277 = vpack.c.bf16 %v2257, %v2257
      %v2279 = vsel %vm370, %v2276, 0
      %2281 = vmatprep.subr.bf16.mxu0 0
      %2282 = vmatpush1.bf16.msra.mxu0 0
      %2283 = vmatprep.subr.bf16.mxu0 0
      %2284 = vmatpush1.bf16.msra.mxu0 0
      %2285 = vmatprep.subr.bf16.mxu0 0
      %2286 = vmatpush1.bf16.msra.mxu0 0
      %2287 = vmatprep.subr.bf16.mxu0 0
      %2288 = vmatpush1.bf16.msra.mxu0 0
      %2289 = vmatprep.subr.bf16.mxu0 0
      %2290 = vmatpush1.bf16.msra.mxu0 0
      %2291 = vmatprep.subr.bf16.mxu0 0
      %2292 = vmatpush1.bf16.msra.mxu0 0
      %2293 = vmatprep.subr.bf16.mxu0 0
      %2294 = vmatpush1.bf16.msra.mxu0 0
      %2295 = vmatprep.subr.bf16.mxu0 0
      %2296 = vmatpush1.bf16.msra.mxu0 %v2015
      %2297 = vmatprep.subr.bf16.mxu0 0
      %2298 = vmatpush2.bf16.msra.mxu0 0
      %2299 = vmatprep.subr.bf16.mxu0 0
      %2300 = vmatpush2.bf16.msra.mxu0 0
      %2301 = vmatprep.subr.bf16.mxu0 0
      %2302 = vmatpush2.bf16.msra.mxu0 0
      %2303 = vmatprep.subr.bf16.mxu0 0
      %2304 = vmatpush2.bf16.msra.mxu0 0
      %2305 = vmatprep.subr.bf16.mxu0 0
      %2306 = vmatpush2.bf16.msra.mxu0 0
      %2307 = vmatprep.subr.bf16.mxu0 0
      %2308 = vmatpush2.bf16.msra.mxu0 0
      %2309 = vmatprep.subr.bf16.mxu0 0
      %2310 = vmatpush2.bf16.msra.mxu0 0
      %2311 = vmatprep.subr.bf16.mxu0 0
      %2312 = vmatpush2.bf16.msra.mxu0 0
      %2313 = vmatprep.mubr.bf16.mxu0 0
      %2314 = vmatmul.mubr.bf16.gmra.mxu0 %v2279
      %v2315 = vpop.f32.mrf.mxu0
      %v2316 = vadd.f32 0.0, %v2315
      %v2317 = vpop.f32.mrf.mxu0
      %v2318 = vpop.f32.mrf.mxu0
      %v2319 = vpop.f32.mrf.mxu0
      %2320 = vdwg.mxu0
      %v2322 = vsel %vm370, %v2277, 0
      %2324 = vmatprep.subr.bf16.mxu0 0
      %2325 = vmatpush1.bf16.msra.mxu0 0
      %2326 = vmatprep.subr.bf16.mxu0 0
      %2327 = vmatpush1.bf16.msra.mxu0 0
      %2328 = vmatprep.subr.bf16.mxu0 0
      %2329 = vmatpush1.bf16.msra.mxu0 0
      %2330 = vmatprep.subr.bf16.mxu0 0
      %2331 = vmatpush1.bf16.msra.mxu0 0
      %2332 = vmatprep.subr.bf16.mxu0 0
      %2333 = vmatpush1.bf16.msra.mxu0 0
      %2334 = vmatprep.subr.bf16.mxu0 0
      %2335 = vmatpush1.bf16.msra.mxu0 0
      %2336 = vmatprep.subr.bf16.mxu0 0
      %2337 = vmatpush1.bf16.msra.mxu0 0
      %2338 = vmatprep.subr.bf16.mxu0 0
      %2339 = vmatpush1.bf16.msra.mxu0 %v2067
      %2340 = vmatprep.subr.bf16.mxu0 0
      %2341 = vmatpush2.bf16.msra.mxu0 0
      %2342 = vmatprep.subr.bf16.mxu0 0
      %2343 = vmatpush2.bf16.msra.mxu0 0
      %2344 = vmatprep.subr.bf16.mxu0 0
      %2345 = vmatpush2.bf16.msra.mxu0 0
      %2346 = vmatprep.subr.bf16.mxu0 0
      %2347 = vmatpush2.bf16.msra.mxu0 0
      %2348 = vmatprep.subr.bf16.mxu0 0
      %2349 = vmatpush2.bf16.msra.mxu0 0
      %2350 = vmatprep.subr.bf16.mxu0 0
      %2351 = vmatpush2.bf16.msra.mxu0 0
      %2352 = vmatprep.subr.bf16.mxu0 0
      %2353 = vmatpush2.bf16.msra.mxu0 0
      %2354 = vmatprep.subr.bf16.mxu0 0
      %2355 = vmatpush2.bf16.msra.mxu0 0
      %2356 = vmatprep.mubr.bf16.mxu0 0
      %2357 = vmatmul.mubr.bf16.gmra.mxu0 %v2322
      %v2358 = vpop.f32.mrf.mxu0
      %v2359 = vadd.f32 0.0, %v2358
      %v2360 = vpop.f32.mrf.mxu0
      %v2361 = vpop.f32.mrf.mxu0
      %v2362 = vpop.f32.mrf.mxu0
      %2363 = vdwg.mxu0
      %v2364 = vsel %vm564, %v2316, 0.0
      %v2365 = vsel %vm564, %v2359, 0.0
      %v2366 = vadd.f32 %v2364, %v2365
      %v2367 = vstv %s2262
      %v2368 = vmul.f32 %v2367, %v1830
      %v2370 = vlaneseq
      %v2371 = vshrl.u32 %v2370, 7
      %v2372 = vsub.s32 0, %v2371
      %v2373 = vrot.slane %v2368, %v2372
      %2374 = vrot.lane.b32.xlu0 %v2373, 40
      %v2375 = vpop.permute.xlu0 %2374
      %v2377 = vadd.f32 %v2366, %v2375
      %v2378 = vstv %s2275
      %v2379 = vrcp.pop %v2378
      %v2380 = vmul.f32 %v2377, %v2379
      %2383 = vrot.lane.b32.xlu0 %v1005, 8
      %v2384 = vpop.permute.xlu0 %2383
      %2385 = vrot.lane.b32.xlu0 %v1006, 8
      %v2386 = vpop.permute.xlu0 %2385
      %2389 = vrot.lane.b32.xlu0 %v1559, 16
      %v2390 = vpop.permute.xlu0 %2389
      %2391 = vrot.lane.b32.xlu0 %v1560, 16
      %v2392 = vpop.permute.xlu0 %2391
      %2395 = vrot.lane.b32.xlu0 %v2113, 24
      %v2396 = vpop.permute.xlu0 %2395
      %2397 = vrot.lane.b32.xlu0 %v2114, 24
      %v2398 = vpop.permute.xlu0 %2397
      %v2401 = vsel %vm209, %v474, %v2384
      %v2404 = vsel %vm209, %v475, %v2386
      %vm2405 = vcmask 130048
      %v2407 = vsel %vm2405, %v2401, %v2390
      %v2409 = vsel %vm2405, %v2404, %v2392
      %vm2410 = vcmask 195584
      %v2412 = vsel %vm2410, %v2407, %v2396
      %v2415 = vsel %vm2410, %v2409, %v2398
      %vm2417 = vcmask 254976
      %2418 = vst.msk [vmem:[%s190] sm:$0x3] %vm2417, %v2412
      %2419 = vst.msk [vmem:[%s190 + $0x2] sm:$0x3] %vm2417, %v2415
      %2421 = vrot.lane.b32.xlu0 %v1272, 8
      %v2422 = vpop.permute.xlu0 %2421
      %2425 = vrot.lane.b32.xlu0 %v1826, 16
      %v2426 = vpop.permute.xlu0 %2425
      %2429 = vrot.lane.b32.xlu0 %v2380, 24
      %v2430 = vpop.permute.xlu0 %2429
      %v2432 = vsel %vm209, %v718, %v2422
      %v2433 = vsel %vm2405, %v2432, %v2426
      %v2434 = vsel %vm2410, %v2433, %v2430
      %v2435 = vpack.c.bf16 %v2434, %v2434
      %vm2436 = vcmask 253952
      %vm2437 = vsmask.f32 256
      %vm2438 = vmand %vm2436, %vm2437
      %v2439 = vld [vmem:[%s193] sm:$0x1]
      %v2440 = vsel %vm2438, %v2435, %v2439
      %2441 = vst [vmem:[%s193] sm:$0x1] %v2440
      %p2442 = scmp.lt.s32.totalorder %s15, 1
      %s2443 = scalar_select %p2442, %s15, 1
      %s2444 = smul.addr %s2443, 2
      %s2445 = smul.addr %s2444, 2
      %s2446 = scalar_lea.vmem %s2, %s2445
      %p2447 = scmp.lt.s32.totalorder %s15, 1
      %s2448 = scalar_select %p2447, %s15, 1
      %s2449 = scalar_lea.vmem %s3, %s2448
      // Predicated region
      $region29: #{timesformer_forward.23} parent=27 // pred_check
        %p2450 = pneg %p85
      $region30: #{timesformer_forward.23} parent=27 // pred_check_branch
        %2452 = sbr.rel (%p2450) target = $region32
      $region31: #{timesformer_forward.23} parent=27 // pred_region
        _
      $region32: #{timesformer_forward.23} parent=27 // pred_fallthru
        _
      // Predicated region
      $region33: #{timesformer_forward.23} parent=27 // pred_check
        %p2453 = pneg %p111
      $region34: #{timesformer_forward.23} parent=27 // pred_check_branch
        %2455 = sbr.rel (%p2453) target = $region36
      $region35: #{timesformer_forward.23} parent=27 // pred_region
        _
      $region36: #{timesformer_forward.23} parent=27 // pred_fallthru
        _
    $region28: #{timesformer_forward.23} parent=5 // pred_fallthru
      _
    %p2456 = scmp.le.s32.totalorder 2, %s10
    // Predicated region
    $region37: #{timesformer_forward.23} parent=5 // pred_check
      %p2457 = pneg %p2456
    $region38: #{timesformer_forward.23} parent=5 // pred_check_branch
      %2459 = sbr.rel (%p2457) target = $region40
    $region39: #{timesformer_forward.23} parent=5 // pred_region
      %s2460 = ssub.s32 %s10, 2
      // Predicated region
      $region41: #{timesformer_forward.23} parent=39 // pred_check
        %p2461 = pneg %p91
      $region42: #{timesformer_forward.23} parent=39 // pred_check_branch
        %2463 = sbr.rel (%p2461) target = $region44
      $region43: #{timesformer_forward.23} parent=39 // pred_region
        %p2464 = scmp.lt.s32.totalorder %s16, 1
        %s2465 = scalar_select %p2464, %s16, 1
        %s2466 = smul.addr %s2465, 2
        %s2467 = smul.addr %s2466, 2
        %s2468 = scalar_lea.vmem %s2, %s2467
      $region44: #{timesformer_forward.23} parent=39 // pred_fallthru
        _
      // Predicated region
      $region45: #{timesformer_forward.23} parent=39 // pred_check
        %p2469 = pneg %p117
      $region46: #{timesformer_forward.23} parent=39 // pred_check_branch
        %2471 = sbr.rel (%p2469) target = $region48
      $region47: #{timesformer_forward.23} parent=39 // pred_region
        %p2472 = scmp.lt.s32.totalorder %s16, 1
        %s2473 = scalar_select %p2472, %s16, 1
        %s2474 = scalar_lea.vmem %s3, %s2473
      $region48: #{timesformer_forward.23} parent=39 // pred_fallthru
        _
    $region40: #{timesformer_forward.23} parent=5 // pred_fallthru
      _
  $region6: #{timesformer_forward.23} parent=0 // loop_footer
    %s14 = sadd.s32 1, %s10
  $region7: #{timesformer_forward.23} parent=0 // loop_footer_branch
    %9 = sbr.rel target = $region3
  $region8: #{timesformer_forward.23} parent=0 // loop_exit
    _

// kernel: timesformer_forward.35
$region0: #{timesformer_forward.35}
  #allocation0 [shape = 'u32[]', space=smem, size = 0x4, offset = 0x4, fixed_abs, tag = 'smem constant byte address 0x4 - core index']
  #allocation1 [shape = 'u32[144,128]{1,0:T(1,128)}', space=vmem, size = 0x12000, scoped, tag = 'internal scratch']
  %s0 = inlined_call_operand.vmem [shape: bf16[2,32], index: 0, kind: input, shape index: {}]
  %s1 = inlined_call_operand.vmem [shape: bf16[32,128], index: 1, kind: input, shape index: {}]
  %s2 = inlined_call_operand.vmem [shape: f32[1,128], index: 2, kind: input, shape index: {}]
  %s3 = inlined_call_operand.vmem [shape: f32[1,32], index: 3, kind: input, shape index: {}]
  %s4 = inlined_call_operand.vmem [shape: f32[1,32], index: 4, kind: input, shape index: {}]
  %s5 = inlined_call_operand.hbm [shape: f32[2,128], index: 5, kind: output, shape index: {}]
  %s6 = sld [smem:[#allocation0]]
  $region30: #{timesformer_forward.35} parent=0
    _
  %s8 = ssub.s32 1, %s6
  %s9 = scalar_select 0, %s8, %s6
  $region1: #{timesformer_forward.35} parent=0
    #allocation2 [shape = 'u8[1024]{0}', space=vmem, size = 0x400, scoped, tag = 'output window, operand 0, single buffered']
    #allocation3 [shape = 's32[1]{0}', space=sflag, size = 0x4, scoped, tag = 'scoped memory for timesformer_forward.35']
    %10 = vsyncpa [#allocation3], 0
    // Predicated region
    $region2: #{timesformer_forward.35} parent=1 // pred_check
      _
    $region3: #{timesformer_forward.35} parent=1 // pred_check_branch
      %12 = sbr.rel (0) target = $region5
    $region4: #{timesformer_forward.35} parent=1 // pred_region
      _
    $region5: #{timesformer_forward.35} parent=1 // pred_fallthru
      _
    // Predicated region
    $region6: #{timesformer_forward.35} parent=1 // pred_check
      _
    $region7: #{timesformer_forward.35} parent=1 // pred_check_branch
      %14 = sbr.rel (0) target = $region9
    $region8: #{timesformer_forward.35} parent=1 // pred_region
      _
    $region9: #{timesformer_forward.35} parent=1 // pred_fallthru
      _
    // Predicated region
    $region10: #{timesformer_forward.35} parent=1 // pred_check
      _
    $region11: #{timesformer_forward.35} parent=1 // pred_check_branch
      %16 = sbr.rel (0) target = $region13
    $region12: #{timesformer_forward.35} parent=1 // pred_region
      _
    $region13: #{timesformer_forward.35} parent=1 // pred_fallthru
      _
    // Predicated region
    $region14: #{timesformer_forward.35} parent=1 // pred_check
      _
    $region15: #{timesformer_forward.35} parent=1 // pred_check_branch
      %18 = sbr.rel (0) target = $region17
    $region16: #{timesformer_forward.35} parent=1 // pred_region
      _
    $region17: #{timesformer_forward.35} parent=1 // pred_fallthru
      _
    // Predicated region
    $region18: #{timesformer_forward.35} parent=1 // pred_check
      _
    $region19: #{timesformer_forward.35} parent=1 // pred_check_branch
      %20 = sbr.rel (0) target = $region21
    $region20: #{timesformer_forward.35} parent=1 // pred_region
      _
    $region21: #{timesformer_forward.35} parent=1 // pred_fallthru
      _
    %v22 = vld [vmem:[%s0] sm:$0x1]
    %v23 = vunpack.c.l.bf16 %v22
    %vm24 = vcmask 254976
    %v25 = vsel %vm24, %v23, 0.0
    %26 = vadd.xlane.f32.xlu0 %v25
    %v27 = vpop.xlane.xlu0 %26
    %v28 = vrcp.pop 32.0
    %v29 = vmul.f32 %v27, %v28
    %v30 = vsub.f32 %v23, %v29
    %v31 = vmul.f32 %v30, %v30
    %v32 = vsel %vm24, %v31, 0.0
    %33 = vadd.xlane.f32.xlu0 %v32
    %v34 = vpop.xlane.xlu0 %33
    %v35 = vmul.f32 %v34, %v28
    %v36 = vadd.f32 %v35, 1e-05
    %v37 = vrsqrt.pop %v36
    %v38 = vmul.f32 %v30, %v37
    %v39 = vld [vmem:[%s3] sm:$0x1]
    %v41 = vlaneseq
    %v42 = vshrl.u32 %v41, 7
    %v43 = vsub.s32 0, %v42
    %v44 = vrot.slane %v39, %v43
    %v46 = vmul.f32 %v38, %v44
    %v47 = vld [vmem:[%s4] sm:$0x1]
    %v49 = vlaneseq
    %v50 = vshrl.u32 %v49, 7
    %v51 = vsub.s32 0, %v50
    %v52 = vrot.slane %v47, %v51
    %v54 = vadd.f32 %v46, %v52
    %v55 = vpack.c.bf16 %v54, %v54
    %v56 = vld [vmem:[%s1] sm:$0xf]
    %v57 = vld [vmem:[%s1 + $0x4] sm:$0xf]
    %v58 = vld [vmem:[%s1 + $0x8] sm:$0xf]
    %v59 = vld [vmem:[%s1 + $0xc] sm:$0xf]
    %v60 = vld [vmem:[%s2] sm:$0x1]
    %v62 = vlaneseq
    %v63 = vshrl.u32 %v62, 7
    %v64 = vsub.s32 0, %v63
    %v65 = vrot.slane %v60, %v64
    %v71 = vunpack.c.l.b16 %v56
    %v72 = vunpack.c.l.b16 %v57
    %v73 = vunpack.c.l.b16 %v58
    %v74 = vunpack.c.l.b16 %v59
    %v75 = vpack.c.b16 %v72, %v71
    %v76 = vpack.c.b16 %v74, %v73
    %vm79 = vcmask 261120
    %v81 = vsel %vm79, %v55, 0
    %83 = vmatprep.subr.bf16.mxu0 0
    %84 = vmatpush1.bf16.msra.mxu0 0
    %85 = vmatprep.subr.bf16.mxu0 0
    %86 = vmatpush1.bf16.msra.mxu0 0
    %87 = vmatprep.subr.bf16.mxu0 0
    %88 = vmatpush1.bf16.msra.mxu0 0
    %89 = vmatprep.subr.bf16.mxu0 0
    %90 = vmatpush1.bf16.msra.mxu0 0
    %91 = vmatprep.subr.bf16.mxu0 0
    %92 = vmatpush1.bf16.msra.mxu0 0
    %93 = vmatprep.subr.bf16.mxu0 0
    %94 = vmatpush1.bf16.msra.mxu0 0
    %95 = vmatprep.subr.bf16.mxu0 0
    %96 = vmatpush1.bf16.msra.mxu0 %v76
    %97 = vmatprep.subr.bf16.mxu0 0
    %98 = vmatpush1.bf16.msra.mxu0 %v75
    %99 = vmatprep.subr.bf16.mxu0 0
    %100 = vmatpush2.bf16.msra.mxu0 0
    %101 = vmatprep.subr.bf16.mxu0 0
    %102 = vmatpush2.bf16.msra.mxu0 0
    %103 = vmatprep.subr.bf16.mxu0 0
    %104 = vmatpush2.bf16.msra.mxu0 0
    %105 = vmatprep.subr.bf16.mxu0 0
    %106 = vmatpush2.bf16.msra.mxu0 0
    %107 = vmatprep.subr.bf16.mxu0 0
    %108 = vmatpush2.bf16.msra.mxu0 0
    %109 = vmatprep.subr.bf16.mxu0 0
    %110 = vmatpush2.bf16.msra.mxu0 0
    %111 = vmatprep.subr.bf16.mxu0 0
    %112 = vmatpush2.bf16.msra.mxu0 0
    %113 = vmatprep.subr.bf16.mxu0 0
    %114 = vmatpush2.bf16.msra.mxu0 0
    %115 = vmatprep.mubr.bf16.mxu0 0
    %116 = vmatmul.mubr.bf16.gmra.mxu0 %v81
    %v117 = vpop.f32.mrf.mxu0
    %v118 = vadd.f32 %v65, %v117
    %v119 = vpop.f32.mrf.mxu0
    %v120 = vpop.f32.mrf.mxu0
    %v121 = vpop.f32.mrf.mxu0
    %122 = vdwg.mxu0
    %123 = vst [vmem:[#allocation2] sm:$0x3] %v118
    // Predicated region
    $region22: #{timesformer_forward.35} parent=1 // pred_check
      _
    $region23: #{timesformer_forward.35} parent=1 // pred_check_branch
      %125 = sbr.rel (0) target = $region25
    $region24: #{timesformer_forward.35} parent=1 // pred_region
      %s127 = ssub.s32 32, 32
      %128 = vsyncadd [#allocation3], %s127
      %s130 = sshll.u32 [#allocation2], 4
      %s131 = int_to_ptr.vmem [resolvable:$true] %s130
      %133 = dma.vmem_to_hbm [thread:$0]  %s131, 32, %s5, [#allocation3]
    $region25: #{timesformer_forward.35} parent=1 // pred_fallthru
      _
    // Predicated region
    $region26: #{timesformer_forward.35} parent=1 // pred_check
      _
    $region27: #{timesformer_forward.35} parent=1 // pred_check_branch
      %135 = sbr.rel (0) target = $region29
    $region28: #{timesformer_forward.35} parent=1 // pred_region
      %136 = dma.done [#allocation3], 32
    $region29: #{timesformer_forward.35} parent=1 // pred_fallthru
      _
    %137 = vsyncpa [#allocation3], 1

// kernel: timesformer_forward.20
$region0: #{timesformer_forward.20}
  #allocation0 [shape = 'u32[]', space=smem, size = 0x4, offset = 0x4, fixed_abs, tag = 'smem constant byte address 0x4 - core index']
  #allocation1 [shape = 'u32[144,128]{1,0:T(1,128)}', space=vmem, size = 0x12000, scoped, tag = 'internal scratch']
  %s0 = inlined_call_operand.vmem [shape: bf16[2,4,2,96], index: 0, kind: input, shape index: {}]
  %s1 = inlined_call_operand.vmem [shape: bf16[2,1,96], index: 1, kind: input, shape index: {}]
  %s2 = inlined_call_operand.vmem [shape: bf16[2,4,2,32], index: 2, kind: output, shape index: {0}]
  %s3 = inlined_call_operand.vmem [shape: bf16[2,1,32], index: 3, kind: output, shape index: {1}]
  %4 = xla_tuple %s2, %s3
  %s5 = sld [smem:[#allocation0]]
  $region49: #{timesformer_forward.20} parent=0
    _
  %s7 = ssub.s32 1, %s5
  %s8 = scalar_select 0, %s7, %s5
  loop: start=0, step=1, limit=4
  $region2: #{timesformer_forward.20} parent=0 // loop_pre_header
    _
  $region3: #{timesformer_forward.20} parent=0 // loop_header
    %s10 = sphi 0, %s14
    %p11 = scmp.ge.s32.totalorder %s10, 4
    %s20 = sphi 0, %s22
    %s23 = sphi 0, %s20
    %s24 = sphi 0, %s23
    %s40 = sphi 0, %s24
    %s46 = sphi 0, %s48
    %s49 = sphi 0, %s46
    %s50 = sphi 0, %s49
    %s66 = sphi 0, %s50
    %s72 = sphi 0, %s74
    %s75 = sphi 0, %s72
    %s76 = sphi 0, %s75
    %s92 = sphi 0, %s76
    %s98 = sphi 0, %s100
    %s101 = sphi 0, %s98
    %s102 = sphi 0, %s101
    %s118 = sphi 0, %s102
  $region4: #{timesformer_forward.20} parent=0 // loop_header_branch
    %13 = sbr.rel (%p11) target = $region8
  $region5: #{timesformer_forward.20} parent=0 // loop_body
    %s15 = ssub.s32 %s10, 1
    %s16 = ssub.s32 %s10, 2
    %s17 = sadd.s32 %s10, 1
    %s18 = ssub.s32 %s10, %s17
    %p19 = scmp.eq.s32.totalorder %s18, 0
    %s21 = sadd.s32 %s20, 1
    %s22 = scalar_select %p19, %s20, %s21
    %p25 = pneg %p19
    %p26 = scmp.eq.s32.totalorder %s10, 1
    %p27 = por %p25, %p26
    %p28 = scmp.ne.s32.totalorder %s20, %s23
    %p29 = scmp.eq.s32.totalorder %s10, 0
    %p30 = por %p28, %p29
    %p31 = scmp.ne.s32.totalorder %s20, %s23
    %p32 = scmp.eq.s32.totalorder %s15, 1
    %p33 = por %p31, %p32
    %p34 = scmp.ne.s32.totalorder %s23, %s24
    %p35 = scmp.eq.s32.totalorder %s15, 0
    %p36 = por %p34, %p35
    %p37 = scmp.ne.s32.totalorder %s23, %s24
    %p38 = scmp.eq.s32.totalorder %s16, 1
    %p39 = por %p37, %p38
    %p41 = scmp.ne.s32.totalorder %s24, %s40
    %p42 = scmp.eq.s32.totalorder %s16, 0
    %p43 = por %p41, %p42
    %s44 = ssub.s32 %s10, %s17
    %p45 = scmp.eq.s32.totalorder %s44, 0
    %s47 = sadd.s32 %s46, 1
    %s48 = scalar_select %p45, %s46, %s47
    %p51 = pneg %p45
    %p52 = scmp.eq.s32.totalorder %s10, 1
    %p53 = por %p51, %p52
    %p54 = scmp.ne.s32.totalorder %s46, %s49
    %p55 = scmp.eq.s32.totalorder %s10, 0
    %p56 = por %p54, %p55
    %p57 = scmp.ne.s32.totalorder %s46, %s49
    %p58 = scmp.eq.s32.totalorder %s15, 1
    %p59 = por %p57, %p58
    %p60 = scmp.ne.s32.totalorder %s49, %s50
    %p61 = scmp.eq.s32.totalorder %s15, 0
    %p62 = por %p60, %p61
    %p63 = scmp.ne.s32.totalorder %s49, %s50
    %p64 = scmp.eq.s32.totalorder %s16, 1
    %p65 = por %p63, %p64
    %p67 = scmp.ne.s32.totalorder %s50, %s66
    %p68 = scmp.eq.s32.totalorder %s16, 0
    %p69 = por %p67, %p68
    %s70 = ssub.s32 %s10, %s17
    %p71 = scmp.eq.s32.totalorder %s70, 0
    %s73 = sadd.s32 %s72, 1
    %s74 = scalar_select %p71, %s72, %s73
    %p77 = pneg %p71
    %p78 = scmp.eq.s32.totalorder %s10, 1
    %p79 = por %p77, %p78
    %p80 = scmp.ne.s32.totalorder %s72, %s75
    %p81 = scmp.eq.s32.totalorder %s10, 0
    %p82 = por %p80, %p81
    %p83 = scmp.ne.s32.totalorder %s72, %s75
    %p84 = scmp.eq.s32.totalorder %s15, 1
    %p85 = por %p83, %p84
    %p86 = scmp.ne.s32.totalorder %s75, %s76
    %p87 = scmp.eq.s32.totalorder %s15, 0
    %p88 = por %p86, %p87
    %p89 = scmp.ne.s32.totalorder %s75, %s76
    %p90 = scmp.eq.s32.totalorder %s16, 1
    %p91 = por %p89, %p90
    %p93 = scmp.ne.s32.totalorder %s76, %s92
    %p94 = scmp.eq.s32.totalorder %s16, 0
    %p95 = por %p93, %p94
    %s96 = ssub.s32 %s10, %s17
    %p97 = scmp.eq.s32.totalorder %s96, 0
    %s99 = sadd.s32 %s98, 1
    %s100 = scalar_select %p97, %s98, %s99
    %p103 = pneg %p97
    %p104 = scmp.eq.s32.totalorder %s10, 1
    %p105 = por %p103, %p104
    %p106 = scmp.ne.s32.totalorder %s98, %s101
    %p107 = scmp.eq.s32.totalorder %s10, 0
    %p108 = por %p106, %p107
    %p109 = scmp.ne.s32.totalorder %s98, %s101
    %p110 = scmp.eq.s32.totalorder %s15, 1
    %p111 = por %p109, %p110
    %p112 = scmp.ne.s32.totalorder %s101, %s102
    %p113 = scmp.eq.s32.totalorder %s15, 0
    %p114 = por %p112, %p113
    %p115 = scmp.ne.s32.totalorder %s101, %s102
    %p116 = scmp.eq.s32.totalorder %s16, 1
    %p117 = por %p115, %p116
    %p119 = scmp.ne.s32.totalorder %s102, %s118
    %p120 = scmp.eq.s32.totalorder %s16, 0
    %p121 = por %p119, %p120
    %p122 = scmp.le.s32.totalorder 1, %s10
    %p123 = scmp.lt.s32.totalorder %s10, 3
    %p124 = pnand %p122, %p123
    %p125 = pneg %p124
    // Predicated region
    $region9: #{timesformer_forward.20} parent=5 // pred_check
      _
    $region10: #{timesformer_forward.20} parent=5 // pred_check_branch
      %127 = sbr.rel (%p124) target = $region12
    $region11: #{timesformer_forward.20} parent=5 // pred_region
      %s128 = ssub.s32 %s10, 1
    $region12: #{timesformer_forward.20} parent=5 // pred_fallthru
      _
    %p129 = scmp.lt.s32.totalorder %s10, 2
    // Predicated region
    $region13: #{timesformer_forward.20} parent=5 // pred_check
      %p130 = pneg %p129
    $region14: #{timesformer_forward.20} parent=5 // pred_check_branch
      %132 = sbr.rel (%p130) target = $region16
    $region15: #{timesformer_forward.20} parent=5 // pred_region
      // Predicated region
      $region17: #{timesformer_forward.20} parent=15 // pred_check
        %p133 = pneg %p30
      $region18: #{timesformer_forward.20} parent=15 // pred_check_branch
        %135 = sbr.rel (%p133) target = $region20
      $region19: #{timesformer_forward.20} parent=15 // pred_region
        %p136 = scmp.lt.s32.totalorder %s10, 1
        %s137 = scalar_select %p136, %s10, 1
        %s138 = smul.addr %s137, 4
        %s139 = scalar_lea.vmem %s0, %s138
      $region20: #{timesformer_forward.20} parent=15 // pred_fallthru
        _
      // Predicated region
      $region21: #{timesformer_forward.20} parent=15 // pred_check
        %p140 = pneg %p56
      $region22: #{timesformer_forward.20} parent=15 // pred_check_branch
        %142 = sbr.rel (%p140) target = $region24
      $region23: #{timesformer_forward.20} parent=15 // pred_region
        %p143 = scmp.lt.s32.totalorder %s10, 1
        %s144 = scalar_select %p143, %s10, 1
        %s145 = scalar_lea.vmem %s1, %s144
      $region24: #{timesformer_forward.20} parent=15 // pred_fallthru
        _
    $region16: #{timesformer_forward.20} parent=5 // pred_fallthru
      _
    %p146 = scmp.le.s32.totalorder 1, %s10
    %p147 = scmp.lt.s32.totalorder %s10, 3
    %p148 = pnand %p146, %p147
    %p149 = pneg %p148
    // Predicated region
    $region25: #{timesformer_forward.20} parent=5 // pred_check
      _
    $region26: #{timesformer_forward.20} parent=5 // pred_check_branch
      %151 = sbr.rel (%p148) target = $region28
    $region27: #{timesformer_forward.20} parent=5 // pred_region
      %s152 = ssub.s32 %s10, 1
      %p153 = scmp.lt.s32.totalorder %s15, 1
      %s154 = scalar_select %p153, %s15, 1
      %s155 = smul.addr %s154, 4
      %s156 = scalar_lea.vmem %s0, %s155
      %p157 = pneg %p36
      %p158 = pneg %p33
      %p159 = scmp.lt.s32.totalorder %s15, 1
      %s160 = scalar_select %p159, %s15, 1
      %s161 = scalar_lea.vmem %s1, %s160
      %p162 = pneg %p62
      %p163 = pneg %p59
      %p164 = pneg %p88
      %p165 = pneg %p85
      %p166 = scmp.lt.s32.totalorder %s15, 1
      %s167 = scalar_select %p166, %s15, 1
      %s168 = smul.addr %s167, 4
      %s169 = scalar_lea.vmem %s2, %s168
      %p170 = pneg %p114
      %p171 = pneg %p111
      %p172 = scmp.lt.s32.totalorder %s15, 1
      %s173 = scalar_select %p172, %s15, 1
      %s174 = scalar_lea.vmem %s3, %s173
      %p175 = scmp.lt.s32.totalorder %s15, 1
      %s176 = scalar_select %p175, %s15, 1
      %s177 = smul.addr %s176, 4
      %s178 = scalar_lea.vmem %s0, %s177
      %p179 = scmp.lt.s32.totalorder %s15, 1
      %s180 = scalar_select %p179, %s15, 1
      %s181 = scalar_lea.vmem %s1, %s180
      %p182 = scmp.lt.s32.totalorder %s15, 1
      %s183 = scalar_select %p182, %s15, 1
      %s184 = smul.addr %s183, 4
      %s185 = scalar_lea.vmem %s2, %s184
      %p186 = scmp.lt.s32.totalorder %s15, 1
      %s187 = scalar_select %p186, %s15, 1
      %s188 = scalar_lea.vmem %s3, %s187
      %v190 = vld [vmem:[%s178] sm:$0x1]
      %v191 = vld [vmem:[%s178 + $0x1] sm:$0x1]
      %v192 = vld [vmem:[%s178 + $0x2] sm:$0x1]
      %v193 = vld [vmem:[%s178 + $0x3] sm:$0x1]
      %v194 = vld [vmem:[%s181] sm:$0x1]
      %v195 = vunpack.c.l.bf16 %v194
      %v198 = vunpack.c.l.s4 1966171168
      %v199 = vunpack.c.0.s8 %v198
      %v200 = vlaneseq
      %v201 = vshrl.u32 %v200, 7
      %v202 = vsub.s32 %v199, %v201
      %v203 = vrot.slane %v190, %v202
      %v205 = vunpack.c.l.s4 1966171168
      %v206 = vunpack.c.0.s8 %v205
      %v207 = vlaneseq
      %v208 = vshrl.u32 %v207, 7
      %v209 = vsub.s32 %v206, %v208
      %v210 = vrot.slane %v203, %v209
      %211 = vrot.lane.b32.xlu0 %v210, 96
      %v212 = vpop.permute.xlu0 %211
      %vm213 = vcmask 64512
      %v215 = vsel %vm213, %v190, 0
      %v218 = vsel %vm213, %v212, 0
      %220 = vmatprep.subr.bf16.mxu0 0
      %221 = vmatpush1.bf16.xpose.msra.mxu0 0
      %222 = vmatprep.subr.bf16.mxu0 0
      %223 = vmatpush1.bf16.xpose.msra.mxu0 0
      %224 = vmatprep.subr.bf16.mxu0 0
      %225 = vmatpush1.bf16.xpose.msra.mxu0 0
      %226 = vmatprep.subr.bf16.mxu0 0
      %227 = vmatpush1.bf16.xpose.msra.mxu0 0
      %228 = vmatprep.subr.bf16.mxu0 0
      %229 = vmatpush1.bf16.xpose.msra.mxu0 0
      %230 = vmatprep.subr.bf16.mxu0 0
      %231 = vmatpush1.bf16.xpose.msra.mxu0 0
      %232 = vmatprep.subr.bf16.mxu0 0
      %233 = vmatpush1.bf16.xpose.msra.mxu0 0
      %234 = vmatprep.subr.bf16.mxu0 0
      %235 = vmatpush1.bf16.xpose.msra.mxu0 %v218
      %236 = vmatprep.subr.bf16.mxu0 0
      %237 = vmatpush2.bf16.xpose.msra.mxu0 0
      %238 = vmatprep.subr.bf16.mxu0 0
      %239 = vmatpush2.bf16.xpose.msra.mxu0 0
      %240 = vmatprep.subr.bf16.mxu0 0
      %241 = vmatpush2.bf16.xpose.msra.mxu0 0
      %242 = vmatprep.subr.bf16.mxu0 0
      %243 = vmatpush2.bf16.xpose.msra.mxu0 0
      %244 = vmatprep.subr.bf16.mxu0 0
      %245 = vmatpush2.bf16.xpose.msra.mxu0 0
      %246 = vmatprep.subr.bf16.mxu0 0
      %247 = vmatpush2.bf16.xpose.msra.mxu0 0
      %248 = vmatprep.subr.bf16.mxu0 0
      %249 = vmatpush2.bf16.xpose.msra.mxu0 0
      %250 = vmatprep.subr.bf16.mxu0 0
      %251 = vmatpush2.bf16.xpose.msra.mxu0 0
      %252 = vmatprep.mubr.bf16.mxu0 0
      %253 = vmatmul.mubr.bf16.gmra.mxu0 %v215
      %v254 = vpop.f32.mrf.mxu0
      %v255 = vadd.f32 0.0, %v254
      %v256 = vpop.f32.mrf.mxu0
      %v257 = vpop.f32.mrf.mxu0
      %v258 = vpop.f32.mrf.mxu0
      %259 = vdwg.mxu0
      %v262 = vunpack.c.l.s4 1966171168
      %v263 = vunpack.c.0.s8 %v262
      %v264 = vlaneseq
      %v265 = vshrl.u32 %v264, 7
      %v266 = vsub.s32 %v263, %v265
      %v267 = vrot.slane %v191, %v266
      %v269 = vunpack.c.l.s4 1966171168
      %v270 = vunpack.c.0.s8 %v269
      %v271 = vlaneseq
      %v272 = vshrl.u32 %v271, 7
      %v273 = vsub.s32 %v270, %v272
      %v274 = vrot.slane %v267, %v273
      %275 = vrot.lane.b32.xlu0 %v274, 96
      %v276 = vpop.permute.xlu0 %275
      %v278 = vsel %vm213, %v191, 0
      %v281 = vsel %vm213, %v276, 0
      %283 = vmatprep.subr.bf16.mxu0 0
      %284 = vmatpush1.bf16.xpose.msra.mxu0 0
      %285 = vmatprep.subr.bf16.mxu0 0
      %286 = vmatpush1.bf16.xpose.msra.mxu0 0
      %287 = vmatprep.subr.bf16.mxu0 0
      %288 = vmatpush1.bf16.xpose.msra.mxu0 0
      %289 = vmatprep.subr.bf16.mxu0 0
      %290 = vmatpush1.bf16.xpose.msra.mxu0 0
      %291 = vmatprep.subr.bf16.mxu0 0
      %292 = vmatpush1.bf16.xpose.msra.mxu0 0
      %293 = vmatprep.subr.bf16.mxu0 0
      %294 = vmatpush1.bf16.xpose.msra.mxu0 0
      %295 = vmatprep.subr.bf16.mxu0 0
      %296 = vmatpush1.bf16.xpose.msra.mxu0 0
      %297 = vmatprep.subr.bf16.mxu0 0
      %298 = vmatpush1.bf16.xpose.msra.mxu0 %v281
      %299 = vmatprep.subr.bf16.mxu0 0
      %300 = vmatpush2.bf16.xpose.msra.mxu0 0
      %301 = vmatprep.subr.bf16.mxu0 0
      %302 = vmatpush2.bf16.xpose.msra.mxu0 0
      %303 = vmatprep.subr.bf16.mxu0 0
      %304 = vmatpush2.bf16.xpose.msra.mxu0 0
      %305 = vmatprep.subr.bf16.mxu0 0
      %306 = vmatpush2.bf16.xpose.msra.mxu0 0
      %307 = vmatprep.subr.bf16.mxu0 0
      %308 = vmatpush2.bf16.xpose.msra.mxu0 0
      %309 = vmatprep.subr.bf16.mxu0 0
      %310 = vmatpush2.bf16.xpose.msra.mxu0 0
      %311 = vmatprep.subr.bf16.mxu0 0
      %312 = vmatpush2.bf16.xpose.msra.mxu0 0
      %313 = vmatprep.subr.bf16.mxu0 0
      %314 = vmatpush2.bf16.xpose.msra.mxu0 0
      %315 = vmatprep.mubr.bf16.mxu0 0
      %316 = vmatmul.mubr.bf16.gmra.mxu0 %v278
      %v317 = vpop.f32.mrf.mxu0
      %v318 = vadd.f32 0.0, %v317
      %v319 = vpop.f32.mrf.mxu0
      %v320 = vpop.f32.mrf.mxu0
      %v321 = vpop.f32.mrf.mxu0
      %322 = vdwg.mxu0
      %v325 = vunpack.c.l.s4 1966171168
      %v326 = vunpack.c.0.s8 %v325
      %v327 = vlaneseq
      %v328 = vshrl.u32 %v327, 7
      %v329 = vsub.s32 %v326, %v328
      %v330 = vrot.slane %v192, %v329
      %v332 = vunpack.c.l.s4 1966171168
      %v333 = vunpack.c.0.s8 %v332
      %v334 = vlaneseq
      %v335 = vshrl.u32 %v334, 7
      %v336 = vsub.s32 %v333, %v335
      %v337 = vrot.slane %v330, %v336
      %338 = vrot.lane.b32.xlu0 %v337, 96
      %v339 = vpop.permute.xlu0 %338
      %v341 = vsel %vm213, %v192, 0
      %v344 = vsel %vm213, %v339, 0
      %346 = vmatprep.subr.bf16.mxu0 0
      %347 = vmatpush1.bf16.xpose.msra.mxu0 0
      %348 = vmatprep.subr.bf16.mxu0 0
      %349 = vmatpush1.bf16.xpose.msra.mxu0 0
      %350 = vmatprep.subr.bf16.mxu0 0
      %351 = vmatpush1.bf16.xpose.msra.mxu0 0
      %352 = vmatprep.subr.bf16.mxu0 0
      %353 = vmatpush1.bf16.xpose.msra.mxu0 0
      %354 = vmatprep.subr.bf16.mxu0 0
      %355 = vmatpush1.bf16.xpose.msra.mxu0 0
      %356 = vmatprep.subr.bf16.mxu0 0
      %357 = vmatpush1.bf16.xpose.msra.mxu0 0
      %358 = vmatprep.subr.bf16.mxu0 0
      %359 = vmatpush1.bf16.xpose.msra.mxu0 0
      %360 = vmatprep.subr.bf16.mxu0 0
      %361 = vmatpush1.bf16.xpose.msra.mxu0 %v344
      %362 = vmatprep.subr.bf16.mxu0 0
      %363 = vmatpush2.bf16.xpose.msra.mxu0 0
      %364 = vmatprep.subr.bf16.mxu0 0
      %365 = vmatpush2.bf16.xpose.msra.mxu0 0
      %366 = vmatprep.subr.bf16.mxu0 0
      %367 = vmatpush2.bf16.xpose.msra.mxu0 0
      %368 = vmatprep.subr.bf16.mxu0 0
      %369 = vmatpush2.bf16.xpose.msra.mxu0 0
      %370 = vmatprep.subr.bf16.mxu0 0
      %371 = vmatpush2.bf16.xpose.msra.mxu0 0
      %372 = vmatprep.subr.bf16.mxu0 0
      %373 = vmatpush2.bf16.xpose.msra.mxu0 0
      %374 = vmatprep.subr.bf16.mxu0 0
      %375 = vmatpush2.bf16.xpose.msra.mxu0 0
      %376 = vmatprep.subr.bf16.mxu0 0
      %377 = vmatpush2.bf16.xpose.msra.mxu0 0
      %378 = vmatprep.mubr.bf16.mxu0 0
      %379 = vmatmul.mubr.bf16.gmra.mxu0 %v341
      %v380 = vpop.f32.mrf.mxu0
      %v381 = vadd.f32 0.0, %v380
      %v382 = vpop.f32.mrf.mxu0
      %v383 = vpop.f32.mrf.mxu0
      %v384 = vpop.f32.mrf.mxu0
      %385 = vdwg.mxu0
      %v388 = vunpack.c.l.s4 1966171168
      %v389 = vunpack.c.0.s8 %v388
      %v390 = vlaneseq
      %v391 = vshrl.u32 %v390, 7
      %v392 = vsub.s32 %v389, %v391
      %v393 = vrot.slane %v193, %v392
      %v395 = vunpack.c.l.s4 1966171168
      %v396 = vunpack.c.0.s8 %v395
      %v397 = vlaneseq
      %v398 = vshrl.u32 %v397, 7
      %v399 = vsub.s32 %v396, %v398
      %v400 = vrot.slane %v393, %v399
      %401 = vrot.lane.b32.xlu0 %v400, 96
      %v402 = vpop.permute.xlu0 %401
      %v404 = vsel %vm213, %v193, 0
      %v407 = vsel %vm213, %v402, 0
      %409 = vmatprep.subr.bf16.mxu0 0
      %410 = vmatpush1.bf16.xpose.msra.mxu0 0
      %411 = vmatprep.subr.bf16.mxu0 0
      %412 = vmatpush1.bf16.xpose.msra.mxu0 0
      %413 = vmatprep.subr.bf16.mxu0 0
      %414 = vmatpush1.bf16.xpose.msra.mxu0 0
      %415 = vmatprep.subr.bf16.mxu0 0
      %416 = vmatpush1.bf16.xpose.msra.mxu0 0
      %417 = vmatprep.subr.bf16.mxu0 0
      %418 = vmatpush1.bf16.xpose.msra.mxu0 0
      %419 = vmatprep.subr.bf16.mxu0 0
      %420 = vmatpush1.bf16.xpose.msra.mxu0 0
      %421 = vmatprep.subr.bf16.mxu0 0
      %422 = vmatpush1.bf16.xpose.msra.mxu0 0
      %423 = vmatprep.subr.bf16.mxu0 0
      %424 = vmatpush1.bf16.xpose.msra.mxu0 %v407
      %425 = vmatprep.subr.bf16.mxu0 0
      %426 = vmatpush2.bf16.xpose.msra.mxu0 0
      %427 = vmatprep.subr.bf16.mxu0 0
      %428 = vmatpush2.bf16.xpose.msra.mxu0 0
      %429 = vmatprep.subr.bf16.mxu0 0
      %430 = vmatpush2.bf16.xpose.msra.mxu0 0
      %431 = vmatprep.subr.bf16.mxu0 0
      %432 = vmatpush2.bf16.xpose.msra.mxu0 0
      %433 = vmatprep.subr.bf16.mxu0 0
      %434 = vmatpush2.bf16.xpose.msra.mxu0 0
      %435 = vmatprep.subr.bf16.mxu0 0
      %436 = vmatpush2.bf16.xpose.msra.mxu0 0
      %437 = vmatprep.subr.bf16.mxu0 0
      %438 = vmatpush2.bf16.xpose.msra.mxu0 0
      %439 = vmatprep.subr.bf16.mxu0 0
      %440 = vmatpush2.bf16.xpose.msra.mxu0 0
      %441 = vmatprep.mubr.bf16.mxu0 0
      %442 = vmatmul.mubr.bf16.gmra.mxu0 %v404
      %v443 = vpop.f32.mrf.mxu0
      %v444 = vadd.f32 0.0, %v443
      %v445 = vpop.f32.mrf.mxu0
      %v446 = vpop.f32.mrf.mxu0
      %v447 = vpop.f32.mrf.mxu0
      %448 = vdwg.mxu0
      %v449 = vunpack.c.l.bf16 %v190
      %v450 = vunpack.c.l.bf16 %v191
      %v451 = vunpack.c.l.bf16 %v192
      %v452 = vunpack.c.l.bf16 %v193
      %v453 = vlaneseq
      %v454 = vshrl.u32 %v453, 7
      %v455 = vsub.s32 0, %v454
      %v456 = vrot.slane %v195, %v455
      %v459 = vunpack.c.l.s4 1983009808
      %v460 = vunpack.c.0.s8 %v459
      %v461 = vlaneseq
      %v462 = vshrl.u32 %v461, 7
      %v463 = vsub.s32 %v460, %v462
      %v464 = vrot.slane %v456, %v463
      %465 = vrot.lane.b32.xlu0 %v464, 96
      %v466 = vpop.permute.xlu0 %465
      %v468 = vmul.f32 %v449, %v466
      %v469 = vmul.f32 %v450, %v466
      %v470 = vmul.f32 %v451, %v466
      %v471 = vmul.f32 %v452, %v466
      %vm472 = vcmask 58368
      %v473 = vsel %vm472, %v468, 0.0
      %474 = vadd.xlane.f32.xlu0 %v473
      %v475 = vpop.xlane.xlu0 %474
      %v476 = vsel %vm472, %v469, 0.0
      %477 = vadd.xlane.f32.xlu0 %v476
      %v478 = vpop.xlane.xlu0 %477
      %v479 = vsel %vm472, %v470, 0.0
      %480 = vadd.xlane.f32.xlu0 %v479
      %v481 = vpop.xlane.xlu0 %480
      %v482 = vsel %vm472, %v471, 0.0
      %483 = vadd.xlane.f32.xlu0 %v482
      %v484 = vpop.xlane.xlu0 %483
      %vm485 = vcmask 9216
      %v486 = vsel %vm485, %v255, -inf
      %487 = vmax.xlane.f32.xlu0 %v486
      %v488 = vpop.xlane.xlu0 %487
      %v489 = vsel %vm485, %v318, -inf
      %490 = vmax.xlane.f32.xlu0 %v489
      %v491 = vpop.xlane.xlu0 %490
      %v492 = vsel %vm485, %v381, -inf
      %493 = vmax.xlane.f32.xlu0 %v492
      %v494 = vpop.xlane.xlu0 %493
      %v495 = vsel %vm485, %v444, -inf
      %496 = vmax.xlane.f32.xlu0 %v495
      %v497 = vpop.xlane.xlu0 %496
      %v498 = vmax.f32 %v488, %v475
      %v499 = vmax.f32 %v491, %v478
      %v500 = vmax.f32 %v494, %v481
      %v501 = vmax.f32 %v497, %v484
      %v502 = vsub.f32 %v255, %v498
      %v503 = vsub.f32 %v318, %v499
      %v504 = vsub.f32 %v381, %v500
      %v505 = vsub.f32 %v444, %v501
      %v506 = vmul.f32 %v502, 1.442695
      %v507 = vpow.pop %v506
      %v508 = vmul.f32 %v503, 1.442695
      %v509 = vpow.pop %v508
      %v510 = vmul.f32 %v504, 1.442695
      %v511 = vpow.pop %v510
      %v512 = vmul.f32 %v505, 1.442695
      %v513 = vpow.pop %v512
      %v514 = vsub.f32 %v475, %v498
      %v515 = vsub.f32 %v478, %v499
      %v516 = vsub.f32 %v481, %v500
      %v517 = vsub.f32 %v484, %v501
      %v518 = vmul.f32 %v514, 1.442695
      %v519 = vpow.pop %v518
      %v520 = vmul.f32 %v515, 1.442695
      %v521 = vpow.pop %v520
      %v522 = vmul.f32 %v516, 1.442695
      %v523 = vpow.pop %v522
      %v524 = vmul.f32 %v517, 1.442695
      %v525 = vpow.pop %v524
      %v526 = vsel %vm485, %v507, 0.0
      %527 = vadd.xlane.f32.xlu0 %v526
      %v528 = vpop.xlane.xlu0 %527
      %v529 = vsel %vm485, %v509, 0.0
      %530 = vadd.xlane.f32.xlu0 %v529
      %v531 = vpop.xlane.xlu0 %530
      %v532 = vsel %vm485, %v511, 0.0
      %533 = vadd.xlane.f32.xlu0 %v532
      %v534 = vpop.xlane.xlu0 %533
      %v535 = vsel %vm485, %v513, 0.0
      %536 = vadd.xlane.f32.xlu0 %v535
      %v537 = vpop.xlane.xlu0 %536
      %v538 = vadd.f32 %v528, %v519
      %v539 = vadd.f32 %v531, %v521
      %v540 = vadd.f32 %v534, %v523
      %v541 = vadd.f32 %v537, %v525
      %v542 = vpack.c.bf16 %v507, %v507
      %v543 = vpack.c.bf16 %v509, %v509
      %v544 = vpack.c.bf16 %v511, %v511
      %v545 = vpack.c.bf16 %v513, %v513
      %v546 = vmul.f32 %v519, %v456
      %v547 = vmul.f32 %v521, %v456
      %v548 = vmul.f32 %v523, %v456
      %v549 = vmul.f32 %v525, %v456
      %550 = vrot.lane.b32.xlu0 %v210, 64
      %v551 = vpop.permute.xlu0 %550
      %553 = vrot.lane.b32.xlu0 %v546, 64
      %v554 = vpop.permute.xlu0 %553
      %vm556 = vcmask 15360
      %v558 = vsel %vm556, %v542, 0
      %vm560 = vcmask 1040384
      %v562 = vsel %vm560, %v551, 0
      %564 = vmatprep.subr.bf16.mxu0 0
      %565 = vmatpush1.bf16.msra.mxu0 0
      %566 = vmatprep.subr.bf16.mxu0 0
      %567 = vmatpush1.bf16.msra.mxu0 0
      %568 = vmatprep.subr.bf16.mxu0 0
      %569 = vmatpush1.bf16.msra.mxu0 0
      %570 = vmatprep.subr.bf16.mxu0 0
      %571 = vmatpush1.bf16.msra.mxu0 0
      %572 = vmatprep.subr.bf16.mxu0 0
      %573 = vmatpush1.bf16.msra.mxu0 0
      %574 = vmatprep.subr.bf16.mxu0 0
      %575 = vmatpush1.bf16.msra.mxu0 0
      %576 = vmatprep.subr.bf16.mxu0 0
      %577 = vmatpush1.bf16.msra.mxu0 0
      %578 = vmatprep.subr.bf16.mxu0 0
      %579 = vmatpush1.bf16.msra.mxu0 %v562
      %580 = vmatprep.subr.bf16.mxu0 0
      %581 = vmatpush2.bf16.msra.mxu0 0
      %582 = vmatprep.subr.bf16.mxu0 0
      %583 = vmatpush2.bf16.msra.mxu0 0
      %584 = vmatprep.subr.bf16.mxu0 0
      %585 = vmatpush2.bf16.msra.mxu0 0
      %586 = vmatprep.subr.bf16.mxu0 0
      %587 = vmatpush2.bf16.msra.mxu0 0
      %588 = vmatprep.subr.bf16.mxu0 0
      %589 = vmatpush2.bf16.msra.mxu0 0
      %590 = vmatprep.subr.bf16.mxu0 0
      %591 = vmatpush2.bf16.msra.mxu0 0
      %592 = vmatprep.subr.bf16.mxu0 0
      %593 = vmatpush2.bf16.msra.mxu0 0
      %594 = vmatprep.subr.bf16.mxu0 0
      %595 = vmatpush2.bf16.msra.mxu0 0
      %596 = vmatprep.mubr.bf16.mxu0 0
      %597 = vmatmul.mubr.bf16.gmra.mxu0 %v558
      %v598 = vpop.f32.mrf.mxu0
      %v599 = vadd.f32 %v554, %v598
      %v600 = vpop.f32.mrf.mxu0
      %v601 = vpop.f32.mrf.mxu0
      %v602 = vpop.f32.mrf.mxu0
      %603 = vdwg.mxu0
      %604 = vrot.lane.b32.xlu0 %v274, 64
      %v605 = vpop.permute.xlu0 %604
      %607 = vrot.lane.b32.xlu0 %v547, 64
      %v608 = vpop.permute.xlu0 %607
      %v611 = vsel %vm556, %v543, 0
      %v614 = vsel %vm560, %v605, 0
      %616 = vmatprep.subr.bf16.mxu0 0
      %617 = vmatpush1.bf16.msra.mxu0 0
      %618 = vmatprep.subr.bf16.mxu0 0
      %619 = vmatpush1.bf16.msra.mxu0 0
      %620 = vmatprep.subr.bf16.mxu0 0
      %621 = vmatpush1.bf16.msra.mxu0 0
      %622 = vmatprep.subr.bf16.mxu0 0
      %623 = vmatpush1.bf16.msra.mxu0 0
      %624 = vmatprep.subr.bf16.mxu0 0
      %625 = vmatpush1.bf16.msra.mxu0 0
      %626 = vmatprep.subr.bf16.mxu0 0
      %627 = vmatpush1.bf16.msra.mxu0 0
      %628 = vmatprep.subr.bf16.mxu0 0
      %629 = vmatpush1.bf16.msra.mxu0 0
      %630 = vmatprep.subr.bf16.mxu0 0
      %631 = vmatpush1.bf16.msra.mxu0 %v614
      %632 = vmatprep.subr.bf16.mxu0 0
      %633 = vmatpush2.bf16.msra.mxu0 0
      %634 = vmatprep.subr.bf16.mxu0 0
      %635 = vmatpush2.bf16.msra.mxu0 0
      %636 = vmatprep.subr.bf16.mxu0 0
      %637 = vmatpush2.bf16.msra.mxu0 0
      %638 = vmatprep.subr.bf16.mxu0 0
      %639 = vmatpush2.bf16.msra.mxu0 0
      %640 = vmatprep.subr.bf16.mxu0 0
      %641 = vmatpush2.bf16.msra.mxu0 0
      %642 = vmatprep.subr.bf16.mxu0 0
      %643 = vmatpush2.bf16.msra.mxu0 0
      %644 = vmatprep.subr.bf16.mxu0 0
      %645 = vmatpush2.bf16.msra.mxu0 0
      %646 = vmatprep.subr.bf16.mxu0 0
      %647 = vmatpush2.bf16.msra.mxu0 0
      %648 = vmatprep.mubr.bf16.mxu0 0
      %649 = vmatmul.mubr.bf16.gmra.mxu0 %v611
      %v650 = vpop.f32.mrf.mxu0
      %v651 = vadd.f32 %v608, %v650
      %v652 = vpop.f32.mrf.mxu0
      %v653 = vpop.f32.mrf.mxu0
      %v654 = vpop.f32.mrf.mxu0
      %655 = vdwg.mxu0
      %656 = vrot.lane.b32.xlu0 %v337, 64
      %v657 = vpop.permute.xlu0 %656
      %659 = vrot.lane.b32.xlu0 %v548, 64
      %v660 = vpop.permute.xlu0 %659
      %v663 = vsel %vm556, %v544, 0
      %v666 = vsel %vm560, %v657, 0
      %668 = vmatprep.subr.bf16.mxu0 0
      %669 = vmatpush1.bf16.msra.mxu0 0
      %670 = vmatprep.subr.bf16.mxu0 0
      %671 = vmatpush1.bf16.msra.mxu0 0
      %672 = vmatprep.subr.bf16.mxu0 0
      %673 = vmatpush1.bf16.msra.mxu0 0
      %674 = vmatprep.subr.bf16.mxu0 0
      %675 = vmatpush1.bf16.msra.mxu0 0
      %676 = vmatprep.subr.bf16.mxu0 0
      %677 = vmatpush1.bf16.msra.mxu0 0
      %678 = vmatprep.subr.bf16.mxu0 0
      %679 = vmatpush1.bf16.msra.mxu0 0
      %680 = vmatprep.subr.bf16.mxu0 0
      %681 = vmatpush1.bf16.msra.mxu0 0
      %682 = vmatprep.subr.bf16.mxu0 0
      %683 = vmatpush1.bf16.msra.mxu0 %v666
      %684 = vmatprep.subr.bf16.mxu0 0
      %685 = vmatpush2.bf16.msra.mxu0 0
      %686 = vmatprep.subr.bf16.mxu0 0
      %687 = vmatpush2.bf16.msra.mxu0 0
      %688 = vmatprep.subr.bf16.mxu0 0
      %689 = vmatpush2.bf16.msra.mxu0 0
      %690 = vmatprep.subr.bf16.mxu0 0
      %691 = vmatpush2.bf16.msra.mxu0 0
      %692 = vmatprep.subr.bf16.mxu0 0
      %693 = vmatpush2.bf16.msra.mxu0 0
      %694 = vmatprep.subr.bf16.mxu0 0
      %695 = vmatpush2.bf16.msra.mxu0 0
      %696 = vmatprep.subr.bf16.mxu0 0
      %697 = vmatpush2.bf16.msra.mxu0 0
      %698 = vmatprep.subr.bf16.mxu0 0
      %699 = vmatpush2.bf16.msra.mxu0 0
      %700 = vmatprep.mubr.bf16.mxu0 0
      %701 = vmatmul.mubr.bf16.gmra.mxu0 %v663
      %v702 = vpop.f32.mrf.mxu0
      %v703 = vadd.f32 %v660, %v702
      %v704 = vpop.f32.mrf.mxu0
      %v705 = vpop.f32.mrf.mxu0
      %v706 = vpop.f32.mrf.mxu0
      %707 = vdwg.mxu0
      %708 = vrot.lane.b32.xlu0 %v400, 64
      %v709 = vpop.permute.xlu0 %708
      %711 = vrot.lane.b32.xlu0 %v549, 64
      %v712 = vpop.permute.xlu0 %711
      %v715 = vsel %vm556, %v545, 0
      %v718 = vsel %vm560, %v709, 0
      %720 = vmatprep.subr.bf16.mxu0 0
      %721 = vmatpush1.bf16.msra.mxu0 0
      %722 = vmatprep.subr.bf16.mxu0 0
      %723 = vmatpush1.bf16.msra.mxu0 0
      %724 = vmatprep.subr.bf16.mxu0 0
      %725 = vmatpush1.bf16.msra.mxu0 0
      %726 = vmatprep.subr.bf16.mxu0 0
      %727 = vmatpush1.bf16.msra.mxu0 0
      %728 = vmatprep.subr.bf16.mxu0 0
      %729 = vmatpush1.bf16.msra.mxu0 0
      %730 = vmatprep.subr.bf16.mxu0 0
      %731 = vmatpush1.bf16.msra.mxu0 0
      %732 = vmatprep.subr.bf16.mxu0 0
      %733 = vmatpush1.bf16.msra.mxu0 0
      %734 = vmatprep.subr.bf16.mxu0 0
      %735 = vmatpush1.bf16.msra.mxu0 %v718
      %736 = vmatprep.subr.bf16.mxu0 0
      %737 = vmatpush2.bf16.msra.mxu0 0
      %738 = vmatprep.subr.bf16.mxu0 0
      %739 = vmatpush2.bf16.msra.mxu0 0
      %740 = vmatprep.subr.bf16.mxu0 0
      %741 = vmatpush2.bf16.msra.mxu0 0
      %742 = vmatprep.subr.bf16.mxu0 0
      %743 = vmatpush2.bf16.msra.mxu0 0
      %744 = vmatprep.subr.bf16.mxu0 0
      %745 = vmatpush2.bf16.msra.mxu0 0
      %746 = vmatprep.subr.bf16.mxu0 0
      %747 = vmatpush2.bf16.msra.mxu0 0
      %748 = vmatprep.subr.bf16.mxu0 0
      %749 = vmatpush2.bf16.msra.mxu0 0
      %750 = vmatprep.subr.bf16.mxu0 0
      %751 = vmatpush2.bf16.msra.mxu0 0
      %752 = vmatprep.mubr.bf16.mxu0 0
      %753 = vmatmul.mubr.bf16.gmra.mxu0 %v715
      %v754 = vpop.f32.mrf.mxu0
      %v755 = vadd.f32 %v712, %v754
      %v756 = vpop.f32.mrf.mxu0
      %v757 = vpop.f32.mrf.mxu0
      %v758 = vpop.f32.mrf.mxu0
      %759 = vdwg.mxu0
      %v760 = vrcp.pop %v538
      %v761 = vrcp.pop %v539
      %v762 = vrcp.pop %v540
      %v763 = vrcp.pop %v541
      %v764 = vmul.f32 %v599, %v760
      %v765 = vmul.f32 %v651, %v761
      %v766 = vmul.f32 %v703, %v762
      %v767 = vmul.f32 %v755, %v763
      %v768 = vpack.c.bf16 %v764, %v764
      %v769 = vpack.c.bf16 %v765, %v765
      %v770 = vpack.c.bf16 %v766, %v766
      %v771 = vpack.c.bf16 %v767, %v767
      %v773 = vsel %vm213, %v194, 0
      %775 = vmatprep.subr.bf16.mxu0 0
      %776 = vmatpush1.bf16.xpose.msra.mxu0 0
      %777 = vmatprep.subr.bf16.mxu0 0
      %778 = vmatpush1.bf16.xpose.msra.mxu0 0
      %779 = vmatprep.subr.bf16.mxu0 0
      %780 = vmatpush1.bf16.xpose.msra.mxu0 0
      %781 = vmatprep.subr.bf16.mxu0 0
      %782 = vmatpush1.bf16.xpose.msra.mxu0 0
      %783 = vmatprep.subr.bf16.mxu0 0
      %784 = vmatpush1.bf16.xpose.msra.mxu0 0
      %785 = vmatprep.subr.bf16.mxu0 0
      %786 = vmatpush1.bf16.xpose.msra.mxu0 0
      %787 = vmatprep.subr.bf16.mxu0 0
      %788 = vmatpush1.bf16.xpose.msra.mxu0 0
      %789 = vmatprep.subr.bf16.mxu0 0
      %790 = vmatpush1.bf16.xpose.msra.mxu0 %v218
      %791 = vmatprep.subr.bf16.mxu0 0
      %792 = vmatpush2.bf16.xpose.msra.mxu0 0
      %793 = vmatprep.subr.bf16.mxu0 0
      %794 = vmatpush2.bf16.xpose.msra.mxu0 0
      %795 = vmatprep.subr.bf16.mxu0 0
      %796 = vmatpush2.bf16.xpose.msra.mxu0 0
      %797 = vmatprep.subr.bf16.mxu0 0
      %798 = vmatpush2.bf16.xpose.msra.mxu0 0
      %799 = vmatprep.subr.bf16.mxu0 0
      %800 = vmatpush2.bf16.xpose.msra.mxu0 0
      %801 = vmatprep.subr.bf16.mxu0 0
      %802 = vmatpush2.bf16.xpose.msra.mxu0 0
      %803 = vmatprep.subr.bf16.mxu0 0
      %804 = vmatpush2.bf16.xpose.msra.mxu0 0
      %805 = vmatprep.subr.bf16.mxu0 0
      %806 = vmatpush2.bf16.xpose.msra.mxu0 0
      %807 = vmatprep.mubr.bf16.mxu0 0
      %808 = vmatmul.mubr.bf16.gmra.mxu0 %v773
      %v809 = vpop.f32.mrf.mxu0
      %v810 = vadd.f32 0.0, %v809
      %v811 = vpop.f32.mrf.mxu0
      %v812 = vpop.f32.mrf.mxu0
      %v813 = vpop.f32.mrf.mxu0
      %814 = vdwg.mxu0
      %815 = vmatprep.subr.bf16.mxu0 0
      %816 = vmatpush1.bf16.xpose.msra.mxu0 0
      %817 = vmatprep.subr.bf16.mxu0 0
      %818 = vmatpush1.bf16.xpose.msra.mxu0 0
      %819 = vmatprep.subr.bf16.mxu0 0
      %820 = vmatpush1.bf16.xpose.msra.mxu0 0
      %821 = vmatprep.subr.bf16.mxu0 0
      %822 = vmatpush1.bf16.xpose.msra.mxu0 0
      %823 = vmatprep.subr.bf16.mxu0 0
      %824 = vmatpush1.bf16.xpose.msra.mxu0 0
      %825 = vmatprep.subr.bf16.mxu0 0
      %826 = vmatpush1.bf16.xpose.msra.mxu0 0
      %827 = vmatprep.subr.bf16.mxu0 0
      %828 = vmatpush1.bf16.xpose.msra.mxu0 0
      %829 = vmatprep.subr.bf16.mxu0 0
      %830 = vmatpush1.bf16.xpose.msra.mxu0 %v281
      %831 = vmatprep.subr.bf16.mxu0 0
      %832 = vmatpush2.bf16.xpose.msra.mxu0 0
      %833 = vmatprep.subr.bf16.mxu0 0
      %834 = vmatpush2.bf16.xpose.msra.mxu0 0
      %835 = vmatprep.subr.bf16.mxu0 0
      %836 = vmatpush2.bf16.xpose.msra.mxu0 0
      %837 = vmatprep.subr.bf16.mxu0 0
      %838 = vmatpush2.bf16.xpose.msra.mxu0 0
      %839 = vmatprep.subr.bf16.mxu0 0
      %840 = vmatpush2.bf16.xpose.msra.mxu0 0
      %841 = vmatprep.subr.bf16.mxu0 0
      %842 = vmatpush2.bf16.xpose.msra.mxu0 0
      %843 = vmatprep.subr.bf16.mxu0 0
      %844 = vmatpush2.bf16.xpose.msra.mxu0 0
      %845 = vmatprep.subr.bf16.mxu0 0
      %846 = vmatpush2.bf16.xpose.msra.mxu0 0
      %847 = vmatprep.mubr.bf16.mxu0 0
      %848 = vmatmul.mubr.bf16.gmra.mxu0 %v773
      %v849 = vpop.f32.mrf.mxu0
      %v850 = vadd.f32 0.0, %v849
      %v851 = vpop.f32.mrf.mxu0
      %v852 = vpop.f32.mrf.mxu0
      %v853 = vpop.f32.mrf.mxu0
      %854 = vdwg.mxu0
      %855 = vmatprep.subr.bf16.mxu0 0
      %856 = vmatpush1.bf16.xpose.msra.mxu0 0
      %857 = vmatprep.subr.bf16.mxu0 0
      %858 = vmatpush1.bf16.xpose.msra.mxu0 0
      %859 = vmatprep.subr.bf16.mxu0 0
      %860 = vmatpush1.bf16.xpose.msra.mxu0 0
      %861 = vmatprep.subr.bf16.mxu0 0
      %862 = vmatpush1.bf16.xpose.msra.mxu0 0
      %863 = vmatprep.subr.bf16.mxu0 0
      %864 = vmatpush1.bf16.xpose.msra.mxu0 0
      %865 = vmatprep.subr.bf16.mxu0 0
      %866 = vmatpush1.bf16.xpose.msra.mxu0 0
      %867 = vmatprep.subr.bf16.mxu0 0
      %868 = vmatpush1.bf16.xpose.msra.mxu0 0
      %869 = vmatprep.subr.bf16.mxu0 0
      %870 = vmatpush1.bf16.xpose.msra.mxu0 %v344
      %871 = vmatprep.subr.bf16.mxu0 0
      %872 = vmatpush2.bf16.xpose.msra.mxu0 0
      %873 = vmatprep.subr.bf16.mxu0 0
      %874 = vmatpush2.bf16.xpose.msra.mxu0 0
      %875 = vmatprep.subr.bf16.mxu0 0
      %876 = vmatpush2.bf16.xpose.msra.mxu0 0
      %877 = vmatprep.subr.bf16.mxu0 0
      %878 = vmatpush2.bf16.xpose.msra.mxu0 0
      %879 = vmatprep.subr.bf16.mxu0 0
      %880 = vmatpush2.bf16.xpose.msra.mxu0 0
      %881 = vmatprep.subr.bf16.mxu0 0
      %882 = vmatpush2.bf16.xpose.msra.mxu0 0
      %883 = vmatprep.subr.bf16.mxu0 0
      %884 = vmatpush2.bf16.xpose.msra.mxu0 0
      %885 = vmatprep.subr.bf16.mxu0 0
      %886 = vmatpush2.bf16.xpose.msra.mxu0 0
      %887 = vmatprep.mubr.bf16.mxu0 0
      %888 = vmatmul.mubr.bf16.gmra.mxu0 %v773
      %v889 = vpop.f32.mrf.mxu0
      %v890 = vadd.f32 0.0, %v889
      %v891 = vpop.f32.mrf.mxu0
      %v892 = vpop.f32.mrf.mxu0
      %v893 = vpop.f32.mrf.mxu0
      %894 = vdwg.mxu0
      %895 = vmatprep.subr.bf16.mxu0 0
      %896 = vmatpush1.bf16.xpose.msra.mxu0 0
      %897 = vmatprep.subr.bf16.mxu0 0
      %898 = vmatpush1.bf16.xpose.msra.mxu0 0
      %899 = vmatprep.subr.bf16.mxu0 0
      %900 = vmatpush1.bf16.xpose.msra.mxu0 0
      %901 = vmatprep.subr.bf16.mxu0 0
      %902 = vmatpush1.bf16.xpose.msra.mxu0 0
      %903 = vmatprep.subr.bf16.mxu0 0
      %904 = vmatpush1.bf16.xpose.msra.mxu0 0
      %905 = vmatprep.subr.bf16.mxu0 0
      %906 = vmatpush1.bf16.xpose.msra.mxu0 0
      %907 = vmatprep.subr.bf16.mxu0 0
      %908 = vmatpush1.bf16.xpose.msra.mxu0 0
      %909 = vmatprep.subr.bf16.mxu0 0
      %910 = vmatpush1.bf16.xpose.msra.mxu0 %v407
      %911 = vmatprep.subr.bf16.mxu0 0
      %912 = vmatpush2.bf16.xpose.msra.mxu0 0
      %913 = vmatprep.subr.bf16.mxu0 0
      %914 = vmatpush2.bf16.xpose.msra.mxu0 0
      %915 = vmatprep.subr.bf16.mxu0 0
      %916 = vmatpush2.bf16.xpose.msra.mxu0 0
      %917 = vmatprep.subr.bf16.mxu0 0
      %918 = vmatpush2.bf16.xpose.msra.mxu0 0
      %919 = vmatprep.subr.bf16.mxu0 0
      %920 = vmatpush2.bf16.xpose.msra.mxu0 0
      %921 = vmatprep.subr.bf16.mxu0 0
      %922 = vmatpush2.bf16.xpose.msra.mxu0 0
      %923 = vmatprep.subr.bf16.mxu0 0
      %924 = vmatpush2.bf16.xpose.msra.mxu0 0
      %925 = vmatprep.subr.bf16.mxu0 0
      %926 = vmatpush2.bf16.xpose.msra.mxu0 0
      %927 = vmatprep.mubr.bf16.mxu0 0
      %928 = vmatmul.mubr.bf16.gmra.mxu0 %v773
      %v929 = vpop.f32.mrf.mxu0
      %v930 = vadd.f32 0.0, %v929
      %v931 = vpop.f32.mrf.mxu0
      %v932 = vpop.f32.mrf.mxu0
      %v933 = vpop.f32.mrf.mxu0
      %934 = vdwg.mxu0
      %936 = vrot.lane.b32.xlu0 %v195, 96
      %v937 = vpop.permute.xlu0 %936
      %v939 = vmul.f32 %v195, %v937
      %vm940 = vcmask 57344
      %v941 = vsel %vm940, %v939, 0.0
      %942 = vadd.xlane.f32.xlu0 %v941
      %v943 = vpop.xlane.xlu0 %942
      %v944 = vrot.slane %v943, 4
      %v945 = vadd.f32 %v943, %v944
      %v946 = vrot.slane %v945, 2
      %v947 = vadd.f32 %v945, %v946
      %v948 = vrot.slane %v947, 1
      %v949 = vadd.f32 %v947, %v948
      %s950 = vtos %v949
      %vm951 = vcmask 8192
      %v952 = vsel %vm951, %v810, -inf
      %v953 = vsel %vm951, %v850, -inf
      %v954 = vsel %vm951, %v890, -inf
      %v955 = vsel %vm951, %v930, -inf
      %v956 = vmax.f32 %v952, %v953
      %v957 = vmax.f32 %v954, %v955
      %v958 = vmax.f32 %v956, %v957
      %959 = vmax.xlane.f32.xlu0 %v958
      %v960 = vpop.xlane.xlu0 %959
      %v961 = vrot.slane %v960, 4
      %v962 = vmax.f32 %v960, %v961
      %v963 = vrot.slane %v962, 2
      %v964 = vmax.f32 %v962, %v963
      %v965 = vrot.slane %v964, 1
      %v966 = vmax.f32 %v964, %v965
      %s967 = vtos %v966
      %s968 = smax.f32 %s967, %s950
      %v969 = vstv %s968
      %v970 = vsub.f32 %v810, %v969
      %v971 = vsub.f32 %v850, %v969
      %v972 = vsub.f32 %v890, %v969
      %v973 = vsub.f32 %v930, %v969
      %v974 = vmul.f32 %v970, 1.442695
      %v975 = vpow.pop %v974
      %v976 = vmul.f32 %v971, 1.442695
      %v977 = vpow.pop %v976
      %v978 = vmul.f32 %v972, 1.442695
      %v979 = vpow.pop %v978
      %v980 = vmul.f32 %v973, 1.442695
      %v981 = vpow.pop %v980
      %s982 = ssub.f32 %s950, %s968
      %v983 = vstv %s982
      %v984 = vmul.f32 %v983, 1.442695
      %v985 = vpow.pop %v984
      %s986 = vtos %v985
      %v987 = vsel %vm951, %v975, 0.0
      %v988 = vsel %vm951, %v977, 0.0
      %v989 = vadd.f32 %v987, %v988
      %v990 = vsel %vm951, %v979, 0.0
      %v991 = vadd.f32 %v989, %v990
      %v992 = vsel %vm951, %v981, 0.0
      %v993 = vadd.f32 %v991, %v992
      %994 = vadd.xlane.f32.xlu0 %v993
      %v995 = vpop.xlane.xlu0 %994
      %v996 = vrot.slane %v995, 4
      %v997 = vadd.f32 %v995, %v996
      %v998 = vrot.slane %v997, 2
      %v999 = vadd.f32 %v997, %v998
      %v1000 = vrot.slane %v999, 1
      %v1001 = vadd.f32 %v999, %v1000
      %s1002 = vtos %v1001
      %s1003 = sadd.f32 %s1002, %s986
      %v1004 = vpack.c.bf16 %v975, %v975
      %v1005 = vpack.c.bf16 %v977, %v977
      %v1006 = vpack.c.bf16 %v979, %v979
      %v1007 = vpack.c.bf16 %v981, %v981
      %v1009 = vsel %vm556, %v1004, 0
      %1011 = vmatprep.subr.bf16.mxu0 0
      %1012 = vmatpush1.bf16.msra.mxu0 0
      %1013 = vmatprep.subr.bf16.mxu0 0
      %1014 = vmatpush1.bf16.msra.mxu0 0
      %1015 = vmatprep.subr.bf16.mxu0 0
      %1016 = vmatpush1.bf16.msra.mxu0 0
      %1017 = vmatprep.subr.bf16.mxu0 0
      %1018 = vmatpush1.bf16.msra.mxu0 0
      %1019 = vmatprep.subr.bf16.mxu0 0
      %1020 = vmatpush1.bf16.msra.mxu0 0
      %1021 = vmatprep.subr.bf16.mxu0 0
      %1022 = vmatpush1.bf16.msra.mxu0 0
      %1023 = vmatprep.subr.bf16.mxu0 0
      %1024 = vmatpush1.bf16.msra.mxu0 0
      %1025 = vmatprep.subr.bf16.mxu0 0
      %1026 = vmatpush1.bf16.msra.mxu0 %v562
      %1027 = vmatprep.subr.bf16.mxu0 0
      %1028 = vmatpush2.bf16.msra.mxu0 0
      %1029 = vmatprep.subr.bf16.mxu0 0
      %1030 = vmatpush2.bf16.msra.mxu0 0
      %1031 = vmatprep.subr.bf16.mxu0 0
      %1032 = vmatpush2.bf16.msra.mxu0 0
      %1033 = vmatprep.subr.bf16.mxu0 0
      %1034 = vmatpush2.bf16.msra.mxu0 0
      %1035 = vmatprep.subr.bf16.mxu0 0
      %1036 = vmatpush2.bf16.msra.mxu0 0
      %1037 = vmatprep.subr.bf16.mxu0 0
      %1038 = vmatpush2.bf16.msra.mxu0 0
      %1039 = vmatprep.subr.bf16.mxu0 0
      %1040 = vmatpush2.bf16.msra.mxu0 0
      %1041 = vmatprep.subr.bf16.mxu0 0
      %1042 = vmatpush2.bf16.msra.mxu0 0
      %1043 = vmatprep.mubr.bf16.mxu0 0
      %1044 = vmatmul.mubr.bf16.gmra.mxu0 %v1009
      %v1045 = vpop.f32.mrf.mxu0
      %v1046 = vadd.f32 0.0, %v1045
      %v1047 = vpop.f32.mrf.mxu0
      %v1048 = vpop.f32.mrf.mxu0
      %v1049 = vpop.f32.mrf.mxu0
      %1050 = vdwg.mxu0
      %v1052 = vsel %vm556, %v1005, 0
      %1054 = vmatprep.subr.bf16.mxu0 0
      %1055 = vmatpush1.bf16.msra.mxu0 0
      %1056 = vmatprep.subr.bf16.mxu0 0
      %1057 = vmatpush1.bf16.msra.mxu0 0
      %1058 = vmatprep.subr.bf16.mxu0 0
      %1059 = vmatpush1.bf16.msra.mxu0 0
      %1060 = vmatprep.subr.bf16.mxu0 0
      %1061 = vmatpush1.bf16.msra.mxu0 0
      %1062 = vmatprep.subr.bf16.mxu0 0
      %1063 = vmatpush1.bf16.msra.mxu0 0
      %1064 = vmatprep.subr.bf16.mxu0 0
      %1065 = vmatpush1.bf16.msra.mxu0 0
      %1066 = vmatprep.subr.bf16.mxu0 0
      %1067 = vmatpush1.bf16.msra.mxu0 0
      %1068 = vmatprep.subr.bf16.mxu0 0
      %1069 = vmatpush1.bf16.msra.mxu0 %v614
      %1070 = vmatprep.subr.bf16.mxu0 0
      %1071 = vmatpush2.bf16.msra.mxu0 0
      %1072 = vmatprep.subr.bf16.mxu0 0
      %1073 = vmatpush2.bf16.msra.mxu0 0
      %1074 = vmatprep.subr.bf16.mxu0 0
      %1075 = vmatpush2.bf16.msra.mxu0 0
      %1076 = vmatprep.subr.bf16.mxu0 0
      %1077 = vmatpush2.bf16.msra.mxu0 0
      %1078 = vmatprep.subr.bf16.mxu0 0
      %1079 = vmatpush2.bf16.msra.mxu0 0
      %1080 = vmatprep.subr.bf16.mxu0 0
      %1081 = vmatpush2.bf16.msra.mxu0 0
      %1082 = vmatprep.subr.bf16.mxu0 0
      %1083 = vmatpush2.bf16.msra.mxu0 0
      %1084 = vmatprep.subr.bf16.mxu0 0
      %1085 = vmatpush2.bf16.msra.mxu0 0
      %1086 = vmatprep.mubr.bf16.mxu0 0
      %1087 = vmatmul.mubr.bf16.gmra.mxu0 %v1052
      %v1088 = vpop.f32.mrf.mxu0
      %v1089 = vadd.f32 0.0, %v1088
      %v1090 = vpop.f32.mrf.mxu0
      %v1091 = vpop.f32.mrf.mxu0
      %v1092 = vpop.f32.mrf.mxu0
      %1093 = vdwg.mxu0
      %v1095 = vsel %vm556, %v1006, 0
      %1097 = vmatprep.subr.bf16.mxu0 0
      %1098 = vmatpush1.bf16.msra.mxu0 0
      %1099 = vmatprep.subr.bf16.mxu0 0
      %1100 = vmatpush1.bf16.msra.mxu0 0
      %1101 = vmatprep.subr.bf16.mxu0 0
      %1102 = vmatpush1.bf16.msra.mxu0 0
      %1103 = vmatprep.subr.bf16.mxu0 0
      %1104 = vmatpush1.bf16.msra.mxu0 0
      %1105 = vmatprep.subr.bf16.mxu0 0
      %1106 = vmatpush1.bf16.msra.mxu0 0
      %1107 = vmatprep.subr.bf16.mxu0 0
      %1108 = vmatpush1.bf16.msra.mxu0 0
      %1109 = vmatprep.subr.bf16.mxu0 0
      %1110 = vmatpush1.bf16.msra.mxu0 0
      %1111 = vmatprep.subr.bf16.mxu0 0
      %1112 = vmatpush1.bf16.msra.mxu0 %v666
      %1113 = vmatprep.subr.bf16.mxu0 0
      %1114 = vmatpush2.bf16.msra.mxu0 0
      %1115 = vmatprep.subr.bf16.mxu0 0
      %1116 = vmatpush2.bf16.msra.mxu0 0
      %1117 = vmatprep.subr.bf16.mxu0 0
      %1118 = vmatpush2.bf16.msra.mxu0 0
      %1119 = vmatprep.subr.bf16.mxu0 0
      %1120 = vmatpush2.bf16.msra.mxu0 0
      %1121 = vmatprep.subr.bf16.mxu0 0
      %1122 = vmatpush2.bf16.msra.mxu0 0
      %1123 = vmatprep.subr.bf16.mxu0 0
      %1124 = vmatpush2.bf16.msra.mxu0 0
      %1125 = vmatprep.subr.bf16.mxu0 0
      %1126 = vmatpush2.bf16.msra.mxu0 0
      %1127 = vmatprep.subr.bf16.mxu0 0
      %1128 = vmatpush2.bf16.msra.mxu0 0
      %1129 = vmatprep.mubr.bf16.mxu0 0
      %1130 = vmatmul.mubr.bf16.gmra.mxu0 %v1095
      %v1131 = vpop.f32.mrf.mxu0
      %v1132 = vadd.f32 0.0, %v1131
      %v1133 = vpop.f32.mrf.mxu0
      %v1134 = vpop.f32.mrf.mxu0
      %v1135 = vpop.f32.mrf.mxu0
      %1136 = vdwg.mxu0
      %v1138 = vsel %vm556, %v1007, 0
      %1140 = vmatprep.subr.bf16.mxu0 0
      %1141 = vmatpush1.bf16.msra.mxu0 0
      %1142 = vmatprep.subr.bf16.mxu0 0
      %1143 = vmatpush1.bf16.msra.mxu0 0
      %1144 = vmatprep.subr.bf16.mxu0 0
      %1145 = vmatpush1.bf16.msra.mxu0 0
      %1146 = vmatprep.subr.bf16.mxu0 0
      %1147 = vmatpush1.bf16.msra.mxu0 0
      %1148 = vmatprep.subr.bf16.mxu0 0
      %1149 = vmatpush1.bf16.msra.mxu0 0
      %1150 = vmatprep.subr.bf16.mxu0 0
      %1151 = vmatpush1.bf16.msra.mxu0 0
      %1152 = vmatprep.subr.bf16.mxu0 0
      %1153 = vmatpush1.bf16.msra.mxu0 0
      %1154 = vmatprep.subr.bf16.mxu0 0
      %1155 = vmatpush1.bf16.msra.mxu0 %v718
      %1156 = vmatprep.subr.bf16.mxu0 0
      %1157 = vmatpush2.bf16.msra.mxu0 0
      %1158 = vmatprep.subr.bf16.mxu0 0
      %1159 = vmatpush2.bf16.msra.mxu0 0
      %1160 = vmatprep.subr.bf16.mxu0 0
      %1161 = vmatpush2.bf16.msra.mxu0 0
      %1162 = vmatprep.subr.bf16.mxu0 0
      %1163 = vmatpush2.bf16.msra.mxu0 0
      %1164 = vmatprep.subr.bf16.mxu0 0
      %1165 = vmatpush2.bf16.msra.mxu0 0
      %1166 = vmatprep.subr.bf16.mxu0 0
      %1167 = vmatpush2.bf16.msra.mxu0 0
      %1168 = vmatprep.subr.bf16.mxu0 0
      %1169 = vmatpush2.bf16.msra.mxu0 0
      %1170 = vmatprep.subr.bf16.mxu0 0
      %1171 = vmatpush2.bf16.msra.mxu0 0
      %1172 = vmatprep.mubr.bf16.mxu0 0
      %1173 = vmatmul.mubr.bf16.gmra.mxu0 %v1138
      %v1174 = vpop.f32.mrf.mxu0
      %v1175 = vadd.f32 0.0, %v1174
      %v1176 = vpop.f32.mrf.mxu0
      %v1177 = vpop.f32.mrf.mxu0
      %v1178 = vpop.f32.mrf.mxu0
      %1179 = vdwg.mxu0
      %v1180 = vsel %vm940, %v1046, 0.0
      %v1181 = vsel %vm940, %v1089, 0.0
      %v1182 = vadd.f32 %v1180, %v1181
      %v1183 = vsel %vm940, %v1132, 0.0
      %v1184 = vadd.f32 %v1182, %v1183
      %v1185 = vsel %vm940, %v1175, 0.0
      %v1186 = vadd.f32 %v1184, %v1185
      %v1187 = vstv %s986
      %v1188 = vmul.f32 %v1187, %v195
      %v1190 = vlaneseq
      %v1191 = vshrl.u32 %v1190, 7
      %v1192 = vsub.s32 0, %v1191
      %v1193 = vrot.slane %v1188, %v1192
      %1194 = vrot.lane.b32.xlu0 %v1193, 64
      %v1195 = vpop.permute.xlu0 %1194
      %v1197 = vadd.f32 %v1186, %v1195
      %v1198 = vstv %s1003
      %v1199 = vrcp.pop %v1198
      %v1200 = vmul.f32 %v1197, %v1199
      %v1201 = vld [vmem:[%s178] sm:$0x1]
      %v1202 = vld [vmem:[%s178 + $0x1] sm:$0x1]
      %v1203 = vld [vmem:[%s178 + $0x2] sm:$0x1]
      %v1204 = vld [vmem:[%s178 + $0x3] sm:$0x1]
      %v1205 = vld [vmem:[%s181] sm:$0x1]
      %v1206 = vunpack.c.l.bf16 %v1205
      %v1209 = vunpack.c.l.s4 1966171168
      %v1210 = vunpack.c.0.s8 %v1209
      %v1211 = vlaneseq
      %v1212 = vshrl.u32 %v1211, 7
      %v1213 = vsub.s32 %v1210, %v1212
      %v1214 = vrot.slane %v1201, %v1213
      %v1216 = vunpack.c.l.s4 1966171168
      %v1217 = vunpack.c.0.s8 %v1216
      %v1218 = vlaneseq
      %v1219 = vshrl.u32 %v1218, 7
      %v1220 = vsub.s32 %v1217, %v1219
      %v1221 = vrot.slane %v1214, %v1220
      %1222 = vrot.lane.b32.xlu0 %v1221, 120
      %v1223 = vpop.permute.xlu0 %1222
      %1224 = vrot.lane.b32.xlu0 %v1221, 88
      %v1225 = vpop.permute.xlu0 %1224
      %v1227 = vsel %vm213, %v1223, 0
      %v1230 = vsel %vm213, %v1225, 0
      %1232 = vmatprep.subr.bf16.mxu0 0
      %1233 = vmatpush1.bf16.xpose.msra.mxu0 0
      %1234 = vmatprep.subr.bf16.mxu0 0
      %1235 = vmatpush1.bf16.xpose.msra.mxu0 0
      %1236 = vmatprep.subr.bf16.mxu0 0
      %1237 = vmatpush1.bf16.xpose.msra.mxu0 0
      %1238 = vmatprep.subr.bf16.mxu0 0
      %1239 = vmatpush1.bf16.xpose.msra.mxu0 0
      %1240 = vmatprep.subr.bf16.mxu0 0
      %1241 = vmatpush1.bf16.xpose.msra.mxu0 0
      %1242 = vmatprep.subr.bf16.mxu0 0
      %1243 = vmatpush1.bf16.xpose.msra.mxu0 0
      %1244 = vmatprep.subr.bf16.mxu0 0
      %1245 = vmatpush1.bf16.xpose.msra.mxu0 0
      %1246 = vmatprep.subr.bf16.mxu0 0
      %1247 = vmatpush1.bf16.xpose.msra.mxu0 %v1230
      %1248 = vmatprep.subr.bf16.mxu0 0
      %1249 = vmatpush2.bf16.xpose.msra.mxu0 0
      %1250 = vmatprep.subr.bf16.mxu0 0
      %1251 = vmatpush2.bf16.xpose.msra.mxu0 0
      %1252 = vmatprep.subr.bf16.mxu0 0
      %1253 = vmatpush2.bf16.xpose.msra.mxu0 0
      %1254 = vmatprep.subr.bf16.mxu0 0
      %1255 = vmatpush2.bf16.xpose.msra.mxu0 0
      %1256 = vmatprep.subr.bf16.mxu0 0
      %1257 = vmatpush2.bf16.xpose.msra.mxu0 0
      %1258 = vmatprep.subr.bf16.mxu0 0
      %1259 = vmatpush2.bf16.xpose.msra.mxu0 0
      %1260 = vmatprep.subr.bf16.mxu0 0
      %1261 = vmatpush2.bf16.xpose.msra.mxu0 0
      %1262 = vmatprep.subr.bf16.mxu0 0
      %1263 = vmatpush2.bf16.xpose.msra.mxu0 0
      %1264 = vmatprep.mubr.bf16.mxu0 0
      %1265 = vmatmul.mubr.bf16.gmra.mxu0 %v1227
      %v1266 = vpop.f32.mrf.mxu0
      %v1267 = vadd.f32 0.0, %v1266
      %v1268 = vpop.f32.mrf.mxu0
      %v1269 = vpop.f32.mrf.mxu0
      %v1270 = vpop.f32.mrf.mxu0
      %1271 = vdwg.mxu0
      %v1274 = vunpack.c.l.s4 1966171168
      %v1275 = vunpack.c.0.s8 %v1274
      %v1276 = vlaneseq
      %v1277 = vshrl.u32 %v1276, 7
      %v1278 = vsub.s32 %v1275, %v1277
      %v1279 = vrot.slane %v1202, %v1278
      %v1281 = vunpack.c.l.s4 1966171168
      %v1282 = vunpack.c.0.s8 %v1281
      %v1283 = vlaneseq
      %v1284 = vshrl.u32 %v1283, 7
      %v1285 = vsub.s32 %v1282, %v1284
      %v1286 = vrot.slane %v1279, %v1285
      %1287 = vrot.lane.b32.xlu0 %v1286, 120
      %v1288 = vpop.permute.xlu0 %1287
      %1289 = vrot.lane.b32.xlu0 %v1286, 88
      %v1290 = vpop.permute.xlu0 %1289
      %v1292 = vsel %vm213, %v1288, 0
      %v1295 = vsel %vm213, %v1290, 0
      %1297 = vmatprep.subr.bf16.mxu0 0
      %1298 = vmatpush1.bf16.xpose.msra.mxu0 0
      %1299 = vmatprep.subr.bf16.mxu0 0
      %1300 = vmatpush1.bf16.xpose.msra.mxu0 0
      %1301 = vmatprep.subr.bf16.mxu0 0
      %1302 = vmatpush1.bf16.xpose.msra.mxu0 0
      %1303 = vmatprep.subr.bf16.mxu0 0
      %1304 = vmatpush1.bf16.xpose.msra.mxu0 0
      %1305 = vmatprep.subr.bf16.mxu0 0
      %1306 = vmatpush1.bf16.xpose.msra.mxu0 0
      %1307 = vmatprep.subr.bf16.mxu0 0
      %1308 = vmatpush1.bf16.xpose.msra.mxu0 0
      %1309 = vmatprep.subr.bf16.mxu0 0
      %1310 = vmatpush1.bf16.xpose.msra.mxu0 0
      %1311 = vmatprep.subr.bf16.mxu0 0
      %1312 = vmatpush1.bf16.xpose.msra.mxu0 %v1295
      %1313 = vmatprep.subr.bf16.mxu0 0
      %1314 = vmatpush2.bf16.xpose.msra.mxu0 0
      %1315 = vmatprep.subr.bf16.mxu0 0
      %1316 = vmatpush2.bf16.xpose.msra.mxu0 0
      %1317 = vmatprep.subr.bf16.mxu0 0
      %1318 = vmatpush2.bf16.xpose.msra.mxu0 0
      %1319 = vmatprep.subr.bf16.mxu0 0
      %1320 = vmatpush2.bf16.xpose.msra.mxu0 0
      %1321 = vmatprep.subr.bf16.mxu0 0
      %1322 = vmatpush2.bf16.xpose.msra.mxu0 0
      %1323 = vmatprep.subr.bf16.mxu0 0
      %1324 = vmatpush2.bf16.xpose.msra.mxu0 0
      %1325 = vmatprep.subr.bf16.mxu0 0
      %1326 = vmatpush2.bf16.xpose.msra.mxu0 0
      %1327 = vmatprep.subr.bf16.mxu0 0
      %1328 = vmatpush2.bf16.xpose.msra.mxu0 0
      %1329 = vmatprep.mubr.bf16.mxu0 0
      %1330 = vmatmul.mubr.bf16.gmra.mxu0 %v1292
      %v1331 = vpop.f32.mrf.mxu0
      %v1332 = vadd.f32 0.0, %v1331
      %v1333 = vpop.f32.mrf.mxu0
      %v1334 = vpop.f32.mrf.mxu0
      %v1335 = vpop.f32.mrf.mxu0
      %1336 = vdwg.mxu0
      %v1339 = vunpack.c.l.s4 1966171168
      %v1340 = vunpack.c.0.s8 %v1339
      %v1341 = vlaneseq
      %v1342 = vshrl.u32 %v1341, 7
      %v1343 = vsub.s32 %v1340, %v1342
      %v1344 = vrot.slane %v1203, %v1343
      %v1346 = vunpack.c.l.s4 1966171168
      %v1347 = vunpack.c.0.s8 %v1346
      %v1348 = vlaneseq
      %v1349 = vshrl.u32 %v1348, 7
      %v1350 = vsub.s32 %v1347, %v1349
      %v1351 = vrot.slane %v1344, %v1350
      %1352 = vrot.lane.b32.xlu0 %v1351, 120
      %v1353 = vpop.permute.xlu0 %1352
      %1354 = vrot.lane.b32.xlu0 %v1351, 88
      %v1355 = vpop.permute.xlu0 %1354
      %v1357 = vsel %vm213, %v1353, 0
      %v1360 = vsel %vm213, %v1355, 0
      %1362 = vmatprep.subr.bf16.mxu0 0
      %1363 = vmatpush1.bf16.xpose.msra.mxu0 0
      %1364 = vmatprep.subr.bf16.mxu0 0
      %1365 = vmatpush1.bf16.xpose.msra.mxu0 0
      %1366 = vmatprep.subr.bf16.mxu0 0
      %1367 = vmatpush1.bf16.xpose.msra.mxu0 0
      %1368 = vmatprep.subr.bf16.mxu0 0
      %1369 = vmatpush1.bf16.xpose.msra.mxu0 0
      %1370 = vmatprep.subr.bf16.mxu0 0
      %1371 = vmatpush1.bf16.xpose.msra.mxu0 0
      %1372 = vmatprep.subr.bf16.mxu0 0
      %1373 = vmatpush1.bf16.xpose.msra.mxu0 0
      %1374 = vmatprep.subr.bf16.mxu0 0
      %1375 = vmatpush1.bf16.xpose.msra.mxu0 0
      %1376 = vmatprep.subr.bf16.mxu0 0
      %1377 = vmatpush1.bf16.xpose.msra.mxu0 %v1360
      %1378 = vmatprep.subr.bf16.mxu0 0
      %1379 = vmatpush2.bf16.xpose.msra.mxu0 0
      %1380 = vmatprep.subr.bf16.mxu0 0
      %1381 = vmatpush2.bf16.xpose.msra.mxu0 0
      %1382 = vmatprep.subr.bf16.mxu0 0
      %1383 = vmatpush2.bf16.xpose.msra.mxu0 0
      %1384 = vmatprep.subr.bf16.mxu0 0
      %1385 = vmatpush2.bf16.xpose.msra.mxu0 0
      %1386 = vmatprep.subr.bf16.mxu0 0
      %1387 = vmatpush2.bf16.xpose.msra.mxu0 0
      %1388 = vmatprep.subr.bf16.mxu0 0
      %1389 = vmatpush2.bf16.xpose.msra.mxu0 0
      %1390 = vmatprep.subr.bf16.mxu0 0
      %1391 = vmatpush2.bf16.xpose.msra.mxu0 0
      %1392 = vmatprep.subr.bf16.mxu0 0
      %1393 = vmatpush2.bf16.xpose.msra.mxu0 0
      %1394 = vmatprep.mubr.bf16.mxu0 0
      %1395 = vmatmul.mubr.bf16.gmra.mxu0 %v1357
      %v1396 = vpop.f32.mrf.mxu0
      %v1397 = vadd.f32 0.0, %v1396
      %v1398 = vpop.f32.mrf.mxu0
      %v1399 = vpop.f32.mrf.mxu0
      %v1400 = vpop.f32.mrf.mxu0
      %1401 = vdwg.mxu0
      %v1404 = vunpack.c.l.s4 1966171168
      %v1405 = vunpack.c.0.s8 %v1404
      %v1406 = vlaneseq
      %v1407 = vshrl.u32 %v1406, 7
      %v1408 = vsub.s32 %v1405, %v1407
      %v1409 = vrot.slane %v1204, %v1408
      %v1411 = vunpack.c.l.s4 1966171168
      %v1412 = vunpack.c.0.s8 %v1411
      %v1413 = vlaneseq
      %v1414 = vshrl.u32 %v1413, 7
      %v1415 = vsub.s32 %v1412, %v1414
      %v1416 = vrot.slane %v1409, %v1415
      %1417 = vrot.lane.b32.xlu0 %v1416, 120
      %v1418 = vpop.permute.xlu0 %1417
      %1419 = vrot.lane.b32.xlu0 %v1416, 88
      %v1420 = vpop.permute.xlu0 %1419
      %v1422 = vsel %vm213, %v1418, 0
      %v1425 = vsel %vm213, %v1420, 0
      %1427 = vmatprep.subr.bf16.mxu0 0
      %1428 = vmatpush1.bf16.xpose.msra.mxu0 0
      %1429 = vmatprep.subr.bf16.mxu0 0
      %1430 = vmatpush1.bf16.xpose.msra.mxu0 0
      %1431 = vmatprep.subr.bf16.mxu0 0
      %1432 = vmatpush1.bf16.xpose.msra.mxu0 0
      %1433 = vmatprep.subr.bf16.mxu0 0
      %1434 = vmatpush1.bf16.xpose.msra.mxu0 0
      %1435 = vmatprep.subr.bf16.mxu0 0
      %1436 = vmatpush1.bf16.xpose.msra.mxu0 0
      %1437 = vmatprep.subr.bf16.mxu0 0
      %1438 = vmatpush1.bf16.xpose.msra.mxu0 0
      %1439 = vmatprep.subr.bf16.mxu0 0
      %1440 = vmatpush1.bf16.xpose.msra.mxu0 0
      %1441 = vmatprep.subr.bf16.mxu0 0
      %1442 = vmatpush1.bf16.xpose.msra.mxu0 %v1425
      %1443 = vmatprep.subr.bf16.mxu0 0
      %1444 = vmatpush2.bf16.xpose.msra.mxu0 0
      %1445 = vmatprep.subr.bf16.mxu0 0
      %1446 = vmatpush2.bf16.xpose.msra.mxu0 0
      %1447 = vmatprep.subr.bf16.mxu0 0
      %1448 = vmatpush2.bf16.xpose.msra.mxu0 0
      %1449 = vmatprep.subr.bf16.mxu0 0
      %1450 = vmatpush2.bf16.xpose.msra.mxu0 0
      %1451 = vmatprep.subr.bf16.mxu0 0
      %1452 = vmatpush2.bf16.xpose.msra.mxu0 0
      %1453 = vmatprep.subr.bf16.mxu0 0
      %1454 = vmatpush2.bf16.xpose.msra.mxu0 0
      %1455 = vmatprep.subr.bf16.mxu0 0
      %1456 = vmatpush2.bf16.xpose.msra.mxu0 0
      %1457 = vmatprep.subr.bf16.mxu0 0
      %1458 = vmatpush2.bf16.xpose.msra.mxu0 0
      %1459 = vmatprep.mubr.bf16.mxu0 0
      %1460 = vmatmul.mubr.bf16.gmra.mxu0 %v1422
      %v1461 = vpop.f32.mrf.mxu0
      %v1462 = vadd.f32 0.0, %v1461
      %v1463 = vpop.f32.mrf.mxu0
      %v1464 = vpop.f32.mrf.mxu0
      %v1465 = vpop.f32.mrf.mxu0
      %1466 = vdwg.mxu0
      %v1467 = vunpack.c.l.bf16 %v1201
      %v1468 = vunpack.c.l.bf16 %v1202
      %v1469 = vunpack.c.l.bf16 %v1203
      %v1470 = vunpack.c.l.bf16 %v1204
      %v1471 = vlaneseq
      %v1472 = vshrl.u32 %v1471, 7
      %v1473 = vsub.s32 0, %v1472
      %v1474 = vrot.slane %v1206, %v1473
      %v1477 = vunpack.c.l.s4 1983009808
      %v1478 = vunpack.c.0.s8 %v1477
      %v1479 = vlaneseq
      %v1480 = vshrl.u32 %v1479, 7
      %v1481 = vsub.s32 %v1478, %v1480
      %v1482 = vrot.slane %v1474, %v1481
      %1483 = vrot.lane.b32.xlu0 %v1482, 96
      %v1484 = vpop.permute.xlu0 %1483
      %v1486 = vmul.f32 %v1467, %v1484
      %v1487 = vmul.f32 %v1468, %v1484
      %v1488 = vmul.f32 %v1469, %v1484
      %v1489 = vmul.f32 %v1470, %v1484
      %v1495 = vunpack.c.l.s4 1983009808
      %v1496 = vunpack.c.0.s8 %v1495
      %v1497 = vlaneseq
      %v1498 = vshrl.u32 %v1497, 7
      %v1499 = vsub.s32 %v1496, %v1498
      %v1500 = vrot.slane %v1486, %v1499
      %v1502 = vunpack.c.l.s4 1983009808
      %v1503 = vunpack.c.0.s8 %v1502
      %v1504 = vlaneseq
      %v1505 = vshrl.u32 %v1504, 7
      %v1506 = vsub.s32 %v1503, %v1505
      %v1507 = vrot.slane %v1487, %v1506
      %v1509 = vunpack.c.l.s4 1983009808
      %v1510 = vunpack.c.0.s8 %v1509
      %v1511 = vlaneseq
      %v1512 = vshrl.u32 %v1511, 7
      %v1513 = vsub.s32 %v1510, %v1512
      %v1514 = vrot.slane %v1488, %v1513
      %v1516 = vunpack.c.l.s4 1983009808
      %v1517 = vunpack.c.0.s8 %v1516
      %v1518 = vlaneseq
      %v1519 = vshrl.u32 %v1518, 7
      %v1520 = vsub.s32 %v1517, %v1519
      %v1521 = vrot.slane %v1489, %v1520
      %1522 = vrot.lane.b32.xlu0 %v1500, 120
      %v1523 = vpop.permute.xlu0 %1522
      %1524 = vrot.lane.b32.xlu0 %v1507, 120
      %v1525 = vpop.permute.xlu0 %1524
      %1526 = vrot.lane.b32.xlu0 %v1514, 120
      %v1527 = vpop.permute.xlu0 %1526
      %1528 = vrot.lane.b32.xlu0 %v1521, 120
      %v1529 = vpop.permute.xlu0 %1528
      %v1534 = vsel %vm472, %v1523, 0.0
      %1535 = vadd.xlane.f32.xlu0 %v1534
      %v1536 = vpop.xlane.xlu0 %1535
      %v1537 = vsel %vm472, %v1525, 0.0
      %1538 = vadd.xlane.f32.xlu0 %v1537
      %v1539 = vpop.xlane.xlu0 %1538
      %v1540 = vsel %vm472, %v1527, 0.0
      %1541 = vadd.xlane.f32.xlu0 %v1540
      %v1542 = vpop.xlane.xlu0 %1541
      %v1543 = vsel %vm472, %v1529, 0.0
      %1544 = vadd.xlane.f32.xlu0 %v1543
      %v1545 = vpop.xlane.xlu0 %1544
      %v1546 = vsel %vm485, %v1267, -inf
      %1547 = vmax.xlane.f32.xlu0 %v1546
      %v1548 = vpop.xlane.xlu0 %1547
      %v1549 = vsel %vm485, %v1332, -inf
      %1550 = vmax.xlane.f32.xlu0 %v1549
      %v1551 = vpop.xlane.xlu0 %1550
      %v1552 = vsel %vm485, %v1397, -inf
      %1553 = vmax.xlane.f32.xlu0 %v1552
      %v1554 = vpop.xlane.xlu0 %1553
      %v1555 = vsel %vm485, %v1462, -inf
      %1556 = vmax.xlane.f32.xlu0 %v1555
      %v1557 = vpop.xlane.xlu0 %1556
      %v1558 = vmax.f32 %v1548, %v1536
      %v1559 = vmax.f32 %v1551, %v1539
      %v1560 = vmax.f32 %v1554, %v1542
      %v1561 = vmax.f32 %v1557, %v1545
      %v1562 = vsub.f32 %v1267, %v1558
      %v1563 = vsub.f32 %v1332, %v1559
      %v1564 = vsub.f32 %v1397, %v1560
      %v1565 = vsub.f32 %v1462, %v1561
      %v1566 = vmul.f32 %v1562, 1.442695
      %v1567 = vpow.pop %v1566
      %v1568 = vmul.f32 %v1563, 1.442695
      %v1569 = vpow.pop %v1568
      %v1570 = vmul.f32 %v1564, 1.442695
      %v1571 = vpow.pop %v1570
      %v1572 = vmul.f32 %v1565, 1.442695
      %v1573 = vpow.pop %v1572
      %v1574 = vsub.f32 %v1536, %v1558
      %v1575 = vsub.f32 %v1539, %v1559
      %v1576 = vsub.f32 %v1542, %v1560
      %v1577 = vsub.f32 %v1545, %v1561
      %v1578 = vmul.f32 %v1574, 1.442695
      %v1579 = vpow.pop %v1578
      %v1580 = vmul.f32 %v1575, 1.442695
      %v1581 = vpow.pop %v1580
      %v1582 = vmul.f32 %v1576, 1.442695
      %v1583 = vpow.pop %v1582
      %v1584 = vmul.f32 %v1577, 1.442695
      %v1585 = vpow.pop %v1584
      %v1586 = vsel %vm485, %v1567, 0.0
      %1587 = vadd.xlane.f32.xlu0 %v1586
      %v1588 = vpop.xlane.xlu0 %1587
      %v1589 = vsel %vm485, %v1569, 0.0
      %1590 = vadd.xlane.f32.xlu0 %v1589
      %v1591 = vpop.xlane.xlu0 %1590
      %v1592 = vsel %vm485, %v1571, 0.0
      %1593 = vadd.xlane.f32.xlu0 %v1592
      %v1594 = vpop.xlane.xlu0 %1593
      %v1595 = vsel %vm485, %v1573, 0.0
      %1596 = vadd.xlane.f32.xlu0 %v1595
      %v1597 = vpop.xlane.xlu0 %1596
      %v1598 = vadd.f32 %v1588, %v1579
      %v1599 = vadd.f32 %v1591, %v1581
      %v1600 = vadd.f32 %v1594, %v1583
      %v1601 = vadd.f32 %v1597, %v1585
      %v1602 = vpack.c.bf16 %v1567, %v1567
      %v1603 = vpack.c.bf16 %v1569, %v1569
      %v1604 = vpack.c.bf16 %v1571, %v1571
      %v1605 = vpack.c.bf16 %v1573, %v1573
      %v1606 = vmul.f32 %v1579, %v1474
      %v1607 = vmul.f32 %v1581, %v1474
      %v1608 = vmul.f32 %v1583, %v1474
      %v1609 = vmul.f32 %v1585, %v1474
      %1610 = vrot.lane.b32.xlu0 %v1221, 56
      %v1611 = vpop.permute.xlu0 %1610
      %1613 = vrot.lane.b32.xlu0 %v1606, 56
      %v1614 = vpop.permute.xlu0 %1613
      %v1617 = vsel %vm556, %v1602, 0
      %v1620 = vsel %vm560, %v1611, 0
      %1622 = vmatprep.subr.bf16.mxu0 0
      %1623 = vmatpush1.bf16.msra.mxu0 0
      %1624 = vmatprep.subr.bf16.mxu0 0
      %1625 = vmatpush1.bf16.msra.mxu0 0
      %1626 = vmatprep.subr.bf16.mxu0 0
      %1627 = vmatpush1.bf16.msra.mxu0 0
      %1628 = vmatprep.subr.bf16.mxu0 0
      %1629 = vmatpush1.bf16.msra.mxu0 0
      %1630 = vmatprep.subr.bf16.mxu0 0
      %1631 = vmatpush1.bf16.msra.mxu0 0
      %1632 = vmatprep.subr.bf16.mxu0 0
      %1633 = vmatpush1.bf16.msra.mxu0 0
      %1634 = vmatprep.subr.bf16.mxu0 0
      %1635 = vmatpush1.bf16.msra.mxu0 0
      %1636 = vmatprep.subr.bf16.mxu0 0
      %1637 = vmatpush1.bf16.msra.mxu0 %v1620
      %1638 = vmatprep.subr.bf16.mxu0 0
      %1639 = vmatpush2.bf16.msra.mxu0 0
      %1640 = vmatprep.subr.bf16.mxu0 0
      %1641 = vmatpush2.bf16.msra.mxu0 0
      %1642 = vmatprep.subr.bf16.mxu0 0
      %1643 = vmatpush2.bf16.msra.mxu0 0
      %1644 = vmatprep.subr.bf16.mxu0 0
      %1645 = vmatpush2.bf16.msra.mxu0 0
      %1646 = vmatprep.subr.bf16.mxu0 0
      %1647 = vmatpush2.bf16.msra.mxu0 0
      %1648 = vmatprep.subr.bf16.mxu0 0
      %1649 = vmatpush2.bf16.msra.mxu0 0
      %1650 = vmatprep.subr.bf16.mxu0 0
      %1651 = vmatpush2.bf16.msra.mxu0 0
      %1652 = vmatprep.subr.bf16.mxu0 0
      %1653 = vmatpush2.bf16.msra.mxu0 0
      %1654 = vmatprep.mubr.bf16.mxu0 0
      %1655 = vmatmul.mubr.bf16.gmra.mxu0 %v1617
      %v1656 = vpop.f32.mrf.mxu0
      %v1657 = vadd.f32 %v1614, %v1656
      %v1658 = vpop.f32.mrf.mxu0
      %v1659 = vpop.f32.mrf.mxu0
      %v1660 = vpop.f32.mrf.mxu0
      %1661 = vdwg.mxu0
      %1662 = vrot.lane.b32.xlu0 %v1286, 56
      %v1663 = vpop.permute.xlu0 %1662
      %1665 = vrot.lane.b32.xlu0 %v1607, 56
      %v1666 = vpop.permute.xlu0 %1665
      %v1669 = vsel %vm556, %v1603, 0
      %v1672 = vsel %vm560, %v1663, 0
      %1674 = vmatprep.subr.bf16.mxu0 0
      %1675 = vmatpush1.bf16.msra.mxu0 0
      %1676 = vmatprep.subr.bf16.mxu0 0
      %1677 = vmatpush1.bf16.msra.mxu0 0
      %1678 = vmatprep.subr.bf16.mxu0 0
      %1679 = vmatpush1.bf16.msra.mxu0 0
      %1680 = vmatprep.subr.bf16.mxu0 0
      %1681 = vmatpush1.bf16.msra.mxu0 0
      %1682 = vmatprep.subr.bf16.mxu0 0
      %1683 = vmatpush1.bf16.msra.mxu0 0
      %1684 = vmatprep.subr.bf16.mxu0 0
      %1685 = vmatpush1.bf16.msra.mxu0 0
      %1686 = vmatprep.subr.bf16.mxu0 0
      %1687 = vmatpush1.bf16.msra.mxu0 0
      %1688 = vmatprep.subr.bf16.mxu0 0
      %1689 = vmatpush1.bf16.msra.mxu0 %v1672
      %1690 = vmatprep.subr.bf16.mxu0 0
      %1691 = vmatpush2.bf16.msra.mxu0 0
      %1692 = vmatprep.subr.bf16.mxu0 0
      %1693 = vmatpush2.bf16.msra.mxu0 0
      %1694 = vmatprep.subr.bf16.mxu0 0
      %1695 = vmatpush2.bf16.msra.mxu0 0
      %1696 = vmatprep.subr.bf16.mxu0 0
      %1697 = vmatpush2.bf16.msra.mxu0 0
      %1698 = vmatprep.subr.bf16.mxu0 0
      %1699 = vmatpush2.bf16.msra.mxu0 0
      %1700 = vmatprep.subr.bf16.mxu0 0
      %1701 = vmatpush2.bf16.msra.mxu0 0
      %1702 = vmatprep.subr.bf16.mxu0 0
      %1703 = vmatpush2.bf16.msra.mxu0 0
      %1704 = vmatprep.subr.bf16.mxu0 0
      %1705 = vmatpush2.bf16.msra.mxu0 0
      %1706 = vmatprep.mubr.bf16.mxu0 0
      %1707 = vmatmul.mubr.bf16.gmra.mxu0 %v1669
      %v1708 = vpop.f32.mrf.mxu0
      %v1709 = vadd.f32 %v1666, %v1708
      %v1710 = vpop.f32.mrf.mxu0
      %v1711 = vpop.f32.mrf.mxu0
      %v1712 = vpop.f32.mrf.mxu0
      %1713 = vdwg.mxu0
      %1714 = vrot.lane.b32.xlu0 %v1351, 56
      %v1715 = vpop.permute.xlu0 %1714
      %1717 = vrot.lane.b32.xlu0 %v1608, 56
      %v1718 = vpop.permute.xlu0 %1717
      %v1721 = vsel %vm556, %v1604, 0
      %v1724 = vsel %vm560, %v1715, 0
      %1726 = vmatprep.subr.bf16.mxu0 0
      %1727 = vmatpush1.bf16.msra.mxu0 0
      %1728 = vmatprep.subr.bf16.mxu0 0
      %1729 = vmatpush1.bf16.msra.mxu0 0
      %1730 = vmatprep.subr.bf16.mxu0 0
      %1731 = vmatpush1.bf16.msra.mxu0 0
      %1732 = vmatprep.subr.bf16.mxu0 0
      %1733 = vmatpush1.bf16.msra.mxu0 0
      %1734 = vmatprep.subr.bf16.mxu0 0
      %1735 = vmatpush1.bf16.msra.mxu0 0
      %1736 = vmatprep.subr.bf16.mxu0 0
      %1737 = vmatpush1.bf16.msra.mxu0 0
      %1738 = vmatprep.subr.bf16.mxu0 0
      %1739 = vmatpush1.bf16.msra.mxu0 0
      %1740 = vmatprep.subr.bf16.mxu0 0
      %1741 = vmatpush1.bf16.msra.mxu0 %v1724
      %1742 = vmatprep.subr.bf16.mxu0 0
      %1743 = vmatpush2.bf16.msra.mxu0 0
      %1744 = vmatprep.subr.bf16.mxu0 0
      %1745 = vmatpush2.bf16.msra.mxu0 0
      %1746 = vmatprep.subr.bf16.mxu0 0
      %1747 = vmatpush2.bf16.msra.mxu0 0
      %1748 = vmatprep.subr.bf16.mxu0 0
      %1749 = vmatpush2.bf16.msra.mxu0 0
      %1750 = vmatprep.subr.bf16.mxu0 0
      %1751 = vmatpush2.bf16.msra.mxu0 0
      %1752 = vmatprep.subr.bf16.mxu0 0
      %1753 = vmatpush2.bf16.msra.mxu0 0
      %1754 = vmatprep.subr.bf16.mxu0 0
      %1755 = vmatpush2.bf16.msra.mxu0 0
      %1756 = vmatprep.subr.bf16.mxu0 0
      %1757 = vmatpush2.bf16.msra.mxu0 0
      %1758 = vmatprep.mubr.bf16.mxu0 0
      %1759 = vmatmul.mubr.bf16.gmra.mxu0 %v1721
      %v1760 = vpop.f32.mrf.mxu0
      %v1761 = vadd.f32 %v1718, %v1760
      %v1762 = vpop.f32.mrf.mxu0
      %v1763 = vpop.f32.mrf.mxu0
      %v1764 = vpop.f32.mrf.mxu0
      %1765 = vdwg.mxu0
      %1766 = vrot.lane.b32.xlu0 %v1416, 56
      %v1767 = vpop.permute.xlu0 %1766
      %1769 = vrot.lane.b32.xlu0 %v1609, 56
      %v1770 = vpop.permute.xlu0 %1769
      %v1773 = vsel %vm556, %v1605, 0
      %v1776 = vsel %vm560, %v1767, 0
      %1778 = vmatprep.subr.bf16.mxu0 0
      %1779 = vmatpush1.bf16.msra.mxu0 0
      %1780 = vmatprep.subr.bf16.mxu0 0
      %1781 = vmatpush1.bf16.msra.mxu0 0
      %1782 = vmatprep.subr.bf16.mxu0 0
      %1783 = vmatpush1.bf16.msra.mxu0 0
      %1784 = vmatprep.subr.bf16.mxu0 0
      %1785 = vmatpush1.bf16.msra.mxu0 0
      %1786 = vmatprep.subr.bf16.mxu0 0
      %1787 = vmatpush1.bf16.msra.mxu0 0
      %1788 = vmatprep.subr.bf16.mxu0 0
      %1789 = vmatpush1.bf16.msra.mxu0 0
      %1790 = vmatprep.subr.bf16.mxu0 0
      %1791 = vmatpush1.bf16.msra.mxu0 0
      %1792 = vmatprep.subr.bf16.mxu0 0
      %1793 = vmatpush1.bf16.msra.mxu0 %v1776
      %1794 = vmatprep.subr.bf16.mxu0 0
      %1795 = vmatpush2.bf16.msra.mxu0 0
      %1796 = vmatprep.subr.bf16.mxu0 0
      %1797 = vmatpush2.bf16.msra.mxu0 0
      %1798 = vmatprep.subr.bf16.mxu0 0
      %1799 = vmatpush2.bf16.msra.mxu0 0
      %1800 = vmatprep.subr.bf16.mxu0 0
      %1801 = vmatpush2.bf16.msra.mxu0 0
      %1802 = vmatprep.subr.bf16.mxu0 0
      %1803 = vmatpush2.bf16.msra.mxu0 0
      %1804 = vmatprep.subr.bf16.mxu0 0
      %1805 = vmatpush2.bf16.msra.mxu0 0
      %1806 = vmatprep.subr.bf16.mxu0 0
      %1807 = vmatpush2.bf16.msra.mxu0 0
      %1808 = vmatprep.subr.bf16.mxu0 0
      %1809 = vmatpush2.bf16.msra.mxu0 0
      %1810 = vmatprep.mubr.bf16.mxu0 0
      %1811 = vmatmul.mubr.bf16.gmra.mxu0 %v1773
      %v1812 = vpop.f32.mrf.mxu0
      %v1813 = vadd.f32 %v1770, %v1812
      %v1814 = vpop.f32.mrf.mxu0
      %v1815 = vpop.f32.mrf.mxu0
      %v1816 = vpop.f32.mrf.mxu0
      %1817 = vdwg.mxu0
      %v1818 = vrcp.pop %v1598
      %v1819 = vrcp.pop %v1599
      %v1820 = vrcp.pop %v1600
      %v1821 = vrcp.pop %v1601
      %v1822 = vmul.f32 %v1657, %v1818
      %v1823 = vmul.f32 %v1709, %v1819
      %v1824 = vmul.f32 %v1761, %v1820
      %v1825 = vmul.f32 %v1813, %v1821
      %v1826 = vpack.c.bf16 %v1822, %v1822
      %v1827 = vpack.c.bf16 %v1823, %v1823
      %v1828 = vpack.c.bf16 %v1824, %v1824
      %v1829 = vpack.c.bf16 %v1825, %v1825
      %v1832 = vunpack.c.l.s4 1966171168
      %v1833 = vunpack.c.0.s8 %v1832
      %v1834 = vlaneseq
      %v1835 = vshrl.u32 %v1834, 7
      %v1836 = vsub.s32 %v1833, %v1835
      %v1837 = vrot.slane %v1205, %v1836
      %v1839 = vunpack.c.l.s4 1966171168
      %v1840 = vunpack.c.0.s8 %v1839
      %v1841 = vlaneseq
      %v1842 = vshrl.u32 %v1841, 7
      %v1843 = vsub.s32 %v1840, %v1842
      %v1844 = vrot.slane %v1837, %v1843
      %1845 = vrot.lane.b32.xlu0 %v1844, 120
      %v1846 = vpop.permute.xlu0 %1845
      %v1848 = vsel %vm213, %v1846, 0
      %1850 = vmatprep.subr.bf16.mxu0 0
      %1851 = vmatpush1.bf16.xpose.msra.mxu0 0
      %1852 = vmatprep.subr.bf16.mxu0 0
      %1853 = vmatpush1.bf16.xpose.msra.mxu0 0
      %1854 = vmatprep.subr.bf16.mxu0 0
      %1855 = vmatpush1.bf16.xpose.msra.mxu0 0
      %1856 = vmatprep.subr.bf16.mxu0 0
      %1857 = vmatpush1.bf16.xpose.msra.mxu0 0
      %1858 = vmatprep.subr.bf16.mxu0 0
      %1859 = vmatpush1.bf16.xpose.msra.mxu0 0
      %1860 = vmatprep.subr.bf16.mxu0 0
      %1861 = vmatpush1.bf16.xpose.msra.mxu0 0
      %1862 = vmatprep.subr.bf16.mxu0 0
      %1863 = vmatpush1.bf16.xpose.msra.mxu0 0
      %1864 = vmatprep.subr.bf16.mxu0 0
      %1865 = vmatpush1.bf16.xpose.msra.mxu0 %v1230
      %1866 = vmatprep.subr.bf16.mxu0 0
      %1867 = vmatpush2.bf16.xpose.msra.mxu0 0
      %1868 = vmatprep.subr.bf16.mxu0 0
      %1869 = vmatpush2.bf16.xpose.msra.mxu0 0
      %1870 = vmatprep.subr.bf16.mxu0 0
      %1871 = vmatpush2.bf16.xpose.msra.mxu0 0
      %1872 = vmatprep.subr.bf16.mxu0 0
      %1873 = vmatpush2.bf16.xpose.msra.mxu0 0
      %1874 = vmatprep.subr.bf16.mxu0 0
      %1875 = vmatpush2.bf16.xpose.msra.mxu0 0
      %1876 = vmatprep.subr.bf16.mxu0 0
      %1877 = vmatpush2.bf16.xpose.msra.mxu0 0
      %1878 = vmatprep.subr.bf16.mxu0 0
      %1879 = vmatpush2.bf16.xpose.msra.mxu0 0
      %1880 = vmatprep.subr.bf16.mxu0 0
      %1881 = vmatpush2.bf16.xpose.msra.mxu0 0
      %1882 = vmatprep.mubr.bf16.mxu0 0
      %1883 = vmatmul.mubr.bf16.gmra.mxu0 %v1848
      %v1884 = vpop.f32.mrf.mxu0
      %v1885 = vadd.f32 0.0, %v1884
      %v1886 = vpop.f32.mrf.mxu0
      %v1887 = vpop.f32.mrf.mxu0
      %v1888 = vpop.f32.mrf.mxu0
      %1889 = vdwg.mxu0
      %1890 = vmatprep.subr.bf16.mxu0 0
      %1891 = vmatpush1.bf16.xpose.msra.mxu0 0
      %1892 = vmatprep.subr.bf16.mxu0 0
      %1893 = vmatpush1.bf16.xpose.msra.mxu0 0
      %1894 = vmatprep.subr.bf16.mxu0 0
      %1895 = vmatpush1.bf16.xpose.msra.mxu0 0
      %1896 = vmatprep.subr.bf16.mxu0 0
      %1897 = vmatpush1.bf16.xpose.msra.mxu0 0
      %1898 = vmatprep.subr.bf16.mxu0 0
      %1899 = vmatpush1.bf16.xpose.msra.mxu0 0
      %1900 = vmatprep.subr.bf16.mxu0 0
      %1901 = vmatpush1.bf16.xpose.msra.mxu0 0
      %1902 = vmatprep.subr.bf16.mxu0 0
      %1903 = vmatpush1.bf16.xpose.msra.mxu0 0
      %1904 = vmatprep.subr.bf16.mxu0 0
      %1905 = vmatpush1.bf16.xpose.msra.mxu0 %v1295
      %1906 = vmatprep.subr.bf16.mxu0 0
      %1907 = vmatpush2.bf16.xpose.msra.mxu0 0
      %1908 = vmatprep.subr.bf16.mxu0 0
      %1909 = vmatpush2.bf16.xpose.msra.mxu0 0
      %1910 = vmatprep.subr.bf16.mxu0 0
      %1911 = vmatpush2.bf16.xpose.msra.mxu0 0
      %1912 = vmatprep.subr.bf16.mxu0 0
      %1913 = vmatpush2.bf16.xpose.msra.mxu0 0
      %1914 = vmatprep.subr.bf16.mxu0 0
      %1915 = vmatpush2.bf16.xpose.msra.mxu0 0
      %1916 = vmatprep.subr.bf16.mxu0 0
      %1917 = vmatpush2.bf16.xpose.msra.mxu0 0
      %1918 = vmatprep.subr.bf16.mxu0 0
      %1919 = vmatpush2.bf16.xpose.msra.mxu0 0
      %1920 = vmatprep.subr.bf16.mxu0 0
      %1921 = vmatpush2.bf16.xpose.msra.mxu0 0
      %1922 = vmatprep.mubr.bf16.mxu0 0
      %1923 = vmatmul.mubr.bf16.gmra.mxu0 %v1848
      %v1924 = vpop.f32.mrf.mxu0
      %v1925 = vadd.f32 0.0, %v1924
      %v1926 = vpop.f32.mrf.mxu0
      %v1927 = vpop.f32.mrf.mxu0
      %v1928 = vpop.f32.mrf.mxu0
      %1929 = vdwg.mxu0
      %1930 = vmatprep.subr.bf16.mxu0 0
      %1931 = vmatpush1.bf16.xpose.msra.mxu0 0
      %1932 = vmatprep.subr.bf16.mxu0 0
      %1933 = vmatpush1.bf16.xpose.msra.mxu0 0
      %1934 = vmatprep.subr.bf16.mxu0 0
      %1935 = vmatpush1.bf16.xpose.msra.mxu0 0
      %1936 = vmatprep.subr.bf16.mxu0 0
      %1937 = vmatpush1.bf16.xpose.msra.mxu0 0
      %1938 = vmatprep.subr.bf16.mxu0 0
      %1939 = vmatpush1.bf16.xpose.msra.mxu0 0
      %1940 = vmatprep.subr.bf16.mxu0 0
      %1941 = vmatpush1.bf16.xpose.msra.mxu0 0
      %1942 = vmatprep.subr.bf16.mxu0 0
      %1943 = vmatpush1.bf16.xpose.msra.mxu0 0
      %1944 = vmatprep.subr.bf16.mxu0 0
      %1945 = vmatpush1.bf16.xpose.msra.mxu0 %v1360
      %1946 = vmatprep.subr.bf16.mxu0 0
      %1947 = vmatpush2.bf16.xpose.msra.mxu0 0
      %1948 = vmatprep.subr.bf16.mxu0 0
      %1949 = vmatpush2.bf16.xpose.msra.mxu0 0
      %1950 = vmatprep.subr.bf16.mxu0 0
      %1951 = vmatpush2.bf16.xpose.msra.mxu0 0
      %1952 = vmatprep.subr.bf16.mxu0 0
      %1953 = vmatpush2.bf16.xpose.msra.mxu0 0
      %1954 = vmatprep.subr.bf16.mxu0 0
      %1955 = vmatpush2.bf16.xpose.msra.mxu0 0
      %1956 = vmatprep.subr.bf16.mxu0 0
      %1957 = vmatpush2.bf16.xpose.msra.mxu0 0
      %1958 = vmatprep.subr.bf16.mxu0 0
      %1959 = vmatpush2.bf16.xpose.msra.mxu0 0
      %1960 = vmatprep.subr.bf16.mxu0 0
      %1961 = vmatpush2.bf16.xpose.msra.mxu0 0
      %1962 = vmatprep.mubr.bf16.mxu0 0
      %1963 = vmatmul.mubr.bf16.gmra.mxu0 %v1848
      %v1964 = vpop.f32.mrf.mxu0
      %v1965 = vadd.f32 0.0, %v1964
      %v1966 = vpop.f32.mrf.mxu0
      %v1967 = vpop.f32.mrf.mxu0
      %v1968 = vpop.f32.mrf.mxu0
      %1969 = vdwg.mxu0
      %1970 = vmatprep.subr.bf16.mxu0 0
      %1971 = vmatpush1.bf16.xpose.msra.mxu0 0
      %1972 = vmatprep.subr.bf16.mxu0 0
      %1973 = vmatpush1.bf16.xpose.msra.mxu0 0
      %1974 = vmatprep.subr.bf16.mxu0 0
      %1975 = vmatpush1.bf16.xpose.msra.mxu0 0
      %1976 = vmatprep.subr.bf16.mxu0 0
      %1977 = vmatpush1.bf16.xpose.msra.mxu0 0
      %1978 = vmatprep.subr.bf16.mxu0 0
      %1979 = vmatpush1.bf16.xpose.msra.mxu0 0
      %1980 = vmatprep.subr.bf16.mxu0 0
      %1981 = vmatpush1.bf16.xpose.msra.mxu0 0
      %1982 = vmatprep.subr.bf16.mxu0 0
      %1983 = vmatpush1.bf16.xpose.msra.mxu0 0
      %1984 = vmatprep.subr.bf16.mxu0 0
      %1985 = vmatpush1.bf16.xpose.msra.mxu0 %v1425
      %1986 = vmatprep.subr.bf16.mxu0 0
      %1987 = vmatpush2.bf16.xpose.msra.mxu0 0
      %1988 = vmatprep.subr.bf16.mxu0 0
      %1989 = vmatpush2.bf16.xpose.msra.mxu0 0
      %1990 = vmatprep.subr.bf16.mxu0 0
      %1991 = vmatpush2.bf16.xpose.msra.mxu0 0
      %1992 = vmatprep.subr.bf16.mxu0 0
      %1993 = vmatpush2.bf16.xpose.msra.mxu0 0
      %1994 = vmatprep.subr.bf16.mxu0 0
      %1995 = vmatpush2.bf16.xpose.msra.mxu0 0
      %1996 = vmatprep.subr.bf16.mxu0 0
      %1997 = vmatpush2.bf16.xpose.msra.mxu0 0
      %1998 = vmatprep.subr.bf16.mxu0 0
      %1999 = vmatpush2.bf16.xpose.msra.mxu0 0
      %2000 = vmatprep.subr.bf16.mxu0 0
      %2001 = vmatpush2.bf16.xpose.msra.mxu0 0
      %2002 = vmatprep.mubr.bf16.mxu0 0
      %2003 = vmatmul.mubr.bf16.gmra.mxu0 %v1848
      %v2004 = vpop.f32.mrf.mxu0
      %v2005 = vadd.f32 0.0, %v2004
      %v2006 = vpop.f32.mrf.mxu0
      %v2007 = vpop.f32.mrf.mxu0
      %v2008 = vpop.f32.mrf.mxu0
      %2009 = vdwg.mxu0
      %2011 = vrot.lane.b32.xlu0 %v1206, 96
      %v2012 = vpop.permute.xlu0 %2011
      %v2014 = vmul.f32 %v1206, %v2012
      %v2016 = vlaneseq
      %v2017 = vshrl.u32 %v2016, 7
      %v2018 = vsub.s32 0, %v2017
      %v2019 = vrot.slane %v2014, %v2018
      %2020 = vrot.lane.b32.xlu0 %v2019, 120
      %v2021 = vpop.permute.xlu0 %2020
      %v2023 = vsel %vm940, %v2021, 0.0
      %2024 = vadd.xlane.f32.xlu0 %v2023
      %v2025 = vpop.xlane.xlu0 %2024
      %v2026 = vrot.slane %v2025, 4
      %v2027 = vadd.f32 %v2025, %v2026
      %v2028 = vrot.slane %v2027, 2
      %v2029 = vadd.f32 %v2027, %v2028
      %v2030 = vrot.slane %v2029, 1
      %v2031 = vadd.f32 %v2029, %v2030
      %s2032 = vtos %v2031
      %v2033 = vsel %vm951, %v1885, -inf
      %v2034 = vsel %vm951, %v1925, -inf
      %v2035 = vsel %vm951, %v1965, -inf
      %v2036 = vsel %vm951, %v2005, -inf
      %v2037 = vmax.f32 %v2033, %v2034
      %v2038 = vmax.f32 %v2035, %v2036
      %v2039 = vmax.f32 %v2037, %v2038
      %2040 = vmax.xlane.f32.xlu0 %v2039
      %v2041 = vpop.xlane.xlu0 %2040
      %v2042 = vrot.slane %v2041, 4
      %v2043 = vmax.f32 %v2041, %v2042
      %v2044 = vrot.slane %v2043, 2
      %v2045 = vmax.f32 %v2043, %v2044
      %v2046 = vrot.slane %v2045, 1
      %v2047 = vmax.f32 %v2045, %v2046
      %s2048 = vtos %v2047
      %s2049 = smax.f32 %s2048, %s2032
      %v2050 = vstv %s2049
      %v2051 = vsub.f32 %v1885, %v2050
      %v2052 = vsub.f32 %v1925, %v2050
      %v2053 = vsub.f32 %v1965, %v2050
      %v2054 = vsub.f32 %v2005, %v2050
      %v2055 = vmul.f32 %v2051, 1.442695
      %v2056 = vpow.pop %v2055
      %v2057 = vmul.f32 %v2052, 1.442695
      %v2058 = vpow.pop %v2057
      %v2059 = vmul.f32 %v2053, 1.442695
      %v2060 = vpow.pop %v2059
      %v2061 = vmul.f32 %v2054, 1.442695
      %v2062 = vpow.pop %v2061
      %s2063 = ssub.f32 %s2032, %s2049
      %v2064 = vstv %s2063
      %v2065 = vmul.f32 %v2064, 1.442695
      %v2066 = vpow.pop %v2065
      %s2067 = vtos %v2066
      %v2068 = vsel %vm951, %v2056, 0.0
      %v2069 = vsel %vm951, %v2058, 0.0
      %v2070 = vadd.f32 %v2068, %v2069
      %v2071 = vsel %vm951, %v2060, 0.0
      %v2072 = vadd.f32 %v2070, %v2071
      %v2073 = vsel %vm951, %v2062, 0.0
      %v2074 = vadd.f32 %v2072, %v2073
      %2075 = vadd.xlane.f32.xlu0 %v2074
      %v2076 = vpop.xlane.xlu0 %2075
      %v2077 = vrot.slane %v2076, 4
      %v2078 = vadd.f32 %v2076, %v2077
      %v2079 = vrot.slane %v2078, 2
      %v2080 = vadd.f32 %v2078, %v2079
      %v2081 = vrot.slane %v2080, 1
      %v2082 = vadd.f32 %v2080, %v2081
      %s2083 = vtos %v2082
      %s2084 = sadd.f32 %s2083, %s2067
      %v2085 = vpack.c.bf16 %v2056, %v2056
      %v2086 = vpack.c.bf16 %v2058, %v2058
      %v2087 = vpack.c.bf16 %v2060, %v2060
      %v2088 = vpack.c.bf16 %v2062, %v2062
      %v2090 = vsel %vm556, %v2085, 0
      %2092 = vmatprep.subr.bf16.mxu0 0
      %2093 = vmatpush1.bf16.msra.mxu0 0
      %2094 = vmatprep.subr.bf16.mxu0 0
      %2095 = vmatpush1.bf16.msra.mxu0 0
      %2096 = vmatprep.subr.bf16.mxu0 0
      %2097 = vmatpush1.bf16.msra.mxu0 0
      %2098 = vmatprep.subr.bf16.mxu0 0
      %2099 = vmatpush1.bf16.msra.mxu0 0
      %2100 = vmatprep.subr.bf16.mxu0 0
      %2101 = vmatpush1.bf16.msra.mxu0 0
      %2102 = vmatprep.subr.bf16.mxu0 0
      %2103 = vmatpush1.bf16.msra.mxu0 0
      %2104 = vmatprep.subr.bf16.mxu0 0
      %2105 = vmatpush1.bf16.msra.mxu0 0
      %2106 = vmatprep.subr.bf16.mxu0 0
      %2107 = vmatpush1.bf16.msra.mxu0 %v1620
      %2108 = vmatprep.subr.bf16.mxu0 0
      %2109 = vmatpush2.bf16.msra.mxu0 0
      %2110 = vmatprep.subr.bf16.mxu0 0
      %2111 = vmatpush2.bf16.msra.mxu0 0
      %2112 = vmatprep.subr.bf16.mxu0 0
      %2113 = vmatpush2.bf16.msra.mxu0 0
      %2114 = vmatprep.subr.bf16.mxu0 0
      %2115 = vmatpush2.bf16.msra.mxu0 0
      %2116 = vmatprep.subr.bf16.mxu0 0
      %2117 = vmatpush2.bf16.msra.mxu0 0
      %2118 = vmatprep.subr.bf16.mxu0 0
      %2119 = vmatpush2.bf16.msra.mxu0 0
      %2120 = vmatprep.subr.bf16.mxu0 0
      %2121 = vmatpush2.bf16.msra.mxu0 0
      %2122 = vmatprep.subr.bf16.mxu0 0
      %2123 = vmatpush2.bf16.msra.mxu0 0
      %2124 = vmatprep.mubr.bf16.mxu0 0
      %2125 = vmatmul.mubr.bf16.gmra.mxu0 %v2090
      %v2126 = vpop.f32.mrf.mxu0
      %v2127 = vadd.f32 0.0, %v2126
      %v2128 = vpop.f32.mrf.mxu0
      %v2129 = vpop.f32.mrf.mxu0
      %v2130 = vpop.f32.mrf.mxu0
      %2131 = vdwg.mxu0
      %v2133 = vsel %vm556, %v2086, 0
      %2135 = vmatprep.subr.bf16.mxu0 0
      %2136 = vmatpush1.bf16.msra.mxu0 0
      %2137 = vmatprep.subr.bf16.mxu0 0
      %2138 = vmatpush1.bf16.msra.mxu0 0
      %2139 = vmatprep.subr.bf16.mxu0 0
      %2140 = vmatpush1.bf16.msra.mxu0 0
      %2141 = vmatprep.subr.bf16.mxu0 0
      %2142 = vmatpush1.bf16.msra.mxu0 0
      %2143 = vmatprep.subr.bf16.mxu0 0
      %2144 = vmatpush1.bf16.msra.mxu0 0
      %2145 = vmatprep.subr.bf16.mxu0 0
      %2146 = vmatpush1.bf16.msra.mxu0 0
      %2147 = vmatprep.subr.bf16.mxu0 0
      %2148 = vmatpush1.bf16.msra.mxu0 0
      %2149 = vmatprep.subr.bf16.mxu0 0
      %2150 = vmatpush1.bf16.msra.mxu0 %v1672
      %2151 = vmatprep.subr.bf16.mxu0 0
      %2152 = vmatpush2.bf16.msra.mxu0 0
      %2153 = vmatprep.subr.bf16.mxu0 0
      %2154 = vmatpush2.bf16.msra.mxu0 0
      %2155 = vmatprep.subr.bf16.mxu0 0
      %2156 = vmatpush2.bf16.msra.mxu0 0
      %2157 = vmatprep.subr.bf16.mxu0 0
      %2158 = vmatpush2.bf16.msra.mxu0 0
      %2159 = vmatprep.subr.bf16.mxu0 0
      %2160 = vmatpush2.bf16.msra.mxu0 0
      %2161 = vmatprep.subr.bf16.mxu0 0
      %2162 = vmatpush2.bf16.msra.mxu0 0
      %2163 = vmatprep.subr.bf16.mxu0 0
      %2164 = vmatpush2.bf16.msra.mxu0 0
      %2165 = vmatprep.subr.bf16.mxu0 0
      %2166 = vmatpush2.bf16.msra.mxu0 0
      %2167 = vmatprep.mubr.bf16.mxu0 0
      %2168 = vmatmul.mubr.bf16.gmra.mxu0 %v2133
      %v2169 = vpop.f32.mrf.mxu0
      %v2170 = vadd.f32 0.0, %v2169
      %v2171 = vpop.f32.mrf.mxu0
      %v2172 = vpop.f32.mrf.mxu0
      %v2173 = vpop.f32.mrf.mxu0
      %2174 = vdwg.mxu0
      %v2176 = vsel %vm556, %v2087, 0
      %2178 = vmatprep.subr.bf16.mxu0 0
      %2179 = vmatpush1.bf16.msra.mxu0 0
      %2180 = vmatprep.subr.bf16.mxu0 0
      %2181 = vmatpush1.bf16.msra.mxu0 0
      %2182 = vmatprep.subr.bf16.mxu0 0
      %2183 = vmatpush1.bf16.msra.mxu0 0
      %2184 = vmatprep.subr.bf16.mxu0 0
      %2185 = vmatpush1.bf16.msra.mxu0 0
      %2186 = vmatprep.subr.bf16.mxu0 0
      %2187 = vmatpush1.bf16.msra.mxu0 0
      %2188 = vmatprep.subr.bf16.mxu0 0
      %2189 = vmatpush1.bf16.msra.mxu0 0
      %2190 = vmatprep.subr.bf16.mxu0 0
      %2191 = vmatpush1.bf16.msra.mxu0 0
      %2192 = vmatprep.subr.bf16.mxu0 0
      %2193 = vmatpush1.bf16.msra.mxu0 %v1724
      %2194 = vmatprep.subr.bf16.mxu0 0
      %2195 = vmatpush2.bf16.msra.mxu0 0
      %2196 = vmatprep.subr.bf16.mxu0 0
      %2197 = vmatpush2.bf16.msra.mxu0 0
      %2198 = vmatprep.subr.bf16.mxu0 0
      %2199 = vmatpush2.bf16.msra.mxu0 0
      %2200 = vmatprep.subr.bf16.mxu0 0
      %2201 = vmatpush2.bf16.msra.mxu0 0
      %2202 = vmatprep.subr.bf16.mxu0 0
      %2203 = vmatpush2.bf16.msra.mxu0 0
      %2204 = vmatprep.subr.bf16.mxu0 0
      %2205 = vmatpush2.bf16.msra.mxu0 0
      %2206 = vmatprep.subr.bf16.mxu0 0
      %2207 = vmatpush2.bf16.msra.mxu0 0
      %2208 = vmatprep.subr.bf16.mxu0 0
      %2209 = vmatpush2.bf16.msra.mxu0 0
      %2210 = vmatprep.mubr.bf16.mxu0 0
      %2211 = vmatmul.mubr.bf16.gmra.mxu0 %v2176
      %v2212 = vpop.f32.mrf.mxu0
      %v2213 = vadd.f32 0.0, %v2212
      %v2214 = vpop.f32.mrf.mxu0
      %v2215 = vpop.f32.mrf.mxu0
      %v2216 = vpop.f32.mrf.mxu0
      %2217 = vdwg.mxu0
      %v2219 = vsel %vm556, %v2088, 0
      %2221 = vmatprep.subr.bf16.mxu0 0
      %2222 = vmatpush1.bf16.msra.mxu0 0
      %2223 = vmatprep.subr.bf16.mxu0 0
      %2224 = vmatpush1.bf16.msra.mxu0 0
      %2225 = vmatprep.subr.bf16.mxu0 0
      %2226 = vmatpush1.bf16.msra.mxu0 0
      %2227 = vmatprep.subr.bf16.mxu0 0
      %2228 = vmatpush1.bf16.msra.mxu0 0
      %2229 = vmatprep.subr.bf16.mxu0 0
      %2230 = vmatpush1.bf16.msra.mxu0 0
      %2231 = vmatprep.subr.bf16.mxu0 0
      %2232 = vmatpush1.bf16.msra.mxu0 0
      %2233 = vmatprep.subr.bf16.mxu0 0
      %2234 = vmatpush1.bf16.msra.mxu0 0
      %2235 = vmatprep.subr.bf16.mxu0 0
      %2236 = vmatpush1.bf16.msra.mxu0 %v1776
      %2237 = vmatprep.subr.bf16.mxu0 0
      %2238 = vmatpush2.bf16.msra.mxu0 0
      %2239 = vmatprep.subr.bf16.mxu0 0
      %2240 = vmatpush2.bf16.msra.mxu0 0
      %2241 = vmatprep.subr.bf16.mxu0 0
      %2242 = vmatpush2.bf16.msra.mxu0 0
      %2243 = vmatprep.subr.bf16.mxu0 0
      %2244 = vmatpush2.bf16.msra.mxu0 0
      %2245 = vmatprep.subr.bf16.mxu0 0
      %2246 = vmatpush2.bf16.msra.mxu0 0
      %2247 = vmatprep.subr.bf16.mxu0 0
      %2248 = vmatpush2.bf16.msra.mxu0 0
      %2249 = vmatprep.subr.bf16.mxu0 0
      %2250 = vmatpush2.bf16.msra.mxu0 0
      %2251 = vmatprep.subr.bf16.mxu0 0
      %2252 = vmatpush2.bf16.msra.mxu0 0
      %2253 = vmatprep.mubr.bf16.mxu0 0
      %2254 = vmatmul.mubr.bf16.gmra.mxu0 %v2219
      %v2255 = vpop.f32.mrf.mxu0
      %v2256 = vadd.f32 0.0, %v2255
      %v2257 = vpop.f32.mrf.mxu0
      %v2258 = vpop.f32.mrf.mxu0
      %v2259 = vpop.f32.mrf.mxu0
      %2260 = vdwg.mxu0
      %v2261 = vsel %vm940, %v2127, 0.0
      %v2262 = vsel %vm940, %v2170, 0.0
      %v2263 = vadd.f32 %v2261, %v2262
      %v2264 = vsel %vm940, %v2213, 0.0
      %v2265 = vadd.f32 %v2263, %v2264
      %v2266 = vsel %vm940, %v2256, 0.0
      %v2267 = vadd.f32 %v2265, %v2266
      %v2268 = vstv %s2067
      %v2269 = vmul.f32 %v2268, %v1206
      %v2271 = vlaneseq
      %v2272 = vshrl.u32 %v2271, 7
      %v2273 = vsub.s32 0, %v2272
      %v2274 = vrot.slane %v2269, %v2273
      %2275 = vrot.lane.b32.xlu0 %v2274, 56
      %v2276 = vpop.permute.xlu0 %2275
      %v2278 = vadd.f32 %v2267, %v2276
      %v2279 = vstv %s2084
      %v2280 = vrcp.pop %v2279
      %v2281 = vmul.f32 %v2278, %v2280
      %v2282 = vld [vmem:[%s178] sm:$0x1]
      %v2283 = vld [vmem:[%s178 + $0x1] sm:$0x1]
      %v2284 = vld [vmem:[%s178 + $0x2] sm:$0x1]
      %v2285 = vld [vmem:[%s178 + $0x3] sm:$0x1]
      %v2286 = vld [vmem:[%s181] sm:$0x1]
      %v2287 = vunpack.c.l.bf16 %v2286
      %v2290 = vunpack.c.l.s4 1966171168
      %v2291 = vunpack.c.0.s8 %v2290
      %v2292 = vlaneseq
      %v2293 = vshrl.u32 %v2292, 7
      %v2294 = vsub.s32 %v2291, %v2293
      %v2295 = vrot.slane %v2282, %v2294
      %v2297 = vunpack.c.l.s4 1966171168
      %v2298 = vunpack.c.0.s8 %v2297
      %v2299 = vlaneseq
      %v2300 = vshrl.u32 %v2299, 7
      %v2301 = vsub.s32 %v2298, %v2300
      %v2302 = vrot.slane %v2295, %v2301
      %2303 = vrot.lane.b32.xlu0 %v2302, 112
      %v2304 = vpop.permute.xlu0 %2303
      %2305 = vrot.lane.b32.xlu0 %v2302, 80
      %v2306 = vpop.permute.xlu0 %2305
      %v2308 = vsel %vm213, %v2304, 0
      %v2311 = vsel %vm213, %v2306, 0
      %2313 = vmatprep.subr.bf16.mxu0 0
      %2314 = vmatpush1.bf16.xpose.msra.mxu0 0
      %2315 = vmatprep.subr.bf16.mxu0 0
      %2316 = vmatpush1.bf16.xpose.msra.mxu0 0
      %2317 = vmatprep.subr.bf16.mxu0 0
      %2318 = vmatpush1.bf16.xpose.msra.mxu0 0
      %2319 = vmatprep.subr.bf16.mxu0 0
      %2320 = vmatpush1.bf16.xpose.msra.mxu0 0
      %2321 = vmatprep.subr.bf16.mxu0 0
      %2322 = vmatpush1.bf16.xpose.msra.mxu0 0
      %2323 = vmatprep.subr.bf16.mxu0 0
      %2324 = vmatpush1.bf16.xpose.msra.mxu0 0
      %2325 = vmatprep.subr.bf16.mxu0 0
      %2326 = vmatpush1.bf16.xpose.msra.mxu0 0
      %2327 = vmatprep.subr.bf16.mxu0 0
      %2328 = vmatpush1.bf16.xpose.msra.mxu0 %v2311
      %2329 = vmatprep.subr.bf16.mxu0 0
      %2330 = vmatpush2.bf16.xpose.msra.mxu0 0
      %2331 = vmatprep.subr.bf16.mxu0 0
      %2332 = vmatpush2.bf16.xpose.msra.mxu0 0
      %2333 = vmatprep.subr.bf16.mxu0 0
      %2334 = vmatpush2.bf16.xpose.msra.mxu0 0
      %2335 = vmatprep.subr.bf16.mxu0 0
      %2336 = vmatpush2.bf16.xpose.msra.mxu0 0
      %2337 = vmatprep.subr.bf16.mxu0 0
      %2338 = vmatpush2.bf16.xpose.msra.mxu0 0
      %2339 = vmatprep.subr.bf16.mxu0 0
      %2340 = vmatpush2.bf16.xpose.msra.mxu0 0
      %2341 = vmatprep.subr.bf16.mxu0 0
      %2342 = vmatpush2.bf16.xpose.msra.mxu0 0
      %2343 = vmatprep.subr.bf16.mxu0 0
      %2344 = vmatpush2.bf16.xpose.msra.mxu0 0
      %2345 = vmatprep.mubr.bf16.mxu0 0
      %2346 = vmatmul.mubr.bf16.gmra.mxu0 %v2308
      %v2347 = vpop.f32.mrf.mxu0
      %v2348 = vadd.f32 0.0, %v2347
      %v2349 = vpop.f32.mrf.mxu0
      %v2350 = vpop.f32.mrf.mxu0
      %v2351 = vpop.f32.mrf.mxu0
      %2352 = vdwg.mxu0
      %v2355 = vunpack.c.l.s4 1966171168
      %v2356 = vunpack.c.0.s8 %v2355
      %v2357 = vlaneseq
      %v2358 = vshrl.u32 %v2357, 7
      %v2359 = vsub.s32 %v2356, %v2358
      %v2360 = vrot.slane %v2283, %v2359
      %v2362 = vunpack.c.l.s4 1966171168
      %v2363 = vunpack.c.0.s8 %v2362
      %v2364 = vlaneseq
      %v2365 = vshrl.u32 %v2364, 7
      %v2366 = vsub.s32 %v2363, %v2365
      %v2367 = vrot.slane %v2360, %v2366
      %2368 = vrot.lane.b32.xlu0 %v2367, 112
      %v2369 = vpop.permute.xlu0 %2368
      %2370 = vrot.lane.b32.xlu0 %v2367, 80
      %v2371 = vpop.permute.xlu0 %2370
      %v2373 = vsel %vm213, %v2369, 0
      %v2376 = vsel %vm213, %v2371, 0
      %2378 = vmatprep.subr.bf16.mxu0 0
      %2379 = vmatpush1.bf16.xpose.msra.mxu0 0
      %2380 = vmatprep.subr.bf16.mxu0 0
      %2381 = vmatpush1.bf16.xpose.msra.mxu0 0
      %2382 = vmatprep.subr.bf16.mxu0 0
      %2383 = vmatpush1.bf16.xpose.msra.mxu0 0
      %2384 = vmatprep.subr.bf16.mxu0 0
      %2385 = vmatpush1.bf16.xpose.msra.mxu0 0
      %2386 = vmatprep.subr.bf16.mxu0 0
      %2387 = vmatpush1.bf16.xpose.msra.mxu0 0
      %2388 = vmatprep.subr.bf16.mxu0 0
      %2389 = vmatpush1.bf16.xpose.msra.mxu0 0
      %2390 = vmatprep.subr.bf16.mxu0 0
      %2391 = vmatpush1.bf16.xpose.msra.mxu0 0
      %2392 = vmatprep.subr.bf16.mxu0 0
      %2393 = vmatpush1.bf16.xpose.msra.mxu0 %v2376
      %2394 = vmatprep.subr.bf16.mxu0 0
      %2395 = vmatpush2.bf16.xpose.msra.mxu0 0
      %2396 = vmatprep.subr.bf16.mxu0 0
      %2397 = vmatpush2.bf16.xpose.msra.mxu0 0
      %2398 = vmatprep.subr.bf16.mxu0 0
      %2399 = vmatpush2.bf16.xpose.msra.mxu0 0
      %2400 = vmatprep.subr.bf16.mxu0 0
      %2401 = vmatpush2.bf16.xpose.msra.mxu0 0
      %2402 = vmatprep.subr.bf16.mxu0 0
      %2403 = vmatpush2.bf16.xpose.msra.mxu0 0
      %2404 = vmatprep.subr.bf16.mxu0 0
      %2405 = vmatpush2.bf16.xpose.msra.mxu0 0
      %2406 = vmatprep.subr.bf16.mxu0 0
      %2407 = vmatpush2.bf16.xpose.msra.mxu0 0
      %2408 = vmatprep.subr.bf16.mxu0 0
      %2409 = vmatpush2.bf16.xpose.msra.mxu0 0
      %2410 = vmatprep.mubr.bf16.mxu0 0
      %2411 = vmatmul.mubr.bf16.gmra.mxu0 %v2373
      %v2412 = vpop.f32.mrf.mxu0
      %v2413 = vadd.f32 0.0, %v2412
      %v2414 = vpop.f32.mrf.mxu0
      %v2415 = vpop.f32.mrf.mxu0
      %v2416 = vpop.f32.mrf.mxu0
      %2417 = vdwg.mxu0
      %v2420 = vunpack.c.l.s4 1966171168
      %v2421 = vunpack.c.0.s8 %v2420
      %v2422 = vlaneseq
      %v2423 = vshrl.u32 %v2422, 7
      %v2424 = vsub.s32 %v2421, %v2423
      %v2425 = vrot.slane %v2284, %v2424
      %v2427 = vunpack.c.l.s4 1966171168
      %v2428 = vunpack.c.0.s8 %v2427
      %v2429 = vlaneseq
      %v2430 = vshrl.u32 %v2429, 7
      %v2431 = vsub.s32 %v2428, %v2430
      %v2432 = vrot.slane %v2425, %v2431
      %2433 = vrot.lane.b32.xlu0 %v2432, 112
      %v2434 = vpop.permute.xlu0 %2433
      %2435 = vrot.lane.b32.xlu0 %v2432, 80
      %v2436 = vpop.permute.xlu0 %2435
      %v2438 = vsel %vm213, %v2434, 0
      %v2441 = vsel %vm213, %v2436, 0
      %2443 = vmatprep.subr.bf16.mxu0 0
      %2444 = vmatpush1.bf16.xpose.msra.mxu0 0
      %2445 = vmatprep.subr.bf16.mxu0 0
      %2446 = vmatpush1.bf16.xpose.msra.mxu0 0
      %2447 = vmatprep.subr.bf16.mxu0 0
      %2448 = vmatpush1.bf16.xpose.msra.mxu0 0
      %2449 = vmatprep.subr.bf16.mxu0 0
      %2450 = vmatpush1.bf16.xpose.msra.mxu0 0
      %2451 = vmatprep.subr.bf16.mxu0 0
      %2452 = vmatpush1.bf16.xpose.msra.mxu0 0
      %2453 = vmatprep.subr.bf16.mxu0 0
      %2454 = vmatpush1.bf16.xpose.msra.mxu0 0
      %2455 = vmatprep.subr.bf16.mxu0 0
      %2456 = vmatpush1.bf16.xpose.msra.mxu0 0
      %2457 = vmatprep.subr.bf16.mxu0 0
      %2458 = vmatpush1.bf16.xpose.msra.mxu0 %v2441
      %2459 = vmatprep.subr.bf16.mxu0 0
      %2460 = vmatpush2.bf16.xpose.msra.mxu0 0
      %2461 = vmatprep.subr.bf16.mxu0 0
      %2462 = vmatpush2.bf16.xpose.msra.mxu0 0
      %2463 = vmatprep.subr.bf16.mxu0 0
      %2464 = vmatpush2.bf16.xpose.msra.mxu0 0
      %2465 = vmatprep.subr.bf16.mxu0 0
      %2466 = vmatpush2.bf16.xpose.msra.mxu0 0
      %2467 = vmatprep.subr.bf16.mxu0 0
      %2468 = vmatpush2.bf16.xpose.msra.mxu0 0
      %2469 = vmatprep.subr.bf16.mxu0 0
      %2470 = vmatpush2.bf16.xpose.msra.mxu0 0
      %2471 = vmatprep.subr.bf16.mxu0 0
      %2472 = vmatpush2.bf16.xpose.msra.mxu0 0
      %2473 = vmatprep.subr.bf16.mxu0 0
      %2474 = vmatpush2.bf16.xpose.msra.mxu0 0
      %2475 = vmatprep.mubr.bf16.mxu0 0
      %2476 = vmatmul.mubr.bf16.gmra.mxu0 %v2438
      %v2477 = vpop.f32.mrf.mxu0
      %v2478 = vadd.f32 0.0, %v2477
      %v2479 = vpop.f32.mrf.mxu0
      %v2480 = vpop.f32.mrf.mxu0
      %v2481 = vpop.f32.mrf.mxu0
      %2482 = vdwg.mxu0
      %v2485 = vunpack.c.l.s4 1966171168
      %v2486 = vunpack.c.0.s8 %v2485
      %v2487 = vlaneseq
      %v2488 = vshrl.u32 %v2487, 7
      %v2489 = vsub.s32 %v2486, %v2488
      %v2490 = vrot.slane %v2285, %v2489
      %v2492 = vunpack.c.l.s4 1966171168
      %v2493 = vunpack.c.0.s8 %v2492
      %v2494 = vlaneseq
      %v2495 = vshrl.u32 %v2494, 7
      %v2496 = vsub.s32 %v2493, %v2495
      %v2497 = vrot.slane %v2490, %v2496
      %2498 = vrot.lane.b32.xlu0 %v2497, 112
      %v2499 = vpop.permute.xlu0 %2498
      %2500 = vrot.lane.b32.xlu0 %v2497, 80
      %v2501 = vpop.permute.xlu0 %2500
      %v2503 = vsel %vm213, %v2499, 0
      %v2506 = vsel %vm213, %v2501, 0
      %2508 = vmatprep.subr.bf16.mxu0 0
      %2509 = vmatpush1.bf16.xpose.msra.mxu0 0
      %2510 = vmatprep.subr.bf16.mxu0 0
      %2511 = vmatpush1.bf16.xpose.msra.mxu0 0
      %2512 = vmatprep.subr.bf16.mxu0 0
      %2513 = vmatpush1.bf16.xpose.msra.mxu0 0
      %2514 = vmatprep.subr.bf16.mxu0 0
      %2515 = vmatpush1.bf16.xpose.msra.mxu0 0
      %2516 = vmatprep.subr.bf16.mxu0 0
      %2517 = vmatpush1.bf16.xpose.msra.mxu0 0
      %2518 = vmatprep.subr.bf16.mxu0 0
      %2519 = vmatpush1.bf16.xpose.msra.mxu0 0
      %2520 = vmatprep.subr.bf16.mxu0 0
      %2521 = vmatpush1.bf16.xpose.msra.mxu0 0
      %2522 = vmatprep.subr.bf16.mxu0 0
      %2523 = vmatpush1.bf16.xpose.msra.mxu0 %v2506
      %2524 = vmatprep.subr.bf16.mxu0 0
      %2525 = vmatpush2.bf16.xpose.msra.mxu0 0
      %2526 = vmatprep.subr.bf16.mxu0 0
      %2527 = vmatpush2.bf16.xpose.msra.mxu0 0
      %2528 = vmatprep.subr.bf16.mxu0 0
      %2529 = vmatpush2.bf16.xpose.msra.mxu0 0
      %2530 = vmatprep.subr.bf16.mxu0 0
      %2531 = vmatpush2.bf16.xpose.msra.mxu0 0
      %2532 = vmatprep.subr.bf16.mxu0 0
      %2533 = vmatpush2.bf16.xpose.msra.mxu0 0
      %2534 = vmatprep.subr.bf16.mxu0 0
      %2535 = vmatpush2.bf16.xpose.msra.mxu0 0
      %2536 = vmatprep.subr.bf16.mxu0 0
      %2537 = vmatpush2.bf16.xpose.msra.mxu0 0
      %2538 = vmatprep.subr.bf16.mxu0 0
      %2539 = vmatpush2.bf16.xpose.msra.mxu0 0
      %2540 = vmatprep.mubr.bf16.mxu0 0
      %2541 = vmatmul.mubr.bf16.gmra.mxu0 %v2503
      %v2542 = vpop.f32.mrf.mxu0
      %v2543 = vadd.f32 0.0, %v2542
      %v2544 = vpop.f32.mrf.mxu0
      %v2545 = vpop.f32.mrf.mxu0
      %v2546 = vpop.f32.mrf.mxu0
      %2547 = vdwg.mxu0
      %v2548 = vunpack.c.l.bf16 %v2282
      %v2549 = vunpack.c.l.bf16 %v2283
      %v2550 = vunpack.c.l.bf16 %v2284
      %v2551 = vunpack.c.l.bf16 %v2285
      %v2552 = vlaneseq
      %v2553 = vshrl.u32 %v2552, 7
      %v2554 = vsub.s32 0, %v2553
      %v2555 = vrot.slane %v2287, %v2554
      %v2558 = vunpack.c.l.s4 1983009808
      %v2559 = vunpack.c.0.s8 %v2558
      %v2560 = vlaneseq
      %v2561 = vshrl.u32 %v2560, 7
      %v2562 = vsub.s32 %v2559, %v2561
      %v2563 = vrot.slane %v2555, %v2562
      %2564 = vrot.lane.b32.xlu0 %v2563, 96
      %v2565 = vpop.permute.xlu0 %2564
      %v2567 = vmul.f32 %v2548, %v2565
      %v2568 = vmul.f32 %v2549, %v2565
      %v2569 = vmul.f32 %v2550, %v2565
      %v2570 = vmul.f32 %v2551, %v2565
      %v2576 = vunpack.c.l.s4 1983009808
      %v2577 = vunpack.c.0.s8 %v2576
      %v2578 = vlaneseq
      %v2579 = vshrl.u32 %v2578, 7
      %v2580 = vsub.s32 %v2577, %v2579
      %v2581 = vrot.slane %v2567, %v2580
      %v2583 = vunpack.c.l.s4 1983009808
      %v2584 = vunpack.c.0.s8 %v2583
      %v2585 = vlaneseq
      %v2586 = vshrl.u32 %v2585, 7
      %v2587 = vsub.s32 %v2584, %v2586
      %v2588 = vrot.slane %v2568, %v2587
      %v2590 = vunpack.c.l.s4 1983009808
      %v2591 = vunpack.c.0.s8 %v2590
      %v2592 = vlaneseq
      %v2593 = vshrl.u32 %v2592, 7
      %v2594 = vsub.s32 %v2591, %v2593
      %v2595 = vrot.slane %v2569, %v2594
      %v2597 = vunpack.c.l.s4 1983009808
      %v2598 = vunpack.c.0.s8 %v2597
      %v2599 = vlaneseq
      %v2600 = vshrl.u32 %v2599, 7
      %v2601 = vsub.s32 %v2598, %v2600
      %v2602 = vrot.slane %v2570, %v2601
      %2603 = vrot.lane.b32.xlu0 %v2581, 112
      %v2604 = vpop.permute.xlu0 %2603
      %2605 = vrot.lane.b32.xlu0 %v2588, 112
      %v2606 = vpop.permute.xlu0 %2605
      %2607 = vrot.lane.b32.xlu0 %v2595, 112
      %v2608 = vpop.permute.xlu0 %2607
      %2609 = vrot.lane.b32.xlu0 %v2602, 112
      %v2610 = vpop.permute.xlu0 %2609
      %v2615 = vsel %vm472, %v2604, 0.0
      %2616 = vadd.xlane.f32.xlu0 %v2615
      %v2617 = vpop.xlane.xlu0 %2616
      %v2618 = vsel %vm472, %v2606, 0.0
      %2619 = vadd.xlane.f32.xlu0 %v2618
      %v2620 = vpop.xlane.xlu0 %2619
      %v2621 = vsel %vm472, %v2608, 0.0
      %2622 = vadd.xlane.f32.xlu0 %v2621
      %v2623 = vpop.xlane.xlu0 %2622
      %v2624 = vsel %vm472, %v2610, 0.0
      %2625 = vadd.xlane.f32.xlu0 %v2624
      %v2626 = vpop.xlane.xlu0 %2625
      %v2627 = vsel %vm485, %v2348, -inf
      %2628 = vmax.xlane.f32.xlu0 %v2627
      %v2629 = vpop.xlane.xlu0 %2628
      %v2630 = vsel %vm485, %v2413, -inf
      %2631 = vmax.xlane.f32.xlu0 %v2630
      %v2632 = vpop.xlane.xlu0 %2631
      %v2633 = vsel %vm485, %v2478, -inf
      %2634 = vmax.xlane.f32.xlu0 %v2633
      %v2635 = vpop.xlane.xlu0 %2634
      %v2636 = vsel %vm485, %v2543, -inf
      %2637 = vmax.xlane.f32.xlu0 %v2636
      %v2638 = vpop.xlane.xlu0 %2637
      %v2639 = vmax.f32 %v2629, %v2617
      %v2640 = vmax.f32 %v2632, %v2620
      %v2641 = vmax.f32 %v2635, %v2623
      %v2642 = vmax.f32 %v2638, %v2626
      %v2643 = vsub.f32 %v2348, %v2639
      %v2644 = vsub.f32 %v2413, %v2640
      %v2645 = vsub.f32 %v2478, %v2641
      %v2646 = vsub.f32 %v2543, %v2642
      %v2647 = vmul.f32 %v2643, 1.442695
      %v2648 = vpow.pop %v2647
      %v2649 = vmul.f32 %v2644, 1.442695
      %v2650 = vpow.pop %v2649
      %v2651 = vmul.f32 %v2645, 1.442695
      %v2652 = vpow.pop %v2651
      %v2653 = vmul.f32 %v2646, 1.442695
      %v2654 = vpow.pop %v2653
      %v2655 = vsub.f32 %v2617, %v2639
      %v2656 = vsub.f32 %v2620, %v2640
      %v2657 = vsub.f32 %v2623, %v2641
      %v2658 = vsub.f32 %v2626, %v2642
      %v2659 = vmul.f32 %v2655, 1.442695
      %v2660 = vpow.pop %v2659
      %v2661 = vmul.f32 %v2656, 1.442695
      %v2662 = vpow.pop %v2661
      %v2663 = vmul.f32 %v2657, 1.442695
      %v2664 = vpow.pop %v2663
      %v2665 = vmul.f32 %v2658, 1.442695
      %v2666 = vpow.pop %v2665
      %v2667 = vsel %vm485, %v2648, 0.0
      %2668 = vadd.xlane.f32.xlu0 %v2667
      %v2669 = vpop.xlane.xlu0 %2668
      %v2670 = vsel %vm485, %v2650, 0.0
      %2671 = vadd.xlane.f32.xlu0 %v2670
      %v2672 = vpop.xlane.xlu0 %2671
      %v2673 = vsel %vm485, %v2652, 0.0
      %2674 = vadd.xlane.f32.xlu0 %v2673
      %v2675 = vpop.xlane.xlu0 %2674
      %v2676 = vsel %vm485, %v2654, 0.0
      %2677 = vadd.xlane.f32.xlu0 %v2676
      %v2678 = vpop.xlane.xlu0 %2677
      %v2679 = vadd.f32 %v2669, %v2660
      %v2680 = vadd.f32 %v2672, %v2662
      %v2681 = vadd.f32 %v2675, %v2664
      %v2682 = vadd.f32 %v2678, %v2666
      %v2683 = vpack.c.bf16 %v2648, %v2648
      %v2684 = vpack.c.bf16 %v2650, %v2650
      %v2685 = vpack.c.bf16 %v2652, %v2652
      %v2686 = vpack.c.bf16 %v2654, %v2654
      %v2687 = vmul.f32 %v2660, %v2555
      %v2688 = vmul.f32 %v2662, %v2555
      %v2689 = vmul.f32 %v2664, %v2555
      %v2690 = vmul.f32 %v2666, %v2555
      %2691 = vrot.lane.b32.xlu0 %v2302, 48
      %v2692 = vpop.permute.xlu0 %2691
      %2694 = vrot.lane.b32.xlu0 %v2687, 48
      %v2695 = vpop.permute.xlu0 %2694
      %v2698 = vsel %vm556, %v2683, 0
      %v2701 = vsel %vm560, %v2692, 0
      %2703 = vmatprep.subr.bf16.mxu0 0
      %2704 = vmatpush1.bf16.msra.mxu0 0
      %2705 = vmatprep.subr.bf16.mxu0 0
      %2706 = vmatpush1.bf16.msra.mxu0 0
      %2707 = vmatprep.subr.bf16.mxu0 0
      %2708 = vmatpush1.bf16.msra.mxu0 0
      %2709 = vmatprep.subr.bf16.mxu0 0
      %2710 = vmatpush1.bf16.msra.mxu0 0
      %2711 = vmatprep.subr.bf16.mxu0 0
      %2712 = vmatpush1.bf16.msra.mxu0 0
      %2713 = vmatprep.subr.bf16.mxu0 0
      %2714 = vmatpush1.bf16.msra.mxu0 0
      %2715 = vmatprep.subr.bf16.mxu0 0
      %2716 = vmatpush1.bf16.msra.mxu0 0
      %2717 = vmatprep.subr.bf16.mxu0 0
      %2718 = vmatpush1.bf16.msra.mxu0 %v2701
      %2719 = vmatprep.subr.bf16.mxu0 0
      %2720 = vmatpush2.bf16.msra.mxu0 0
      %2721 = vmatprep.subr.bf16.mxu0 0
      %2722 = vmatpush2.bf16.msra.mxu0 0
      %2723 = vmatprep.subr.bf16.mxu0 0
      %2724 = vmatpush2.bf16.msra.mxu0 0
      %2725 = vmatprep.subr.bf16.mxu0 0
      %2726 = vmatpush2.bf16.msra.mxu0 0
      %2727 = vmatprep.subr.bf16.mxu0 0
      %2728 = vmatpush2.bf16.msra.mxu0 0
      %2729 = vmatprep.subr.bf16.mxu0 0
      %2730 = vmatpush2.bf16.msra.mxu0 0
      %2731 = vmatprep.subr.bf16.mxu0 0
      %2732 = vmatpush2.bf16.msra.mxu0 0
      %2733 = vmatprep.subr.bf16.mxu0 0
      %2734 = vmatpush2.bf16.msra.mxu0 0
      %2735 = vmatprep.mubr.bf16.mxu0 0
      %2736 = vmatmul.mubr.bf16.gmra.mxu0 %v2698
      %v2737 = vpop.f32.mrf.mxu0
      %v2738 = vadd.f32 %v2695, %v2737
      %v2739 = vpop.f32.mrf.mxu0
      %v2740 = vpop.f32.mrf.mxu0
      %v2741 = vpop.f32.mrf.mxu0
      %2742 = vdwg.mxu0
      %2743 = vrot.lane.b32.xlu0 %v2367, 48
      %v2744 = vpop.permute.xlu0 %2743
      %2746 = vrot.lane.b32.xlu0 %v2688, 48
      %v2747 = vpop.permute.xlu0 %2746
      %v2750 = vsel %vm556, %v2684, 0
      %v2753 = vsel %vm560, %v2744, 0
      %2755 = vmatprep.subr.bf16.mxu0 0
      %2756 = vmatpush1.bf16.msra.mxu0 0
      %2757 = vmatprep.subr.bf16.mxu0 0
      %2758 = vmatpush1.bf16.msra.mxu0 0
      %2759 = vmatprep.subr.bf16.mxu0 0
      %2760 = vmatpush1.bf16.msra.mxu0 0
      %2761 = vmatprep.subr.bf16.mxu0 0
      %2762 = vmatpush1.bf16.msra.mxu0 0
      %2763 = vmatprep.subr.bf16.mxu0 0
      %2764 = vmatpush1.bf16.msra.mxu0 0
      %2765 = vmatprep.subr.bf16.mxu0 0
      %2766 = vmatpush1.bf16.msra.mxu0 0
      %2767 = vmatprep.subr.bf16.mxu0 0
      %2768 = vmatpush1.bf16.msra.mxu0 0
      %2769 = vmatprep.subr.bf16.mxu0 0
      %2770 = vmatpush1.bf16.msra.mxu0 %v2753
      %2771 = vmatprep.subr.bf16.mxu0 0
      %2772 = vmatpush2.bf16.msra.mxu0 0
      %2773 = vmatprep.subr.bf16.mxu0 0
      %2774 = vmatpush2.bf16.msra.mxu0 0
      %2775 = vmatprep.subr.bf16.mxu0 0
      %2776 = vmatpush2.bf16.msra.mxu0 0
      %2777 = vmatprep.subr.bf16.mxu0 0
      %2778 = vmatpush2.bf16.msra.mxu0 0
      %2779 = vmatprep.subr.bf16.mxu0 0
      %2780 = vmatpush2.bf16.msra.mxu0 0
      %2781 = vmatprep.subr.bf16.mxu0 0
      %2782 = vmatpush2.bf16.msra.mxu0 0
      %2783 = vmatprep.subr.bf16.mxu0 0
      %2784 = vmatpush2.bf16.msra.mxu0 0
      %2785 = vmatprep.subr.bf16.mxu0 0
      %2786 = vmatpush2.bf16.msra.mxu0 0
      %2787 = vmatprep.mubr.bf16.mxu0 0
      %2788 = vmatmul.mubr.bf16.gmra.mxu0 %v2750
      %v2789 = vpop.f32.mrf.mxu0
      %v2790 = vadd.f32 %v2747, %v2789
      %v2791 = vpop.f32.mrf.mxu0
      %v2792 = vpop.f32.mrf.mxu0
      %v2793 = vpop.f32.mrf.mxu0
      %2794 = vdwg.mxu0
      %2795 = vrot.lane.b32.xlu0 %v2432, 48
      %v2796 = vpop.permute.xlu0 %2795
      %2798 = vrot.lane.b32.xlu0 %v2689, 48
      %v2799 = vpop.permute.xlu0 %2798
      %v2802 = vsel %vm556, %v2685, 0
      %v2805 = vsel %vm560, %v2796, 0
      %2807 = vmatprep.subr.bf16.mxu0 0
      %2808 = vmatpush1.bf16.msra.mxu0 0
      %2809 = vmatprep.subr.bf16.mxu0 0
      %2810 = vmatpush1.bf16.msra.mxu0 0
      %2811 = vmatprep.subr.bf16.mxu0 0
      %2812 = vmatpush1.bf16.msra.mxu0 0
      %2813 = vmatprep.subr.bf16.mxu0 0
      %2814 = vmatpush1.bf16.msra.mxu0 0
      %2815 = vmatprep.subr.bf16.mxu0 0
      %2816 = vmatpush1.bf16.msra.mxu0 0
      %2817 = vmatprep.subr.bf16.mxu0 0
      %2818 = vmatpush1.bf16.msra.mxu0 0
      %2819 = vmatprep.subr.bf16.mxu0 0
      %2820 = vmatpush1.bf16.msra.mxu0 0
      %2821 = vmatprep.subr.bf16.mxu0 0
      %2822 = vmatpush1.bf16.msra.mxu0 %v2805
      %2823 = vmatprep.subr.bf16.mxu0 0
      %2824 = vmatpush2.bf16.msra.mxu0 0
      %2825 = vmatprep.subr.bf16.mxu0 0
      %2826 = vmatpush2.bf16.msra.mxu0 0
      %2827 = vmatprep.subr.bf16.mxu0 0
      %2828 = vmatpush2.bf16.msra.mxu0 0
      %2829 = vmatprep.subr.bf16.mxu0 0
      %2830 = vmatpush2.bf16.msra.mxu0 0
      %2831 = vmatprep.subr.bf16.mxu0 0
      %2832 = vmatpush2.bf16.msra.mxu0 0
      %2833 = vmatprep.subr.bf16.mxu0 0
      %2834 = vmatpush2.bf16.msra.mxu0 0
      %2835 = vmatprep.subr.bf16.mxu0 0
      %2836 = vmatpush2.bf16.msra.mxu0 0
      %2837 = vmatprep.subr.bf16.mxu0 0
      %2838 = vmatpush2.bf16.msra.mxu0 0
      %2839 = vmatprep.mubr.bf16.mxu0 0
      %2840 = vmatmul.mubr.bf16.gmra.mxu0 %v2802
      %v2841 = vpop.f32.mrf.mxu0
      %v2842 = vadd.f32 %v2799, %v2841
      %v2843 = vpop.f32.mrf.mxu0
      %v2844 = vpop.f32.mrf.mxu0
      %v2845 = vpop.f32.mrf.mxu0
      %2846 = vdwg.mxu0
      %2847 = vrot.lane.b32.xlu0 %v2497, 48
      %v2848 = vpop.permute.xlu0 %2847
      %2850 = vrot.lane.b32.xlu0 %v2690, 48
      %v2851 = vpop.permute.xlu0 %2850
      %v2854 = vsel %vm556, %v2686, 0
      %v2857 = vsel %vm560, %v2848, 0
      %2859 = vmatprep.subr.bf16.mxu0 0
      %2860 = vmatpush1.bf16.msra.mxu0 0
      %2861 = vmatprep.subr.bf16.mxu0 0
      %2862 = vmatpush1.bf16.msra.mxu0 0
      %2863 = vmatprep.subr.bf16.mxu0 0
      %2864 = vmatpush1.bf16.msra.mxu0 0
      %2865 = vmatprep.subr.bf16.mxu0 0
      %2866 = vmatpush1.bf16.msra.mxu0 0
      %2867 = vmatprep.subr.bf16.mxu0 0
      %2868 = vmatpush1.bf16.msra.mxu0 0
      %2869 = vmatprep.subr.bf16.mxu0 0
      %2870 = vmatpush1.bf16.msra.mxu0 0
      %2871 = vmatprep.subr.bf16.mxu0 0
      %2872 = vmatpush1.bf16.msra.mxu0 0
      %2873 = vmatprep.subr.bf16.mxu0 0
      %2874 = vmatpush1.bf16.msra.mxu0 %v2857
      %2875 = vmatprep.subr.bf16.mxu0 0
      %2876 = vmatpush2.bf16.msra.mxu0 0
      %2877 = vmatprep.subr.bf16.mxu0 0
      %2878 = vmatpush2.bf16.msra.mxu0 0
      %2879 = vmatprep.subr.bf16.mxu0 0
      %2880 = vmatpush2.bf16.msra.mxu0 0
      %2881 = vmatprep.subr.bf16.mxu0 0
      %2882 = vmatpush2.bf16.msra.mxu0 0
      %2883 = vmatprep.subr.bf16.mxu0 0
      %2884 = vmatpush2.bf16.msra.mxu0 0
      %2885 = vmatprep.subr.bf16.mxu0 0
      %2886 = vmatpush2.bf16.msra.mxu0 0
      %2887 = vmatprep.subr.bf16.mxu0 0
      %2888 = vmatpush2.bf16.msra.mxu0 0
      %2889 = vmatprep.subr.bf16.mxu0 0
      %2890 = vmatpush2.bf16.msra.mxu0 0
      %2891 = vmatprep.mubr.bf16.mxu0 0
      %2892 = vmatmul.mubr.bf16.gmra.mxu0 %v2854
      %v2893 = vpop.f32.mrf.mxu0
      %v2894 = vadd.f32 %v2851, %v2893
      %v2895 = vpop.f32.mrf.mxu0
      %v2896 = vpop.f32.mrf.mxu0
      %v2897 = vpop.f32.mrf.mxu0
      %2898 = vdwg.mxu0
      %v2899 = vrcp.pop %v2679
      %v2900 = vrcp.pop %v2680
      %v2901 = vrcp.pop %v2681
      %v2902 = vrcp.pop %v2682
      %v2903 = vmul.f32 %v2738, %v2899
      %v2904 = vmul.f32 %v2790, %v2900
      %v2905 = vmul.f32 %v2842, %v2901
      %v2906 = vmul.f32 %v2894, %v2902
      %v2907 = vpack.c.bf16 %v2903, %v2903
      %v2908 = vpack.c.bf16 %v2904, %v2904
      %v2909 = vpack.c.bf16 %v2905, %v2905
      %v2910 = vpack.c.bf16 %v2906, %v2906
      %v2913 = vunpack.c.l.s4 1966171168
      %v2914 = vunpack.c.0.s8 %v2913
      %v2915 = vlaneseq
      %v2916 = vshrl.u32 %v2915, 7
      %v2917 = vsub.s32 %v2914, %v2916
      %v2918 = vrot.slane %v2286, %v2917
      %v2920 = vunpack.c.l.s4 1966171168
      %v2921 = vunpack.c.0.s8 %v2920
      %v2922 = vlaneseq
      %v2923 = vshrl.u32 %v2922, 7
      %v2924 = vsub.s32 %v2921, %v2923
      %v2925 = vrot.slane %v2918, %v2924
      %2926 = vrot.lane.b32.xlu0 %v2925, 112
      %v2927 = vpop.permute.xlu0 %2926
      %v2929 = vsel %vm213, %v2927, 0
      %2931 = vmatprep.subr.bf16.mxu0 0
      %2932 = vmatpush1.bf16.xpose.msra.mxu0 0
      %2933 = vmatprep.subr.bf16.mxu0 0
      %2934 = vmatpush1.bf16.xpose.msra.mxu0 0
      %2935 = vmatprep.subr.bf16.mxu0 0
      %2936 = vmatpush1.bf16.xpose.msra.mxu0 0
      %2937 = vmatprep.subr.bf16.mxu0 0
      %2938 = vmatpush1.bf16.xpose.msra.mxu0 0
      %2939 = vmatprep.subr.bf16.mxu0 0
      %2940 = vmatpush1.bf16.xpose.msra.mxu0 0
      %2941 = vmatprep.subr.bf16.mxu0 0
      %2942 = vmatpush1.bf16.xpose.msra.mxu0 0
      %2943 = vmatprep.subr.bf16.mxu0 0
      %2944 = vmatpush1.bf16.xpose.msra.mxu0 0
      %2945 = vmatprep.subr.bf16.mxu0 0
      %2946 = vmatpush1.bf16.xpose.msra.mxu0 %v2311
      %2947 = vmatprep.subr.bf16.mxu0 0
      %2948 = vmatpush2.bf16.xpose.msra.mxu0 0
      %2949 = vmatprep.subr.bf16.mxu0 0
      %2950 = vmatpush2.bf16.xpose.msra.mxu0 0
      %2951 = vmatprep.subr.bf16.mxu0 0
      %2952 = vmatpush2.bf16.xpose.msra.mxu0 0
      %2953 = vmatprep.subr.bf16.mxu0 0
      %2954 = vmatpush2.bf16.xpose.msra.mxu0 0
      %2955 = vmatprep.subr.bf16.mxu0 0
      %2956 = vmatpush2.bf16.xpose.msra.mxu0 0
      %2957 = vmatprep.subr.bf16.mxu0 0
      %2958 = vmatpush2.bf16.xpose.msra.mxu0 0
      %2959 = vmatprep.subr.bf16.mxu0 0
      %2960 = vmatpush2.bf16.xpose.msra.mxu0 0
      %2961 = vmatprep.subr.bf16.mxu0 0
      %2962 = vmatpush2.bf16.xpose.msra.mxu0 0
      %2963 = vmatprep.mubr.bf16.mxu0 0
      %2964 = vmatmul.mubr.bf16.gmra.mxu0 %v2929
      %v2965 = vpop.f32.mrf.mxu0
      %v2966 = vadd.f32 0.0, %v2965
      %v2967 = vpop.f32.mrf.mxu0
      %v2968 = vpop.f32.mrf.mxu0
      %v2969 = vpop.f32.mrf.mxu0
      %2970 = vdwg.mxu0
      %2971 = vmatprep.subr.bf16.mxu0 0
      %2972 = vmatpush1.bf16.xpose.msra.mxu0 0
      %2973 = vmatprep.subr.bf16.mxu0 0
      %2974 = vmatpush1.bf16.xpose.msra.mxu0 0
      %2975 = vmatprep.subr.bf16.mxu0 0
      %2976 = vmatpush1.bf16.xpose.msra.mxu0 0
      %2977 = vmatprep.subr.bf16.mxu0 0
      %2978 = vmatpush1.bf16.xpose.msra.mxu0 0
      %2979 = vmatprep.subr.bf16.mxu0 0
      %2980 = vmatpush1.bf16.xpose.msra.mxu0 0
      %2981 = vmatprep.subr.bf16.mxu0 0
      %2982 = vmatpush1.bf16.xpose.msra.mxu0 0
      %2983 = vmatprep.subr.bf16.mxu0 0
      %2984 = vmatpush1.bf16.xpose.msra.mxu0 0
      %2985 = vmatprep.subr.bf16.mxu0 0
      %2986 = vmatpush1.bf16.xpose.msra.mxu0 %v2376
      %2987 = vmatprep.subr.bf16.mxu0 0
      %2988 = vmatpush2.bf16.xpose.msra.mxu0 0
      %2989 = vmatprep.subr.bf16.mxu0 0
      %2990 = vmatpush2.bf16.xpose.msra.mxu0 0
      %2991 = vmatprep.subr.bf16.mxu0 0
      %2992 = vmatpush2.bf16.xpose.msra.mxu0 0
      %2993 = vmatprep.subr.bf16.mxu0 0
      %2994 = vmatpush2.bf16.xpose.msra.mxu0 0
      %2995 = vmatprep.subr.bf16.mxu0 0
      %2996 = vmatpush2.bf16.xpose.msra.mxu0 0
      %2997 = vmatprep.subr.bf16.mxu0 0
      %2998 = vmatpush2.bf16.xpose.msra.mxu0 0
      %2999 = vmatprep.subr.bf16.mxu0 0
      %3000 = vmatpush2.bf16.xpose.msra.mxu0 0
      %3001 = vmatprep.subr.bf16.mxu0 0
      %3002 = vmatpush2.bf16.xpose.msra.mxu0 0
      %3003 = vmatprep.mubr.bf16.mxu0 0
      %3004 = vmatmul.mubr.bf16.gmra.mxu0 %v2929
      %v3005 = vpop.f32.mrf.mxu0
      %v3006 = vadd.f32 0.0, %v3005
      %v3007 = vpop.f32.mrf.mxu0
      %v3008 = vpop.f32.mrf.mxu0
      %v3009 = vpop.f32.mrf.mxu0
      %3010 = vdwg.mxu0
      %3011 = vmatprep.subr.bf16.mxu0 0
      %3012 = vmatpush1.bf16.xpose.msra.mxu0 0
      %3013 = vmatprep.subr.bf16.mxu0 0
      %3014 = vmatpush1.bf16.xpose.msra.mxu0 0
      %3015 = vmatprep.subr.bf16.mxu0 0
      %3016 = vmatpush1.bf16.xpose.msra.mxu0 0
      %3017 = vmatprep.subr.bf16.mxu0 0
      %3018 = vmatpush1.bf16.xpose.msra.mxu0 0
      %3019 = vmatprep.subr.bf16.mxu0 0
      %3020 = vmatpush1.bf16.xpose.msra.mxu0 0
      %3021 = vmatprep.subr.bf16.mxu0 0
      %3022 = vmatpush1.bf16.xpose.msra.mxu0 0
      %3023 = vmatprep.subr.bf16.mxu0 0
      %3024 = vmatpush1.bf16.xpose.msra.mxu0 0
      %3025 = vmatprep.subr.bf16.mxu0 0
      %3026 = vmatpush1.bf16.xpose.msra.mxu0 %v2441
      %3027 = vmatprep.subr.bf16.mxu0 0
      %3028 = vmatpush2.bf16.xpose.msra.mxu0 0
      %3029 = vmatprep.subr.bf16.mxu0 0
      %3030 = vmatpush2.bf16.xpose.msra.mxu0 0
      %3031 = vmatprep.subr.bf16.mxu0 0
      %3032 = vmatpush2.bf16.xpose.msra.mxu0 0
      %3033 = vmatprep.subr.bf16.mxu0 0
      %3034 = vmatpush2.bf16.xpose.msra.mxu0 0
      %3035 = vmatprep.subr.bf16.mxu0 0
      %3036 = vmatpush2.bf16.xpose.msra.mxu0 0
      %3037 = vmatprep.subr.bf16.mxu0 0
      %3038 = vmatpush2.bf16.xpose.msra.mxu0 0
      %3039 = vmatprep.subr.bf16.mxu0 0
      %3040 = vmatpush2.bf16.xpose.msra.mxu0 0
      %3041 = vmatprep.subr.bf16.mxu0 0
      %3042 = vmatpush2.bf16.xpose.msra.mxu0 0
      %3043 = vmatprep.mubr.bf16.mxu0 0
      %3044 = vmatmul.mubr.bf16.gmra.mxu0 %v2929
      %v3045 = vpop.f32.mrf.mxu0
      %v3046 = vadd.f32 0.0, %v3045
      %v3047 = vpop.f32.mrf.mxu0
      %v3048 = vpop.f32.mrf.mxu0
      %v3049 = vpop.f32.mrf.mxu0
      %3050 = vdwg.mxu0
      %3051 = vmatprep.subr.bf16.mxu0 0
      %3052 = vmatpush1.bf16.xpose.msra.mxu0 0
      %3053 = vmatprep.subr.bf16.mxu0 0
      %3054 = vmatpush1.bf16.xpose.msra.mxu0 0
      %3055 = vmatprep.subr.bf16.mxu0 0
      %3056 = vmatpush1.bf16.xpose.msra.mxu0 0
      %3057 = vmatprep.subr.bf16.mxu0 0
      %3058 = vmatpush1.bf16.xpose.msra.mxu0 0
      %3059 = vmatprep.subr.bf16.mxu0 0
      %3060 = vmatpush1.bf16.xpose.msra.mxu0 0
      %3061 = vmatprep.subr.bf16.mxu0 0
      %3062 = vmatpush1.bf16.xpose.msra.mxu0 0
      %3063 = vmatprep.subr.bf16.mxu0 0
      %3064 = vmatpush1.bf16.xpose.msra.mxu0 0
      %3065 = vmatprep.subr.bf16.mxu0 0
      %3066 = vmatpush1.bf16.xpose.msra.mxu0 %v2506
      %3067 = vmatprep.subr.bf16.mxu0 0
      %3068 = vmatpush2.bf16.xpose.msra.mxu0 0
      %3069 = vmatprep.subr.bf16.mxu0 0
      %3070 = vmatpush2.bf16.xpose.msra.mxu0 0
      %3071 = vmatprep.subr.bf16.mxu0 0
      %3072 = vmatpush2.bf16.xpose.msra.mxu0 0
      %3073 = vmatprep.subr.bf16.mxu0 0
      %3074 = vmatpush2.bf16.xpose.msra.mxu0 0
      %3075 = vmatprep.subr.bf16.mxu0 0
      %3076 = vmatpush2.bf16.xpose.msra.mxu0 0
      %3077 = vmatprep.subr.bf16.mxu0 0
      %3078 = vmatpush2.bf16.xpose.msra.mxu0 0
      %3079 = vmatprep.subr.bf16.mxu0 0
      %3080 = vmatpush2.bf16.xpose.msra.mxu0 0
      %3081 = vmatprep.subr.bf16.mxu0 0
      %3082 = vmatpush2.bf16.xpose.msra.mxu0 0
      %3083 = vmatprep.mubr.bf16.mxu0 0
      %3084 = vmatmul.mubr.bf16.gmra.mxu0 %v2929
      %v3085 = vpop.f32.mrf.mxu0
      %v3086 = vadd.f32 0.0, %v3085
      %v3087 = vpop.f32.mrf.mxu0
      %v3088 = vpop.f32.mrf.mxu0
      %v3089 = vpop.f32.mrf.mxu0
      %3090 = vdwg.mxu0
      %3092 = vrot.lane.b32.xlu0 %v2287, 96
      %v3093 = vpop.permute.xlu0 %3092
      %v3095 = vmul.f32 %v2287, %v3093
      %v3097 = vlaneseq
      %v3098 = vshrl.u32 %v3097, 7
      %v3099 = vsub.s32 0, %v3098
      %v3100 = vrot.slane %v3095, %v3099
      %3101 = vrot.lane.b32.xlu0 %v3100, 112
      %v3102 = vpop.permute.xlu0 %3101
      %v3104 = vsel %vm940, %v3102, 0.0
      %3105 = vadd.xlane.f32.xlu0 %v3104
      %v3106 = vpop.xlane.xlu0 %3105
      %v3107 = vrot.slane %v3106, 4
      %v3108 = vadd.f32 %v3106, %v3107
      %v3109 = vrot.slane %v3108, 2
      %v3110 = vadd.f32 %v3108, %v3109
      %v3111 = vrot.slane %v3110, 1
      %v3112 = vadd.f32 %v3110, %v3111
      %s3113 = vtos %v3112
      %v3114 = vsel %vm951, %v2966, -inf
      %v3115 = vsel %vm951, %v3006, -inf
      %v3116 = vsel %vm951, %v3046, -inf
      %v3117 = vsel %vm951, %v3086, -inf
      %v3118 = vmax.f32 %v3114, %v3115
      %v3119 = vmax.f32 %v3116, %v3117
      %v3120 = vmax.f32 %v3118, %v3119
      %3121 = vmax.xlane.f32.xlu0 %v3120
      %v3122 = vpop.xlane.xlu0 %3121
      %v3123 = vrot.slane %v3122, 4
      %v3124 = vmax.f32 %v3122, %v3123
      %v3125 = vrot.slane %v3124, 2
      %v3126 = vmax.f32 %v3124, %v3125
      %v3127 = vrot.slane %v3126, 1
      %v3128 = vmax.f32 %v3126, %v3127
      %s3129 = vtos %v3128
      %s3130 = smax.f32 %s3129, %s3113
      %v3131 = vstv %s3130
      %v3132 = vsub.f32 %v2966, %v3131
      %v3133 = vsub.f32 %v3006, %v3131
      %v3134 = vsub.f32 %v3046, %v3131
      %v3135 = vsub.f32 %v3086, %v3131
      %v3136 = vmul.f32 %v3132, 1.442695
      %v3137 = vpow.pop %v3136
      %v3138 = vmul.f32 %v3133, 1.442695
      %v3139 = vpow.pop %v3138
      %v3140 = vmul.f32 %v3134, 1.442695
      %v3141 = vpow.pop %v3140
      %v3142 = vmul.f32 %v3135, 1.442695
      %v3143 = vpow.pop %v3142
      %s3144 = ssub.f32 %s3113, %s3130
      %v3145 = vstv %s3144
      %v3146 = vmul.f32 %v3145, 1.442695
      %v3147 = vpow.pop %v3146
      %s3148 = vtos %v3147
      %v3149 = vsel %vm951, %v3137, 0.0
      %v3150 = vsel %vm951, %v3139, 0.0
      %v3151 = vadd.f32 %v3149, %v3150
      %v3152 = vsel %vm951, %v3141, 0.0
      %v3153 = vadd.f32 %v3151, %v3152
      %v3154 = vsel %vm951, %v3143, 0.0
      %v3155 = vadd.f32 %v3153, %v3154
      %3156 = vadd.xlane.f32.xlu0 %v3155
      %v3157 = vpop.xlane.xlu0 %3156
      %v3158 = vrot.slane %v3157, 4
      %v3159 = vadd.f32 %v3157, %v3158
      %v3160 = vrot.slane %v3159, 2
      %v3161 = vadd.f32 %v3159, %v3160
      %v3162 = vrot.slane %v3161, 1
      %v3163 = vadd.f32 %v3161, %v3162
      %s3164 = vtos %v3163
      %s3165 = sadd.f32 %s3164, %s3148
      %v3166 = vpack.c.bf16 %v3137, %v3137
      %v3167 = vpack.c.bf16 %v3139, %v3139
      %v3168 = vpack.c.bf16 %v3141, %v3141
      %v3169 = vpack.c.bf16 %v3143, %v3143
      %v3171 = vsel %vm556, %v3166, 0
      %3173 = vmatprep.subr.bf16.mxu0 0
      %3174 = vmatpush1.bf16.msra.mxu0 0
      %3175 = vmatprep.subr.bf16.mxu0 0
      %3176 = vmatpush1.bf16.msra.mxu0 0
      %3177 = vmatprep.subr.bf16.mxu0 0
      %3178 = vmatpush1.bf16.msra.mxu0 0
      %3179 = vmatprep.subr.bf16.mxu0 0
      %3180 = vmatpush1.bf16.msra.mxu0 0
      %3181 = vmatprep.subr.bf16.mxu0 0
      %3182 = vmatpush1.bf16.msra.mxu0 0
      %3183 = vmatprep.subr.bf16.mxu0 0
      %3184 = vmatpush1.bf16.msra.mxu0 0
      %3185 = vmatprep.subr.bf16.mxu0 0
      %3186 = vmatpush1.bf16.msra.mxu0 0
      %3187 = vmatprep.subr.bf16.mxu0 0
      %3188 = vmatpush1.bf16.msra.mxu0 %v2701
      %3189 = vmatprep.subr.bf16.mxu0 0
      %3190 = vmatpush2.bf16.msra.mxu0 0
      %3191 = vmatprep.subr.bf16.mxu0 0
      %3192 = vmatpush2.bf16.msra.mxu0 0
      %3193 = vmatprep.subr.bf16.mxu0 0
      %3194 = vmatpush2.bf16.msra.mxu0 0
      %3195 = vmatprep.subr.bf16.mxu0 0
      %3196 = vmatpush2.bf16.msra.mxu0 0
      %3197 = vmatprep.subr.bf16.mxu0 0
      %3198 = vmatpush2.bf16.msra.mxu0 0
      %3199 = vmatprep.subr.bf16.mxu0 0
      %3200 = vmatpush2.bf16.msra.mxu0 0
      %3201 = vmatprep.subr.bf16.mxu0 0
      %3202 = vmatpush2.bf16.msra.mxu0 0
      %3203 = vmatprep.subr.bf16.mxu0 0
      %3204 = vmatpush2.bf16.msra.mxu0 0
      %3205 = vmatprep.mubr.bf16.mxu0 0
      %3206 = vmatmul.mubr.bf16.gmra.mxu0 %v3171
      %v3207 = vpop.f32.mrf.mxu0
      %v3208 = vadd.f32 0.0, %v3207
      %v3209 = vpop.f32.mrf.mxu0
      %v3210 = vpop.f32.mrf.mxu0
      %v3211 = vpop.f32.mrf.mxu0
      %3212 = vdwg.mxu0
      %v3214 = vsel %vm556, %v3167, 0
      %3216 = vmatprep.subr.bf16.mxu0 0
      %3217 = vmatpush1.bf16.msra.mxu0 0
      %3218 = vmatprep.subr.bf16.mxu0 0
      %3219 = vmatpush1.bf16.msra.mxu0 0
      %3220 = vmatprep.subr.bf16.mxu0 0
      %3221 = vmatpush1.bf16.msra.mxu0 0
      %3222 = vmatprep.subr.bf16.mxu0 0
      %3223 = vmatpush1.bf16.msra.mxu0 0
      %3224 = vmatprep.subr.bf16.mxu0 0
      %3225 = vmatpush1.bf16.msra.mxu0 0
      %3226 = vmatprep.subr.bf16.mxu0 0
      %3227 = vmatpush1.bf16.msra.mxu0 0
      %3228 = vmatprep.subr.bf16.mxu0 0
      %3229 = vmatpush1.bf16.msra.mxu0 0
      %3230 = vmatprep.subr.bf16.mxu0 0
      %3231 = vmatpush1.bf16.msra.mxu0 %v2753
      %3232 = vmatprep.subr.bf16.mxu0 0
      %3233 = vmatpush2.bf16.msra.mxu0 0
      %3234 = vmatprep.subr.bf16.mxu0 0
      %3235 = vmatpush2.bf16.msra.mxu0 0
      %3236 = vmatprep.subr.bf16.mxu0 0
      %3237 = vmatpush2.bf16.msra.mxu0 0
      %3238 = vmatprep.subr.bf16.mxu0 0
      %3239 = vmatpush2.bf16.msra.mxu0 0
      %3240 = vmatprep.subr.bf16.mxu0 0
      %3241 = vmatpush2.bf16.msra.mxu0 0
      %3242 = vmatprep.subr.bf16.mxu0 0
      %3243 = vmatpush2.bf16.msra.mxu0 0
      %3244 = vmatprep.subr.bf16.mxu0 0
      %3245 = vmatpush2.bf16.msra.mxu0 0
      %3246 = vmatprep.subr.bf16.mxu0 0
      %3247 = vmatpush2.bf16.msra.mxu0 0
      %3248 = vmatprep.mubr.bf16.mxu0 0
      %3249 = vmatmul.mubr.bf16.gmra.mxu0 %v3214
      %v3250 = vpop.f32.mrf.mxu0
      %v3251 = vadd.f32 0.0, %v3250
      %v3252 = vpop.f32.mrf.mxu0
      %v3253 = vpop.f32.mrf.mxu0
      %v3254 = vpop.f32.mrf.mxu0
      %3255 = vdwg.mxu0
      %v3257 = vsel %vm556, %v3168, 0
      %3259 = vmatprep.subr.bf16.mxu0 0
      %3260 = vmatpush1.bf16.msra.mxu0 0
      %3261 = vmatprep.subr.bf16.mxu0 0
      %3262 = vmatpush1.bf16.msra.mxu0 0
      %3263 = vmatprep.subr.bf16.mxu0 0
      %3264 = vmatpush1.bf16.msra.mxu0 0
      %3265 = vmatprep.subr.bf16.mxu0 0
      %3266 = vmatpush1.bf16.msra.mxu0 0
      %3267 = vmatprep.subr.bf16.mxu0 0
      %3268 = vmatpush1.bf16.msra.mxu0 0
      %3269 = vmatprep.subr.bf16.mxu0 0
      %3270 = vmatpush1.bf16.msra.mxu0 0
      %3271 = vmatprep.subr.bf16.mxu0 0
      %3272 = vmatpush1.bf16.msra.mxu0 0
      %3273 = vmatprep.subr.bf16.mxu0 0
      %3274 = vmatpush1.bf16.msra.mxu0 %v2805
      %3275 = vmatprep.subr.bf16.mxu0 0
      %3276 = vmatpush2.bf16.msra.mxu0 0
      %3277 = vmatprep.subr.bf16.mxu0 0
      %3278 = vmatpush2.bf16.msra.mxu0 0
      %3279 = vmatprep.subr.bf16.mxu0 0
      %3280 = vmatpush2.bf16.msra.mxu0 0
      %3281 = vmatprep.subr.bf16.mxu0 0
      %3282 = vmatpush2.bf16.msra.mxu0 0
      %3283 = vmatprep.subr.bf16.mxu0 0
      %3284 = vmatpush2.bf16.msra.mxu0 0
      %3285 = vmatprep.subr.bf16.mxu0 0
      %3286 = vmatpush2.bf16.msra.mxu0 0
      %3287 = vmatprep.subr.bf16.mxu0 0
      %3288 = vmatpush2.bf16.msra.mxu0 0
      %3289 = vmatprep.subr.bf16.mxu0 0
      %3290 = vmatpush2.bf16.msra.mxu0 0
      %3291 = vmatprep.mubr.bf16.mxu0 0
      %3292 = vmatmul.mubr.bf16.gmra.mxu0 %v3257
      %v3293 = vpop.f32.mrf.mxu0
      %v3294 = vadd.f32 0.0, %v3293
      %v3295 = vpop.f32.mrf.mxu0
      %v3296 = vpop.f32.mrf.mxu0
      %v3297 = vpop.f32.mrf.mxu0
      %3298 = vdwg.mxu0
      %v3300 = vsel %vm556, %v3169, 0
      %3302 = vmatprep.subr.bf16.mxu0 0
      %3303 = vmatpush1.bf16.msra.mxu0 0
      %3304 = vmatprep.subr.bf16.mxu0 0
      %3305 = vmatpush1.bf16.msra.mxu0 0
      %3306 = vmatprep.subr.bf16.mxu0 0
      %3307 = vmatpush1.bf16.msra.mxu0 0
      %3308 = vmatprep.subr.bf16.mxu0 0
      %3309 = vmatpush1.bf16.msra.mxu0 0
      %3310 = vmatprep.subr.bf16.mxu0 0
      %3311 = vmatpush1.bf16.msra.mxu0 0
      %3312 = vmatprep.subr.bf16.mxu0 0
      %3313 = vmatpush1.bf16.msra.mxu0 0
      %3314 = vmatprep.subr.bf16.mxu0 0
      %3315 = vmatpush1.bf16.msra.mxu0 0
      %3316 = vmatprep.subr.bf16.mxu0 0
      %3317 = vmatpush1.bf16.msra.mxu0 %v2857
      %3318 = vmatprep.subr.bf16.mxu0 0
      %3319 = vmatpush2.bf16.msra.mxu0 0
      %3320 = vmatprep.subr.bf16.mxu0 0
      %3321 = vmatpush2.bf16.msra.mxu0 0
      %3322 = vmatprep.subr.bf16.mxu0 0
      %3323 = vmatpush2.bf16.msra.mxu0 0
      %3324 = vmatprep.subr.bf16.mxu0 0
      %3325 = vmatpush2.bf16.msra.mxu0 0
      %3326 = vmatprep.subr.bf16.mxu0 0
      %3327 = vmatpush2.bf16.msra.mxu0 0
      %3328 = vmatprep.subr.bf16.mxu0 0
      %3329 = vmatpush2.bf16.msra.mxu0 0
      %3330 = vmatprep.subr.bf16.mxu0 0
      %3331 = vmatpush2.bf16.msra.mxu0 0
      %3332 = vmatprep.subr.bf16.mxu0 0
      %3333 = vmatpush2.bf16.msra.mxu0 0
      %3334 = vmatprep.mubr.bf16.mxu0 0
      %3335 = vmatmul.mubr.bf16.gmra.mxu0 %v3300
      %v3336 = vpop.f32.mrf.mxu0
      %v3337 = vadd.f32 0.0, %v3336
      %v3338 = vpop.f32.mrf.mxu0
      %v3339 = vpop.f32.mrf.mxu0
      %v3340 = vpop.f32.mrf.mxu0
      %3341 = vdwg.mxu0
      %v3342 = vsel %vm940, %v3208, 0.0
      %v3343 = vsel %vm940, %v3251, 0.0
      %v3344 = vadd.f32 %v3342, %v3343
      %v3345 = vsel %vm940, %v3294, 0.0
      %v3346 = vadd.f32 %v3344, %v3345
      %v3347 = vsel %vm940, %v3337, 0.0
      %v3348 = vadd.f32 %v3346, %v3347
      %v3349 = vstv %s3148
      %v3350 = vmul.f32 %v3349, %v2287
      %v3352 = vlaneseq
      %v3353 = vshrl.u32 %v3352, 7
      %v3354 = vsub.s32 0, %v3353
      %v3355 = vrot.slane %v3350, %v3354
      %3356 = vrot.lane.b32.xlu0 %v3355, 48
      %v3357 = vpop.permute.xlu0 %3356
      %v3359 = vadd.f32 %v3348, %v3357
      %v3360 = vstv %s3165
      %v3361 = vrcp.pop %v3360
      %v3362 = vmul.f32 %v3359, %v3361
      %v3363 = vld [vmem:[%s178] sm:$0x1]
      %v3364 = vld [vmem:[%s178 + $0x1] sm:$0x1]
      %v3365 = vld [vmem:[%s178 + $0x2] sm:$0x1]
      %v3366 = vld [vmem:[%s178 + $0x3] sm:$0x1]
      %v3367 = vld [vmem:[%s181] sm:$0x1]
      %v3368 = vunpack.c.l.bf16 %v3367
      %v3371 = vunpack.c.l.s4 1966171168
      %v3372 = vunpack.c.0.s8 %v3371
      %v3373 = vlaneseq
      %v3374 = vshrl.u32 %v3373, 7
      %v3375 = vsub.s32 %v3372, %v3374
      %v3376 = vrot.slane %v3363, %v3375
      %v3378 = vunpack.c.l.s4 1966171168
      %v3379 = vunpack.c.0.s8 %v3378
      %v3380 = vlaneseq
      %v3381 = vshrl.u32 %v3380, 7
      %v3382 = vsub.s32 %v3379, %v3381
      %v3383 = vrot.slane %v3376, %v3382
      %3384 = vrot.lane.b32.xlu0 %v3383, 104
      %v3385 = vpop.permute.xlu0 %3384
      %3386 = vrot.lane.b32.xlu0 %v3383, 72
      %v3387 = vpop.permute.xlu0 %3386
      %v3389 = vsel %vm213, %v3385, 0
      %v3392 = vsel %vm213, %v3387, 0
      %3394 = vmatprep.subr.bf16.mxu0 0
      %3395 = vmatpush1.bf16.xpose.msra.mxu0 0
      %3396 = vmatprep.subr.bf16.mxu0 0
      %3397 = vmatpush1.bf16.xpose.msra.mxu0 0
      %3398 = vmatprep.subr.bf16.mxu0 0
      %3399 = vmatpush1.bf16.xpose.msra.mxu0 0
      %3400 = vmatprep.subr.bf16.mxu0 0
      %3401 = vmatpush1.bf16.xpose.msra.mxu0 0
      %3402 = vmatprep.subr.bf16.mxu0 0
      %3403 = vmatpush1.bf16.xpose.msra.mxu0 0
      %3404 = vmatprep.subr.bf16.mxu0 0
      %3405 = vmatpush1.bf16.xpose.msra.mxu0 0
      %3406 = vmatprep.subr.bf16.mxu0 0
      %3407 = vmatpush1.bf16.xpose.msra.mxu0 0
      %3408 = vmatprep.subr.bf16.mxu0 0
      %3409 = vmatpush1.bf16.xpose.msra.mxu0 %v3392
      %3410 = vmatprep.subr.bf16.mxu0 0
      %3411 = vmatpush2.bf16.xpose.msra.mxu0 0
      %3412 = vmatprep.subr.bf16.mxu0 0
      %3413 = vmatpush2.bf16.xpose.msra.mxu0 0
      %3414 = vmatprep.subr.bf16.mxu0 0
      %3415 = vmatpush2.bf16.xpose.msra.mxu0 0
      %3416 = vmatprep.subr.bf16.mxu0 0
      %3417 = vmatpush2.bf16.xpose.msra.mxu0 0
      %3418 = vmatprep.subr.bf16.mxu0 0
      %3419 = vmatpush2.bf16.xpose.msra.mxu0 0
      %3420 = vmatprep.subr.bf16.mxu0 0
      %3421 = vmatpush2.bf16.xpose.msra.mxu0 0
      %3422 = vmatprep.subr.bf16.mxu0 0
      %3423 = vmatpush2.bf16.xpose.msra.mxu0 0
      %3424 = vmatprep.subr.bf16.mxu0 0
      %3425 = vmatpush2.bf16.xpose.msra.mxu0 0
      %3426 = vmatprep.mubr.bf16.mxu0 0
      %3427 = vmatmul.mubr.bf16.gmra.mxu0 %v3389
      %v3428 = vpop.f32.mrf.mxu0
      %v3429 = vadd.f32 0.0, %v3428
      %v3430 = vpop.f32.mrf.mxu0
      %v3431 = vpop.f32.mrf.mxu0
      %v3432 = vpop.f32.mrf.mxu0
      %3433 = vdwg.mxu0
      %v3436 = vunpack.c.l.s4 1966171168
      %v3437 = vunpack.c.0.s8 %v3436
      %v3438 = vlaneseq
      %v3439 = vshrl.u32 %v3438, 7
      %v3440 = vsub.s32 %v3437, %v3439
      %v3441 = vrot.slane %v3364, %v3440
      %v3443 = vunpack.c.l.s4 1966171168
      %v3444 = vunpack.c.0.s8 %v3443
      %v3445 = vlaneseq
      %v3446 = vshrl.u32 %v3445, 7
      %v3447 = vsub.s32 %v3444, %v3446
      %v3448 = vrot.slane %v3441, %v3447
      %3449 = vrot.lane.b32.xlu0 %v3448, 104
      %v3450 = vpop.permute.xlu0 %3449
      %3451 = vrot.lane.b32.xlu0 %v3448, 72
      %v3452 = vpop.permute.xlu0 %3451
      %v3454 = vsel %vm213, %v3450, 0
      %v3457 = vsel %vm213, %v3452, 0
      %3459 = vmatprep.subr.bf16.mxu0 0
      %3460 = vmatpush1.bf16.xpose.msra.mxu0 0
      %3461 = vmatprep.subr.bf16.mxu0 0
      %3462 = vmatpush1.bf16.xpose.msra.mxu0 0
      %3463 = vmatprep.subr.bf16.mxu0 0
      %3464 = vmatpush1.bf16.xpose.msra.mxu0 0
      %3465 = vmatprep.subr.bf16.mxu0 0
      %3466 = vmatpush1.bf16.xpose.msra.mxu0 0
      %3467 = vmatprep.subr.bf16.mxu0 0
      %3468 = vmatpush1.bf16.xpose.msra.mxu0 0
      %3469 = vmatprep.subr.bf16.mxu0 0
      %3470 = vmatpush1.bf16.xpose.msra.mxu0 0
      %3471 = vmatprep.subr.bf16.mxu0 0
      %3472 = vmatpush1.bf16.xpose.msra.mxu0 0
      %3473 = vmatprep.subr.bf16.mxu0 0
      %3474 = vmatpush1.bf16.xpose.msra.mxu0 %v3457
      %3475 = vmatprep.subr.bf16.mxu0 0
      %3476 = vmatpush2.bf16.xpose.msra.mxu0 0
      %3477 = vmatprep.subr.bf16.mxu0 0
      %3478 = vmatpush2.bf16.xpose.msra.mxu0 0
      %3479 = vmatprep.subr.bf16.mxu0 0
      %3480 = vmatpush2.bf16.xpose.msra.mxu0 0
      %3481 = vmatprep.subr.bf16.mxu0 0
      %3482 = vmatpush2.bf16.xpose.msra.mxu0 0
      %3483 = vmatprep.subr.bf16.mxu0 0
      %3484 = vmatpush2.bf16.xpose.msra.mxu0 0
      %3485 = vmatprep.subr.bf16.mxu0 0
      %3486 = vmatpush2.bf16.xpose.msra.mxu0 0
      %3487 = vmatprep.subr.bf16.mxu0 0
      %3488 = vmatpush2.bf16.xpose.msra.mxu0 0
      %3489 = vmatprep.subr.bf16.mxu0 0
      %3490 = vmatpush2.bf16.xpose.msra.mxu0 0
      %3491 = vmatprep.mubr.bf16.mxu0 0
      %3492 = vmatmul.mubr.bf16.gmra.mxu0 %v3454
      %v3493 = vpop.f32.mrf.mxu0
      %v3494 = vadd.f32 0.0, %v3493
      %v3495 = vpop.f32.mrf.mxu0
      %v3496 = vpop.f32.mrf.mxu0
      %v3497 = vpop.f32.mrf.mxu0
      %3498 = vdwg.mxu0
      %v3501 = vunpack.c.l.s4 1966171168
      %v3502 = vunpack.c.0.s8 %v3501
      %v3503 = vlaneseq
      %v3504 = vshrl.u32 %v3503, 7
      %v3505 = vsub.s32 %v3502, %v3504
      %v3506 = vrot.slane %v3365, %v3505
      %v3508 = vunpack.c.l.s4 1966171168
      %v3509 = vunpack.c.0.s8 %v3508
      %v3510 = vlaneseq
      %v3511 = vshrl.u32 %v3510, 7
      %v3512 = vsub.s32 %v3509, %v3511
      %v3513 = vrot.slane %v3506, %v3512
      %3514 = vrot.lane.b32.xlu0 %v3513, 104
      %v3515 = vpop.permute.xlu0 %3514
      %3516 = vrot.lane.b32.xlu0 %v3513, 72
      %v3517 = vpop.permute.xlu0 %3516
      %v3519 = vsel %vm213, %v3515, 0
      %v3522 = vsel %vm213, %v3517, 0
      %3524 = vmatprep.subr.bf16.mxu0 0
      %3525 = vmatpush1.bf16.xpose.msra.mxu0 0
      %3526 = vmatprep.subr.bf16.mxu0 0
      %3527 = vmatpush1.bf16.xpose.msra.mxu0 0
      %3528 = vmatprep.subr.bf16.mxu0 0
      %3529 = vmatpush1.bf16.xpose.msra.mxu0 0
      %3530 = vmatprep.subr.bf16.mxu0 0
      %3531 = vmatpush1.bf16.xpose.msra.mxu0 0
      %3532 = vmatprep.subr.bf16.mxu0 0
      %3533 = vmatpush1.bf16.xpose.msra.mxu0 0
      %3534 = vmatprep.subr.bf16.mxu0 0
      %3535 = vmatpush1.bf16.xpose.msra.mxu0 0
      %3536 = vmatprep.subr.bf16.mxu0 0
      %3537 = vmatpush1.bf16.xpose.msra.mxu0 0
      %3538 = vmatprep.subr.bf16.mxu0 0
      %3539 = vmatpush1.bf16.xpose.msra.mxu0 %v3522
      %3540 = vmatprep.subr.bf16.mxu0 0
      %3541 = vmatpush2.bf16.xpose.msra.mxu0 0
      %3542 = vmatprep.subr.bf16.mxu0 0
      %3543 = vmatpush2.bf16.xpose.msra.mxu0 0
      %3544 = vmatprep.subr.bf16.mxu0 0
      %3545 = vmatpush2.bf16.xpose.msra.mxu0 0
      %3546 = vmatprep.subr.bf16.mxu0 0
      %3547 = vmatpush2.bf16.xpose.msra.mxu0 0
      %3548 = vmatprep.subr.bf16.mxu0 0
      %3549 = vmatpush2.bf16.xpose.msra.mxu0 0
      %3550 = vmatprep.subr.bf16.mxu0 0
      %3551 = vmatpush2.bf16.xpose.msra.mxu0 0
      %3552 = vmatprep.subr.bf16.mxu0 0
      %3553 = vmatpush2.bf16.xpose.msra.mxu0 0
      %3554 = vmatprep.subr.bf16.mxu0 0
      %3555 = vmatpush2.bf16.xpose.msra.mxu0 0
      %3556 = vmatprep.mubr.bf16.mxu0 0
      %3557 = vmatmul.mubr.bf16.gmra.mxu0 %v3519
      %v3558 = vpop.f32.mrf.mxu0
      %v3559 = vadd.f32 0.0, %v3558
      %v3560 = vpop.f32.mrf.mxu0
      %v3561 = vpop.f32.mrf.mxu0
      %v3562 = vpop.f32.mrf.mxu0
      %3563 = vdwg.mxu0
      %v3566 = vunpack.c.l.s4 1966171168
      %v3567 = vunpack.c.0.s8 %v3566
      %v3568 = vlaneseq
      %v3569 = vshrl.u32 %v3568, 7
      %v3570 = vsub.s32 %v3567, %v3569
      %v3571 = vrot.slane %v3366, %v3570
      %v3573 = vunpack.c.l.s4 1966171168
      %v3574 = vunpack.c.0.s8 %v3573
      %v3575 = vlaneseq
      %v3576 = vshrl.u32 %v3575, 7
      %v3577 = vsub.s32 %v3574, %v3576
      %v3578 = vrot.slane %v3571, %v3577
      %3579 = vrot.lane.b32.xlu0 %v3578, 104
      %v3580 = vpop.permute.xlu0 %3579
      %3581 = vrot.lane.b32.xlu0 %v3578, 72
      %v3582 = vpop.permute.xlu0 %3581
      %v3584 = vsel %vm213, %v3580, 0
      %v3587 = vsel %vm213, %v3582, 0
      %3589 = vmatprep.subr.bf16.mxu0 0
      %3590 = vmatpush1.bf16.xpose.msra.mxu0 0
      %3591 = vmatprep.subr.bf16.mxu0 0
      %3592 = vmatpush1.bf16.xpose.msra.mxu0 0
      %3593 = vmatprep.subr.bf16.mxu0 0
      %3594 = vmatpush1.bf16.xpose.msra.mxu0 0
      %3595 = vmatprep.subr.bf16.mxu0 0
      %3596 = vmatpush1.bf16.xpose.msra.mxu0 0
      %3597 = vmatprep.subr.bf16.mxu0 0
      %3598 = vmatpush1.bf16.xpose.msra.mxu0 0
      %3599 = vmatprep.subr.bf16.mxu0 0
      %3600 = vmatpush1.bf16.xpose.msra.mxu0 0
      %3601 = vmatprep.subr.bf16.mxu0 0
      %3602 = vmatpush1.bf16.xpose.msra.mxu0 0
      %3603 = vmatprep.subr.bf16.mxu0 0
      %3604 = vmatpush1.bf16.xpose.msra.mxu0 %v3587
      %3605 = vmatprep.subr.bf16.mxu0 0
      %3606 = vmatpush2.bf16.xpose.msra.mxu0 0
      %3607 = vmatprep.subr.bf16.mxu0 0
      %3608 = vmatpush2.bf16.xpose.msra.mxu0 0
      %3609 = vmatprep.subr.bf16.mxu0 0
      %3610 = vmatpush2.bf16.xpose.msra.mxu0 0
      %3611 = vmatprep.subr.bf16.mxu0 0
      %3612 = vmatpush2.bf16.xpose.msra.mxu0 0
      %3613 = vmatprep.subr.bf16.mxu0 0
      %3614 = vmatpush2.bf16.xpose.msra.mxu0 0
      %3615 = vmatprep.subr.bf16.mxu0 0
      %3616 = vmatpush2.bf16.xpose.msra.mxu0 0
      %3617 = vmatprep.subr.bf16.mxu0 0
      %3618 = vmatpush2.bf16.xpose.msra.mxu0 0
      %3619 = vmatprep.subr.bf16.mxu0 0
      %3620 = vmatpush2.bf16.xpose.msra.mxu0 0
      %3621 = vmatprep.mubr.bf16.mxu0 0
      %3622 = vmatmul.mubr.bf16.gmra.mxu0 %v3584
      %v3623 = vpop.f32.mrf.mxu0
      %v3624 = vadd.f32 0.0, %v3623
      %v3625 = vpop.f32.mrf.mxu0
      %v3626 = vpop.f32.mrf.mxu0
      %v3627 = vpop.f32.mrf.mxu0
      %3628 = vdwg.mxu0
      %v3629 = vunpack.c.l.bf16 %v3363
      %v3630 = vunpack.c.l.bf16 %v3364
      %v3631 = vunpack.c.l.bf16 %v3365
      %v3632 = vunpack.c.l.bf16 %v3366
      %v3633 = vlaneseq
      %v3634 = vshrl.u32 %v3633, 7
      %v3635 = vsub.s32 0, %v3634
      %v3636 = vrot.slane %v3368, %v3635
      %v3639 = vunpack.c.l.s4 1983009808
      %v3640 = vunpack.c.0.s8 %v3639
      %v3641 = vlaneseq
      %v3642 = vshrl.u32 %v3641, 7
      %v3643 = vsub.s32 %v3640, %v3642
      %v3644 = vrot.slane %v3636, %v3643
      %3645 = vrot.lane.b32.xlu0 %v3644, 96
      %v3646 = vpop.permute.xlu0 %3645
      %v3648 = vmul.f32 %v3629, %v3646
      %v3649 = vmul.f32 %v3630, %v3646
      %v3650 = vmul.f32 %v3631, %v3646
      %v3651 = vmul.f32 %v3632, %v3646
      %v3657 = vunpack.c.l.s4 1983009808
      %v3658 = vunpack.c.0.s8 %v3657
      %v3659 = vlaneseq
      %v3660 = vshrl.u32 %v3659, 7
      %v3661 = vsub.s32 %v3658, %v3660
      %v3662 = vrot.slane %v3648, %v3661
      %v3664 = vunpack.c.l.s4 1983009808
      %v3665 = vunpack.c.0.s8 %v3664
      %v3666 = vlaneseq
      %v3667 = vshrl.u32 %v3666, 7
      %v3668 = vsub.s32 %v3665, %v3667
      %v3669 = vrot.slane %v3649, %v3668
      %v3671 = vunpack.c.l.s4 1983009808
      %v3672 = vunpack.c.0.s8 %v3671
      %v3673 = vlaneseq
      %v3674 = vshrl.u32 %v3673, 7
      %v3675 = vsub.s32 %v3672, %v3674
      %v3676 = vrot.slane %v3650, %v3675
      %v3678 = vunpack.c.l.s4 1983009808
      %v3679 = vunpack.c.0.s8 %v3678
      %v3680 = vlaneseq
      %v3681 = vshrl.u32 %v3680, 7
      %v3682 = vsub.s32 %v3679, %v3681
      %v3683 = vrot.slane %v3651, %v3682
      %3684 = vrot.lane.b32.xlu0 %v3662, 104
      %v3685 = vpop.permute.xlu0 %3684
      %3686 = vrot.lane.b32.xlu0 %v3669, 104
      %v3687 = vpop.permute.xlu0 %3686
      %3688 = vrot.lane.b32.xlu0 %v3676, 104
      %v3689 = vpop.permute.xlu0 %3688
      %3690 = vrot.lane.b32.xlu0 %v3683, 104
      %v3691 = vpop.permute.xlu0 %3690
      %v3696 = vsel %vm472, %v3685, 0.0
      %3697 = vadd.xlane.f32.xlu0 %v3696
      %v3698 = vpop.xlane.xlu0 %3697
      %v3699 = vsel %vm472, %v3687, 0.0
      %3700 = vadd.xlane.f32.xlu0 %v3699
      %v3701 = vpop.xlane.xlu0 %3700
      %v3702 = vsel %vm472, %v3689, 0.0
      %3703 = vadd.xlane.f32.xlu0 %v3702
      %v3704 = vpop.xlane.xlu0 %3703
      %v3705 = vsel %vm472, %v3691, 0.0
      %3706 = vadd.xlane.f32.xlu0 %v3705
      %v3707 = vpop.xlane.xlu0 %3706
      %v3708 = vsel %vm485, %v3429, -inf
      %3709 = vmax.xlane.f32.xlu0 %v3708
      %v3710 = vpop.xlane.xlu0 %3709
      %v3711 = vsel %vm485, %v3494, -inf
      %3712 = vmax.xlane.f32.xlu0 %v3711
      %v3713 = vpop.xlane.xlu0 %3712
      %v3714 = vsel %vm485, %v3559, -inf
      %3715 = vmax.xlane.f32.xlu0 %v3714
      %v3716 = vpop.xlane.xlu0 %3715
      %v3717 = vsel %vm485, %v3624, -inf
      %3718 = vmax.xlane.f32.xlu0 %v3717
      %v3719 = vpop.xlane.xlu0 %3718
      %v3720 = vmax.f32 %v3710, %v3698
      %v3721 = vmax.f32 %v3713, %v3701
      %v3722 = vmax.f32 %v3716, %v3704
      %v3723 = vmax.f32 %v3719, %v3707
      %v3724 = vsub.f32 %v3429, %v3720
      %v3725 = vsub.f32 %v3494, %v3721
      %v3726 = vsub.f32 %v3559, %v3722
      %v3727 = vsub.f32 %v3624, %v3723
      %v3728 = vmul.f32 %v3724, 1.442695
      %v3729 = vpow.pop %v3728
      %v3730 = vmul.f32 %v3725, 1.442695
      %v3731 = vpow.pop %v3730
      %v3732 = vmul.f32 %v3726, 1.442695
      %v3733 = vpow.pop %v3732
      %v3734 = vmul.f32 %v3727, 1.442695
      %v3735 = vpow.pop %v3734
      %v3736 = vsub.f32 %v3698, %v3720
      %v3737 = vsub.f32 %v3701, %v3721
      %v3738 = vsub.f32 %v3704, %v3722
      %v3739 = vsub.f32 %v3707, %v3723
      %v3740 = vmul.f32 %v3736, 1.442695
      %v3741 = vpow.pop %v3740
      %v3742 = vmul.f32 %v3737, 1.442695
      %v3743 = vpow.pop %v3742
      %v3744 = vmul.f32 %v3738, 1.442695
      %v3745 = vpow.pop %v3744
      %v3746 = vmul.f32 %v3739, 1.442695
      %v3747 = vpow.pop %v3746
      %v3748 = vsel %vm485, %v3729, 0.0
      %3749 = vadd.xlane.f32.xlu0 %v3748
      %v3750 = vpop.xlane.xlu0 %3749
      %v3751 = vsel %vm485, %v3731, 0.0
      %3752 = vadd.xlane.f32.xlu0 %v3751
      %v3753 = vpop.xlane.xlu0 %3752
      %v3754 = vsel %vm485, %v3733, 0.0
      %3755 = vadd.xlane.f32.xlu0 %v3754
      %v3756 = vpop.xlane.xlu0 %3755
      %v3757 = vsel %vm485, %v3735, 0.0
      %3758 = vadd.xlane.f32.xlu0 %v3757
      %v3759 = vpop.xlane.xlu0 %3758
      %v3760 = vadd.f32 %v3750, %v3741
      %v3761 = vadd.f32 %v3753, %v3743
      %v3762 = vadd.f32 %v3756, %v3745
      %v3763 = vadd.f32 %v3759, %v3747
      %v3764 = vpack.c.bf16 %v3729, %v3729
      %v3765 = vpack.c.bf16 %v3731, %v3731
      %v3766 = vpack.c.bf16 %v3733, %v3733
      %v3767 = vpack.c.bf16 %v3735, %v3735
      %v3768 = vmul.f32 %v3741, %v3636
      %v3769 = vmul.f32 %v3743, %v3636
      %v3770 = vmul.f32 %v3745, %v3636
      %v3771 = vmul.f32 %v3747, %v3636
      %3772 = vrot.lane.b32.xlu0 %v3383, 40
      %v3773 = vpop.permute.xlu0 %3772
      %3775 = vrot.lane.b32.xlu0 %v3768, 40
      %v3776 = vpop.permute.xlu0 %3775
      %v3779 = vsel %vm556, %v3764, 0
      %v3782 = vsel %vm560, %v3773, 0
      %3784 = vmatprep.subr.bf16.mxu0 0
      %3785 = vmatpush1.bf16.msra.mxu0 0
      %3786 = vmatprep.subr.bf16.mxu0 0
      %3787 = vmatpush1.bf16.msra.mxu0 0
      %3788 = vmatprep.subr.bf16.mxu0 0
      %3789 = vmatpush1.bf16.msra.mxu0 0
      %3790 = vmatprep.subr.bf16.mxu0 0
      %3791 = vmatpush1.bf16.msra.mxu0 0
      %3792 = vmatprep.subr.bf16.mxu0 0
      %3793 = vmatpush1.bf16.msra.mxu0 0
      %3794 = vmatprep.subr.bf16.mxu0 0
      %3795 = vmatpush1.bf16.msra.mxu0 0
      %3796 = vmatprep.subr.bf16.mxu0 0
      %3797 = vmatpush1.bf16.msra.mxu0 0
      %3798 = vmatprep.subr.bf16.mxu0 0
      %3799 = vmatpush1.bf16.msra.mxu0 %v3782
      %3800 = vmatprep.subr.bf16.mxu0 0
      %3801 = vmatpush2.bf16.msra.mxu0 0
      %3802 = vmatprep.subr.bf16.mxu0 0
      %3803 = vmatpush2.bf16.msra.mxu0 0
      %3804 = vmatprep.subr.bf16.mxu0 0
      %3805 = vmatpush2.bf16.msra.mxu0 0
      %3806 = vmatprep.subr.bf16.mxu0 0
      %3807 = vmatpush2.bf16.msra.mxu0 0
      %3808 = vmatprep.subr.bf16.mxu0 0
      %3809 = vmatpush2.bf16.msra.mxu0 0
      %3810 = vmatprep.subr.bf16.mxu0 0
      %3811 = vmatpush2.bf16.msra.mxu0 0
      %3812 = vmatprep.subr.bf16.mxu0 0
      %3813 = vmatpush2.bf16.msra.mxu0 0
      %3814 = vmatprep.subr.bf16.mxu0 0
      %3815 = vmatpush2.bf16.msra.mxu0 0
      %3816 = vmatprep.mubr.bf16.mxu0 0
      %3817 = vmatmul.mubr.bf16.gmra.mxu0 %v3779
      %v3818 = vpop.f32.mrf.mxu0
      %v3819 = vadd.f32 %v3776, %v3818
      %v3820 = vpop.f32.mrf.mxu0
      %v3821 = vpop.f32.mrf.mxu0
      %v3822 = vpop.f32.mrf.mxu0
      %3823 = vdwg.mxu0
      %3824 = vrot.lane.b32.xlu0 %v3448, 40
      %v3825 = vpop.permute.xlu0 %3824
      %3827 = vrot.lane.b32.xlu0 %v3769, 40
      %v3828 = vpop.permute.xlu0 %3827
      %v3831 = vsel %vm556, %v3765, 0
      %v3834 = vsel %vm560, %v3825, 0
      %3836 = vmatprep.subr.bf16.mxu0 0
      %3837 = vmatpush1.bf16.msra.mxu0 0
      %3838 = vmatprep.subr.bf16.mxu0 0
      %3839 = vmatpush1.bf16.msra.mxu0 0
      %3840 = vmatprep.subr.bf16.mxu0 0
      %3841 = vmatpush1.bf16.msra.mxu0 0
      %3842 = vmatprep.subr.bf16.mxu0 0
      %3843 = vmatpush1.bf16.msra.mxu0 0
      %3844 = vmatprep.subr.bf16.mxu0 0
      %3845 = vmatpush1.bf16.msra.mxu0 0
      %3846 = vmatprep.subr.bf16.mxu0 0
      %3847 = vmatpush1.bf16.msra.mxu0 0
      %3848 = vmatprep.subr.bf16.mxu0 0
      %3849 = vmatpush1.bf16.msra.mxu0 0
      %3850 = vmatprep.subr.bf16.mxu0 0
      %3851 = vmatpush1.bf16.msra.mxu0 %v3834
      %3852 = vmatprep.subr.bf16.mxu0 0
      %3853 = vmatpush2.bf16.msra.mxu0 0
      %3854 = vmatprep.subr.bf16.mxu0 0
      %3855 = vmatpush2.bf16.msra.mxu0 0
      %3856 = vmatprep.subr.bf16.mxu0 0
      %3857 = vmatpush2.bf16.msra.mxu0 0
      %3858 = vmatprep.subr.bf16.mxu0 0
      %3859 = vmatpush2.bf16.msra.mxu0 0
      %3860 = vmatprep.subr.bf16.mxu0 0
      %3861 = vmatpush2.bf16.msra.mxu0 0
      %3862 = vmatprep.subr.bf16.mxu0 0
      %3863 = vmatpush2.bf16.msra.mxu0 0
      %3864 = vmatprep.subr.bf16.mxu0 0
      %3865 = vmatpush2.bf16.msra.mxu0 0
      %3866 = vmatprep.subr.bf16.mxu0 0
      %3867 = vmatpush2.bf16.msra.mxu0 0
      %3868 = vmatprep.mubr.bf16.mxu0 0
      %3869 = vmatmul.mubr.bf16.gmra.mxu0 %v3831
      %v3870 = vpop.f32.mrf.mxu0
      %v3871 = vadd.f32 %v3828, %v3870
      %v3872 = vpop.f32.mrf.mxu0
      %v3873 = vpop.f32.mrf.mxu0
      %v3874 = vpop.f32.mrf.mxu0
      %3875 = vdwg.mxu0
      %3876 = vrot.lane.b32.xlu0 %v3513, 40
      %v3877 = vpop.permute.xlu0 %3876
      %3879 = vrot.lane.b32.xlu0 %v3770, 40
      %v3880 = vpop.permute.xlu0 %3879
      %v3883 = vsel %vm556, %v3766, 0
      %v3886 = vsel %vm560, %v3877, 0
      %3888 = vmatprep.subr.bf16.mxu0 0
      %3889 = vmatpush1.bf16.msra.mxu0 0
      %3890 = vmatprep.subr.bf16.mxu0 0
      %3891 = vmatpush1.bf16.msra.mxu0 0
      %3892 = vmatprep.subr.bf16.mxu0 0
      %3893 = vmatpush1.bf16.msra.mxu0 0
      %3894 = vmatprep.subr.bf16.mxu0 0
      %3895 = vmatpush1.bf16.msra.mxu0 0
      %3896 = vmatprep.subr.bf16.mxu0 0
      %3897 = vmatpush1.bf16.msra.mxu0 0
      %3898 = vmatprep.subr.bf16.mxu0 0
      %3899 = vmatpush1.bf16.msra.mxu0 0
      %3900 = vmatprep.subr.bf16.mxu0 0
      %3901 = vmatpush1.bf16.msra.mxu0 0
      %3902 = vmatprep.subr.bf16.mxu0 0
      %3903 = vmatpush1.bf16.msra.mxu0 %v3886
      %3904 = vmatprep.subr.bf16.mxu0 0
      %3905 = vmatpush2.bf16.msra.mxu0 0
      %3906 = vmatprep.subr.bf16.mxu0 0
      %3907 = vmatpush2.bf16.msra.mxu0 0
      %3908 = vmatprep.subr.bf16.mxu0 0
      %3909 = vmatpush2.bf16.msra.mxu0 0
      %3910 = vmatprep.subr.bf16.mxu0 0
      %3911 = vmatpush2.bf16.msra.mxu0 0
      %3912 = vmatprep.subr.bf16.mxu0 0
      %3913 = vmatpush2.bf16.msra.mxu0 0
      %3914 = vmatprep.subr.bf16.mxu0 0
      %3915 = vmatpush2.bf16.msra.mxu0 0
      %3916 = vmatprep.subr.bf16.mxu0 0
      %3917 = vmatpush2.bf16.msra.mxu0 0
      %3918 = vmatprep.subr.bf16.mxu0 0
      %3919 = vmatpush2.bf16.msra.mxu0 0
      %3920 = vmatprep.mubr.bf16.mxu0 0
      %3921 = vmatmul.mubr.bf16.gmra.mxu0 %v3883
      %v3922 = vpop.f32.mrf.mxu0
      %v3923 = vadd.f32 %v3880, %v3922
      %v3924 = vpop.f32.mrf.mxu0
      %v3925 = vpop.f32.mrf.mxu0
      %v3926 = vpop.f32.mrf.mxu0
      %3927 = vdwg.mxu0
      %3928 = vrot.lane.b32.xlu0 %v3578, 40
      %v3929 = vpop.permute.xlu0 %3928
      %3931 = vrot.lane.b32.xlu0 %v3771, 40
      %v3932 = vpop.permute.xlu0 %3931
      %v3935 = vsel %vm556, %v3767, 0
      %v3938 = vsel %vm560, %v3929, 0
      %3940 = vmatprep.subr.bf16.mxu0 0
      %3941 = vmatpush1.bf16.msra.mxu0 0
      %3942 = vmatprep.subr.bf16.mxu0 0
      %3943 = vmatpush1.bf16.msra.mxu0 0
      %3944 = vmatprep.subr.bf16.mxu0 0
      %3945 = vmatpush1.bf16.msra.mxu0 0
      %3946 = vmatprep.subr.bf16.mxu0 0
      %3947 = vmatpush1.bf16.msra.mxu0 0
      %3948 = vmatprep.subr.bf16.mxu0 0
      %3949 = vmatpush1.bf16.msra.mxu0 0
      %3950 = vmatprep.subr.bf16.mxu0 0
      %3951 = vmatpush1.bf16.msra.mxu0 0
      %3952 = vmatprep.subr.bf16.mxu0 0
      %3953 = vmatpush1.bf16.msra.mxu0 0
      %3954 = vmatprep.subr.bf16.mxu0 0
      %3955 = vmatpush1.bf16.msra.mxu0 %v3938
      %3956 = vmatprep.subr.bf16.mxu0 0
      %3957 = vmatpush2.bf16.msra.mxu0 0
      %3958 = vmatprep.subr.bf16.mxu0 0
      %3959 = vmatpush2.bf16.msra.mxu0 0
      %3960 = vmatprep.subr.bf16.mxu0 0
      %3961 = vmatpush2.bf16.msra.mxu0 0
      %3962 = vmatprep.subr.bf16.mxu0 0
      %3963 = vmatpush2.bf16.msra.mxu0 0
      %3964 = vmatprep.subr.bf16.mxu0 0
      %3965 = vmatpush2.bf16.msra.mxu0 0
      %3966 = vmatprep.subr.bf16.mxu0 0
      %3967 = vmatpush2.bf16.msra.mxu0 0
      %3968 = vmatprep.subr.bf16.mxu0 0
      %3969 = vmatpush2.bf16.msra.mxu0 0
      %3970 = vmatprep.subr.bf16.mxu0 0
      %3971 = vmatpush2.bf16.msra.mxu0 0
      %3972 = vmatprep.mubr.bf16.mxu0 0
      %3973 = vmatmul.mubr.bf16.gmra.mxu0 %v3935
      %v3974 = vpop.f32.mrf.mxu0
      %v3975 = vadd.f32 %v3932, %v3974
      %v3976 = vpop.f32.mrf.mxu0
      %v3977 = vpop.f32.mrf.mxu0
      %v3978 = vpop.f32.mrf.mxu0
      %3979 = vdwg.mxu0
      %v3980 = vrcp.pop %v3760
      %v3981 = vrcp.pop %v3761
      %v3982 = vrcp.pop %v3762
      %v3983 = vrcp.pop %v3763
      %v3984 = vmul.f32 %v3819, %v3980
      %v3985 = vmul.f32 %v3871, %v3981
      %v3986 = vmul.f32 %v3923, %v3982
      %v3987 = vmul.f32 %v3975, %v3983
      %v3988 = vpack.c.bf16 %v3984, %v3984
      %v3989 = vpack.c.bf16 %v3985, %v3985
      %v3990 = vpack.c.bf16 %v3986, %v3986
      %v3991 = vpack.c.bf16 %v3987, %v3987
      %v3994 = vunpack.c.l.s4 1966171168
      %v3995 = vunpack.c.0.s8 %v3994
      %v3996 = vlaneseq
      %v3997 = vshrl.u32 %v3996, 7
      %v3998 = vsub.s32 %v3995, %v3997
      %v3999 = vrot.slane %v3367, %v3998
      %v4001 = vunpack.c.l.s4 1966171168
      %v4002 = vunpack.c.0.s8 %v4001
      %v4003 = vlaneseq
      %v4004 = vshrl.u32 %v4003, 7
      %v4005 = vsub.s32 %v4002, %v4004
      %v4006 = vrot.slane %v3999, %v4005
      %4007 = vrot.lane.b32.xlu0 %v4006, 104
      %v4008 = vpop.permute.xlu0 %4007
      %v4010 = vsel %vm213, %v4008, 0
      %4012 = vmatprep.subr.bf16.mxu0 0
      %4013 = vmatpush1.bf16.xpose.msra.mxu0 0
      %4014 = vmatprep.subr.bf16.mxu0 0
      %4015 = vmatpush1.bf16.xpose.msra.mxu0 0
      %4016 = vmatprep.subr.bf16.mxu0 0
      %4017 = vmatpush1.bf16.xpose.msra.mxu0 0
      %4018 = vmatprep.subr.bf16.mxu0 0
      %4019 = vmatpush1.bf16.xpose.msra.mxu0 0
      %4020 = vmatprep.subr.bf16.mxu0 0
      %4021 = vmatpush1.bf16.xpose.msra.mxu0 0
      %4022 = vmatprep.subr.bf16.mxu0 0
      %4023 = vmatpush1.bf16.xpose.msra.mxu0 0
      %4024 = vmatprep.subr.bf16.mxu0 0
      %4025 = vmatpush1.bf16.xpose.msra.mxu0 0
      %4026 = vmatprep.subr.bf16.mxu0 0
      %4027 = vmatpush1.bf16.xpose.msra.mxu0 %v3392
      %4028 = vmatprep.subr.bf16.mxu0 0
      %4029 = vmatpush2.bf16.xpose.msra.mxu0 0
      %4030 = vmatprep.subr.bf16.mxu0 0
      %4031 = vmatpush2.bf16.xpose.msra.mxu0 0
      %4032 = vmatprep.subr.bf16.mxu0 0
      %4033 = vmatpush2.bf16.xpose.msra.mxu0 0
      %4034 = vmatprep.subr.bf16.mxu0 0
      %4035 = vmatpush2.bf16.xpose.msra.mxu0 0
      %4036 = vmatprep.subr.bf16.mxu0 0
      %4037 = vmatpush2.bf16.xpose.msra.mxu0 0
      %4038 = vmatprep.subr.bf16.mxu0 0
      %4039 = vmatpush2.bf16.xpose.msra.mxu0 0
      %4040 = vmatprep.subr.bf16.mxu0 0
      %4041 = vmatpush2.bf16.xpose.msra.mxu0 0
      %4042 = vmatprep.subr.bf16.mxu0 0
      %4043 = vmatpush2.bf16.xpose.msra.mxu0 0
      %4044 = vmatprep.mubr.bf16.mxu0 0
      %4045 = vmatmul.mubr.bf16.gmra.mxu0 %v4010
      %v4046 = vpop.f32.mrf.mxu0
      %v4047 = vadd.f32 0.0, %v4046
      %v4048 = vpop.f32.mrf.mxu0
      %v4049 = vpop.f32.mrf.mxu0
      %v4050 = vpop.f32.mrf.mxu0
      %4051 = vdwg.mxu0
      %4052 = vmatprep.subr.bf16.mxu0 0
      %4053 = vmatpush1.bf16.xpose.msra.mxu0 0
      %4054 = vmatprep.subr.bf16.mxu0 0
      %4055 = vmatpush1.bf16.xpose.msra.mxu0 0
      %4056 = vmatprep.subr.bf16.mxu0 0
      %4057 = vmatpush1.bf16.xpose.msra.mxu0 0
      %4058 = vmatprep.subr.bf16.mxu0 0
      %4059 = vmatpush1.bf16.xpose.msra.mxu0 0
      %4060 = vmatprep.subr.bf16.mxu0 0
      %4061 = vmatpush1.bf16.xpose.msra.mxu0 0
      %4062 = vmatprep.subr.bf16.mxu0 0
      %4063 = vmatpush1.bf16.xpose.msra.mxu0 0
      %4064 = vmatprep.subr.bf16.mxu0 0
      %4065 = vmatpush1.bf16.xpose.msra.mxu0 0
      %4066 = vmatprep.subr.bf16.mxu0 0
      %4067 = vmatpush1.bf16.xpose.msra.mxu0 %v3457
      %4068 = vmatprep.subr.bf16.mxu0 0
      %4069 = vmatpush2.bf16.xpose.msra.mxu0 0
      %4070 = vmatprep.subr.bf16.mxu0 0
      %4071 = vmatpush2.bf16.xpose.msra.mxu0 0
      %4072 = vmatprep.subr.bf16.mxu0 0
      %4073 = vmatpush2.bf16.xpose.msra.mxu0 0
      %4074 = vmatprep.subr.bf16.mxu0 0
      %4075 = vmatpush2.bf16.xpose.msra.mxu0 0
      %4076 = vmatprep.subr.bf16.mxu0 0
      %4077 = vmatpush2.bf16.xpose.msra.mxu0 0
      %4078 = vmatprep.subr.bf16.mxu0 0
      %4079 = vmatpush2.bf16.xpose.msra.mxu0 0
      %4080 = vmatprep.subr.bf16.mxu0 0
      %4081 = vmatpush2.bf16.xpose.msra.mxu0 0
      %4082 = vmatprep.subr.bf16.mxu0 0
      %4083 = vmatpush2.bf16.xpose.msra.mxu0 0
      %4084 = vmatprep.mubr.bf16.mxu0 0
      %4085 = vmatmul.mubr.bf16.gmra.mxu0 %v4010
      %v4086 = vpop.f32.mrf.mxu0
      %v4087 = vadd.f32 0.0, %v4086
      %v4088 = vpop.f32.mrf.mxu0
      %v4089 = vpop.f32.mrf.mxu0
      %v4090 = vpop.f32.mrf.mxu0
      %4091 = vdwg.mxu0
      %4092 = vmatprep.subr.bf16.mxu0 0
      %4093 = vmatpush1.bf16.xpose.msra.mxu0 0
      %4094 = vmatprep.subr.bf16.mxu0 0
      %4095 = vmatpush1.bf16.xpose.msra.mxu0 0
      %4096 = vmatprep.subr.bf16.mxu0 0
      %4097 = vmatpush1.bf16.xpose.msra.mxu0 0
      %4098 = vmatprep.subr.bf16.mxu0 0
      %4099 = vmatpush1.bf16.xpose.msra.mxu0 0
      %4100 = vmatprep.subr.bf16.mxu0 0
      %4101 = vmatpush1.bf16.xpose.msra.mxu0 0
      %4102 = vmatprep.subr.bf16.mxu0 0
      %4103 = vmatpush1.bf16.xpose.msra.mxu0 0
      %4104 = vmatprep.subr.bf16.mxu0 0
      %4105 = vmatpush1.bf16.xpose.msra.mxu0 0
      %4106 = vmatprep.subr.bf16.mxu0 0
      %4107 = vmatpush1.bf16.xpose.msra.mxu0 %v3522
      %4108 = vmatprep.subr.bf16.mxu0 0
      %4109 = vmatpush2.bf16.xpose.msra.mxu0 0
      %4110 = vmatprep.subr.bf16.mxu0 0
      %4111 = vmatpush2.bf16.xpose.msra.mxu0 0
      %4112 = vmatprep.subr.bf16.mxu0 0
      %4113 = vmatpush2.bf16.xpose.msra.mxu0 0
      %4114 = vmatprep.subr.bf16.mxu0 0
      %4115 = vmatpush2.bf16.xpose.msra.mxu0 0
      %4116 = vmatprep.subr.bf16.mxu0 0
      %4117 = vmatpush2.bf16.xpose.msra.mxu0 0
      %4118 = vmatprep.subr.bf16.mxu0 0
      %4119 = vmatpush2.bf16.xpose.msra.mxu0 0
      %4120 = vmatprep.subr.bf16.mxu0 0
      %4121 = vmatpush2.bf16.xpose.msra.mxu0 0
      %4122 = vmatprep.subr.bf16.mxu0 0
      %4123 = vmatpush2.bf16.xpose.msra.mxu0 0
      %4124 = vmatprep.mubr.bf16.mxu0 0
      %4125 = vmatmul.mubr.bf16.gmra.mxu0 %v4010
      %v4126 = vpop.f32.mrf.mxu0
      %v4127 = vadd.f32 0.0, %v4126
      %v4128 = vpop.f32.mrf.mxu0
      %v4129 = vpop.f32.mrf.mxu0
      %v4130 = vpop.f32.mrf.mxu0
      %4131 = vdwg.mxu0
      %4132 = vmatprep.subr.bf16.mxu0 0
      %4133 = vmatpush1.bf16.xpose.msra.mxu0 0
      %4134 = vmatprep.subr.bf16.mxu0 0
      %4135 = vmatpush1.bf16.xpose.msra.mxu0 0
      %4136 = vmatprep.subr.bf16.mxu0 0
      %4137 = vmatpush1.bf16.xpose.msra.mxu0 0
      %4138 = vmatprep.subr.bf16.mxu0 0
      %4139 = vmatpush1.bf16.xpose.msra.mxu0 0
      %4140 = vmatprep.subr.bf16.mxu0 0
      %4141 = vmatpush1.bf16.xpose.msra.mxu0 0
      %4142 = vmatprep.subr.bf16.mxu0 0
      %4143 = vmatpush1.bf16.xpose.msra.mxu0 0
      %4144 = vmatprep.subr.bf16.mxu0 0
      %4145 = vmatpush1.bf16.xpose.msra.mxu0 0
      %4146 = vmatprep.subr.bf16.mxu0 0
      %4147 = vmatpush1.bf16.xpose.msra.mxu0 %v3587
      %4148 = vmatprep.subr.bf16.mxu0 0
      %4149 = vmatpush2.bf16.xpose.msra.mxu0 0
      %4150 = vmatprep.subr.bf16.mxu0 0
      %4151 = vmatpush2.bf16.xpose.msra.mxu0 0
      %4152 = vmatprep.subr.bf16.mxu0 0
      %4153 = vmatpush2.bf16.xpose.msra.mxu0 0
      %4154 = vmatprep.subr.bf16.mxu0 0
      %4155 = vmatpush2.bf16.xpose.msra.mxu0 0
      %4156 = vmatprep.subr.bf16.mxu0 0
      %4157 = vmatpush2.bf16.xpose.msra.mxu0 0
      %4158 = vmatprep.subr.bf16.mxu0 0
      %4159 = vmatpush2.bf16.xpose.msra.mxu0 0
      %4160 = vmatprep.subr.bf16.mxu0 0
      %4161 = vmatpush2.bf16.xpose.msra.mxu0 0
      %4162 = vmatprep.subr.bf16.mxu0 0
      %4163 = vmatpush2.bf16.xpose.msra.mxu0 0
      %4164 = vmatprep.mubr.bf16.mxu0 0
      %4165 = vmatmul.mubr.bf16.gmra.mxu0 %v4010
      %v4166 = vpop.f32.mrf.mxu0
      %v4167 = vadd.f32 0.0, %v4166
      %v4168 = vpop.f32.mrf.mxu0
      %v4169 = vpop.f32.mrf.mxu0
      %v4170 = vpop.f32.mrf.mxu0
      %4171 = vdwg.mxu0
      %4173 = vrot.lane.b32.xlu0 %v3368, 96
      %v4174 = vpop.permute.xlu0 %4173
      %v4176 = vmul.f32 %v3368, %v4174
      %v4178 = vlaneseq
      %v4179 = vshrl.u32 %v4178, 7
      %v4180 = vsub.s32 0, %v4179
      %v4181 = vrot.slane %v4176, %v4180
      %4182 = vrot.lane.b32.xlu0 %v4181, 104
      %v4183 = vpop.permute.xlu0 %4182
      %v4185 = vsel %vm940, %v4183, 0.0
      %4186 = vadd.xlane.f32.xlu0 %v4185
      %v4187 = vpop.xlane.xlu0 %4186
      %v4188 = vrot.slane %v4187, 4
      %v4189 = vadd.f32 %v4187, %v4188
      %v4190 = vrot.slane %v4189, 2
      %v4191 = vadd.f32 %v4189, %v4190
      %v4192 = vrot.slane %v4191, 1
      %v4193 = vadd.f32 %v4191, %v4192
      %s4194 = vtos %v4193
      %v4195 = vsel %vm951, %v4047, -inf
      %v4196 = vsel %vm951, %v4087, -inf
      %v4197 = vsel %vm951, %v4127, -inf
      %v4198 = vsel %vm951, %v4167, -inf
      %v4199 = vmax.f32 %v4195, %v4196
      %v4200 = vmax.f32 %v4197, %v4198
      %v4201 = vmax.f32 %v4199, %v4200
      %4202 = vmax.xlane.f32.xlu0 %v4201
      %v4203 = vpop.xlane.xlu0 %4202
      %v4204 = vrot.slane %v4203, 4
      %v4205 = vmax.f32 %v4203, %v4204
      %v4206 = vrot.slane %v4205, 2
      %v4207 = vmax.f32 %v4205, %v4206
      %v4208 = vrot.slane %v4207, 1
      %v4209 = vmax.f32 %v4207, %v4208
      %s4210 = vtos %v4209
      %s4211 = smax.f32 %s4210, %s4194
      %v4212 = vstv %s4211
      %v4213 = vsub.f32 %v4047, %v4212
      %v4214 = vsub.f32 %v4087, %v4212
      %v4215 = vsub.f32 %v4127, %v4212
      %v4216 = vsub.f32 %v4167, %v4212
      %v4217 = vmul.f32 %v4213, 1.442695
      %v4218 = vpow.pop %v4217
      %v4219 = vmul.f32 %v4214, 1.442695
      %v4220 = vpow.pop %v4219
      %v4221 = vmul.f32 %v4215, 1.442695
      %v4222 = vpow.pop %v4221
      %v4223 = vmul.f32 %v4216, 1.442695
      %v4224 = vpow.pop %v4223
      %s4225 = ssub.f32 %s4194, %s4211
      %v4226 = vstv %s4225
      %v4227 = vmul.f32 %v4226, 1.442695
      %v4228 = vpow.pop %v4227
      %s4229 = vtos %v4228
      %v4230 = vsel %vm951, %v4218, 0.0
      %v4231 = vsel %vm951, %v4220, 0.0
      %v4232 = vadd.f32 %v4230, %v4231
      %v4233 = vsel %vm951, %v4222, 0.0
      %v4234 = vadd.f32 %v4232, %v4233
      %v4235 = vsel %vm951, %v4224, 0.0
      %v4236 = vadd.f32 %v4234, %v4235
      %4237 = vadd.xlane.f32.xlu0 %v4236
      %v4238 = vpop.xlane.xlu0 %4237
      %v4239 = vrot.slane %v4238, 4
      %v4240 = vadd.f32 %v4238, %v4239
      %v4241 = vrot.slane %v4240, 2
      %v4242 = vadd.f32 %v4240, %v4241
      %v4243 = vrot.slane %v4242, 1
      %v4244 = vadd.f32 %v4242, %v4243
      %s4245 = vtos %v4244
      %s4246 = sadd.f32 %s4245, %s4229
      %v4247 = vpack.c.bf16 %v4218, %v4218
      %v4248 = vpack.c.bf16 %v4220, %v4220
      %v4249 = vpack.c.bf16 %v4222, %v4222
      %v4250 = vpack.c.bf16 %v4224, %v4224
      %v4252 = vsel %vm556, %v4247, 0
      %4254 = vmatprep.subr.bf16.mxu0 0
      %4255 = vmatpush1.bf16.msra.mxu0 0
      %4256 = vmatprep.subr.bf16.mxu0 0
      %4257 = vmatpush1.bf16.msra.mxu0 0
      %4258 = vmatprep.subr.bf16.mxu0 0
      %4259 = vmatpush1.bf16.msra.mxu0 0
      %4260 = vmatprep.subr.bf16.mxu0 0
      %4261 = vmatpush1.bf16.msra.mxu0 0
      %4262 = vmatprep.subr.bf16.mxu0 0
      %4263 = vmatpush1.bf16.msra.mxu0 0
      %4264 = vmatprep.subr.bf16.mxu0 0
      %4265 = vmatpush1.bf16.msra.mxu0 0
      %4266 = vmatprep.subr.bf16.mxu0 0
      %4267 = vmatpush1.bf16.msra.mxu0 0
      %4268 = vmatprep.subr.bf16.mxu0 0
      %4269 = vmatpush1.bf16.msra.mxu0 %v3782
      %4270 = vmatprep.subr.bf16.mxu0 0
      %4271 = vmatpush2.bf16.msra.mxu0 0
      %4272 = vmatprep.subr.bf16.mxu0 0
      %4273 = vmatpush2.bf16.msra.mxu0 0
      %4274 = vmatprep.subr.bf16.mxu0 0
      %4275 = vmatpush2.bf16.msra.mxu0 0
      %4276 = vmatprep.subr.bf16.mxu0 0
      %4277 = vmatpush2.bf16.msra.mxu0 0
      %4278 = vmatprep.subr.bf16.mxu0 0
      %4279 = vmatpush2.bf16.msra.mxu0 0
      %4280 = vmatprep.subr.bf16.mxu0 0
      %4281 = vmatpush2.bf16.msra.mxu0 0
      %4282 = vmatprep.subr.bf16.mxu0 0
      %4283 = vmatpush2.bf16.msra.mxu0 0
      %4284 = vmatprep.subr.bf16.mxu0 0
      %4285 = vmatpush2.bf16.msra.mxu0 0
      %4286 = vmatprep.mubr.bf16.mxu0 0
      %4287 = vmatmul.mubr.bf16.gmra.mxu0 %v4252
      %v4288 = vpop.f32.mrf.mxu0
      %v4289 = vadd.f32 0.0, %v4288
      %v4290 = vpop.f32.mrf.mxu0
      %v4291 = vpop.f32.mrf.mxu0
      %v4292 = vpop.f32.mrf.mxu0
      %4293 = vdwg.mxu0
      %v4295 = vsel %vm556, %v4248, 0
      %4297 = vmatprep.subr.bf16.mxu0 0
      %4298 = vmatpush1.bf16.msra.mxu0 0
      %4299 = vmatprep.subr.bf16.mxu0 0
      %4300 = vmatpush1.bf16.msra.mxu0 0
      %4301 = vmatprep.subr.bf16.mxu0 0
      %4302 = vmatpush1.bf16.msra.mxu0 0
      %4303 = vmatprep.subr.bf16.mxu0 0
      %4304 = vmatpush1.bf16.msra.mxu0 0
      %4305 = vmatprep.subr.bf16.mxu0 0
      %4306 = vmatpush1.bf16.msra.mxu0 0
      %4307 = vmatprep.subr.bf16.mxu0 0
      %4308 = vmatpush1.bf16.msra.mxu0 0
      %4309 = vmatprep.subr.bf16.mxu0 0
      %4310 = vmatpush1.bf16.msra.mxu0 0
      %4311 = vmatprep.subr.bf16.mxu0 0
      %4312 = vmatpush1.bf16.msra.mxu0 %v3834
      %4313 = vmatprep.subr.bf16.mxu0 0
      %4314 = vmatpush2.bf16.msra.mxu0 0
      %4315 = vmatprep.subr.bf16.mxu0 0
      %4316 = vmatpush2.bf16.msra.mxu0 0
      %4317 = vmatprep.subr.bf16.mxu0 0
      %4318 = vmatpush2.bf16.msra.mxu0 0
      %4319 = vmatprep.subr.bf16.mxu0 0
      %4320 = vmatpush2.bf16.msra.mxu0 0
      %4321 = vmatprep.subr.bf16.mxu0 0
      %4322 = vmatpush2.bf16.msra.mxu0 0
      %4323 = vmatprep.subr.bf16.mxu0 0
      %4324 = vmatpush2.bf16.msra.mxu0 0
      %4325 = vmatprep.subr.bf16.mxu0 0
      %4326 = vmatpush2.bf16.msra.mxu0 0
      %4327 = vmatprep.subr.bf16.mxu0 0
      %4328 = vmatpush2.bf16.msra.mxu0 0
      %4329 = vmatprep.mubr.bf16.mxu0 0
      %4330 = vmatmul.mubr.bf16.gmra.mxu0 %v4295
      %v4331 = vpop.f32.mrf.mxu0
      %v4332 = vadd.f32 0.0, %v4331
      %v4333 = vpop.f32.mrf.mxu0
      %v4334 = vpop.f32.mrf.mxu0
      %v4335 = vpop.f32.mrf.mxu0
      %4336 = vdwg.mxu0
      %v4338 = vsel %vm556, %v4249, 0
      %4340 = vmatprep.subr.bf16.mxu0 0
      %4341 = vmatpush1.bf16.msra.mxu0 0
      %4342 = vmatprep.subr.bf16.mxu0 0
      %4343 = vmatpush1.bf16.msra.mxu0 0
      %4344 = vmatprep.subr.bf16.mxu0 0
      %4345 = vmatpush1.bf16.msra.mxu0 0
      %4346 = vmatprep.subr.bf16.mxu0 0
      %4347 = vmatpush1.bf16.msra.mxu0 0
      %4348 = vmatprep.subr.bf16.mxu0 0
      %4349 = vmatpush1.bf16.msra.mxu0 0
      %4350 = vmatprep.subr.bf16.mxu0 0
      %4351 = vmatpush1.bf16.msra.mxu0 0
      %4352 = vmatprep.subr.bf16.mxu0 0
      %4353 = vmatpush1.bf16.msra.mxu0 0
      %4354 = vmatprep.subr.bf16.mxu0 0
      %4355 = vmatpush1.bf16.msra.mxu0 %v3886
      %4356 = vmatprep.subr.bf16.mxu0 0
      %4357 = vmatpush2.bf16.msra.mxu0 0
      %4358 = vmatprep.subr.bf16.mxu0 0
      %4359 = vmatpush2.bf16.msra.mxu0 0
      %4360 = vmatprep.subr.bf16.mxu0 0
      %4361 = vmatpush2.bf16.msra.mxu0 0
      %4362 = vmatprep.subr.bf16.mxu0 0
      %4363 = vmatpush2.bf16.msra.mxu0 0
      %4364 = vmatprep.subr.bf16.mxu0 0
      %4365 = vmatpush2.bf16.msra.mxu0 0
      %4366 = vmatprep.subr.bf16.mxu0 0
      %4367 = vmatpush2.bf16.msra.mxu0 0
      %4368 = vmatprep.subr.bf16.mxu0 0
      %4369 = vmatpush2.bf16.msra.mxu0 0
      %4370 = vmatprep.subr.bf16.mxu0 0
      %4371 = vmatpush2.bf16.msra.mxu0 0
      %4372 = vmatprep.mubr.bf16.mxu0 0
      %4373 = vmatmul.mubr.bf16.gmra.mxu0 %v4338
      %v4374 = vpop.f32.mrf.mxu0
      %v4375 = vadd.f32 0.0, %v4374
      %v4376 = vpop.f32.mrf.mxu0
      %v4377 = vpop.f32.mrf.mxu0
      %v4378 = vpop.f32.mrf.mxu0
      %4379 = vdwg.mxu0
      %v4381 = vsel %vm556, %v4250, 0
      %4383 = vmatprep.subr.bf16.mxu0 0
      %4384 = vmatpush1.bf16.msra.mxu0 0
      %4385 = vmatprep.subr.bf16.mxu0 0
      %4386 = vmatpush1.bf16.msra.mxu0 0
      %4387 = vmatprep.subr.bf16.mxu0 0
      %4388 = vmatpush1.bf16.msra.mxu0 0
      %4389 = vmatprep.subr.bf16.mxu0 0
      %4390 = vmatpush1.bf16.msra.mxu0 0
      %4391 = vmatprep.subr.bf16.mxu0 0
      %4392 = vmatpush1.bf16.msra.mxu0 0
      %4393 = vmatprep.subr.bf16.mxu0 0
      %4394 = vmatpush1.bf16.msra.mxu0 0
      %4395 = vmatprep.subr.bf16.mxu0 0
      %4396 = vmatpush1.bf16.msra.mxu0 0
      %4397 = vmatprep.subr.bf16.mxu0 0
      %4398 = vmatpush1.bf16.msra.mxu0 %v3938
      %4399 = vmatprep.subr.bf16.mxu0 0
      %4400 = vmatpush2.bf16.msra.mxu0 0
      %4401 = vmatprep.subr.bf16.mxu0 0
      %4402 = vmatpush2.bf16.msra.mxu0 0
      %4403 = vmatprep.subr.bf16.mxu0 0
      %4404 = vmatpush2.bf16.msra.mxu0 0
      %4405 = vmatprep.subr.bf16.mxu0 0
      %4406 = vmatpush2.bf16.msra.mxu0 0
      %4407 = vmatprep.subr.bf16.mxu0 0
      %4408 = vmatpush2.bf16.msra.mxu0 0
      %4409 = vmatprep.subr.bf16.mxu0 0
      %4410 = vmatpush2.bf16.msra.mxu0 0
      %4411 = vmatprep.subr.bf16.mxu0 0
      %4412 = vmatpush2.bf16.msra.mxu0 0
      %4413 = vmatprep.subr.bf16.mxu0 0
      %4414 = vmatpush2.bf16.msra.mxu0 0
      %4415 = vmatprep.mubr.bf16.mxu0 0
      %4416 = vmatmul.mubr.bf16.gmra.mxu0 %v4381
      %v4417 = vpop.f32.mrf.mxu0
      %v4418 = vadd.f32 0.0, %v4417
      %v4419 = vpop.f32.mrf.mxu0
      %v4420 = vpop.f32.mrf.mxu0
      %v4421 = vpop.f32.mrf.mxu0
      %4422 = vdwg.mxu0
      %v4423 = vsel %vm940, %v4289, 0.0
      %v4424 = vsel %vm940, %v4332, 0.0
      %v4425 = vadd.f32 %v4423, %v4424
      %v4426 = vsel %vm940, %v4375, 0.0
      %v4427 = vadd.f32 %v4425, %v4426
      %v4428 = vsel %vm940, %v4418, 0.0
      %v4429 = vadd.f32 %v4427, %v4428
      %v4430 = vstv %s4229
      %v4431 = vmul.f32 %v4430, %v3368
      %v4433 = vlaneseq
      %v4434 = vshrl.u32 %v4433, 7
      %v4435 = vsub.s32 0, %v4434
      %v4436 = vrot.slane %v4431, %v4435
      %4437 = vrot.lane.b32.xlu0 %v4436, 40
      %v4438 = vpop.permute.xlu0 %4437
      %v4440 = vadd.f32 %v4429, %v4438
      %v4441 = vstv %s4246
      %v4442 = vrcp.pop %v4441
      %v4443 = vmul.f32 %v4440, %v4442
      %4448 = vrot.lane.b32.xlu0 %v1826, 8
      %v4449 = vpop.permute.xlu0 %4448
      %4450 = vrot.lane.b32.xlu0 %v1827, 8
      %v4451 = vpop.permute.xlu0 %4450
      %4452 = vrot.lane.b32.xlu0 %v1828, 8
      %v4453 = vpop.permute.xlu0 %4452
      %4454 = vrot.lane.b32.xlu0 %v1829, 8
      %v4455 = vpop.permute.xlu0 %4454
      %4460 = vrot.lane.b32.xlu0 %v2907, 16
      %v4461 = vpop.permute.xlu0 %4460
      %4462 = vrot.lane.b32.xlu0 %v2908, 16
      %v4463 = vpop.permute.xlu0 %4462
      %4464 = vrot.lane.b32.xlu0 %v2909, 16
      %v4465 = vpop.permute.xlu0 %4464
      %4466 = vrot.lane.b32.xlu0 %v2910, 16
      %v4467 = vpop.permute.xlu0 %4466
      %4472 = vrot.lane.b32.xlu0 %v3988, 24
      %v4473 = vpop.permute.xlu0 %4472
      %4474 = vrot.lane.b32.xlu0 %v3989, 24
      %v4475 = vpop.permute.xlu0 %4474
      %4476 = vrot.lane.b32.xlu0 %v3990, 24
      %v4477 = vpop.permute.xlu0 %4476
      %4478 = vrot.lane.b32.xlu0 %v3991, 24
      %v4479 = vpop.permute.xlu0 %4478
      %v4482 = vsel %vm213, %v768, %v4449
      %v4485 = vsel %vm213, %v769, %v4451
      %v4488 = vsel %vm213, %v770, %v4453
      %v4491 = vsel %vm213, %v771, %v4455
      %vm4492 = vcmask 130048
      %v4494 = vsel %vm4492, %v4482, %v4461
      %v4496 = vsel %vm4492, %v4485, %v4463
      %v4498 = vsel %vm4492, %v4488, %v4465
      %v4500 = vsel %vm4492, %v4491, %v4467
      %vm4501 = vcmask 195584
      %v4503 = vsel %vm4501, %v4494, %v4473
      %v4506 = vsel %vm4501, %v4496, %v4475
      %v4509 = vsel %vm4501, %v4498, %v4477
      %v4512 = vsel %vm4501, %v4500, %v4479
      %vm4514 = vcmask 253952
      %4515 = vst.msk [vmem:[%s185] sm:$0x1] %vm4514, %v4503
      %4516 = vst.msk [vmem:[%s185 + $0x1] sm:$0x1] %vm4514, %v4506
      %4517 = vst.msk [vmem:[%s185 + $0x2] sm:$0x1] %vm4514, %v4509
      %4518 = vst.msk [vmem:[%s185 + $0x3] sm:$0x1] %vm4514, %v4512
      %4520 = vrot.lane.b32.xlu0 %v2281, 8
      %v4521 = vpop.permute.xlu0 %4520
      %4524 = vrot.lane.b32.xlu0 %v3362, 16
      %v4525 = vpop.permute.xlu0 %4524
      %4528 = vrot.lane.b32.xlu0 %v4443, 24
      %v4529 = vpop.permute.xlu0 %4528
      %v4531 = vsel %vm213, %v1200, %v4521
      %v4532 = vsel %vm4492, %v4531, %v4525
      %v4533 = vsel %vm4501, %v4532, %v4529
      %v4534 = vpack.c.bf16 %v4533, %v4533
      %vm4535 = vcmask 253952
      %vm4536 = vsmask.f32 256
      %vm4537 = vmand %vm4535, %vm4536
      %v4538 = vld [vmem:[%s188] sm:$0x1]
      %v4539 = vsel %vm4537, %v4534, %v4538
      %4540 = vst [vmem:[%s188] sm:$0x1] %v4539
      %p4541 = scmp.lt.s32.totalorder %s15, 1
      %s4542 = scalar_select %p4541, %s15, 1
      %s4543 = smul.addr %s4542, 4
      %s4544 = scalar_lea.vmem %s2, %s4543
      %p4545 = scmp.lt.s32.totalorder %s15, 1
      %s4546 = scalar_select %p4545, %s15, 1
      %s4547 = scalar_lea.vmem %s3, %s4546
      // Predicated region
      $region29: #{timesformer_forward.20} parent=27 // pred_check
        %p4548 = pneg %p85
      $region30: #{timesformer_forward.20} parent=27 // pred_check_branch
        %4550 = sbr.rel (%p4548) target = $region32
      $region31: #{timesformer_forward.20} parent=27 // pred_region
        _
      $region32: #{timesformer_forward.20} parent=27 // pred_fallthru
        _
      // Predicated region
      $region33: #{timesformer_forward.20} parent=27 // pred_check
        %p4551 = pneg %p111
      $region34: #{timesformer_forward.20} parent=27 // pred_check_branch
        %4553 = sbr.rel (%p4551) target = $region36
      $region35: #{timesformer_forward.20} parent=27 // pred_region
        _
      $region36: #{timesformer_forward.20} parent=27 // pred_fallthru
        _
    $region28: #{timesformer_forward.20} parent=5 // pred_fallthru
      _
    %p4554 = scmp.le.s32.totalorder 2, %s10
    // Predicated region
    $region37: #{timesformer_forward.20} parent=5 // pred_check
      %p4555 = pneg %p4554
    $region38: #{timesformer_forward.20} parent=5 // pred_check_branch
      %4557 = sbr.rel (%p4555) target = $region40
    $region39: #{timesformer_forward.20} parent=5 // pred_region
      %s4558 = ssub.s32 %s10, 2
      // Predicated region
      $region41: #{timesformer_forward.20} parent=39 // pred_check
        %p4559 = pneg %p91
      $region42: #{timesformer_forward.20} parent=39 // pred_check_branch
        %4561 = sbr.rel (%p4559) target = $region44
      $region43: #{timesformer_forward.20} parent=39 // pred_region
        %p4562 = scmp.lt.s32.totalorder %s16, 1
        %s4563 = scalar_select %p4562, %s16, 1
        %s4564 = smul.addr %s4563, 4
        %s4565 = scalar_lea.vmem %s2, %s4564
      $region44: #{timesformer_forward.20} parent=39 // pred_fallthru
        _
      // Predicated region
      $region45: #{timesformer_forward.20} parent=39 // pred_check
        %p4566 = pneg %p117
      $region46: #{timesformer_forward.20} parent=39 // pred_check_branch
        %4568 = sbr.rel (%p4566) target = $region48
      $region47: #{timesformer_forward.20} parent=39 // pred_region
        %p4569 = scmp.lt.s32.totalorder %s16, 1
        %s4570 = scalar_select %p4569, %s16, 1
        %s4571 = scalar_lea.vmem %s3, %s4570
      $region48: #{timesformer_forward.20} parent=39 // pred_fallthru
        _
    $region40: #{timesformer_forward.20} parent=5 // pred_fallthru
      _
  $region6: #{timesformer_forward.20} parent=0 // loop_footer
    %s14 = sadd.s32 1, %s10
  $region7: #{timesformer_forward.20} parent=0 // loop_footer_branch
    %9 = sbr.rel target = $region3
  $region8: #{timesformer_forward.20} parent=0 // loop_exit
    _

</llo_original>
